<compile_context>
chip_gen: v6e
topology: v6e:2x2x1
jax: 0.10.0
libtpu: 0.0.40
codegen_flags: <defaults>
</compile_context>

<pallas_src>
import functools

import jax
import jax.numpy as jnp
from jax import lax
from jax.experimental import pallas as pl
from jax.experimental.pallas import tpu as pltpu


def _conv3x3(x, w_ref, b_ref):
    """3x3 'same' conv (padding=1, stride=1) as 9 accumulating MXU matmuls.

    x:     (NB, H, W, C) in the matmul dtype (bf16 or f32)
    w_ref: (3, 3, C, P) ref (tap order dh, dw), matmul dtype
    b_ref: (1, P) ref, float32
    returns (NB*H*W, P) float32
    """
    NB, H, W, C = x.shape
    M = NB * H * W
    # Pad H only (single concat); the +/-1 W shifts are built once each as
    # zero-filled shifted views.  No 9x im2col slab is ever materialized.
    zrow = jnp.zeros((NB, 1, W, C), x.dtype)
    xp = jnp.concatenate([zrow, x, zrow], axis=1)                 # (NB, H+2, W, C)
    zcol = jnp.zeros((NB, H + 2, 1, C), x.dtype)
    xw = (jnp.concatenate([zcol, xp[:, :, :W - 1, :]], axis=2),   # input col j-1
          xp,                                                     # input col j
          jnp.concatenate([xp[:, :, 1:, :], zcol], axis=2))       # input col j+1

    # Center tap initializes the accumulator (no separate zero-init pass).
    acc = jnp.dot(xw[1][:, 1:1 + H].reshape(M, C), w_ref[1, 1],
                  preferred_element_type=jnp.float32)
    for dh in range(3):
        for dw in range(3):
            if dh == 1 and dw == 1:
                continue
            lhs = xw[dw][:, dh:dh + H].reshape(M, C)              # leading-dim reshape
            acc = acc + jnp.dot(lhs, w_ref[dh, dw],
                                preferred_element_type=jnp.float32)
    return acc + b_ref[...]                                       # bias broadcast once


def _group_norm_relu(y, gamma, beta, sel, eps):
    """GroupNorm (per sample, over HW x group-channels) followed by ReLU.

    y: (NB, HW, P) f32; gamma/beta: (1, P) f32; sel: (P, G) one-hot f32.
    """
    NB, HW, P = y.shape
    G = sel.shape[1]
    inv_cnt = 1.0 / float(HW * (P // G))
    # Single traversal of the activation for both moments ...
    s1 = jnp.sum(y, axis=1)                                       # (NB, P)
    s2 = jnp.sum(y * y, axis=1)                                   # (NB, P)
    # ... then channel->group reduce and group->channel scatter ride the MXU.
    mean_g = jnp.dot(s1, sel, preferred_element_type=jnp.float32) * inv_cnt
    ex2_g = jnp.dot(s2, sel, preferred_element_type=jnp.float32) * inv_cnt
    # TODO(synk): single-pass E[x^2]-E[x]^2 variance (clamped at 0); switch to a
    #             centered second pass if strict parity with torch GN is needed.
    var_g = jnp.maximum(ex2_g - mean_g * mean_g, 0.0)
    rstd_g = lax.rsqrt(var_g + eps)                               # (NB, G), EUP
    ct = (((1,), (1,)), ((), ()))                                 # contract the G axis
    mean_c = lax.dot_general(mean_g, sel, ct, preferred_element_type=jnp.float32)
    rstd_c = lax.dot_general(rstd_g, sel, ct, preferred_element_type=jnp.float32)
    scale = rstd_c * gamma                                        # (NB, P)
    shift = beta - mean_c * scale                                 # (NB, P)
    return jnp.maximum(y * scale[:, None, :] + shift[:, None, :], 0.0)


def _fold_w_into_lanes(y4):
    """(NB, H, W, P) -> (NB, H, W*P): fold W into the lane dim so the output
    store is a full-width, unmasked vst (W*P is a multiple of 128)."""
    W = y4.shape[2]
    return jnp.concatenate([y4[:, :, j, :] for j in range(W)], axis=-1)


def residual_block_kernel(x_ref, w1_ref, b1_ref, g1_ref, be1_ref,
                          w2_ref, b2_ref, g2_ref, be2_ref, sel_ref, o_ref,
                          *, matmul_dtype, eps):
    NB, H, W, C = x_ref.shape
    P = w1_ref.shape[-1]
    HW = H * W

    sel = sel_ref[...]                                            # shared by both GNs

    # conv1 -> GN1 -> relu  (x is NOT kept live past conv1; re-read at residual)
    x = x_ref[...].astype(matmul_dtype)
    y = _conv3x3(x, w1_ref, b1_ref)                               # (NB*H*W, P) f32
    y = _group_norm_relu(y.reshape(NB, HW, P), g1_ref[...], be1_ref[...], sel, eps)

    # conv2 -> GN2 -> relu  (intermediate cast to the matmul dtype, f32 accum)
    y = _conv3x3(y.reshape(NB, H, W, P).astype(matmul_dtype), w2_ref, b2_ref)
    y = _group_norm_relu(y.reshape(NB, HW, P), g2_ref[...], be2_ref[...], sel, eps)

    # residual add + relu; fold W into lanes once, then one dense store.
    y4 = y.reshape(NB, H, W, P)                                   # leading-dim split
    out4 = jnp.maximum(x_ref[...].astype(jnp.float32) + y4, 0.0)  # re-read x here
    o_ref[...] = _fold_w_into_lanes(out4).astype(o_ref.dtype)


def residual_block_nhwc(x, params, num_groups, *, matmul_dtype=jnp.bfloat16,
                        batch_block=1, eps=1e-5,
                        vmem_limit_bytes=48 * 1024 * 1024):
    """x: (N, H, W, C) float32 NHWC. Returns (N, H, W, planes) float32.

    matmul_dtype=jnp.bfloat16 (with f32 accumulation) is the right choice on
    v5e, v6e and v7x alike; use jnp.float32 only for strict-accuracy checks.
    batch_block=1 keeps per-step VMEM small and gives the grid >1 step so the
    'parallel' axis can use both v7x TensorCores; batch_block=None folds the
    whole batch into one step.
    """
    N, H, W, C = x.shape
    P = params["w1"].shape[-1]
    assert params["w1"].shape == (3, 3, C, P)
    assert C == P, "stride=1 identity shortcut requires in_planes == planes"
    assert P % num_groups == 0
    G = num_groups

    NB = N if batch_block is None else min(batch_block, N)
    assert N % NB == 0

    # Weights stay in HWIO tap order (dh, dw, cin, cout), cast to the MXU dtype.
    w1 = params["w1"].astype(matmul_dtype)
    w2 = params["w2"].astype(matmul_dtype)
    vec = lambda a: a.reshape(1, P).astype(jnp.float32)
    b1, g1, be1 = vec(params["b1"]), vec(params["g1"]), vec(params["be1"])
    b2, g2, be2 = vec(params["b2"]), vec(params["g2"]), vec(params["be2"])
    # Channel -> group one-hot selector, built once, shared by both GroupNorms.
    sel = (jnp.arange(P, dtype=jnp.int32)[:, None] // (P // G)
           == jnp.arange(G, dtype=jnp.int32)[None, :]).astype(jnp.float32)

    kernel = functools.partial(residual_block_kernel,
                               matmul_dtype=matmul_dtype, eps=eps)

    def const_spec(shape):
        # Constant-index parameters: single-buffered, no pointless double buffer.
        return pl.BlockSpec(shape, lambda n: (0,) * len(shape),
                            pipeline_mode=pl.Buffered(1))

    out = pl.pallas_call(
        kernel,
        out_shape=jax.ShapeDtypeStruct((N, H, W * P), jnp.float32),
        grid_spec=pltpu.PrefetchScalarGridSpec(
            num_scalar_prefetch=0,
            grid=(N // NB,),
            in_specs=[
                pl.BlockSpec((NB, H, W, C), lambda n: (n, 0, 0, 0)),    # x
                const_spec((3, 3, C, P)),                               # w1
                const_spec((1, P)), const_spec((1, P)), const_spec((1, P)),
                const_spec((3, 3, P, P)),                               # w2
                const_spec((1, P)), const_spec((1, P)), const_spec((1, P)),
                const_spec((P, G)),                                     # sel
            ],
            # Lane-dense output: last dim W*P (512 here) -> unmasked stores.
            out_specs=pl.BlockSpec((NB, H, W * P), lambda n: (n, 0, 0)),
        ),
        compiler_params=pltpu.CompilerParams(
            dimension_semantics=("parallel",),
            vmem_limit_bytes=vmem_limit_bytes),
    )(x, w1, b1, g1, be1, w2, b2, g2, be2, sel)
    return out.reshape(N, H, W, P)                # free metadata reshape in HBM


def residual_block(x_nchw, params, num_groups, **kwargs):
    """PyTorch-layout wrapper (NCHW in/out).  When stacking ResidualBlocks, keep
    NHWC between blocks and call residual_block_nhwc directly to avoid the HBM
    transpose round trips around every block."""
    x = jnp.transpose(x_nchw, (0, 2, 3, 1))
    out = residual_block_nhwc(x, params, num_groups, **kwargs)
    return jnp.transpose(out, (0, 3, 1, 2))


def reference(x, params, num_groups, eps=1e-5):
    """Pure-JAX NCHW reference (mirrors the PyTorch module), fp32."""
    def conv(inp, w_hwio, b):
        w_oihw = jnp.transpose(w_hwio, (3, 2, 0, 1))
        y = lax.conv_general_dilated(
            inp, w_oihw, (1, 1), ((1, 1), (1, 1)),
            dimension_numbers=("NCHW", "OIHW", "NCHW"),
            precision=lax.Precision.HIGHEST)
        return y + b[None, :, None, None]

    def gn(inp, gamma, beta):
        N, C, H, W = inp.shape
        xg = inp.reshape(N, num_groups, -1)
        m = xg.mean(axis=-1, keepdims=True)
        v = ((xg - m) ** 2).mean(axis=-1, keepdims=True)
        xn = ((xg - m) * lax.rsqrt(v + eps)).reshape(N, C, H, W)
        return xn * gamma[None, :, None, None] + beta[None, :, None, None]

    y = jax.nn.relu(gn(conv(x, params["w1"], params["b1"]),
                       params["g1"], params["be1"]))
    y = jax.nn.relu(gn(conv(y, params["w2"], params["b2"]),
                       params["g2"], params["be2"]))
    return jax.nn.relu(x + y)


if __name__ == "__main__":
    key = jax.random.PRNGKey(0)
    N, H, W = 2, 16, 16
    planes = 32                     # in_planes == planes (stride=1 residual path)
    C = planes
    num_groups = planes // 8        # = 4, as in the PyTorch module

    ks = jax.random.split(key, 8)
    x_nchw = jax.random.normal(ks[0], (N, C, H, W), jnp.float32)
    params = dict(
        w1=0.1 * jax.random.normal(ks[1], (3, 3, C, planes), jnp.float32),
        b1=0.1 * jax.random.normal(ks[2], (planes,), jnp.float32),
        g1=1.0 + 0.1 * jax.random.normal(ks[3], (planes,), jnp.float32),
        be1=0.1 * jax.random.normal(ks[4], (planes,), jnp.float32),
        w2=0.1 * jax.random.normal(ks[5], (3, 3, planes, planes), jnp.float32),
        b2=0.1 * jax.random.normal(ks[6], (planes,), jnp.float32),
        g2=1.0 + 0.1 * jax.random.normal(ks[7], (planes,), jnp.float32),
        be2=jnp.zeros((planes,), jnp.float32),
    )

    ref = reference(x_nchw, params, num_groups)

    # Exact-math validation: f32 MXU inputs (strict-accuracy configuration).
    out_f32 = jax.block_until_ready(
        residual_block(x_nchw, params, num_groups, matmul_dtype=jnp.float32))
    assert out_f32.shape == (N, planes, H, W), out_f32.shape
    assert jnp.allclose(out_f32, ref, atol=1e-3, rtol=1e-3), (
        float(jnp.max(jnp.abs(out_f32 - ref))))

    # Performance configuration (v5e / v6e / v7x): bf16 MXU inputs, f32 accum.
    out_bf16 = jax.block_until_ready(
        residual_block(x_nchw, params, num_groups))
    assert out_bf16.shape == (N, planes, H, W), out_bf16.shape
    assert jnp.allclose(out_bf16, ref, atol=0.15, rtol=0.05), (
        float(jnp.max(jnp.abs(out_bf16 - ref))))

    print("KERNEL_OK")
</pallas_src>

<mosaic_0001>
module attributes {stable_mosaic.version = 11 : i64} {
  func.func @residual_block_kernel(%arg0: i32, %arg1: memref<1x16x16x32xf32, #tpu.memory_space<vmem>>, %arg2: memref<3x3x32x32xf32, #tpu.memory_space<vmem>>, %arg3: memref<1x32xf32, #tpu.memory_space<vmem>>, %arg4: memref<1x32xf32, #tpu.memory_space<vmem>>, %arg5: memref<1x32xf32, #tpu.memory_space<vmem>>, %arg6: memref<3x3x32x32xf32, #tpu.memory_space<vmem>>, %arg7: memref<1x32xf32, #tpu.memory_space<vmem>>, %arg8: memref<1x32xf32, #tpu.memory_space<vmem>>, %arg9: memref<1x32xf32, #tpu.memory_space<vmem>>, %arg10: memref<32x4xf32, #tpu.memory_space<vmem>>, %arg11: memref<1x16x512xf32, #tpu.memory_space<vmem>>) attributes {dimension_semantics = [#tpu.dimension_semantics<parallel>], iteration_bounds = array<i64: 2>, scalar_prefetch = 0 : i64, scratch_operands = 0 : i64, tpu.core_type = #tpu.core_type<tc>, window_params = [{transform_indices = @transform_0, window_bounds = array<i64: 1, 16, 16, 32>}, {pipeline_mode = #tpu.pipeline_mode<synchronous>, transform_indices = @transform_1, window_bounds = array<i64: 3, 3, 32, 32>}, {pipeline_mode = #tpu.pipeline_mode<synchronous>, transform_indices = @transform_2, window_bounds = array<i64: 1, 32>}, {pipeline_mode = #tpu.pipeline_mode<synchronous>, transform_indices = @transform_3, window_bounds = array<i64: 1, 32>}, {pipeline_mode = #tpu.pipeline_mode<synchronous>, transform_indices = @transform_4, window_bounds = array<i64: 1, 32>}, {pipeline_mode = #tpu.pipeline_mode<synchronous>, transform_indices = @transform_5, window_bounds = array<i64: 3, 3, 32, 32>}, {pipeline_mode = #tpu.pipeline_mode<synchronous>, transform_indices = @transform_6, window_bounds = array<i64: 1, 32>}, {pipeline_mode = #tpu.pipeline_mode<synchronous>, transform_indices = @transform_7, window_bounds = array<i64: 1, 32>}, {pipeline_mode = #tpu.pipeline_mode<synchronous>, transform_indices = @transform_8, window_bounds = array<i64: 1, 32>}, {pipeline_mode = #tpu.pipeline_mode<synchronous>, transform_indices = @transform_9, window_bounds = array<i64: 32, 4>}, {transform_indices = @transform_10, window_bounds = array<i64: 1, 16, 512>}]} {
    %c0 = arith.constant 0 : index
    %c0_0 = arith.constant 0 : index
    %0 = vector.load %arg10[%c0, %c0_0] : memref<32x4xf32, #tpu.memory_space<vmem>>, vector<32x4xf32>
    %c0_1 = arith.constant 0 : index
    %c0_2 = arith.constant 0 : index
    %c0_3 = arith.constant 0 : index
    %c0_4 = arith.constant 0 : index
    %1 = vector.load %arg1[%c0_1, %c0_2, %c0_3, %c0_4] : memref<1x16x16x32xf32, #tpu.memory_space<vmem>>, vector<1x16x16x32xf32>
    %cst = arith.constant 0.000000e+00 : f32
    %2 = vector.broadcast %cst : f32 to vector<1x1x16x32xf32>
    %3 = tpu.concatenate %2, %1, %2 in 1 : vector<1x1x16x32xf32>, vector<1x16x16x32xf32>, vector<1x1x16x32xf32> -> vector<1x18x16x32xf32>
    %cst_5 = arith.constant 0.000000e+00 : f32
    %4 = vector.broadcast %cst_5 : f32 to vector<1x18x1x32xf32>
    %5 = vector.extract_strided_slice %3 {offsets = [0, 0, 0, 0], sizes = [1, 18, 15, 32], strides = [1, 1, 1, 1]} : vector<1x18x16x32xf32> to vector<1x18x15x32xf32>
    %6 = tpu.concatenate %4, %5 in 2 : vector<1x18x1x32xf32>, vector<1x18x15x32xf32> -> vector<1x18x16x32xf32>
    %7 = vector.extract_strided_slice %3 {offsets = [0, 0, 1, 0], sizes = [1, 18, 15, 32], strides = [1, 1, 1, 1]} : vector<1x18x16x32xf32> to vector<1x18x15x32xf32>
    %8 = tpu.concatenate %7, %4 in 2 : vector<1x18x15x32xf32>, vector<1x18x1x32xf32> -> vector<1x18x16x32xf32>
    %9 = vector.extract_strided_slice %3 {offsets = [0, 1, 0, 0], sizes = [1, 16, 16, 32], strides = [1, 1, 1, 1]} : vector<1x18x16x32xf32> to vector<1x16x16x32xf32>
    %10 = vector.shape_cast %9 : vector<1x16x16x32xf32> to vector<256x32xf32>
    %c1 = arith.constant 1 : index
    %c1_6 = arith.constant 1 : index
    %c0_7 = arith.constant 0 : index
    %c0_8 = arith.constant 0 : index
    %11 = vector.load %arg2[%c1, %c1_6, %c0_7, %c0_8] : memref<3x3x32x32xf32, #tpu.memory_space<vmem>>, vector<1x1x32x32xf32>
    %12 = vector.shape_cast %11 : vector<1x1x32x32xf32> to vector<32x32xf32>
    %cst_9 = arith.constant dense<0.000000e+00> : vector<256x32xf32>
    %13 = tpu.matmul %10, %12, %cst_9 {dimension_numbers = #tpu.dot_dimension_numbers<[1], [0], [0], [1], [0, 0, 1, 1], [], []>} : vector<256x32xf32>, vector<32x32xf32>, vector<256x32xf32> -> vector<256x32xf32>
    %14 = vector.extract_strided_slice %6 {offsets = [0, 0, 0, 0], sizes = [1, 16, 16, 32], strides = [1, 1, 1, 1]} : vector<1x18x16x32xf32> to vector<1x16x16x32xf32>
    %15 = vector.shape_cast %14 : vector<1x16x16x32xf32> to vector<256x32xf32>
    %c0_10 = arith.constant 0 : index
    %c0_11 = arith.constant 0 : index
    %c0_12 = arith.constant 0 : index
    %c0_13 = arith.constant 0 : index
    %16 = vector.load %arg2[%c0_10, %c0_11, %c0_12, %c0_13] : memref<3x3x32x32xf32, #tpu.memory_space<vmem>>, vector<1x1x32x32xf32>
    %17 = vector.shape_cast %16 : vector<1x1x32x32xf32> to vector<32x32xf32>
    %cst_14 = arith.constant dense<0.000000e+00> : vector<256x32xf32>
    %18 = tpu.matmul %15, %17, %cst_14 {dimension_numbers = #tpu.dot_dimension_numbers<[1], [0], [0], [1], [0, 0, 1, 1], [], []>} : vector<256x32xf32>, vector<32x32xf32>, vector<256x32xf32> -> vector<256x32xf32>
    %19 = arith.addf %13, %18 : vector<256x32xf32>
    %20 = vector.extract_strided_slice %3 {offsets = [0, 0, 0, 0], sizes = [1, 16, 16, 32], strides = [1, 1, 1, 1]} : vector<1x18x16x32xf32> to vector<1x16x16x32xf32>
    %21 = vector.shape_cast %20 : vector<1x16x16x32xf32> to vector<256x32xf32>
    %c0_15 = arith.constant 0 : index
    %c1_16 = arith.constant 1 : index
    %c0_17 = arith.constant 0 : index
    %c0_18 = arith.constant 0 : index
    %22 = vector.load %arg2[%c0_15, %c1_16, %c0_17, %c0_18] : memref<3x3x32x32xf32, #tpu.memory_space<vmem>>, vector<1x1x32x32xf32>
    %23 = vector.shape_cast %22 : vector<1x1x32x32xf32> to vector<32x32xf32>
    %cst_19 = arith.constant dense<0.000000e+00> : vector<256x32xf32>
    %24 = tpu.matmul %21, %23, %cst_19 {dimension_numbers = #tpu.dot_dimension_numbers<[1], [0], [0], [1], [0, 0, 1, 1], [], []>} : vector<256x32xf32>, vector<32x32xf32>, vector<256x32xf32> -> vector<256x32xf32>
    %25 = arith.addf %19, %24 : vector<256x32xf32>
    %26 = vector.extract_strided_slice %8 {offsets = [0, 0, 0, 0], sizes = [1, 16, 16, 32], strides = [1, 1, 1, 1]} : vector<1x18x16x32xf32> to vector<1x16x16x32xf32>
    %27 = vector.shape_cast %26 : vector<1x16x16x32xf32> to vector<256x32xf32>
    %c0_20 = arith.constant 0 : index
    %c2 = arith.constant 2 : index
    %c0_21 = arith.constant 0 : index
    %c0_22 = arith.constant 0 : index
    %28 = vector.load %arg2[%c0_20, %c2, %c0_21, %c0_22] : memref<3x3x32x32xf32, #tpu.memory_space<vmem>>, vector<1x1x32x32xf32>
    %29 = vector.shape_cast %28 : vector<1x1x32x32xf32> to vector<32x32xf32>
    %cst_23 = arith.constant dense<0.000000e+00> : vector<256x32xf32>
    %30 = tpu.matmul %27, %29, %cst_23 {dimension_numbers = #tpu.dot_dimension_numbers<[1], [0], [0], [1], [0, 0, 1, 1], [], []>} : vector<256x32xf32>, vector<32x32xf32>, vector<256x32xf32> -> vector<256x32xf32>
    %31 = arith.addf %25, %30 : vector<256x32xf32>
    %32 = vector.extract_strided_slice %6 {offsets = [0, 1, 0, 0], sizes = [1, 16, 16, 32], strides = [1, 1, 1, 1]} : vector<1x18x16x32xf32> to vector<1x16x16x32xf32>
    %33 = vector.shape_cast %32 : vector<1x16x16x32xf32> to vector<256x32xf32>
    %c1_24 = arith.constant 1 : index
    %c0_25 = arith.constant 0 : index
    %c0_26 = arith.constant 0 : index
    %c0_27 = arith.constant 0 : index
    %34 = vector.load %arg2[%c1_24, %c0_25, %c0_26, %c0_27] : memref<3x3x32x32xf32, #tpu.memory_space<vmem>>, vector<1x1x32x32xf32>
    %35 = vector.shape_cast %34 : vector<1x1x32x32xf32> to vector<32x32xf32>
    %cst_28 = arith.constant dense<0.000000e+00> : vector<256x32xf32>
    %36 = tpu.matmul %33, %35, %cst_28 {dimension_numbers = #tpu.dot_dimension_numbers<[1], [0], [0], [1], [0, 0, 1, 1], [], []>} : vector<256x32xf32>, vector<32x32xf32>, vector<256x32xf32> -> vector<256x32xf32>
    %37 = arith.addf %31, %36 : vector<256x32xf32>
    %38 = vector.extract_strided_slice %8 {offsets = [0, 1, 0, 0], sizes = [1, 16, 16, 32], strides = [1, 1, 1, 1]} : vector<1x18x16x32xf32> to vector<1x16x16x32xf32>
    %39 = vector.shape_cast %38 : vector<1x16x16x32xf32> to vector<256x32xf32>
    %c1_29 = arith.constant 1 : index
    %c2_30 = arith.constant 2 : index
    %c0_31 = arith.constant 0 : index
    %c0_32 = arith.constant 0 : index
    %40 = vector.load %arg2[%c1_29, %c2_30, %c0_31, %c0_32] : memref<3x3x32x32xf32, #tpu.memory_space<vmem>>, vector<1x1x32x32xf32>
    %41 = vector.shape_cast %40 : vector<1x1x32x32xf32> to vector<32x32xf32>
    %cst_33 = arith.constant dense<0.000000e+00> : vector<256x32xf32>
    %42 = tpu.matmul %39, %41, %cst_33 {dimension_numbers = #tpu.dot_dimension_numbers<[1], [0], [0], [1], [0, 0, 1, 1], [], []>} : vector<256x32xf32>, vector<32x32xf32>, vector<256x32xf32> -> vector<256x32xf32>
    %43 = arith.addf %37, %42 : vector<256x32xf32>
    %44 = vector.extract_strided_slice %6 {offsets = [0, 2, 0, 0], sizes = [1, 16, 16, 32], strides = [1, 1, 1, 1]} : vector<1x18x16x32xf32> to vector<1x16x16x32xf32>
    %45 = vector.shape_cast %44 : vector<1x16x16x32xf32> to vector<256x32xf32>
    %c2_34 = arith.constant 2 : index
    %c0_35 = arith.constant 0 : index
    %c0_36 = arith.constant 0 : index
    %c0_37 = arith.constant 0 : index
    %46 = vector.load %arg2[%c2_34, %c0_35, %c0_36, %c0_37] : memref<3x3x32x32xf32, #tpu.memory_space<vmem>>, vector<1x1x32x32xf32>
    %47 = vector.shape_cast %46 : vector<1x1x32x32xf32> to vector<32x32xf32>
    %cst_38 = arith.constant dense<0.000000e+00> : vector<256x32xf32>
    %48 = tpu.matmul %45, %47, %cst_38 {dimension_numbers = #tpu.dot_dimension_numbers<[1], [0], [0], [1], [0, 0, 1, 1], [], []>} : vector<256x32xf32>, vector<32x32xf32>, vector<256x32xf32> -> vector<256x32xf32>
    %49 = arith.addf %43, %48 : vector<256x32xf32>
    %50 = vector.extract_strided_slice %3 {offsets = [0, 2, 0, 0], sizes = [1, 16, 16, 32], strides = [1, 1, 1, 1]} : vector<1x18x16x32xf32> to vector<1x16x16x32xf32>
    %51 = vector.shape_cast %50 : vector<1x16x16x32xf32> to vector<256x32xf32>
    %c2_39 = arith.constant 2 : index
    %c1_40 = arith.constant 1 : index
    %c0_41 = arith.constant 0 : index
    %c0_42 = arith.constant 0 : index
    %52 = vector.load %arg2[%c2_39, %c1_40, %c0_41, %c0_42] : memref<3x3x32x32xf32, #tpu.memory_space<vmem>>, vector<1x1x32x32xf32>
    %53 = vector.shape_cast %52 : vector<1x1x32x32xf32> to vector<32x32xf32>
    %cst_43 = arith.constant dense<0.000000e+00> : vector<256x32xf32>
    %54 = tpu.matmul %51, %53, %cst_43 {dimension_numbers = #tpu.dot_dimension_numbers<[1], [0], [0], [1], [0, 0, 1, 1], [], []>} : vector<256x32xf32>, vector<32x32xf32>, vector<256x32xf32> -> vector<256x32xf32>
    %55 = arith.addf %49, %54 : vector<256x32xf32>
    %56 = vector.extract_strided_slice %8 {offsets = [0, 2, 0, 0], sizes = [1, 16, 16, 32], strides = [1, 1, 1, 1]} : vector<1x18x16x32xf32> to vector<1x16x16x32xf32>
    %57 = vector.shape_cast %56 : vector<1x16x16x32xf32> to vector<256x32xf32>
    %c2_44 = arith.constant 2 : index
    %c2_45 = arith.constant 2 : index
    %c0_46 = arith.constant 0 : index
    %c0_47 = arith.constant 0 : index
    %58 = vector.load %arg2[%c2_44, %c2_45, %c0_46, %c0_47] : memref<3x3x32x32xf32, #tpu.memory_space<vmem>>, vector<1x1x32x32xf32>
    %59 = vector.shape_cast %58 : vector<1x1x32x32xf32> to vector<32x32xf32>
    %cst_48 = arith.constant dense<0.000000e+00> : vector<256x32xf32>
    %60 = tpu.matmul %57, %59, %cst_48 {dimension_numbers = #tpu.dot_dimension_numbers<[1], [0], [0], [1], [0, 0, 1, 1], [], []>} : vector<256x32xf32>, vector<32x32xf32>, vector<256x32xf32> -> vector<256x32xf32>
    %61 = arith.addf %55, %60 : vector<256x32xf32>
    %c0_49 = arith.constant 0 : index
    %c0_50 = arith.constant 0 : index
    %62 = vector.load %arg3[%c0_49, %c0_50] : memref<1x32xf32, #tpu.memory_space<vmem>>, vector<1x32xf32>
    %63 = vector.broadcast %62 : vector<1x32xf32> to vector<256x32xf32>
    %64 = arith.addf %61, %63 : vector<256x32xf32>
    %65 = vector.shape_cast %64 : vector<256x32xf32> to vector<1x256x32xf32>
    %c0_51 = arith.constant 0 : index
    %c0_52 = arith.constant 0 : index
    %66 = vector.load %arg4[%c0_51, %c0_52] : memref<1x32xf32, #tpu.memory_space<vmem>>, vector<1x32xf32>
    %c0_53 = arith.constant 0 : index
    %c0_54 = arith.constant 0 : index
    %67 = vector.load %arg5[%c0_53, %c0_54] : memref<1x32xf32, #tpu.memory_space<vmem>>, vector<1x32xf32>
    %cst_55 = arith.constant dense<0.000000e+00> : vector<1x32xf32>
    %68 = vector.multi_reduction <add>, %65, %cst_55 [1] : vector<1x256x32xf32> to vector<1x32xf32>
    %69 = arith.mulf %65, %65 : vector<1x256x32xf32>
    %cst_56 = arith.constant dense<0.000000e+00> : vector<1x32xf32>
    %70 = vector.multi_reduction <add>, %69, %cst_56 [1] : vector<1x256x32xf32> to vector<1x32xf32>
    %cst_57 = arith.constant dense<0.000000e+00> : vector<1x4xf32>
    %71 = tpu.matmul %68, %0, %cst_57 {dimension_numbers = #tpu.dot_dimension_numbers<[1], [0], [0], [1], [0, 0, 1, 1], [], []>} : vector<1x32xf32>, vector<32x4xf32>, vector<1x4xf32> -> vector<1x4xf32>
    %cst_58 = arith.constant 4.8828125E-4 : f32
    %72 = vector.broadcast %cst_58 : f32 to vector<1x4xf32>
    %73 = arith.mulf %71, %72 : vector<1x4xf32>
    %cst_59 = arith.constant dense<0.000000e+00> : vector<1x4xf32>
    %74 = tpu.matmul %70, %0, %cst_59 {dimension_numbers = #tpu.dot_dimension_numbers<[1], [0], [0], [1], [0, 0, 1, 1], [], []>} : vector<1x32xf32>, vector<32x4xf32>, vector<1x4xf32> -> vector<1x4xf32>
    %cst_60 = arith.constant 4.8828125E-4 : f32
    %75 = vector.broadcast %cst_60 : f32 to vector<1x4xf32>
    %76 = arith.mulf %74, %75 : vector<1x4xf32>
    %77 = arith.mulf %73, %73 : vector<1x4xf32>
    %78 = arith.subf %76, %77 : vector<1x4xf32>
    %cst_61 = arith.constant 0.000000e+00 : f32
    %79 = vector.broadcast %cst_61 : f32 to vector<1x4xf32>
    %80 = arith.maximumf %78, %79 : vector<1x4xf32>
    %cst_62 = arith.constant 9.99999974E-6 : f32
    %81 = vector.broadcast %cst_62 : f32 to vector<1x4xf32>
    %82 = arith.addf %80, %81 : vector<1x4xf32>
    %83 = math.rsqrt %82 : vector<1x4xf32>
    %cst_63 = arith.constant dense<0.000000e+00> : vector<1x32xf32>
    %84 = tpu.matmul %73, %0, %cst_63 {dimension_numbers = #tpu.dot_dimension_numbers<[1], [1], [0], [0], [0, 0, 1, 0], [], []>} : vector<1x4xf32>, vector<32x4xf32>, vector<1x32xf32> -> vector<1x32xf32>
    %cst_64 = arith.constant dense<0.000000e+00> : vector<1x32xf32>
    %85 = tpu.matmul %83, %0, %cst_64 {dimension_numbers = #tpu.dot_dimension_numbers<[1], [1], [0], [0], [0, 0, 1, 0], [], []>} : vector<1x4xf32>, vector<32x4xf32>, vector<1x32xf32> -> vector<1x32xf32>
    %86 = arith.mulf %85, %66 : vector<1x32xf32>
    %87 = arith.mulf %84, %86 : vector<1x32xf32>
    %88 = arith.subf %67, %87 : vector<1x32xf32>
    %89 = vector.shape_cast %86 : vector<1x32xf32> to vector<1x1x32xf32>
    %90 = vector.broadcast %89 : vector<1x1x32xf32> to vector<1x256x32xf32>
    %91 = arith.mulf %65, %90 : vector<1x256x32xf32>
    %92 = vector.shape_cast %88 : vector<1x32xf32> to vector<1x1x32xf32>
    %93 = vector.broadcast %92 : vector<1x1x32xf32> to vector<1x256x32xf32>
    %94 = arith.addf %91, %93 : vector<1x256x32xf32>
    %cst_65 = arith.constant 0.000000e+00 : f32
    %95 = vector.broadcast %cst_65 : f32 to vector<1x256x32xf32>
    %96 = arith.maximumf %94, %95 : vector<1x256x32xf32>
    %97 = vector.shape_cast %96 : vector<1x256x32xf32> to vector<1x16x16x32xf32>
    %cst_66 = arith.constant 0.000000e+00 : f32
    %98 = vector.broadcast %cst_66 : f32 to vector<1x1x16x32xf32>
    %99 = tpu.concatenate %98, %97, %98 in 1 : vector<1x1x16x32xf32>, vector<1x16x16x32xf32>, vector<1x1x16x32xf32> -> vector<1x18x16x32xf32>
    %cst_67 = arith.constant 0.000000e+00 : f32
    %100 = vector.broadcast %cst_67 : f32 to vector<1x18x1x32xf32>
    %101 = vector.extract_strided_slice %99 {offsets = [0, 0, 0, 0], sizes = [1, 18, 15, 32], strides = [1, 1, 1, 1]} : vector<1x18x16x32xf32> to vector<1x18x15x32xf32>
    %102 = tpu.concatenate %100, %101 in 2 : vector<1x18x1x32xf32>, vector<1x18x15x32xf32> -> vector<1x18x16x32xf32>
    %103 = vector.extract_strided_slice %99 {offsets = [0, 0, 1, 0], sizes = [1, 18, 15, 32], strides = [1, 1, 1, 1]} : vector<1x18x16x32xf32> to vector<1x18x15x32xf32>
    %104 = tpu.concatenate %103, %100 in 2 : vector<1x18x15x32xf32>, vector<1x18x1x32xf32> -> vector<1x18x16x32xf32>
    %105 = vector.extract_strided_slice %99 {offsets = [0, 1, 0, 0], sizes = [1, 16, 16, 32], strides = [1, 1, 1, 1]} : vector<1x18x16x32xf32> to vector<1x16x16x32xf32>
    %106 = vector.shape_cast %105 : vector<1x16x16x32xf32> to vector<256x32xf32>
    %c1_68 = arith.constant 1 : index
    %c1_69 = arith.constant 1 : index
    %c0_70 = arith.constant 0 : index
    %c0_71 = arith.constant 0 : index
    %107 = vector.load %arg6[%c1_68, %c1_69, %c0_70, %c0_71] : memref<3x3x32x32xf32, #tpu.memory_space<vmem>>, vector<1x1x32x32xf32>
    %108 = vector.shape_cast %107 : vector<1x1x32x32xf32> to vector<32x32xf32>
    %cst_72 = arith.constant dense<0.000000e+00> : vector<256x32xf32>
    %109 = tpu.matmul %106, %108, %cst_72 {dimension_numbers = #tpu.dot_dimension_numbers<[1], [0], [0], [1], [0, 0, 1, 1], [], []>} : vector<256x32xf32>, vector<32x32xf32>, vector<256x32xf32> -> vector<256x32xf32>
    %110 = vector.extract_strided_slice %102 {offsets = [0, 0, 0, 0], sizes = [1, 16, 16, 32], strides = [1, 1, 1, 1]} : vector<1x18x16x32xf32> to vector<1x16x16x32xf32>
    %111 = vector.shape_cast %110 : vector<1x16x16x32xf32> to vector<256x32xf32>
    %c0_73 = arith.constant 0 : index
    %c0_74 = arith.constant 0 : index
    %c0_75 = arith.constant 0 : index
    %c0_76 = arith.constant 0 : index
    %112 = vector.load %arg6[%c0_73, %c0_74, %c0_75, %c0_76] : memref<3x3x32x32xf32, #tpu.memory_space<vmem>>, vector<1x1x32x32xf32>
    %113 = vector.shape_cast %112 : vector<1x1x32x32xf32> to vector<32x32xf32>
    %cst_77 = arith.constant dense<0.000000e+00> : vector<256x32xf32>
    %114 = tpu.matmul %111, %113, %cst_77 {dimension_numbers = #tpu.dot_dimension_numbers<[1], [0], [0], [1], [0, 0, 1, 1], [], []>} : vector<256x32xf32>, vector<32x32xf32>, vector<256x32xf32> -> vector<256x32xf32>
    %115 = arith.addf %109, %114 : vector<256x32xf32>
    %116 = vector.extract_strided_slice %99 {offsets = [0, 0, 0, 0], sizes = [1, 16, 16, 32], strides = [1, 1, 1, 1]} : vector<1x18x16x32xf32> to vector<1x16x16x32xf32>
    %117 = vector.shape_cast %116 : vector<1x16x16x32xf32> to vector<256x32xf32>
    %c0_78 = arith.constant 0 : index
    %c1_79 = arith.constant 1 : index
    %c0_80 = arith.constant 0 : index
    %c0_81 = arith.constant 0 : index
    %118 = vector.load %arg6[%c0_78, %c1_79, %c0_80, %c0_81] : memref<3x3x32x32xf32, #tpu.memory_space<vmem>>, vector<1x1x32x32xf32>
    %119 = vector.shape_cast %118 : vector<1x1x32x32xf32> to vector<32x32xf32>
    %cst_82 = arith.constant dense<0.000000e+00> : vector<256x32xf32>
    %120 = tpu.matmul %117, %119, %cst_82 {dimension_numbers = #tpu.dot_dimension_numbers<[1], [0], [0], [1], [0, 0, 1, 1], [], []>} : vector<256x32xf32>, vector<32x32xf32>, vector<256x32xf32> -> vector<256x32xf32>
    %121 = arith.addf %115, %120 : vector<256x32xf32>
    %122 = vector.extract_strided_slice %104 {offsets = [0, 0, 0, 0], sizes = [1, 16, 16, 32], strides = [1, 1, 1, 1]} : vector<1x18x16x32xf32> to vector<1x16x16x32xf32>
    %123 = vector.shape_cast %122 : vector<1x16x16x32xf32> to vector<256x32xf32>
    %c0_83 = arith.constant 0 : index
    %c2_84 = arith.constant 2 : index
    %c0_85 = arith.constant 0 : index
    %c0_86 = arith.constant 0 : index
    %124 = vector.load %arg6[%c0_83, %c2_84, %c0_85, %c0_86] : memref<3x3x32x32xf32, #tpu.memory_space<vmem>>, vector<1x1x32x32xf32>
    %125 = vector.shape_cast %124 : vector<1x1x32x32xf32> to vector<32x32xf32>
    %cst_87 = arith.constant dense<0.000000e+00> : vector<256x32xf32>
    %126 = tpu.matmul %123, %125, %cst_87 {dimension_numbers = #tpu.dot_dimension_numbers<[1], [0], [0], [1], [0, 0, 1, 1], [], []>} : vector<256x32xf32>, vector<32x32xf32>, vector<256x32xf32> -> vector<256x32xf32>
    %127 = arith.addf %121, %126 : vector<256x32xf32>
    %128 = vector.extract_strided_slice %102 {offsets = [0, 1, 0, 0], sizes = [1, 16, 16, 32], strides = [1, 1, 1, 1]} : vector<1x18x16x32xf32> to vector<1x16x16x32xf32>
    %129 = vector.shape_cast %128 : vector<1x16x16x32xf32> to vector<256x32xf32>
    %c1_88 = arith.constant 1 : index
    %c0_89 = arith.constant 0 : index
    %c0_90 = arith.constant 0 : index
    %c0_91 = arith.constant 0 : index
    %130 = vector.load %arg6[%c1_88, %c0_89, %c0_90, %c0_91] : memref<3x3x32x32xf32, #tpu.memory_space<vmem>>, vector<1x1x32x32xf32>
    %131 = vector.shape_cast %130 : vector<1x1x32x32xf32> to vector<32x32xf32>
    %cst_92 = arith.constant dense<0.000000e+00> : vector<256x32xf32>
    %132 = tpu.matmul %129, %131, %cst_92 {dimension_numbers = #tpu.dot_dimension_numbers<[1], [0], [0], [1], [0, 0, 1, 1], [], []>} : vector<256x32xf32>, vector<32x32xf32>, vector<256x32xf32> -> vector<256x32xf32>
    %133 = arith.addf %127, %132 : vector<256x32xf32>
    %134 = vector.extract_strided_slice %104 {offsets = [0, 1, 0, 0], sizes = [1, 16, 16, 32], strides = [1, 1, 1, 1]} : vector<1x18x16x32xf32> to vector<1x16x16x32xf32>
    %135 = vector.shape_cast %134 : vector<1x16x16x32xf32> to vector<256x32xf32>
    %c1_93 = arith.constant 1 : index
    %c2_94 = arith.constant 2 : index
    %c0_95 = arith.constant 0 : index
    %c0_96 = arith.constant 0 : index
    %136 = vector.load %arg6[%c1_93, %c2_94, %c0_95, %c0_96] : memref<3x3x32x32xf32, #tpu.memory_space<vmem>>, vector<1x1x32x32xf32>
    %137 = vector.shape_cast %136 : vector<1x1x32x32xf32> to vector<32x32xf32>
    %cst_97 = arith.constant dense<0.000000e+00> : vector<256x32xf32>
    %138 = tpu.matmul %135, %137, %cst_97 {dimension_numbers = #tpu.dot_dimension_numbers<[1], [0], [0], [1], [0, 0, 1, 1], [], []>} : vector<256x32xf32>, vector<32x32xf32>, vector<256x32xf32> -> vector<256x32xf32>
    %139 = arith.addf %133, %138 : vector<256x32xf32>
    %140 = vector.extract_strided_slice %102 {offsets = [0, 2, 0, 0], sizes = [1, 16, 16, 32], strides = [1, 1, 1, 1]} : vector<1x18x16x32xf32> to vector<1x16x16x32xf32>
    %141 = vector.shape_cast %140 : vector<1x16x16x32xf32> to vector<256x32xf32>
    %c2_98 = arith.constant 2 : index
    %c0_99 = arith.constant 0 : index
    %c0_100 = arith.constant 0 : index
    %c0_101 = arith.constant 0 : index
    %142 = vector.load %arg6[%c2_98, %c0_99, %c0_100, %c0_101] : memref<3x3x32x32xf32, #tpu.memory_space<vmem>>, vector<1x1x32x32xf32>
    %143 = vector.shape_cast %142 : vector<1x1x32x32xf32> to vector<32x32xf32>
    %cst_102 = arith.constant dense<0.000000e+00> : vector<256x32xf32>
    %144 = tpu.matmul %141, %143, %cst_102 {dimension_numbers = #tpu.dot_dimension_numbers<[1], [0], [0], [1], [0, 0, 1, 1], [], []>} : vector<256x32xf32>, vector<32x32xf32>, vector<256x32xf32> -> vector<256x32xf32>
    %145 = arith.addf %139, %144 : vector<256x32xf32>
    %146 = vector.extract_strided_slice %99 {offsets = [0, 2, 0, 0], sizes = [1, 16, 16, 32], strides = [1, 1, 1, 1]} : vector<1x18x16x32xf32> to vector<1x16x16x32xf32>
    %147 = vector.shape_cast %146 : vector<1x16x16x32xf32> to vector<256x32xf32>
    %c2_103 = arith.constant 2 : index
    %c1_104 = arith.constant 1 : index
    %c0_105 = arith.constant 0 : index
    %c0_106 = arith.constant 0 : index
    %148 = vector.load %arg6[%c2_103, %c1_104, %c0_105, %c0_106] : memref<3x3x32x32xf32, #tpu.memory_space<vmem>>, vector<1x1x32x32xf32>
    %149 = vector.shape_cast %148 : vector<1x1x32x32xf32> to vector<32x32xf32>
    %cst_107 = arith.constant dense<0.000000e+00> : vector<256x32xf32>
    %150 = tpu.matmul %147, %149, %cst_107 {dimension_numbers = #tpu.dot_dimension_numbers<[1], [0], [0], [1], [0, 0, 1, 1], [], []>} : vector<256x32xf32>, vector<32x32xf32>, vector<256x32xf32> -> vector<256x32xf32>
    %151 = arith.addf %145, %150 : vector<256x32xf32>
    %152 = vector.extract_strided_slice %104 {offsets = [0, 2, 0, 0], sizes = [1, 16, 16, 32], strides = [1, 1, 1, 1]} : vector<1x18x16x32xf32> to vector<1x16x16x32xf32>
    %153 = vector.shape_cast %152 : vector<1x16x16x32xf32> to vector<256x32xf32>
    %c2_108 = arith.constant 2 : index
    %c2_109 = arith.constant 2 : index
    %c0_110 = arith.constant 0 : index
    %c0_111 = arith.constant 0 : index
    %154 = vector.load %arg6[%c2_108, %c2_109, %c0_110, %c0_111] : memref<3x3x32x32xf32, #tpu.memory_space<vmem>>, vector<1x1x32x32xf32>
    %155 = vector.shape_cast %154 : vector<1x1x32x32xf32> to vector<32x32xf32>
    %cst_112 = arith.constant dense<0.000000e+00> : vector<256x32xf32>
    %156 = tpu.matmul %153, %155, %cst_112 {dimension_numbers = #tpu.dot_dimension_numbers<[1], [0], [0], [1], [0, 0, 1, 1], [], []>} : vector<256x32xf32>, vector<32x32xf32>, vector<256x32xf32> -> vector<256x32xf32>
    %157 = arith.addf %151, %156 : vector<256x32xf32>
    %c0_113 = arith.constant 0 : index
    %c0_114 = arith.constant 0 : index
    %158 = vector.load %arg7[%c0_113, %c0_114] : memref<1x32xf32, #tpu.memory_space<vmem>>, vector<1x32xf32>
    %159 = vector.broadcast %158 : vector<1x32xf32> to vector<256x32xf32>
    %160 = arith.addf %157, %159 : vector<256x32xf32>
    %161 = vector.shape_cast %160 : vector<256x32xf32> to vector<1x256x32xf32>
    %c0_115 = arith.constant 0 : index
    %c0_116 = arith.constant 0 : index
    %162 = vector.load %arg8[%c0_115, %c0_116] : memref<1x32xf32, #tpu.memory_space<vmem>>, vector<1x32xf32>
    %c0_117 = arith.constant 0 : index
    %c0_118 = arith.constant 0 : index
    %163 = vector.load %arg9[%c0_117, %c0_118] : memref<1x32xf32, #tpu.memory_space<vmem>>, vector<1x32xf32>
    %cst_119 = arith.constant dense<0.000000e+00> : vector<1x32xf32>
    %164 = vector.multi_reduction <add>, %161, %cst_119 [1] : vector<1x256x32xf32> to vector<1x32xf32>
    %165 = arith.mulf %161, %161 : vector<1x256x32xf32>
    %cst_120 = arith.constant dense<0.000000e+00> : vector<1x32xf32>
    %166 = vector.multi_reduction <add>, %165, %cst_120 [1] : vector<1x256x32xf32> to vector<1x32xf32>
    %cst_121 = arith.constant dense<0.000000e+00> : vector<1x4xf32>
    %167 = tpu.matmul %164, %0, %cst_121 {dimension_numbers = #tpu.dot_dimension_numbers<[1], [0], [0], [1], [0, 0, 1, 1], [], []>} : vector<1x32xf32>, vector<32x4xf32>, vector<1x4xf32> -> vector<1x4xf32>
    %cst_122 = arith.constant 4.8828125E-4 : f32
    %168 = vector.broadcast %cst_122 : f32 to vector<1x4xf32>
    %169 = arith.mulf %167, %168 : vector<1x4xf32>
    %cst_123 = arith.constant dense<0.000000e+00> : vector<1x4xf32>
    %170 = tpu.matmul %166, %0, %cst_123 {dimension_numbers = #tpu.dot_dimension_numbers<[1], [0], [0], [1], [0, 0, 1, 1], [], []>} : vector<1x32xf32>, vector<32x4xf32>, vector<1x4xf32> -> vector<1x4xf32>
    %cst_124 = arith.constant 4.8828125E-4 : f32
    %171 = vector.broadcast %cst_124 : f32 to vector<1x4xf32>
    %172 = arith.mulf %170, %171 : vector<1x4xf32>
    %173 = arith.mulf %169, %169 : vector<1x4xf32>
    %174 = arith.subf %172, %173 : vector<1x4xf32>
    %cst_125 = arith.constant 0.000000e+00 : f32
    %175 = vector.broadcast %cst_125 : f32 to vector<1x4xf32>
    %176 = arith.maximumf %174, %175 : vector<1x4xf32>
    %cst_126 = arith.constant 9.99999974E-6 : f32
    %177 = vector.broadcast %cst_126 : f32 to vector<1x4xf32>
    %178 = arith.addf %176, %177 : vector<1x4xf32>
    %179 = math.rsqrt %178 : vector<1x4xf32>
    %cst_127 = arith.constant dense<0.000000e+00> : vector<1x32xf32>
    %180 = tpu.matmul %169, %0, %cst_127 {dimension_numbers = #tpu.dot_dimension_numbers<[1], [1], [0], [0], [0, 0, 1, 0], [], []>} : vector<1x4xf32>, vector<32x4xf32>, vector<1x32xf32> -> vector<1x32xf32>
    %cst_128 = arith.constant dense<0.000000e+00> : vector<1x32xf32>
    %181 = tpu.matmul %179, %0, %cst_128 {dimension_numbers = #tpu.dot_dimension_numbers<[1], [1], [0], [0], [0, 0, 1, 0], [], []>} : vector<1x4xf32>, vector<32x4xf32>, vector<1x32xf32> -> vector<1x32xf32>
    %182 = arith.mulf %181, %162 : vector<1x32xf32>
    %183 = arith.mulf %180, %182 : vector<1x32xf32>
    %184 = arith.subf %163, %183 : vector<1x32xf32>
    %185 = vector.shape_cast %182 : vector<1x32xf32> to vector<1x1x32xf32>
    %186 = vector.broadcast %185 : vector<1x1x32xf32> to vector<1x256x32xf32>
    %187 = arith.mulf %161, %186 : vector<1x256x32xf32>
    %188 = vector.shape_cast %184 : vector<1x32xf32> to vector<1x1x32xf32>
    %189 = vector.broadcast %188 : vector<1x1x32xf32> to vector<1x256x32xf32>
    %190 = arith.addf %187, %189 : vector<1x256x32xf32>
    %cst_129 = arith.constant 0.000000e+00 : f32
    %191 = vector.broadcast %cst_129 : f32 to vector<1x256x32xf32>
    %192 = arith.maximumf %190, %191 : vector<1x256x32xf32>
    %193 = vector.shape_cast %192 : vector<1x256x32xf32> to vector<1x16x16x32xf32>
    %c0_130 = arith.constant 0 : index
    %c0_131 = arith.constant 0 : index
    %c0_132 = arith.constant 0 : index
    %c0_133 = arith.constant 0 : index
    %194 = vector.load %arg1[%c0_130, %c0_131, %c0_132, %c0_133] : memref<1x16x16x32xf32, #tpu.memory_space<vmem>>, vector<1x16x16x32xf32>
    %195 = arith.addf %194, %193 : vector<1x16x16x32xf32>
    %cst_134 = arith.constant 0.000000e+00 : f32
    %196 = vector.broadcast %cst_134 : f32 to vector<1x16x16x32xf32>
    %197 = arith.maximumf %195, %196 : vector<1x16x16x32xf32>
    %198 = vector.extract_strided_slice %197 {offsets = [0, 0, 0, 0], sizes = [1, 16, 1, 32], strides = [1, 1, 1, 1]} : vector<1x16x16x32xf32> to vector<1x16x1x32xf32>
    %199 = vector.shape_cast %198 : vector<1x16x1x32xf32> to vector<1x16x32xf32>
    %200 = vector.extract_strided_slice %197 {offsets = [0, 0, 1, 0], sizes = [1, 16, 1, 32], strides = [1, 1, 1, 1]} : vector<1x16x16x32xf32> to vector<1x16x1x32xf32>
    %201 = vector.shape_cast %200 : vector<1x16x1x32xf32> to vector<1x16x32xf32>
    %202 = vector.extract_strided_slice %197 {offsets = [0, 0, 2, 0], sizes = [1, 16, 1, 32], strides = [1, 1, 1, 1]} : vector<1x16x16x32xf32> to vector<1x16x1x32xf32>
    %203 = vector.shape_cast %202 : vector<1x16x1x32xf32> to vector<1x16x32xf32>
    %204 = vector.extract_strided_slice %197 {offsets = [0, 0, 3, 0], sizes = [1, 16, 1, 32], strides = [1, 1, 1, 1]} : vector<1x16x16x32xf32> to vector<1x16x1x32xf32>
    %205 = vector.shape_cast %204 : vector<1x16x1x32xf32> to vector<1x16x32xf32>
    %206 = vector.extract_strided_slice %197 {offsets = [0, 0, 4, 0], sizes = [1, 16, 1, 32], strides = [1, 1, 1, 1]} : vector<1x16x16x32xf32> to vector<1x16x1x32xf32>
    %207 = vector.shape_cast %206 : vector<1x16x1x32xf32> to vector<1x16x32xf32>
    %208 = vector.extract_strided_slice %197 {offsets = [0, 0, 5, 0], sizes = [1, 16, 1, 32], strides = [1, 1, 1, 1]} : vector<1x16x16x32xf32> to vector<1x16x1x32xf32>
    %209 = vector.shape_cast %208 : vector<1x16x1x32xf32> to vector<1x16x32xf32>
    %210 = vector.extract_strided_slice %197 {offsets = [0, 0, 6, 0], sizes = [1, 16, 1, 32], strides = [1, 1, 1, 1]} : vector<1x16x16x32xf32> to vector<1x16x1x32xf32>
    %211 = vector.shape_cast %210 : vector<1x16x1x32xf32> to vector<1x16x32xf32>
    %212 = vector.extract_strided_slice %197 {offsets = [0, 0, 7, 0], sizes = [1, 16, 1, 32], strides = [1, 1, 1, 1]} : vector<1x16x16x32xf32> to vector<1x16x1x32xf32>
    %213 = vector.shape_cast %212 : vector<1x16x1x32xf32> to vector<1x16x32xf32>
    %214 = vector.extract_strided_slice %197 {offsets = [0, 0, 8, 0], sizes = [1, 16, 1, 32], strides = [1, 1, 1, 1]} : vector<1x16x16x32xf32> to vector<1x16x1x32xf32>
    %215 = vector.shape_cast %214 : vector<1x16x1x32xf32> to vector<1x16x32xf32>
    %216 = vector.extract_strided_slice %197 {offsets = [0, 0, 9, 0], sizes = [1, 16, 1, 32], strides = [1, 1, 1, 1]} : vector<1x16x16x32xf32> to vector<1x16x1x32xf32>
    %217 = vector.shape_cast %216 : vector<1x16x1x32xf32> to vector<1x16x32xf32>
    %218 = vector.extract_strided_slice %197 {offsets = [0, 0, 10, 0], sizes = [1, 16, 1, 32], strides = [1, 1, 1, 1]} : vector<1x16x16x32xf32> to vector<1x16x1x32xf32>
    %219 = vector.shape_cast %218 : vector<1x16x1x32xf32> to vector<1x16x32xf32>
    %220 = vector.extract_strided_slice %197 {offsets = [0, 0, 11, 0], sizes = [1, 16, 1, 32], strides = [1, 1, 1, 1]} : vector<1x16x16x32xf32> to vector<1x16x1x32xf32>
    %221 = vector.shape_cast %220 : vector<1x16x1x32xf32> to vector<1x16x32xf32>
    %222 = vector.extract_strided_slice %197 {offsets = [0, 0, 12, 0], sizes = [1, 16, 1, 32], strides = [1, 1, 1, 1]} : vector<1x16x16x32xf32> to vector<1x16x1x32xf32>
    %223 = vector.shape_cast %222 : vector<1x16x1x32xf32> to vector<1x16x32xf32>
    %224 = vector.extract_strided_slice %197 {offsets = [0, 0, 13, 0], sizes = [1, 16, 1, 32], strides = [1, 1, 1, 1]} : vector<1x16x16x32xf32> to vector<1x16x1x32xf32>
    %225 = vector.shape_cast %224 : vector<1x16x1x32xf32> to vector<1x16x32xf32>
    %226 = vector.extract_strided_slice %197 {offsets = [0, 0, 14, 0], sizes = [1, 16, 1, 32], strides = [1, 1, 1, 1]} : vector<1x16x16x32xf32> to vector<1x16x1x32xf32>
    %227 = vector.shape_cast %226 : vector<1x16x1x32xf32> to vector<1x16x32xf32>
    %228 = vector.extract_strided_slice %197 {offsets = [0, 0, 15, 0], sizes = [1, 16, 1, 32], strides = [1, 1, 1, 1]} : vector<1x16x16x32xf32> to vector<1x16x1x32xf32>
    %229 = vector.shape_cast %228 : vector<1x16x1x32xf32> to vector<1x16x32xf32>
    %230 = tpu.concatenate %199, %201, %203, %205, %207, %209, %211, %213, %215, %217, %219, %221, %223, %225, %227, %229 in 2 : vector<1x16x32xf32>, vector<1x16x32xf32>, vector<1x16x32xf32>, vector<1x16x32xf32>, vector<1x16x32xf32>, vector<1x16x32xf32>, vector<1x16x32xf32>, vector<1x16x32xf32>, vector<1x16x32xf32>, vector<1x16x32xf32>, vector<1x16x32xf32>, vector<1x16x32xf32>, vector<1x16x32xf32>, vector<1x16x32xf32>, vector<1x16x32xf32>, vector<1x16x32xf32> -> vector<1x16x512xf32>
    %c0_135 = arith.constant 0 : index
    %c0_136 = arith.constant 0 : index
    %c0_137 = arith.constant 0 : index
    %231 = vector.load %arg11[%c0_135, %c0_136, %c0_137] : memref<1x16x512xf32, #tpu.memory_space<vmem>>, vector<1x16x512xf32>
    tpu.vector_store %arg11[%c0_135, %c0_136, %c0_137], %230 {strides = array<i32>} : memref<1x16x512xf32, #tpu.memory_space<vmem>>, vector<1x16x512xf32>,
    return
  }
  func.func @transform_0(%arg0: i32) -> (i32, i32, i32, i32) {
    %c0_i32 = arith.constant 0 : i32
    %c0_i32_0 = arith.constant 0 : i32
    %c0_i32_1 = arith.constant 0 : i32
    %c0_i32_2 = arith.constant 0 : i32
    return %arg0, %c0_i32, %c0_i32_0, %c0_i32_1 : i32, i32, i32, i32
  }
  func.func @transform_1(%arg0: i32) -> (i32, i32, i32, i32) {
    %c0_i32 = arith.constant 0 : i32
    %c0_i32_0 = arith.constant 0 : i32
    %c0_i32_1 = arith.constant 0 : i32
    %c0_i32_2 = arith.constant 0 : i32
    %c0_i32_3 = arith.constant 0 : i32
    return %c0_i32, %c0_i32_0, %c0_i32_1, %c0_i32_2 : i32, i32, i32, i32
  }
  func.func @transform_2(%arg0: i32) -> (i32, i32) {
    %c0_i32 = arith.constant 0 : i32
    %c0_i32_0 = arith.constant 0 : i32
    %c0_i32_1 = arith.constant 0 : i32
    return %c0_i32, %c0_i32_0 : i32, i32
  }
  func.func @transform_3(%arg0: i32) -> (i32, i32) {
    %c0_i32 = arith.constant 0 : i32
    %c0_i32_0 = arith.constant 0 : i32
    %c0_i32_1 = arith.constant 0 : i32
    return %c0_i32, %c0_i32_0 : i32, i32
  }
  func.func @transform_4(%arg0: i32) -> (i32, i32) {
    %c0_i32 = arith.constant 0 : i32
    %c0_i32_0 = arith.constant 0 : i32
    %c0_i32_1 = arith.constant 0 : i32
    return %c0_i32, %c0_i32_0 : i32, i32
  }
  func.func @transform_5(%arg0: i32) -> (i32, i32, i32, i32) {
    %c0_i32 = arith.constant 0 : i32
    %c0_i32_0 = arith.constant 0 : i32
    %c0_i32_1 = arith.constant 0 : i32
    %c0_i32_2 = arith.constant 0 : i32
    %c0_i32_3 = arith.constant 0 : i32
    return %c0_i32, %c0_i32_0, %c0_i32_1, %c0_i32_2 : i32, i32, i32, i32
  }
  func.func @transform_6(%arg0: i32) -> (i32, i32) {
    %c0_i32 = arith.constant 0 : i32
    %c0_i32_0 = arith.constant 0 : i32
    %c0_i32_1 = arith.constant 0 : i32
    return %c0_i32, %c0_i32_0 : i32, i32
  }
  func.func @transform_7(%arg0: i32) -> (i32, i32) {
    %c0_i32 = arith.constant 0 : i32
    %c0_i32_0 = arith.constant 0 : i32
    %c0_i32_1 = arith.constant 0 : i32
    return %c0_i32, %c0_i32_0 : i32, i32
  }
  func.func @transform_8(%arg0: i32) -> (i32, i32) {
    %c0_i32 = arith.constant 0 : i32
    %c0_i32_0 = arith.constant 0 : i32
    %c0_i32_1 = arith.constant 0 : i32
    return %c0_i32, %c0_i32_0 : i32, i32
  }
  func.func @transform_9(%arg0: i32) -> (i32, i32) {
    %c0_i32 = arith.constant 0 : i32
    %c0_i32_0 = arith.constant 0 : i32
    %c0_i32_1 = arith.constant 0 : i32
    return %c0_i32, %c0_i32_0 : i32, i32
  }
  func.func @transform_10(%arg0: i32) -> (i32, i32, i32) {
    %c0_i32 = arith.constant 0 : i32
    %c0_i32_0 = arith.constant 0 : i32
    %c0_i32_1 = arith.constant 0 : i32
    return %arg0, %c0_i32, %c0_i32_0 : i32, i32, i32
  }
}

</mosaic_0001>

<llo_original>
// kernel: tpu_custom_call.1
$region0: #{tpu_custom_call.1}
  #allocation0 [shape = 'u32[]', space=smem, size = 0x4, offset = 0x4, fixed_abs, tag = 'smem constant byte address 0x4 - core index']
  #allocation1 [shape = 'u32[144,128]{1,0:T(1,128)}', space=vmem, size = 0x12000, scoped, tag = 'internal scratch']
  %s0 = inlined_call_operand.hbm [shape: f32[2,16,16,32], index: 0, kind: input, shape index: {}]
  %s1 = inlined_call_operand.hbm [shape: f32[3,3,32,32], index: 1, kind: input, shape index: {}]
  %s2 = inlined_call_operand.vmem [shape: f32[1,32], index: 2, kind: input, shape index: {}]
  %s3 = inlined_call_operand.vmem [shape: f32[1,32], index: 3, kind: input, shape index: {}]
  %s4 = inlined_call_operand.vmem [shape: f32[1,32], index: 4, kind: input, shape index: {}]
  %s5 = inlined_call_operand.hbm [shape: f32[3,3,32,32], index: 5, kind: input, shape index: {}]
  %s6 = inlined_call_operand.vmem [shape: f32[1,32], index: 6, kind: input, shape index: {}]
  %s7 = inlined_call_operand.vmem [shape: f32[1,32], index: 7, kind: input, shape index: {}]
  %s8 = inlined_call_operand.vmem [shape: f32[1,32], index: 8, kind: input, shape index: {}]
  %s9 = inlined_call_operand.vmem [shape: f32[32,4], index: 9, kind: input, shape index: {}]
  %s10 = inlined_call_operand.hbm [shape: f32[2,16,512], index: 10, kind: output, shape index: {}]
  %s11 = sld [smem:[#allocation0]]
  $region85: #{tpu_custom_call.1} parent=0
    _
  %s13 = ssub.s32 1, %s11
  %s14 = scalar_select 0, %s13, %s11
  $region1: #{tpu_custom_call.1} parent=0
    #allocation2 [shape = 'u8[262144]{0}', space=vmem, size = 0x40000, scoped, tag = 'input window, operand 0']
    #allocation3 [shape = 's32[2]{0}', space=sflag, size = 0x8, scoped, tag = 'scoped memory for tpu_custom_call.1']
    #allocation4 [shape = 's32[2]{0}', space=sflag, size = 0x8, scoped, tag = 'scoped memory for tpu_custom_call.1']
    #allocation5 [shape = 'u8[147456]{0}', space=vmem, size = 0x24000, scoped, tag = 'input window, operand 1, single buffered']
    #allocation6 [shape = 's32[1]{0}', space=sflag, size = 0x4, scoped, tag = 'scoped memory for tpu_custom_call.1']
    #allocation7 [shape = 'u8[147456]{0}', space=vmem, size = 0x24000, scoped, tag = 'input window, operand 5, single buffered']
    #allocation8 [shape = 'u8[65536]{0}', space=vmem, size = 0x10000, scoped, tag = 'output window, operand 0']
    %15 = vsyncpa [#allocation3], 0
    %s16 = scalar_lea.sflag [#allocation3], 1
    %17 = vsyncpa %s16, 0
    %18 = vsyncpa [#allocation6], 0
    %19 = vsyncpa [#allocation4], 0
    %s20 = scalar_lea.sflag [#allocation4], 1
    %21 = vsyncpa %s20, 0
    loop: start=0, step=1, limit=4
    $region2: #{tpu_custom_call.1} parent=1 // loop_pre_header
      _
    $region3: #{tpu_custom_call.1} parent=1 // loop_header
      %s23 = sphi 0, %s27
      %p24 = scmp.ge.s32.totalorder %s23, 4
      %s33 = sphi 0, %s35
      %s36 = sphi 0, %s33
      %s37 = sphi 0, %s36
      %s53 = sphi 0, %s37
      %s57 = sphi 0, %s57
      %s59 = sphi 0, %s57
      %s60 = sphi 0, %s59
      %s74 = sphi 0, %s60
      %s78 = sphi 0, %s78
      %s80 = sphi 0, %s78
      %s81 = sphi 0, %s80
      %s95 = sphi 0, %s81
      %s99 = sphi 0, %s99
      %s101 = sphi 0, %s99
      %s102 = sphi 0, %s101
      %s116 = sphi 0, %s102
      %s120 = sphi 0, %s120
      %s122 = sphi 0, %s120
      %s123 = sphi 0, %s122
      %s137 = sphi 0, %s123
      %s141 = sphi 0, %s141
      %s143 = sphi 0, %s141
      %s144 = sphi 0, %s143
      %s158 = sphi 0, %s144
      %s162 = sphi 0, %s162
      %s164 = sphi 0, %s162
      %s165 = sphi 0, %s164
      %s179 = sphi 0, %s165
      %s183 = sphi 0, %s183
      %s185 = sphi 0, %s183
      %s186 = sphi 0, %s185
      %s200 = sphi 0, %s186
      %s204 = sphi 0, %s204
      %s206 = sphi 0, %s204
      %s207 = sphi 0, %s206
      %s221 = sphi 0, %s207
      %s225 = sphi 0, %s225
      %s227 = sphi 0, %s225
      %s228 = sphi 0, %s227
      %s242 = sphi 0, %s228
      %s248 = sphi 0, %s250
      %s251 = sphi 0, %s248
      %s252 = sphi 0, %s251
      %s268 = sphi 0, %s252
    $region4: #{tpu_custom_call.1} parent=1 // loop_header_branch
      %26 = sbr.rel (%p24) target = $region8
    $region5: #{tpu_custom_call.1} parent=1 // loop_body
      %s28 = ssub.s32 %s23, 1
      %s29 = ssub.s32 %s23, 2
      %s30 = sadd.s32 %s23, 1
      %s31 = ssub.s32 %s23, %s30
      %p32 = scmp.eq.s32.totalorder %s31, 0
      %s34 = sadd.s32 %s33, 1
      %s35 = scalar_select %p32, %s33, %s34
      %p38 = pneg %p32
      %p39 = scmp.eq.s32.totalorder %s23, 1
      %p40 = por %p38, %p39
      %p41 = scmp.ne.s32.totalorder %s33, %s36
      %p42 = scmp.eq.s32.totalorder %s23, 0
      %p43 = por %p41, %p42
      %p44 = scmp.ne.s32.totalorder %s33, %s36
      %p45 = scmp.eq.s32.totalorder %s28, 1
      %p46 = por %p44, %p45
      %p47 = scmp.ne.s32.totalorder %s36, %s37
      %p48 = scmp.eq.s32.totalorder %s28, 0
      %p49 = por %p47, %p48
      %p50 = scmp.ne.s32.totalorder %s36, %s37
      %p51 = scmp.eq.s32.totalorder %s29, 1
      %p52 = por %p50, %p51
      %p54 = scmp.ne.s32.totalorder %s37, %s53
      %p55 = scmp.eq.s32.totalorder %s29, 0
      %p56 = por %p54, %p55
      %s58 = sadd.s32 %s57, 1
      %p61 = scmp.eq.s32.totalorder %s23, 1
      %p62 = scmp.ne.s32.totalorder %s57, %s59
      %p63 = scmp.eq.s32.totalorder %s23, 0
      %p64 = por %p62, %p63
      %p65 = scmp.ne.s32.totalorder %s57, %s59
      %p66 = scmp.eq.s32.totalorder %s28, 1
      %p67 = por %p65, %p66
      %p68 = scmp.ne.s32.totalorder %s59, %s60
      %p69 = scmp.eq.s32.totalorder %s28, 0
      %p70 = por %p68, %p69
      %p71 = scmp.ne.s32.totalorder %s59, %s60
      %p72 = scmp.eq.s32.totalorder %s29, 1
      %p73 = por %p71, %p72
      %p75 = scmp.ne.s32.totalorder %s60, %s74
      %p76 = scmp.eq.s32.totalorder %s29, 0
      %p77 = por %p75, %p76
      %s79 = sadd.s32 %s78, 1
      %p82 = scmp.eq.s32.totalorder %s23, 1
      %p83 = scmp.ne.s32.totalorder %s78, %s80
      %p84 = scmp.eq.s32.totalorder %s23, 0
      %p85 = por %p83, %p84
      %p86 = scmp.ne.s32.totalorder %s78, %s80
      %p87 = scmp.eq.s32.totalorder %s28, 1
      %p88 = por %p86, %p87
      %p89 = scmp.ne.s32.totalorder %s80, %s81
      %p90 = scmp.eq.s32.totalorder %s28, 0
      %p91 = por %p89, %p90
      %p92 = scmp.ne.s32.totalorder %s80, %s81
      %p93 = scmp.eq.s32.totalorder %s29, 1
      %p94 = por %p92, %p93
      %p96 = scmp.ne.s32.totalorder %s81, %s95
      %p97 = scmp.eq.s32.totalorder %s29, 0
      %p98 = por %p96, %p97
      %s100 = sadd.s32 %s99, 1
      %p103 = scmp.eq.s32.totalorder %s23, 1
      %p104 = scmp.ne.s32.totalorder %s99, %s101
      %p105 = scmp.eq.s32.totalorder %s23, 0
      %p106 = por %p104, %p105
      %p107 = scmp.ne.s32.totalorder %s99, %s101
      %p108 = scmp.eq.s32.totalorder %s28, 1
      %p109 = por %p107, %p108
      %p110 = scmp.ne.s32.totalorder %s101, %s102
      %p111 = scmp.eq.s32.totalorder %s28, 0
      %p112 = por %p110, %p111
      %p113 = scmp.ne.s32.totalorder %s101, %s102
      %p114 = scmp.eq.s32.totalorder %s29, 1
      %p115 = por %p113, %p114
      %p117 = scmp.ne.s32.totalorder %s102, %s116
      %p118 = scmp.eq.s32.totalorder %s29, 0
      %p119 = por %p117, %p118
      %s121 = sadd.s32 %s120, 1
      %p124 = scmp.eq.s32.totalorder %s23, 1
      %p125 = scmp.ne.s32.totalorder %s120, %s122
      %p126 = scmp.eq.s32.totalorder %s23, 0
      %p127 = por %p125, %p126
      %p128 = scmp.ne.s32.totalorder %s120, %s122
      %p129 = scmp.eq.s32.totalorder %s28, 1
      %p130 = por %p128, %p129
      %p131 = scmp.ne.s32.totalorder %s122, %s123
      %p132 = scmp.eq.s32.totalorder %s28, 0
      %p133 = por %p131, %p132
      %p134 = scmp.ne.s32.totalorder %s122, %s123
      %p135 = scmp.eq.s32.totalorder %s29, 1
      %p136 = por %p134, %p135
      %p138 = scmp.ne.s32.totalorder %s123, %s137
      %p139 = scmp.eq.s32.totalorder %s29, 0
      %p140 = por %p138, %p139
      %s142 = sadd.s32 %s141, 1
      %p145 = scmp.eq.s32.totalorder %s23, 1
      %p146 = scmp.ne.s32.totalorder %s141, %s143
      %p147 = scmp.eq.s32.totalorder %s23, 0
      %p148 = por %p146, %p147
      %p149 = scmp.ne.s32.totalorder %s141, %s143
      %p150 = scmp.eq.s32.totalorder %s28, 1
      %p151 = por %p149, %p150
      %p152 = scmp.ne.s32.totalorder %s143, %s144
      %p153 = scmp.eq.s32.totalorder %s28, 0
      %p154 = por %p152, %p153
      %p155 = scmp.ne.s32.totalorder %s143, %s144
      %p156 = scmp.eq.s32.totalorder %s29, 1
      %p157 = por %p155, %p156
      %p159 = scmp.ne.s32.totalorder %s144, %s158
      %p160 = scmp.eq.s32.totalorder %s29, 0
      %p161 = por %p159, %p160
      %s163 = sadd.s32 %s162, 1
      %p166 = scmp.eq.s32.totalorder %s23, 1
      %p167 = scmp.ne.s32.totalorder %s162, %s164
      %p168 = scmp.eq.s32.totalorder %s23, 0
      %p169 = por %p167, %p168
      %p170 = scmp.ne.s32.totalorder %s162, %s164
      %p171 = scmp.eq.s32.totalorder %s28, 1
      %p172 = por %p170, %p171
      %p173 = scmp.ne.s32.totalorder %s164, %s165
      %p174 = scmp.eq.s32.totalorder %s28, 0
      %p175 = por %p173, %p174
      %p176 = scmp.ne.s32.totalorder %s164, %s165
      %p177 = scmp.eq.s32.totalorder %s29, 1
      %p178 = por %p176, %p177
      %p180 = scmp.ne.s32.totalorder %s165, %s179
      %p181 = scmp.eq.s32.totalorder %s29, 0
      %p182 = por %p180, %p181
      %s184 = sadd.s32 %s183, 1
      %p187 = scmp.eq.s32.totalorder %s23, 1
      %p188 = scmp.ne.s32.totalorder %s183, %s185
      %p189 = scmp.eq.s32.totalorder %s23, 0
      %p190 = por %p188, %p189
      %p191 = scmp.ne.s32.totalorder %s183, %s185
      %p192 = scmp.eq.s32.totalorder %s28, 1
      %p193 = por %p191, %p192
      %p194 = scmp.ne.s32.totalorder %s185, %s186
      %p195 = scmp.eq.s32.totalorder %s28, 0
      %p196 = por %p194, %p195
      %p197 = scmp.ne.s32.totalorder %s185, %s186
      %p198 = scmp.eq.s32.totalorder %s29, 1
      %p199 = por %p197, %p198
      %p201 = scmp.ne.s32.totalorder %s186, %s200
      %p202 = scmp.eq.s32.totalorder %s29, 0
      %p203 = por %p201, %p202
      %s205 = sadd.s32 %s204, 1
      %p208 = scmp.eq.s32.totalorder %s23, 1
      %p209 = scmp.ne.s32.totalorder %s204, %s206
      %p210 = scmp.eq.s32.totalorder %s23, 0
      %p211 = por %p209, %p210
      %p212 = scmp.ne.s32.totalorder %s204, %s206
      %p213 = scmp.eq.s32.totalorder %s28, 1
      %p214 = por %p212, %p213
      %p215 = scmp.ne.s32.totalorder %s206, %s207
      %p216 = scmp.eq.s32.totalorder %s28, 0
      %p217 = por %p215, %p216
      %p218 = scmp.ne.s32.totalorder %s206, %s207
      %p219 = scmp.eq.s32.totalorder %s29, 1
      %p220 = por %p218, %p219
      %p222 = scmp.ne.s32.totalorder %s207, %s221
      %p223 = scmp.eq.s32.totalorder %s29, 0
      %p224 = por %p222, %p223
      %s226 = sadd.s32 %s225, 1
      %p229 = scmp.eq.s32.totalorder %s23, 1
      %p230 = scmp.ne.s32.totalorder %s225, %s227
      %p231 = scmp.eq.s32.totalorder %s23, 0
      %p232 = por %p230, %p231
      %p233 = scmp.ne.s32.totalorder %s225, %s227
      %p234 = scmp.eq.s32.totalorder %s28, 1
      %p235 = por %p233, %p234
      %p236 = scmp.ne.s32.totalorder %s227, %s228
      %p237 = scmp.eq.s32.totalorder %s28, 0
      %p238 = por %p236, %p237
      %p239 = scmp.ne.s32.totalorder %s227, %s228
      %p240 = scmp.eq.s32.totalorder %s29, 1
      %p241 = por %p239, %p240
      %p243 = scmp.ne.s32.totalorder %s228, %s242
      %p244 = scmp.eq.s32.totalorder %s29, 0
      %p245 = por %p243, %p244
      %s246 = ssub.s32 %s23, %s30
      %p247 = scmp.eq.s32.totalorder %s246, 0
      %s249 = sadd.s32 %s248, 1
      %s250 = scalar_select %p247, %s248, %s249
      %p253 = pneg %p247
      %p254 = scmp.eq.s32.totalorder %s23, 1
      %p255 = por %p253, %p254
      %p256 = scmp.ne.s32.totalorder %s248, %s251
      %p257 = scmp.eq.s32.totalorder %s23, 0
      %p258 = por %p256, %p257
      %p259 = scmp.ne.s32.totalorder %s248, %s251
      %p260 = scmp.eq.s32.totalorder %s28, 1
      %p261 = por %p259, %p260
      %p262 = scmp.ne.s32.totalorder %s251, %s252
      %p263 = scmp.eq.s32.totalorder %s28, 0
      %p264 = por %p262, %p263
      %p265 = scmp.ne.s32.totalorder %s251, %s252
      %p266 = scmp.eq.s32.totalorder %s29, 1
      %p267 = por %p265, %p266
      %p269 = scmp.ne.s32.totalorder %s252, %s268
      %p270 = scmp.eq.s32.totalorder %s29, 0
      %p271 = por %p269, %p270
      %p272 = scmp.le.s32.totalorder 1, %s23
      %p273 = scmp.lt.s32.totalorder %s23, 3
      %p274 = pnand %p272, %p273
      %p275 = pneg %p274
      // Predicated region
      $region9: #{tpu_custom_call.1} parent=5 // pred_check
        _
      $region10: #{tpu_custom_call.1} parent=5 // pred_check_branch
        %277 = sbr.rel (%p274) target = $region12
      $region11: #{tpu_custom_call.1} parent=5 // pred_region
        %s278 = ssub.s32 %s23, 1
        // Predicated region
        $region13: #{tpu_custom_call.1} parent=11 // pred_check
          %p279 = pneg %p70
        $region14: #{tpu_custom_call.1} parent=11 // pred_check_branch
          %281 = sbr.rel (%p279) target = $region16
        $region15: #{tpu_custom_call.1} parent=11 // pred_region
          %s283 = ssub.s32 4608, 4608
          %284 = vsyncadd [#allocation6], %s283
          %s285 = sshll.u32 [#allocation5], 4
          %s286 = int_to_ptr.vmem [resolvable:$true] %s285
          %291 = dma.hbm_to_vmem [thread:$0]  %s1, 4608, %s286, [#allocation6], 128, 128, 8
        $region16: #{tpu_custom_call.1} parent=11 // pred_fallthru
          _
        // Predicated region
        $region17: #{tpu_custom_call.1} parent=11 // pred_check
          %p292 = pneg %p91
        $region18: #{tpu_custom_call.1} parent=11 // pred_check_branch
          %294 = sbr.rel (%p292) target = $region20
        $region19: #{tpu_custom_call.1} parent=11 // pred_region
          _
        $region20: #{tpu_custom_call.1} parent=11 // pred_fallthru
          _
        // Predicated region
        $region21: #{tpu_custom_call.1} parent=11 // pred_check
          %p295 = pneg %p112
        $region22: #{tpu_custom_call.1} parent=11 // pred_check_branch
          %297 = sbr.rel (%p295) target = $region24
        $region23: #{tpu_custom_call.1} parent=11 // pred_region
          _
        $region24: #{tpu_custom_call.1} parent=11 // pred_fallthru
          _
        // Predicated region
        $region25: #{tpu_custom_call.1} parent=11 // pred_check
          %p298 = pneg %p133
        $region26: #{tpu_custom_call.1} parent=11 // pred_check_branch
          %300 = sbr.rel (%p298) target = $region28
        $region27: #{tpu_custom_call.1} parent=11 // pred_region
          _
        $region28: #{tpu_custom_call.1} parent=11 // pred_fallthru
          _
        // Predicated region
        $region29: #{tpu_custom_call.1} parent=11 // pred_check
          %p301 = pneg %p154
        $region30: #{tpu_custom_call.1} parent=11 // pred_check_branch
          %303 = sbr.rel (%p301) target = $region32
        $region31: #{tpu_custom_call.1} parent=11 // pred_region
          %s305 = ssub.s32 4608, 4608
          %306 = vsyncadd [#allocation6], %s305
          %s307 = sshll.u32 [#allocation7], 4
          %s308 = int_to_ptr.vmem [resolvable:$true] %s307
          %313 = dma.hbm_to_vmem [thread:$0]  %s5, 4608, %s308, [#allocation6], 128, 128, 8
        $region32: #{tpu_custom_call.1} parent=11 // pred_fallthru
          _
        // Predicated region
        $region33: #{tpu_custom_call.1} parent=11 // pred_check
          %p314 = pneg %p175
        $region34: #{tpu_custom_call.1} parent=11 // pred_check_branch
          %316 = sbr.rel (%p314) target = $region36
        $region35: #{tpu_custom_call.1} parent=11 // pred_region
          _
        $region36: #{tpu_custom_call.1} parent=11 // pred_fallthru
          _
        // Predicated region
        $region37: #{tpu_custom_call.1} parent=11 // pred_check
          %p317 = pneg %p196
        $region38: #{tpu_custom_call.1} parent=11 // pred_check_branch
          %319 = sbr.rel (%p317) target = $region40
        $region39: #{tpu_custom_call.1} parent=11 // pred_region
          _
        $region40: #{tpu_custom_call.1} parent=11 // pred_fallthru
          _
        // Predicated region
        $region41: #{tpu_custom_call.1} parent=11 // pred_check
          %p320 = pneg %p217
        $region42: #{tpu_custom_call.1} parent=11 // pred_check_branch
          %322 = sbr.rel (%p320) target = $region44
        $region43: #{tpu_custom_call.1} parent=11 // pred_region
          _
        $region44: #{tpu_custom_call.1} parent=11 // pred_fallthru
          _
        // Predicated region
        $region45: #{tpu_custom_call.1} parent=11 // pred_check
          %p323 = pneg %p238
        $region46: #{tpu_custom_call.1} parent=11 // pred_check_branch
          %325 = sbr.rel (%p323) target = $region48
        $region47: #{tpu_custom_call.1} parent=11 // pred_region
          _
        $region48: #{tpu_custom_call.1} parent=11 // pred_fallthru
          _
      $region12: #{tpu_custom_call.1} parent=5 // pred_fallthru
        _
      %p326 = scmp.lt.s32.totalorder %s23, 2
      // Predicated region
      $region49: #{tpu_custom_call.1} parent=5 // pred_check
        %p327 = pneg %p326
      $region50: #{tpu_custom_call.1} parent=5 // pred_check_branch
        %329 = sbr.rel (%p327) target = $region52
      $region51: #{tpu_custom_call.1} parent=5 // pred_region
        // Predicated region
        $region53: #{tpu_custom_call.1} parent=51 // pred_check
          %p330 = pneg %p43
        $region54: #{tpu_custom_call.1} parent=51 // pred_check_branch
          %332 = sbr.rel (%p330) target = $region56
        $region55: #{tpu_custom_call.1} parent=51 // pred_region
          %s333 = sand.u32 %s33, 1
          %s334 = scalar_lea.sflag [#allocation3], %s333
          %s335 = sand.u32 %s33, 1
          %s336 = smul.addr %s335, 256
          %s337 = scalar_lea.vmem [#allocation2], %s336
          %s339 = ssub.s32 4096, 4096
          %340 = vsyncadd %s334, %s339
          %s341 = smul.addr %s23, 32
          %s342 = smul.addr %s341, 128
          %s343 = scalar_lea.hbm %s0, %s342
          %s344 = sshll.u32 %s337, 4
          %s345 = int_to_ptr.vmem [resolvable:$true] %s344
          %350 = dma.hbm_to_vmem [thread:$0]  %s343, 4096, %s345, %s334, 128, 128, 8
        $region56: #{tpu_custom_call.1} parent=51 // pred_fallthru
          _
      $region52: #{tpu_custom_call.1} parent=5 // pred_fallthru
        _
      %p351 = scmp.le.s32.totalorder 1, %s23
      %p352 = scmp.lt.s32.totalorder %s23, 3
      %p353 = pnand %p351, %p352
      %p354 = pneg %p353
      // Predicated region
      $region57: #{tpu_custom_call.1} parent=5 // pred_check
        _
      $region58: #{tpu_custom_call.1} parent=5 // pred_check_branch
        %356 = sbr.rel (%p353) target = $region60
      $region59: #{tpu_custom_call.1} parent=5 // pred_region
        %s357 = ssub.s32 %s23, 1
        %s358 = sand.u32 %s36, 1
        %s359 = scalar_lea.sflag [#allocation3], %s358
        %s360 = sand.u32 %s36, 1
        %s361 = smul.addr %s360, 256
        %s362 = scalar_lea.vmem [#allocation2], %s361
        // Predicated region
        $region61: #{tpu_custom_call.1} parent=59 // pred_check
          %p363 = pneg %p49
        $region62: #{tpu_custom_call.1} parent=59 // pred_check_branch
          %365 = sbr.rel (%p363) target = $region64
        $region63: #{tpu_custom_call.1} parent=59 // pred_region
          %366 = dma.done %s359, 4096
        $region64: #{tpu_custom_call.1} parent=59 // pred_fallthru
          _
        // Predicated region
        $region65: #{tpu_custom_call.1} parent=59 // pred_check
          %p367 = pneg %p70
        $region66: #{tpu_custom_call.1} parent=59 // pred_check_branch
          %369 = sbr.rel (%p367) target = $region68
        $region67: #{tpu_custom_call.1} parent=59 // pred_region
          %370 = dma.done [#allocation6], 4608
        $region68: #{tpu_custom_call.1} parent=59 // pred_fallthru
          _
        // Predicated region
        $region69: #{tpu_custom_call.1} parent=59 // pred_check
          %p371 = pneg %p154
        $region70: #{tpu_custom_call.1} parent=59 // pred_check_branch
          %373 = sbr.rel (%p371) target = $region72
        $region71: #{tpu_custom_call.1} parent=59 // pred_region
          %374 = dma.done [#allocation6], 4608
        $region72: #{tpu_custom_call.1} parent=59 // pred_fallthru
          _
        %s375 = sand.u32 %s36, 1
        %s376 = scalar_lea.sflag [#allocation3], %s375
        %s377 = sand.u32 %s36, 1
        %s378 = smul.addr %s377, 256
        %s379 = scalar_lea.vmem [#allocation2], %s378
        %p380 = pneg %p49
        %p381 = pneg %p46
        %p382 = pneg %p70
        %p383 = pneg %p67
        %p384 = pneg %p91
        %p385 = pneg %p88
        %p386 = pneg %p112
        %p387 = pneg %p109
        %p388 = pneg %p133
        %p389 = pneg %p130
        %p390 = pneg %p154
        %p391 = pneg %p151
        %p392 = pneg %p175
        %p393 = pneg %p172
        %p394 = pneg %p196
        %p395 = pneg %p193
        %p396 = pneg %p217
        %p397 = pneg %p214
        %p398 = pneg %p238
        %p399 = pneg %p235
        %p400 = pneg %p264
        %p401 = pneg %p261
        %s402 = sand.u32 %s251, 1
        %s403 = scalar_lea.sflag [#allocation4], %s402
        %s404 = sand.u32 %s251, 1
        %s405 = smul.addr %s404, 64
        %s406 = scalar_lea.vmem [#allocation8], %s405
        %v407 = vld [vmem:[%s9] sm:$0xff]
        %v408 = vld [vmem:[%s9 + $0x8] sm:$0xff]
        %v409 = vld [vmem:[%s9 + $0x10] sm:$0xff]
        %v410 = vld [vmem:[%s9 + $0x18] sm:$0xff]
        %v411 = vld [vmem:[%s362] sm:$0xff]
        %v412 = vld [vmem:[%s362 + $0x8] sm:$0xff]
        %v413 = vld [vmem:[%s362 + $0x10] sm:$0xff]
        %v414 = vld [vmem:[%s362 + $0x18] sm:$0xff]
        %v415 = vld [vmem:[%s362 + $0x20] sm:$0xff]
        %v416 = vld [vmem:[%s362 + $0x28] sm:$0xff]
        %v417 = vld [vmem:[%s362 + $0x30] sm:$0xff]
        %v418 = vld [vmem:[%s362 + $0x38] sm:$0xff]
        %v419 = vld [vmem:[%s362 + $0x40] sm:$0xff]
        %v420 = vld [vmem:[%s362 + $0x48] sm:$0xff]
        %v421 = vld [vmem:[%s362 + $0x50] sm:$0xff]
        %v422 = vld [vmem:[%s362 + $0x58] sm:$0xff]
        %v423 = vld [vmem:[%s362 + $0x60] sm:$0xff]
        %v424 = vld [vmem:[%s362 + $0x68] sm:$0xff]
        %v425 = vld [vmem:[%s362 + $0x70] sm:$0xff]
        %v426 = vld [vmem:[%s362 + $0x78] sm:$0xff]
        %v427 = vld [vmem:[%s362 + $0x80] sm:$0xff]
        %v428 = vld [vmem:[%s362 + $0x88] sm:$0xff]
        %v429 = vld [vmem:[%s362 + $0x90] sm:$0xff]
        %v430 = vld [vmem:[%s362 + $0x98] sm:$0xff]
        %v431 = vld [vmem:[%s362 + $0xa0] sm:$0xff]
        %v432 = vld [vmem:[%s362 + $0xa8] sm:$0xff]
        %v433 = vld [vmem:[%s362 + $0xb0] sm:$0xff]
        %v434 = vld [vmem:[%s362 + $0xb8] sm:$0xff]
        %v435 = vld [vmem:[%s362 + $0xc0] sm:$0xff]
        %v436 = vld [vmem:[%s362 + $0xc8] sm:$0xff]
        %v437 = vld [vmem:[%s362 + $0xd0] sm:$0xff]
        %v438 = vld [vmem:[%s362 + $0xd8] sm:$0xff]
        %v439 = vld [vmem:[%s362 + $0xe0] sm:$0xff]
        %v440 = vld [vmem:[%s362 + $0xe8] sm:$0xff]
        %v441 = vld [vmem:[%s362 + $0xf0] sm:$0xff]
        %v442 = vld [vmem:[%s362 + $0xf8] sm:$0xff]
        %vm476 = vcmask 1040384
        %v477 = vrot.slane 0.0, 7
        %v478 = vsel %vm476, %v477, %v477
        %v479 = vrot.slane %v411, 7
        %v480 = vrot.slane %v412, 7
        %v481 = vsel %vm476, %v479, %v480
        %v482 = vrot.slane %v413, 7
        %v483 = vrot.slane %v414, 7
        %v484 = vsel %vm476, %v482, %v483
        %v485 = vrot.slane %v415, 7
        %v486 = vrot.slane %v416, 7
        %v487 = vsel %vm476, %v485, %v486
        %v488 = vrot.slane %v417, 7
        %v489 = vrot.slane %v418, 7
        %v490 = vsel %vm476, %v488, %v489
        %v491 = vrot.slane %v419, 7
        %v492 = vrot.slane %v420, 7
        %v493 = vsel %vm476, %v491, %v492
        %v494 = vrot.slane %v421, 7
        %v495 = vrot.slane %v422, 7
        %v496 = vsel %vm476, %v494, %v495
        %v497 = vrot.slane %v423, 7
        %v498 = vrot.slane %v424, 7
        %v499 = vsel %vm476, %v497, %v498
        %v500 = vrot.slane %v425, 7
        %v501 = vrot.slane %v426, 7
        %v502 = vsel %vm476, %v500, %v501
        %v503 = vrot.slane %v427, 7
        %v504 = vrot.slane %v428, 7
        %v505 = vsel %vm476, %v503, %v504
        %v506 = vrot.slane %v429, 7
        %v507 = vrot.slane %v430, 7
        %v508 = vsel %vm476, %v506, %v507
        %v509 = vrot.slane %v431, 7
        %v510 = vrot.slane %v432, 7
        %v511 = vsel %vm476, %v509, %v510
        %v512 = vrot.slane %v433, 7
        %v513 = vrot.slane %v434, 7
        %v514 = vsel %vm476, %v512, %v513
        %v515 = vrot.slane %v435, 7
        %v516 = vrot.slane %v436, 7
        %v517 = vsel %vm476, %v515, %v516
        %v518 = vrot.slane %v437, 7
        %v519 = vrot.slane %v438, 7
        %v520 = vsel %vm476, %v518, %v519
        %v521 = vrot.slane %v439, 7
        %v522 = vrot.slane %v440, 7
        %v523 = vsel %vm476, %v521, %v522
        %v524 = vrot.slane %v441, 7
        %v525 = vrot.slane %v442, 7
        %v526 = vsel %vm476, %v524, %v525
        %v544 = vsel %vm476, 0.0, %v477
        %v545 = vsel %vm476, 0.0, %v479
        %v546 = vsel %vm476, 0.0, %v482
        %v547 = vsel %vm476, 0.0, %v485
        %v548 = vsel %vm476, 0.0, %v488
        %v549 = vsel %vm476, 0.0, %v491
        %v550 = vsel %vm476, 0.0, %v494
        %v551 = vsel %vm476, 0.0, %v497
        %v552 = vsel %vm476, 0.0, %v500
        %v553 = vsel %vm476, 0.0, %v503
        %v554 = vsel %vm476, 0.0, %v506
        %v555 = vsel %vm476, 0.0, %v509
        %v556 = vsel %vm476, 0.0, %v512
        %v557 = vsel %vm476, 0.0, %v515
        %v558 = vsel %vm476, 0.0, %v518
        %v559 = vsel %vm476, 0.0, %v521
        %v560 = vsel %vm476, 0.0, %v524
        %vm561 = vcmask 1046528
        %v562 = vrot.slane 0.0, 1
        %v563 = vsel %vm561, %v562, %v562
        %v564 = vrot.slane %v411, 1
        %v565 = vrot.slane %v412, 1
        %v566 = vsel %vm561, %v564, %v565
        %v567 = vrot.slane %v413, 1
        %v568 = vrot.slane %v414, 1
        %v569 = vsel %vm561, %v567, %v568
        %v570 = vrot.slane %v415, 1
        %v571 = vrot.slane %v416, 1
        %v572 = vsel %vm561, %v570, %v571
        %v573 = vrot.slane %v417, 1
        %v574 = vrot.slane %v418, 1
        %v575 = vsel %vm561, %v573, %v574
        %v576 = vrot.slane %v419, 1
        %v577 = vrot.slane %v420, 1
        %v578 = vsel %vm561, %v576, %v577
        %v579 = vrot.slane %v421, 1
        %v580 = vrot.slane %v422, 1
        %v581 = vsel %vm561, %v579, %v580
        %v582 = vrot.slane %v423, 1
        %v583 = vrot.slane %v424, 1
        %v584 = vsel %vm561, %v582, %v583
        %v585 = vrot.slane %v425, 1
        %v586 = vrot.slane %v426, 1
        %v587 = vsel %vm561, %v585, %v586
        %v588 = vrot.slane %v427, 1
        %v589 = vrot.slane %v428, 1
        %v590 = vsel %vm561, %v588, %v589
        %v591 = vrot.slane %v429, 1
        %v592 = vrot.slane %v430, 1
        %v593 = vsel %vm561, %v591, %v592
        %v594 = vrot.slane %v431, 1
        %v595 = vrot.slane %v432, 1
        %v596 = vsel %vm561, %v594, %v595
        %v597 = vrot.slane %v433, 1
        %v598 = vrot.slane %v434, 1
        %v599 = vsel %vm561, %v597, %v598
        %v600 = vrot.slane %v435, 1
        %v601 = vrot.slane %v436, 1
        %v602 = vsel %vm561, %v600, %v601
        %v603 = vrot.slane %v437, 1
        %v604 = vrot.slane %v438, 1
        %v605 = vsel %vm561, %v603, %v604
        %v606 = vrot.slane %v439, 1
        %v607 = vrot.slane %v440, 1
        %v608 = vsel %vm561, %v606, %v607
        %v609 = vrot.slane %v441, 1
        %v610 = vrot.slane %v442, 1
        %v611 = vsel %vm561, %v609, %v610
        %v629 = vsel %vm561, %v562, 0.0
        %v630 = vsel %vm561, %v565, 0.0
        %v631 = vsel %vm561, %v568, 0.0
        %v632 = vsel %vm561, %v571, 0.0
        %v633 = vsel %vm561, %v574, 0.0
        %v634 = vsel %vm561, %v577, 0.0
        %v635 = vsel %vm561, %v580, 0.0
        %v636 = vsel %vm561, %v583, 0.0
        %v637 = vsel %vm561, %v586, 0.0
        %v638 = vsel %vm561, %v589, 0.0
        %v639 = vsel %vm561, %v592, 0.0
        %v640 = vsel %vm561, %v595, 0.0
        %v641 = vsel %vm561, %v598, 0.0
        %v642 = vsel %vm561, %v601, 0.0
        %v643 = vsel %vm561, %v604, 0.0
        %v644 = vsel %vm561, %v607, 0.0
        %v645 = vsel %vm561, %v610, 0.0
        %s646 = scalar_lea.vmem [#allocation5], 128
        %v647 = vld [vmem:[%s646] sm:$0xff]
        %v648 = vld [vmem:[%s646 + $0x8] sm:$0xff]
        %v649 = vld [vmem:[%s646 + $0x10] sm:$0xff]
        %v650 = vld [vmem:[%s646 + $0x18] sm:$0xff]
        %v651 = vld [vmem:[#allocation5] sm:$0xff]
        %v652 = vld [vmem:[#allocation5 + $0x8] sm:$0xff]
        %v653 = vld [vmem:[#allocation5 + $0x10] sm:$0xff]
        %v654 = vld [vmem:[#allocation5 + $0x18] sm:$0xff]
        %vm655 = vcmask 261120
        %v657 = vsel %vm655, %v544, 0
        %v659 = vsel %vm655, %v478, 0
        %v662 = vsel %vm655, %v545, 0
        %v664 = vsel %vm655, %v481, 0
        %v667 = vsel %vm655, %v546, 0
        %v669 = vsel %vm655, %v484, 0
        %v672 = vsel %vm655, %v547, 0
        %v674 = vsel %vm655, %v487, 0
        %v677 = vsel %vm655, %v548, 0
        %v679 = vsel %vm655, %v490, 0
        %v682 = vsel %vm655, %v549, 0
        %v684 = vsel %vm655, %v493, 0
        %v687 = vsel %vm655, %v550, 0
        %v689 = vsel %vm655, %v496, 0
        %v692 = vsel %vm655, %v551, 0
        %v694 = vsel %vm655, %v499, 0
        %v697 = vsel %vm655, %v552, 0
        %v699 = vsel %vm655, %v502, 0
        %v702 = vsel %vm655, %v553, 0
        %v704 = vsel %vm655, %v505, 0
        %v707 = vsel %vm655, %v554, 0
        %v709 = vsel %vm655, %v508, 0
        %v712 = vsel %vm655, %v555, 0
        %v714 = vsel %vm655, %v511, 0
        %v717 = vsel %vm655, %v556, 0
        %v719 = vsel %vm655, %v514, 0
        %v722 = vsel %vm655, %v557, 0
        %v724 = vsel %vm655, %v517, 0
        %v727 = vsel %vm655, %v558, 0
        %v729 = vsel %vm655, %v520, 0
        %v732 = vsel %vm655, %v559, 0
        %v734 = vsel %vm655, %v523, 0
        %736 = vmatprep.subr.mxu0 0.0
        %737 = vmatpush1.msra.mxu0 0.0
        %738 = vmatprep.subr.mxu0 0.0
        %739 = vmatpush1.msra.mxu0 0.0
        %740 = vmatprep.subr.mxu0 0.0
        %741 = vmatpush1.msra.mxu0 0.0
        %742 = vmatprep.subr.mxu0 0.0
        %743 = vmatpush1.msra.mxu0 0.0
        %744 = vmatprep.subr.mxu0 0.0
        %745 = vmatpush1.msra.mxu0 0.0
        %746 = vmatprep.subr.mxu0 0.0
        %747 = vmatpush1.msra.mxu0 0.0
        %748 = vmatprep.subr.mxu0 0.0
        %749 = vmatpush1.msra.mxu0 0.0
        %750 = vmatprep.subr.mxu0 0.0
        %751 = vmatpush1.msra.mxu0 0.0
        %752 = vmatprep.subr.mxu0 0.0
        %753 = vmatpush1.msra.mxu0 0.0
        %754 = vmatprep.subr.mxu0 0.0
        %755 = vmatpush1.msra.mxu0 0.0
        %756 = vmatprep.subr.mxu0 0.0
        %757 = vmatpush1.msra.mxu0 0.0
        %758 = vmatprep.subr.mxu0 0.0
        %759 = vmatpush1.msra.mxu0 0.0
        %760 = vmatprep.subr.mxu0 0.0
        %761 = vmatpush1.msra.mxu0 %v654
        %762 = vmatprep.subr.mxu0 0.0
        %763 = vmatpush1.msra.mxu0 %v653
        %764 = vmatprep.subr.mxu0 0.0
        %765 = vmatpush1.msra.mxu0 %v652
        %766 = vmatprep.subr.mxu0 0.0
        %767 = vmatpush1.msra.mxu0 %v651
        %768 = vmatprep.subr.mxu0 0.0
        %769 = vmatpush2.msra.mxu0 0.0
        %770 = vmatprep.subr.mxu0 0.0
        %771 = vmatpush2.msra.mxu0 0.0
        %772 = vmatprep.subr.mxu0 0.0
        %773 = vmatpush2.msra.mxu0 0.0
        %774 = vmatprep.subr.mxu0 0.0
        %775 = vmatpush2.msra.mxu0 0.0
        %776 = vmatprep.subr.mxu0 0.0
        %777 = vmatpush2.msra.mxu0 0.0
        %778 = vmatprep.subr.mxu0 0.0
        %779 = vmatpush2.msra.mxu0 0.0
        %780 = vmatprep.subr.mxu0 0.0
        %781 = vmatpush2.msra.mxu0 0.0
        %782 = vmatprep.subr.mxu0 0.0
        %783 = vmatpush2.msra.mxu0 0.0
        %784 = vmatprep.subr.mxu0 0.0
        %785 = vmatpush2.msra.mxu0 0.0
        %786 = vmatprep.subr.mxu0 0.0
        %787 = vmatpush2.msra.mxu0 0.0
        %788 = vmatprep.subr.mxu0 0.0
        %789 = vmatpush2.msra.mxu0 0.0
        %790 = vmatprep.subr.mxu0 0.0
        %791 = vmatpush2.msra.mxu0 0.0
        %792 = vmatprep.subr.mxu0 0.0
        %793 = vmatpush2.msra.mxu0 0.0
        %794 = vmatprep.subr.mxu0 0.0
        %795 = vmatpush2.msra.mxu0 0.0
        %796 = vmatprep.subr.mxu0 0.0
        %797 = vmatpush2.msra.mxu0 0.0
        %798 = vmatprep.subr.mxu0 0.0
        %799 = vmatpush2.msra.mxu0 0.0
        %800 = vmatprep.mubr.f32.mxu0 0.0
        %801 = vmatmul.mubr.f32.gmra.mxu0 %v657
        %v802 = vpop.f32.mrf.mxu0
        %v803 = vadd.f32 0.0, %v802
        %v804 = vpop.f32.mrf.mxu0
        %805 = vmatprep.mubr.f32.mxu0 0.0
        %806 = vmatmul.mubr.f32.gmra.mxu0 %v659
        %v807 = vpop.f32.mrf.mxu0
        %v808 = vadd.f32 0.0, %v807
        %v809 = vpop.f32.mrf.mxu0
        %810 = vmatprep.mubr.f32.mxu0 0.0
        %811 = vmatmul.mubr.f32.gmra.mxu0 %v662
        %v812 = vpop.f32.mrf.mxu0
        %v813 = vadd.f32 0.0, %v812
        %v814 = vpop.f32.mrf.mxu0
        %815 = vmatprep.mubr.f32.mxu0 0.0
        %816 = vmatmul.mubr.f32.gmra.mxu0 %v664
        %v817 = vpop.f32.mrf.mxu0
        %v818 = vadd.f32 0.0, %v817
        %v819 = vpop.f32.mrf.mxu0
        %820 = vmatprep.mubr.f32.mxu0 0.0
        %821 = vmatmul.mubr.f32.gmra.mxu0 %v667
        %v822 = vpop.f32.mrf.mxu0
        %v823 = vadd.f32 0.0, %v822
        %v824 = vpop.f32.mrf.mxu0
        %825 = vmatprep.mubr.f32.mxu0 0.0
        %826 = vmatmul.mubr.f32.gmra.mxu0 %v669
        %v827 = vpop.f32.mrf.mxu0
        %v828 = vadd.f32 0.0, %v827
        %v829 = vpop.f32.mrf.mxu0
        %830 = vmatprep.mubr.f32.mxu0 0.0
        %831 = vmatmul.mubr.f32.gmra.mxu0 %v672
        %v832 = vpop.f32.mrf.mxu0
        %v833 = vadd.f32 0.0, %v832
        %v834 = vpop.f32.mrf.mxu0
        %835 = vmatprep.mubr.f32.mxu0 0.0
        %836 = vmatmul.mubr.f32.gmra.mxu0 %v674
        %v837 = vpop.f32.mrf.mxu0
        %v838 = vadd.f32 0.0, %v837
        %v839 = vpop.f32.mrf.mxu0
        %840 = vmatprep.mubr.f32.mxu0 0.0
        %841 = vmatmul.mubr.f32.gmra.mxu0 %v677
        %v842 = vpop.f32.mrf.mxu0
        %v843 = vadd.f32 0.0, %v842
        %v844 = vpop.f32.mrf.mxu0
        %845 = vmatprep.mubr.f32.mxu0 0.0
        %846 = vmatmul.mubr.f32.gmra.mxu0 %v679
        %v847 = vpop.f32.mrf.mxu0
        %v848 = vadd.f32 0.0, %v847
        %v849 = vpop.f32.mrf.mxu0
        %850 = vmatprep.mubr.f32.mxu0 0.0
        %851 = vmatmul.mubr.f32.gmra.mxu0 %v682
        %v852 = vpop.f32.mrf.mxu0
        %v853 = vadd.f32 0.0, %v852
        %v854 = vpop.f32.mrf.mxu0
        %855 = vmatprep.mubr.f32.mxu0 0.0
        %856 = vmatmul.mubr.f32.gmra.mxu0 %v684
        %v857 = vpop.f32.mrf.mxu0
        %v858 = vadd.f32 0.0, %v857
        %v859 = vpop.f32.mrf.mxu0
        %860 = vmatprep.mubr.f32.mxu0 0.0
        %861 = vmatmul.mubr.f32.gmra.mxu0 %v687
        %v862 = vpop.f32.mrf.mxu0
        %v863 = vadd.f32 0.0, %v862
        %v864 = vpop.f32.mrf.mxu0
        %865 = vmatprep.mubr.f32.mxu0 0.0
        %866 = vmatmul.mubr.f32.gmra.mxu0 %v689
        %v867 = vpop.f32.mrf.mxu0
        %v868 = vadd.f32 0.0, %v867
        %v869 = vpop.f32.mrf.mxu0
        %870 = vmatprep.mubr.f32.mxu0 0.0
        %871 = vmatmul.mubr.f32.gmra.mxu0 %v692
        %v872 = vpop.f32.mrf.mxu0
        %v873 = vadd.f32 0.0, %v872
        %v874 = vpop.f32.mrf.mxu0
        %875 = vmatprep.mubr.f32.mxu0 0.0
        %876 = vmatmul.mubr.f32.gmra.mxu0 %v694
        %v877 = vpop.f32.mrf.mxu0
        %v878 = vadd.f32 0.0, %v877
        %v879 = vpop.f32.mrf.mxu0
        %880 = vmatprep.mubr.f32.mxu0 0.0
        %881 = vmatmul.mubr.f32.gmra.mxu0 %v697
        %v882 = vpop.f32.mrf.mxu0
        %v883 = vadd.f32 0.0, %v882
        %v884 = vpop.f32.mrf.mxu0
        %885 = vmatprep.mubr.f32.mxu0 0.0
        %886 = vmatmul.mubr.f32.gmra.mxu0 %v699
        %v887 = vpop.f32.mrf.mxu0
        %v888 = vadd.f32 0.0, %v887
        %v889 = vpop.f32.mrf.mxu0
        %890 = vmatprep.mubr.f32.mxu0 0.0
        %891 = vmatmul.mubr.f32.gmra.mxu0 %v702
        %v892 = vpop.f32.mrf.mxu0
        %v893 = vadd.f32 0.0, %v892
        %v894 = vpop.f32.mrf.mxu0
        %895 = vmatprep.mubr.f32.mxu0 0.0
        %896 = vmatmul.mubr.f32.gmra.mxu0 %v704
        %v897 = vpop.f32.mrf.mxu0
        %v898 = vadd.f32 0.0, %v897
        %v899 = vpop.f32.mrf.mxu0
        %900 = vmatprep.mubr.f32.mxu0 0.0
        %901 = vmatmul.mubr.f32.gmra.mxu0 %v707
        %v902 = vpop.f32.mrf.mxu0
        %v903 = vadd.f32 0.0, %v902
        %v904 = vpop.f32.mrf.mxu0
        %905 = vmatprep.mubr.f32.mxu0 0.0
        %906 = vmatmul.mubr.f32.gmra.mxu0 %v709
        %v907 = vpop.f32.mrf.mxu0
        %v908 = vadd.f32 0.0, %v907
        %v909 = vpop.f32.mrf.mxu0
        %910 = vmatprep.mubr.f32.mxu0 0.0
        %911 = vmatmul.mubr.f32.gmra.mxu0 %v712
        %v912 = vpop.f32.mrf.mxu0
        %v913 = vadd.f32 0.0, %v912
        %v914 = vpop.f32.mrf.mxu0
        %915 = vmatprep.mubr.f32.mxu0 0.0
        %916 = vmatmul.mubr.f32.gmra.mxu0 %v714
        %v917 = vpop.f32.mrf.mxu0
        %v918 = vadd.f32 0.0, %v917
        %v919 = vpop.f32.mrf.mxu0
        %920 = vmatprep.mubr.f32.mxu0 0.0
        %921 = vmatmul.mubr.f32.gmra.mxu0 %v717
        %v922 = vpop.f32.mrf.mxu0
        %v923 = vadd.f32 0.0, %v922
        %v924 = vpop.f32.mrf.mxu0
        %925 = vmatprep.mubr.f32.mxu0 0.0
        %926 = vmatmul.mubr.f32.gmra.mxu0 %v719
        %v927 = vpop.f32.mrf.mxu0
        %v928 = vadd.f32 0.0, %v927
        %v929 = vpop.f32.mrf.mxu0
        %930 = vmatprep.mubr.f32.mxu0 0.0
        %931 = vmatmul.mubr.f32.gmra.mxu0 %v722
        %v932 = vpop.f32.mrf.mxu0
        %v933 = vadd.f32 0.0, %v932
        %v934 = vpop.f32.mrf.mxu0
        %935 = vmatprep.mubr.f32.mxu0 0.0
        %936 = vmatmul.mubr.f32.gmra.mxu0 %v724
        %v937 = vpop.f32.mrf.mxu0
        %v938 = vadd.f32 0.0, %v937
        %v939 = vpop.f32.mrf.mxu0
        %940 = vmatprep.mubr.f32.mxu0 0.0
        %941 = vmatmul.mubr.f32.gmra.mxu0 %v727
        %v942 = vpop.f32.mrf.mxu0
        %v943 = vadd.f32 0.0, %v942
        %v944 = vpop.f32.mrf.mxu0
        %945 = vmatprep.mubr.f32.mxu0 0.0
        %946 = vmatmul.mubr.f32.gmra.mxu0 %v729
        %v947 = vpop.f32.mrf.mxu0
        %v948 = vadd.f32 0.0, %v947
        %v949 = vpop.f32.mrf.mxu0
        %950 = vmatprep.mubr.f32.mxu0 0.0
        %951 = vmatmul.mubr.f32.gmra.mxu0 %v732
        %v952 = vpop.f32.mrf.mxu0
        %v953 = vadd.f32 0.0, %v952
        %v954 = vpop.f32.mrf.mxu0
        %955 = vmatprep.mubr.f32.mxu0 0.0
        %956 = vmatmul.mubr.f32.gmra.mxu0 %v734
        %v957 = vpop.f32.mrf.mxu0
        %v958 = vadd.f32 0.0, %v957
        %v959 = vpop.f32.mrf.mxu0
        %960 = vdwg.mxu0
        %v961 = vsel %vm655, %v411, 0
        %v963 = vsel %vm655, %v412, 0
        %v965 = vsel %vm655, %v413, 0
        %v967 = vsel %vm655, %v414, 0
        %v969 = vsel %vm655, %v415, 0
        %v971 = vsel %vm655, %v416, 0
        %v973 = vsel %vm655, %v417, 0
        %v975 = vsel %vm655, %v418, 0
        %v977 = vsel %vm655, %v419, 0
        %v979 = vsel %vm655, %v420, 0
        %v981 = vsel %vm655, %v421, 0
        %v983 = vsel %vm655, %v422, 0
        %v985 = vsel %vm655, %v423, 0
        %v987 = vsel %vm655, %v424, 0
        %v989 = vsel %vm655, %v425, 0
        %v991 = vsel %vm655, %v426, 0
        %v993 = vsel %vm655, %v427, 0
        %v995 = vsel %vm655, %v428, 0
        %v997 = vsel %vm655, %v429, 0
        %v999 = vsel %vm655, %v430, 0
        %v1001 = vsel %vm655, %v431, 0
        %v1003 = vsel %vm655, %v432, 0
        %v1005 = vsel %vm655, %v433, 0
        %v1007 = vsel %vm655, %v434, 0
        %v1009 = vsel %vm655, %v435, 0
        %v1011 = vsel %vm655, %v436, 0
        %v1013 = vsel %vm655, %v437, 0
        %v1015 = vsel %vm655, %v438, 0
        %v1017 = vsel %vm655, %v439, 0
        %v1019 = vsel %vm655, %v440, 0
        %v1021 = vsel %vm655, %v441, 0
        %v1023 = vsel %vm655, %v442, 0
        %1025 = vmatprep.subr.mxu0 0.0
        %1026 = vmatpush1.msra.mxu0 0.0
        %1027 = vmatprep.subr.mxu0 0.0
        %1028 = vmatpush1.msra.mxu0 0.0
        %1029 = vmatprep.subr.mxu0 0.0
        %1030 = vmatpush1.msra.mxu0 0.0
        %1031 = vmatprep.subr.mxu0 0.0
        %1032 = vmatpush1.msra.mxu0 0.0
        %1033 = vmatprep.subr.mxu0 0.0
        %1034 = vmatpush1.msra.mxu0 0.0
        %1035 = vmatprep.subr.mxu0 0.0
        %1036 = vmatpush1.msra.mxu0 0.0
        %1037 = vmatprep.subr.mxu0 0.0
        %1038 = vmatpush1.msra.mxu0 0.0
        %1039 = vmatprep.subr.mxu0 0.0
        %1040 = vmatpush1.msra.mxu0 0.0
        %1041 = vmatprep.subr.mxu0 0.0
        %1042 = vmatpush1.msra.mxu0 0.0
        %1043 = vmatprep.subr.mxu0 0.0
        %1044 = vmatpush1.msra.mxu0 0.0
        %1045 = vmatprep.subr.mxu0 0.0
        %1046 = vmatpush1.msra.mxu0 0.0
        %1047 = vmatprep.subr.mxu0 0.0
        %1048 = vmatpush1.msra.mxu0 0.0
        %1049 = vmatprep.subr.mxu0 0.0
        %1050 = vmatpush1.msra.mxu0 %v650
        %1051 = vmatprep.subr.mxu0 0.0
        %1052 = vmatpush1.msra.mxu0 %v649
        %1053 = vmatprep.subr.mxu0 0.0
        %1054 = vmatpush1.msra.mxu0 %v648
        %1055 = vmatprep.subr.mxu0 0.0
        %1056 = vmatpush1.msra.mxu0 %v647
        %1057 = vmatprep.subr.mxu0 0.0
        %1058 = vmatpush2.msra.mxu0 0.0
        %1059 = vmatprep.subr.mxu0 0.0
        %1060 = vmatpush2.msra.mxu0 0.0
        %1061 = vmatprep.subr.mxu0 0.0
        %1062 = vmatpush2.msra.mxu0 0.0
        %1063 = vmatprep.subr.mxu0 0.0
        %1064 = vmatpush2.msra.mxu0 0.0
        %1065 = vmatprep.subr.mxu0 0.0
        %1066 = vmatpush2.msra.mxu0 0.0
        %1067 = vmatprep.subr.mxu0 0.0
        %1068 = vmatpush2.msra.mxu0 0.0
        %1069 = vmatprep.subr.mxu0 0.0
        %1070 = vmatpush2.msra.mxu0 0.0
        %1071 = vmatprep.subr.mxu0 0.0
        %1072 = vmatpush2.msra.mxu0 0.0
        %1073 = vmatprep.subr.mxu0 0.0
        %1074 = vmatpush2.msra.mxu0 0.0
        %1075 = vmatprep.subr.mxu0 0.0
        %1076 = vmatpush2.msra.mxu0 0.0
        %1077 = vmatprep.subr.mxu0 0.0
        %1078 = vmatpush2.msra.mxu0 0.0
        %1079 = vmatprep.subr.mxu0 0.0
        %1080 = vmatpush2.msra.mxu0 0.0
        %1081 = vmatprep.subr.mxu0 0.0
        %1082 = vmatpush2.msra.mxu0 0.0
        %1083 = vmatprep.subr.mxu0 0.0
        %1084 = vmatpush2.msra.mxu0 0.0
        %1085 = vmatprep.subr.mxu0 0.0
        %1086 = vmatpush2.msra.mxu0 0.0
        %1087 = vmatprep.subr.mxu0 0.0
        %1088 = vmatpush2.msra.mxu0 0.0
        %1089 = vmatprep.mubr.f32.mxu0 0.0
        %1090 = vmatmul.mubr.f32.gmra.mxu0 %v961
        %v1091 = vpop.f32.mrf.mxu0
        %v1092 = vadd.f32 %v803, %v1091
        %v1093 = vpop.f32.mrf.mxu0
        %1094 = vmatprep.mubr.f32.mxu0 0.0
        %1095 = vmatmul.mubr.f32.gmra.mxu0 %v963
        %v1096 = vpop.f32.mrf.mxu0
        %v1097 = vadd.f32 %v808, %v1096
        %v1098 = vpop.f32.mrf.mxu0
        %1099 = vmatprep.mubr.f32.mxu0 0.0
        %1100 = vmatmul.mubr.f32.gmra.mxu0 %v965
        %v1101 = vpop.f32.mrf.mxu0
        %v1102 = vadd.f32 %v813, %v1101
        %v1103 = vpop.f32.mrf.mxu0
        %1104 = vmatprep.mubr.f32.mxu0 0.0
        %1105 = vmatmul.mubr.f32.gmra.mxu0 %v967
        %v1106 = vpop.f32.mrf.mxu0
        %v1107 = vadd.f32 %v818, %v1106
        %v1108 = vpop.f32.mrf.mxu0
        %1109 = vmatprep.mubr.f32.mxu0 0.0
        %1110 = vmatmul.mubr.f32.gmra.mxu0 %v969
        %v1111 = vpop.f32.mrf.mxu0
        %v1112 = vadd.f32 %v823, %v1111
        %v1113 = vpop.f32.mrf.mxu0
        %1114 = vmatprep.mubr.f32.mxu0 0.0
        %1115 = vmatmul.mubr.f32.gmra.mxu0 %v971
        %v1116 = vpop.f32.mrf.mxu0
        %v1117 = vadd.f32 %v828, %v1116
        %v1118 = vpop.f32.mrf.mxu0
        %1119 = vmatprep.mubr.f32.mxu0 0.0
        %1120 = vmatmul.mubr.f32.gmra.mxu0 %v973
        %v1121 = vpop.f32.mrf.mxu0
        %v1122 = vadd.f32 %v833, %v1121
        %v1123 = vpop.f32.mrf.mxu0
        %1124 = vmatprep.mubr.f32.mxu0 0.0
        %1125 = vmatmul.mubr.f32.gmra.mxu0 %v975
        %v1126 = vpop.f32.mrf.mxu0
        %v1127 = vadd.f32 %v838, %v1126
        %v1128 = vpop.f32.mrf.mxu0
        %1129 = vmatprep.mubr.f32.mxu0 0.0
        %1130 = vmatmul.mubr.f32.gmra.mxu0 %v977
        %v1131 = vpop.f32.mrf.mxu0
        %v1132 = vadd.f32 %v843, %v1131
        %v1133 = vpop.f32.mrf.mxu0
        %1134 = vmatprep.mubr.f32.mxu0 0.0
        %1135 = vmatmul.mubr.f32.gmra.mxu0 %v979
        %v1136 = vpop.f32.mrf.mxu0
        %v1137 = vadd.f32 %v848, %v1136
        %v1138 = vpop.f32.mrf.mxu0
        %1139 = vmatprep.mubr.f32.mxu0 0.0
        %1140 = vmatmul.mubr.f32.gmra.mxu0 %v981
        %v1141 = vpop.f32.mrf.mxu0
        %v1142 = vadd.f32 %v853, %v1141
        %v1143 = vpop.f32.mrf.mxu0
        %1144 = vmatprep.mubr.f32.mxu0 0.0
        %1145 = vmatmul.mubr.f32.gmra.mxu0 %v983
        %v1146 = vpop.f32.mrf.mxu0
        %v1147 = vadd.f32 %v858, %v1146
        %v1148 = vpop.f32.mrf.mxu0
        %1149 = vmatprep.mubr.f32.mxu0 0.0
        %1150 = vmatmul.mubr.f32.gmra.mxu0 %v985
        %v1151 = vpop.f32.mrf.mxu0
        %v1152 = vadd.f32 %v863, %v1151
        %v1153 = vpop.f32.mrf.mxu0
        %1154 = vmatprep.mubr.f32.mxu0 0.0
        %1155 = vmatmul.mubr.f32.gmra.mxu0 %v987
        %v1156 = vpop.f32.mrf.mxu0
        %v1157 = vadd.f32 %v868, %v1156
        %v1158 = vpop.f32.mrf.mxu0
        %1159 = vmatprep.mubr.f32.mxu0 0.0
        %1160 = vmatmul.mubr.f32.gmra.mxu0 %v989
        %v1161 = vpop.f32.mrf.mxu0
        %v1162 = vadd.f32 %v873, %v1161
        %v1163 = vpop.f32.mrf.mxu0
        %1164 = vmatprep.mubr.f32.mxu0 0.0
        %1165 = vmatmul.mubr.f32.gmra.mxu0 %v991
        %v1166 = vpop.f32.mrf.mxu0
        %v1167 = vadd.f32 %v878, %v1166
        %v1168 = vpop.f32.mrf.mxu0
        %1169 = vmatprep.mubr.f32.mxu0 0.0
        %1170 = vmatmul.mubr.f32.gmra.mxu0 %v993
        %v1171 = vpop.f32.mrf.mxu0
        %v1172 = vadd.f32 %v883, %v1171
        %v1173 = vpop.f32.mrf.mxu0
        %1174 = vmatprep.mubr.f32.mxu0 0.0
        %1175 = vmatmul.mubr.f32.gmra.mxu0 %v995
        %v1176 = vpop.f32.mrf.mxu0
        %v1177 = vadd.f32 %v888, %v1176
        %v1178 = vpop.f32.mrf.mxu0
        %1179 = vmatprep.mubr.f32.mxu0 0.0
        %1180 = vmatmul.mubr.f32.gmra.mxu0 %v997
        %v1181 = vpop.f32.mrf.mxu0
        %v1182 = vadd.f32 %v893, %v1181
        %v1183 = vpop.f32.mrf.mxu0
        %1184 = vmatprep.mubr.f32.mxu0 0.0
        %1185 = vmatmul.mubr.f32.gmra.mxu0 %v999
        %v1186 = vpop.f32.mrf.mxu0
        %v1187 = vadd.f32 %v898, %v1186
        %v1188 = vpop.f32.mrf.mxu0
        %1189 = vmatprep.mubr.f32.mxu0 0.0
        %1190 = vmatmul.mubr.f32.gmra.mxu0 %v1001
        %v1191 = vpop.f32.mrf.mxu0
        %v1192 = vadd.f32 %v903, %v1191
        %v1193 = vpop.f32.mrf.mxu0
        %1194 = vmatprep.mubr.f32.mxu0 0.0
        %1195 = vmatmul.mubr.f32.gmra.mxu0 %v1003
        %v1196 = vpop.f32.mrf.mxu0
        %v1197 = vadd.f32 %v908, %v1196
        %v1198 = vpop.f32.mrf.mxu0
        %1199 = vmatprep.mubr.f32.mxu0 0.0
        %1200 = vmatmul.mubr.f32.gmra.mxu0 %v1005
        %v1201 = vpop.f32.mrf.mxu0
        %v1202 = vadd.f32 %v913, %v1201
        %v1203 = vpop.f32.mrf.mxu0
        %1204 = vmatprep.mubr.f32.mxu0 0.0
        %1205 = vmatmul.mubr.f32.gmra.mxu0 %v1007
        %v1206 = vpop.f32.mrf.mxu0
        %v1207 = vadd.f32 %v918, %v1206
        %v1208 = vpop.f32.mrf.mxu0
        %1209 = vmatprep.mubr.f32.mxu0 0.0
        %1210 = vmatmul.mubr.f32.gmra.mxu0 %v1009
        %v1211 = vpop.f32.mrf.mxu0
        %v1212 = vadd.f32 %v923, %v1211
        %v1213 = vpop.f32.mrf.mxu0
        %1214 = vmatprep.mubr.f32.mxu0 0.0
        %1215 = vmatmul.mubr.f32.gmra.mxu0 %v1011
        %v1216 = vpop.f32.mrf.mxu0
        %v1217 = vadd.f32 %v928, %v1216
        %v1218 = vpop.f32.mrf.mxu0
        %1219 = vmatprep.mubr.f32.mxu0 0.0
        %1220 = vmatmul.mubr.f32.gmra.mxu0 %v1013
        %v1221 = vpop.f32.mrf.mxu0
        %v1222 = vadd.f32 %v933, %v1221
        %v1223 = vpop.f32.mrf.mxu0
        %1224 = vmatprep.mubr.f32.mxu0 0.0
        %1225 = vmatmul.mubr.f32.gmra.mxu0 %v1015
        %v1226 = vpop.f32.mrf.mxu0
        %v1227 = vadd.f32 %v938, %v1226
        %v1228 = vpop.f32.mrf.mxu0
        %1229 = vmatprep.mubr.f32.mxu0 0.0
        %1230 = vmatmul.mubr.f32.gmra.mxu0 %v1017
        %v1231 = vpop.f32.mrf.mxu0
        %v1232 = vadd.f32 %v943, %v1231
        %v1233 = vpop.f32.mrf.mxu0
        %1234 = vmatprep.mubr.f32.mxu0 0.0
        %1235 = vmatmul.mubr.f32.gmra.mxu0 %v1019
        %v1236 = vpop.f32.mrf.mxu0
        %v1237 = vadd.f32 %v948, %v1236
        %v1238 = vpop.f32.mrf.mxu0
        %1239 = vmatprep.mubr.f32.mxu0 0.0
        %1240 = vmatmul.mubr.f32.gmra.mxu0 %v1021
        %v1241 = vpop.f32.mrf.mxu0
        %v1242 = vadd.f32 %v953, %v1241
        %v1243 = vpop.f32.mrf.mxu0
        %1244 = vmatprep.mubr.f32.mxu0 0.0
        %1245 = vmatmul.mubr.f32.gmra.mxu0 %v1023
        %v1246 = vpop.f32.mrf.mxu0
        %v1247 = vadd.f32 %v958, %v1246
        %v1248 = vpop.f32.mrf.mxu0
        %1249 = vdwg.mxu0
        %s1250 = scalar_lea.vmem [#allocation5], 32
        %v1251 = vld [vmem:[%s1250] sm:$0xff]
        %v1252 = vld [vmem:[%s1250 + $0x8] sm:$0xff]
        %v1253 = vld [vmem:[%s1250 + $0x10] sm:$0xff]
        %v1254 = vld [vmem:[%s1250 + $0x18] sm:$0xff]
        %v1255 = vsel %vm655, 0.0, 0
        %1257 = vmatprep.subr.mxu0 0.0
        %1258 = vmatpush1.msra.mxu0 0.0
        %1259 = vmatprep.subr.mxu0 0.0
        %1260 = vmatpush1.msra.mxu0 0.0
        %1261 = vmatprep.subr.mxu0 0.0
        %1262 = vmatpush1.msra.mxu0 0.0
        %1263 = vmatprep.subr.mxu0 0.0
        %1264 = vmatpush1.msra.mxu0 0.0
        %1265 = vmatprep.subr.mxu0 0.0
        %1266 = vmatpush1.msra.mxu0 0.0
        %1267 = vmatprep.subr.mxu0 0.0
        %1268 = vmatpush1.msra.mxu0 0.0
        %1269 = vmatprep.subr.mxu0 0.0
        %1270 = vmatpush1.msra.mxu0 0.0
        %1271 = vmatprep.subr.mxu0 0.0
        %1272 = vmatpush1.msra.mxu0 0.0
        %1273 = vmatprep.subr.mxu0 0.0
        %1274 = vmatpush1.msra.mxu0 0.0
        %1275 = vmatprep.subr.mxu0 0.0
        %1276 = vmatpush1.msra.mxu0 0.0
        %1277 = vmatprep.subr.mxu0 0.0
        %1278 = vmatpush1.msra.mxu0 0.0
        %1279 = vmatprep.subr.mxu0 0.0
        %1280 = vmatpush1.msra.mxu0 0.0
        %1281 = vmatprep.subr.mxu0 0.0
        %1282 = vmatpush1.msra.mxu0 %v1254
        %1283 = vmatprep.subr.mxu0 0.0
        %1284 = vmatpush1.msra.mxu0 %v1253
        %1285 = vmatprep.subr.mxu0 0.0
        %1286 = vmatpush1.msra.mxu0 %v1252
        %1287 = vmatprep.subr.mxu0 0.0
        %1288 = vmatpush1.msra.mxu0 %v1251
        %1289 = vmatprep.subr.mxu0 0.0
        %1290 = vmatpush2.msra.mxu0 0.0
        %1291 = vmatprep.subr.mxu0 0.0
        %1292 = vmatpush2.msra.mxu0 0.0
        %1293 = vmatprep.subr.mxu0 0.0
        %1294 = vmatpush2.msra.mxu0 0.0
        %1295 = vmatprep.subr.mxu0 0.0
        %1296 = vmatpush2.msra.mxu0 0.0
        %1297 = vmatprep.subr.mxu0 0.0
        %1298 = vmatpush2.msra.mxu0 0.0
        %1299 = vmatprep.subr.mxu0 0.0
        %1300 = vmatpush2.msra.mxu0 0.0
        %1301 = vmatprep.subr.mxu0 0.0
        %1302 = vmatpush2.msra.mxu0 0.0
        %1303 = vmatprep.subr.mxu0 0.0
        %1304 = vmatpush2.msra.mxu0 0.0
        %1305 = vmatprep.subr.mxu0 0.0
        %1306 = vmatpush2.msra.mxu0 0.0
        %1307 = vmatprep.subr.mxu0 0.0
        %1308 = vmatpush2.msra.mxu0 0.0
        %1309 = vmatprep.subr.mxu0 0.0
        %1310 = vmatpush2.msra.mxu0 0.0
        %1311 = vmatprep.subr.mxu0 0.0
        %1312 = vmatpush2.msra.mxu0 0.0
        %1313 = vmatprep.subr.mxu0 0.0
        %1314 = vmatpush2.msra.mxu0 0.0
        %1315 = vmatprep.subr.mxu0 0.0
        %1316 = vmatpush2.msra.mxu0 0.0
        %1317 = vmatprep.subr.mxu0 0.0
        %1318 = vmatpush2.msra.mxu0 0.0
        %1319 = vmatprep.subr.mxu0 0.0
        %1320 = vmatpush2.msra.mxu0 0.0
        %1321 = vmatprep.mubr.f32.mxu0 0.0
        %1322 = vmatmul.mubr.f32.gmra.mxu0 %v1255
        %v1323 = vpop.f32.mrf.mxu0
        %v1324 = vadd.f32 0.0, %v1323
        %v1325 = vpop.f32.mrf.mxu0
        %1326 = vmatprep.mubr.f32.mxu0 0.0
        %1327 = vmatmul.mubr.f32.gmra.mxu0 %v1255
        %v1328 = vpop.f32.mrf.mxu0
        %v1329 = vadd.f32 0.0, %v1328
        %v1330 = vpop.f32.mrf.mxu0
        %1331 = vmatprep.mubr.f32.mxu0 0.0
        %1332 = vmatmul.mubr.f32.gmra.mxu0 %v961
        %v1333 = vpop.f32.mrf.mxu0
        %v1334 = vadd.f32 0.0, %v1333
        %v1335 = vpop.f32.mrf.mxu0
        %1336 = vmatprep.mubr.f32.mxu0 0.0
        %1337 = vmatmul.mubr.f32.gmra.mxu0 %v963
        %v1338 = vpop.f32.mrf.mxu0
        %v1339 = vadd.f32 0.0, %v1338
        %v1340 = vpop.f32.mrf.mxu0
        %1341 = vmatprep.mubr.f32.mxu0 0.0
        %1342 = vmatmul.mubr.f32.gmra.mxu0 %v965
        %v1343 = vpop.f32.mrf.mxu0
        %v1344 = vadd.f32 0.0, %v1343
        %v1345 = vpop.f32.mrf.mxu0
        %1346 = vmatprep.mubr.f32.mxu0 0.0
        %1347 = vmatmul.mubr.f32.gmra.mxu0 %v967
        %v1348 = vpop.f32.mrf.mxu0
        %v1349 = vadd.f32 0.0, %v1348
        %v1350 = vpop.f32.mrf.mxu0
        %1351 = vmatprep.mubr.f32.mxu0 0.0
        %1352 = vmatmul.mubr.f32.gmra.mxu0 %v969
        %v1353 = vpop.f32.mrf.mxu0
        %v1354 = vadd.f32 0.0, %v1353
        %v1355 = vpop.f32.mrf.mxu0
        %1356 = vmatprep.mubr.f32.mxu0 0.0
        %1357 = vmatmul.mubr.f32.gmra.mxu0 %v971
        %v1358 = vpop.f32.mrf.mxu0
        %v1359 = vadd.f32 0.0, %v1358
        %v1360 = vpop.f32.mrf.mxu0
        %1361 = vmatprep.mubr.f32.mxu0 0.0
        %1362 = vmatmul.mubr.f32.gmra.mxu0 %v973
        %v1363 = vpop.f32.mrf.mxu0
        %v1364 = vadd.f32 0.0, %v1363
        %v1365 = vpop.f32.mrf.mxu0
        %1366 = vmatprep.mubr.f32.mxu0 0.0
        %1367 = vmatmul.mubr.f32.gmra.mxu0 %v975
        %v1368 = vpop.f32.mrf.mxu0
        %v1369 = vadd.f32 0.0, %v1368
        %v1370 = vpop.f32.mrf.mxu0
        %1371 = vmatprep.mubr.f32.mxu0 0.0
        %1372 = vmatmul.mubr.f32.gmra.mxu0 %v977
        %v1373 = vpop.f32.mrf.mxu0
        %v1374 = vadd.f32 0.0, %v1373
        %v1375 = vpop.f32.mrf.mxu0
        %1376 = vmatprep.mubr.f32.mxu0 0.0
        %1377 = vmatmul.mubr.f32.gmra.mxu0 %v979
        %v1378 = vpop.f32.mrf.mxu0
        %v1379 = vadd.f32 0.0, %v1378
        %v1380 = vpop.f32.mrf.mxu0
        %1381 = vmatprep.mubr.f32.mxu0 0.0
        %1382 = vmatmul.mubr.f32.gmra.mxu0 %v981
        %v1383 = vpop.f32.mrf.mxu0
        %v1384 = vadd.f32 0.0, %v1383
        %v1385 = vpop.f32.mrf.mxu0
        %1386 = vmatprep.mubr.f32.mxu0 0.0
        %1387 = vmatmul.mubr.f32.gmra.mxu0 %v983
        %v1388 = vpop.f32.mrf.mxu0
        %v1389 = vadd.f32 0.0, %v1388
        %v1390 = vpop.f32.mrf.mxu0
        %1391 = vmatprep.mubr.f32.mxu0 0.0
        %1392 = vmatmul.mubr.f32.gmra.mxu0 %v985
        %v1393 = vpop.f32.mrf.mxu0
        %v1394 = vadd.f32 0.0, %v1393
        %v1395 = vpop.f32.mrf.mxu0
        %1396 = vmatprep.mubr.f32.mxu0 0.0
        %1397 = vmatmul.mubr.f32.gmra.mxu0 %v987
        %v1398 = vpop.f32.mrf.mxu0
        %v1399 = vadd.f32 0.0, %v1398
        %v1400 = vpop.f32.mrf.mxu0
        %1401 = vmatprep.mubr.f32.mxu0 0.0
        %1402 = vmatmul.mubr.f32.gmra.mxu0 %v989
        %v1403 = vpop.f32.mrf.mxu0
        %v1404 = vadd.f32 0.0, %v1403
        %v1405 = vpop.f32.mrf.mxu0
        %1406 = vmatprep.mubr.f32.mxu0 0.0
        %1407 = vmatmul.mubr.f32.gmra.mxu0 %v991
        %v1408 = vpop.f32.mrf.mxu0
        %v1409 = vadd.f32 0.0, %v1408
        %v1410 = vpop.f32.mrf.mxu0
        %1411 = vmatprep.mubr.f32.mxu0 0.0
        %1412 = vmatmul.mubr.f32.gmra.mxu0 %v993
        %v1413 = vpop.f32.mrf.mxu0
        %v1414 = vadd.f32 0.0, %v1413
        %v1415 = vpop.f32.mrf.mxu0
        %1416 = vmatprep.mubr.f32.mxu0 0.0
        %1417 = vmatmul.mubr.f32.gmra.mxu0 %v995
        %v1418 = vpop.f32.mrf.mxu0
        %v1419 = vadd.f32 0.0, %v1418
        %v1420 = vpop.f32.mrf.mxu0
        %1421 = vmatprep.mubr.f32.mxu0 0.0
        %1422 = vmatmul.mubr.f32.gmra.mxu0 %v997
        %v1423 = vpop.f32.mrf.mxu0
        %v1424 = vadd.f32 0.0, %v1423
        %v1425 = vpop.f32.mrf.mxu0
        %1426 = vmatprep.mubr.f32.mxu0 0.0
        %1427 = vmatmul.mubr.f32.gmra.mxu0 %v999
        %v1428 = vpop.f32.mrf.mxu0
        %v1429 = vadd.f32 0.0, %v1428
        %v1430 = vpop.f32.mrf.mxu0
        %1431 = vmatprep.mubr.f32.mxu0 0.0
        %1432 = vmatmul.mubr.f32.gmra.mxu0 %v1001
        %v1433 = vpop.f32.mrf.mxu0
        %v1434 = vadd.f32 0.0, %v1433
        %v1435 = vpop.f32.mrf.mxu0
        %1436 = vmatprep.mubr.f32.mxu0 0.0
        %1437 = vmatmul.mubr.f32.gmra.mxu0 %v1003
        %v1438 = vpop.f32.mrf.mxu0
        %v1439 = vadd.f32 0.0, %v1438
        %v1440 = vpop.f32.mrf.mxu0
        %1441 = vmatprep.mubr.f32.mxu0 0.0
        %1442 = vmatmul.mubr.f32.gmra.mxu0 %v1005
        %v1443 = vpop.f32.mrf.mxu0
        %v1444 = vadd.f32 0.0, %v1443
        %v1445 = vpop.f32.mrf.mxu0
        %1446 = vmatprep.mubr.f32.mxu0 0.0
        %1447 = vmatmul.mubr.f32.gmra.mxu0 %v1007
        %v1448 = vpop.f32.mrf.mxu0
        %v1449 = vadd.f32 0.0, %v1448
        %v1450 = vpop.f32.mrf.mxu0
        %1451 = vmatprep.mubr.f32.mxu0 0.0
        %1452 = vmatmul.mubr.f32.gmra.mxu0 %v1009
        %v1453 = vpop.f32.mrf.mxu0
        %v1454 = vadd.f32 0.0, %v1453
        %v1455 = vpop.f32.mrf.mxu0
        %1456 = vmatprep.mubr.f32.mxu0 0.0
        %1457 = vmatmul.mubr.f32.gmra.mxu0 %v1011
        %v1458 = vpop.f32.mrf.mxu0
        %v1459 = vadd.f32 0.0, %v1458
        %v1460 = vpop.f32.mrf.mxu0
        %1461 = vmatprep.mubr.f32.mxu0 0.0
        %1462 = vmatmul.mubr.f32.gmra.mxu0 %v1013
        %v1463 = vpop.f32.mrf.mxu0
        %v1464 = vadd.f32 0.0, %v1463
        %v1465 = vpop.f32.mrf.mxu0
        %1466 = vmatprep.mubr.f32.mxu0 0.0
        %1467 = vmatmul.mubr.f32.gmra.mxu0 %v1015
        %v1468 = vpop.f32.mrf.mxu0
        %v1469 = vadd.f32 0.0, %v1468
        %v1470 = vpop.f32.mrf.mxu0
        %1471 = vmatprep.mubr.f32.mxu0 0.0
        %1472 = vmatmul.mubr.f32.gmra.mxu0 %v1017
        %v1473 = vpop.f32.mrf.mxu0
        %v1474 = vadd.f32 0.0, %v1473
        %v1475 = vpop.f32.mrf.mxu0
        %1476 = vmatprep.mubr.f32.mxu0 0.0
        %1477 = vmatmul.mubr.f32.gmra.mxu0 %v1019
        %v1478 = vpop.f32.mrf.mxu0
        %v1479 = vadd.f32 0.0, %v1478
        %v1480 = vpop.f32.mrf.mxu0
        %1481 = vdwg.mxu0
        %v1482 = vadd.f32 %v1092, %v1324
        %v1483 = vadd.f32 %v1097, %v1329
        %v1484 = vadd.f32 %v1102, %v1334
        %v1485 = vadd.f32 %v1107, %v1339
        %v1486 = vadd.f32 %v1112, %v1344
        %v1487 = vadd.f32 %v1117, %v1349
        %v1488 = vadd.f32 %v1122, %v1354
        %v1489 = vadd.f32 %v1127, %v1359
        %v1490 = vadd.f32 %v1132, %v1364
        %v1491 = vadd.f32 %v1137, %v1369
        %v1492 = vadd.f32 %v1142, %v1374
        %v1493 = vadd.f32 %v1147, %v1379
        %v1494 = vadd.f32 %v1152, %v1384
        %v1495 = vadd.f32 %v1157, %v1389
        %v1496 = vadd.f32 %v1162, %v1394
        %v1497 = vadd.f32 %v1167, %v1399
        %v1498 = vadd.f32 %v1172, %v1404
        %v1499 = vadd.f32 %v1177, %v1409
        %v1500 = vadd.f32 %v1182, %v1414
        %v1501 = vadd.f32 %v1187, %v1419
        %v1502 = vadd.f32 %v1192, %v1424
        %v1503 = vadd.f32 %v1197, %v1429
        %v1504 = vadd.f32 %v1202, %v1434
        %v1505 = vadd.f32 %v1207, %v1439
        %v1506 = vadd.f32 %v1212, %v1444
        %v1507 = vadd.f32 %v1217, %v1449
        %v1508 = vadd.f32 %v1222, %v1454
        %v1509 = vadd.f32 %v1227, %v1459
        %v1510 = vadd.f32 %v1232, %v1464
        %v1511 = vadd.f32 %v1237, %v1469
        %v1512 = vadd.f32 %v1242, %v1474
        %v1513 = vadd.f32 %v1247, %v1479
        %s1514 = scalar_lea.vmem [#allocation5], 64
        %v1515 = vld [vmem:[%s1514] sm:$0xff]
        %v1516 = vld [vmem:[%s1514 + $0x8] sm:$0xff]
        %v1517 = vld [vmem:[%s1514 + $0x10] sm:$0xff]
        %v1518 = vld [vmem:[%s1514 + $0x18] sm:$0xff]
        %v1519 = vsel %vm655, %v563, 0
        %v1522 = vsel %vm655, %v629, 0
        %v1524 = vsel %vm655, %v566, 0
        %v1527 = vsel %vm655, %v630, 0
        %v1529 = vsel %vm655, %v569, 0
        %v1532 = vsel %vm655, %v631, 0
        %v1534 = vsel %vm655, %v572, 0
        %v1537 = vsel %vm655, %v632, 0
        %v1539 = vsel %vm655, %v575, 0
        %v1542 = vsel %vm655, %v633, 0
        %v1544 = vsel %vm655, %v578, 0
        %v1547 = vsel %vm655, %v634, 0
        %v1549 = vsel %vm655, %v581, 0
        %v1552 = vsel %vm655, %v635, 0
        %v1554 = vsel %vm655, %v584, 0
        %v1557 = vsel %vm655, %v636, 0
        %v1559 = vsel %vm655, %v587, 0
        %v1562 = vsel %vm655, %v637, 0
        %v1564 = vsel %vm655, %v590, 0
        %v1567 = vsel %vm655, %v638, 0
        %v1569 = vsel %vm655, %v593, 0
        %v1572 = vsel %vm655, %v639, 0
        %v1574 = vsel %vm655, %v596, 0
        %v1577 = vsel %vm655, %v640, 0
        %v1579 = vsel %vm655, %v599, 0
        %v1582 = vsel %vm655, %v641, 0
        %v1584 = vsel %vm655, %v602, 0
        %v1587 = vsel %vm655, %v642, 0
        %v1589 = vsel %vm655, %v605, 0
        %v1592 = vsel %vm655, %v643, 0
        %v1594 = vsel %vm655, %v608, 0
        %v1597 = vsel %vm655, %v644, 0
        %1599 = vmatprep.subr.mxu0 0.0
        %1600 = vmatpush1.msra.mxu0 0.0
        %1601 = vmatprep.subr.mxu0 0.0
        %1602 = vmatpush1.msra.mxu0 0.0
        %1603 = vmatprep.subr.mxu0 0.0
        %1604 = vmatpush1.msra.mxu0 0.0
        %1605 = vmatprep.subr.mxu0 0.0
        %1606 = vmatpush1.msra.mxu0 0.0
        %1607 = vmatprep.subr.mxu0 0.0
        %1608 = vmatpush1.msra.mxu0 0.0
        %1609 = vmatprep.subr.mxu0 0.0
        %1610 = vmatpush1.msra.mxu0 0.0
        %1611 = vmatprep.subr.mxu0 0.0
        %1612 = vmatpush1.msra.mxu0 0.0
        %1613 = vmatprep.subr.mxu0 0.0
        %1614 = vmatpush1.msra.mxu0 0.0
        %1615 = vmatprep.subr.mxu0 0.0
        %1616 = vmatpush1.msra.mxu0 0.0
        %1617 = vmatprep.subr.mxu0 0.0
        %1618 = vmatpush1.msra.mxu0 0.0
        %1619 = vmatprep.subr.mxu0 0.0
        %1620 = vmatpush1.msra.mxu0 0.0
        %1621 = vmatprep.subr.mxu0 0.0
        %1622 = vmatpush1.msra.mxu0 0.0
        %1623 = vmatprep.subr.mxu0 0.0
        %1624 = vmatpush1.msra.mxu0 %v1518
        %1625 = vmatprep.subr.mxu0 0.0
        %1626 = vmatpush1.msra.mxu0 %v1517
        %1627 = vmatprep.subr.mxu0 0.0
        %1628 = vmatpush1.msra.mxu0 %v1516
        %1629 = vmatprep.subr.mxu0 0.0
        %1630 = vmatpush1.msra.mxu0 %v1515
        %1631 = vmatprep.subr.mxu0 0.0
        %1632 = vmatpush2.msra.mxu0 0.0
        %1633 = vmatprep.subr.mxu0 0.0
        %1634 = vmatpush2.msra.mxu0 0.0
        %1635 = vmatprep.subr.mxu0 0.0
        %1636 = vmatpush2.msra.mxu0 0.0
        %1637 = vmatprep.subr.mxu0 0.0
        %1638 = vmatpush2.msra.mxu0 0.0
        %1639 = vmatprep.subr.mxu0 0.0
        %1640 = vmatpush2.msra.mxu0 0.0
        %1641 = vmatprep.subr.mxu0 0.0
        %1642 = vmatpush2.msra.mxu0 0.0
        %1643 = vmatprep.subr.mxu0 0.0
        %1644 = vmatpush2.msra.mxu0 0.0
        %1645 = vmatprep.subr.mxu0 0.0
        %1646 = vmatpush2.msra.mxu0 0.0
        %1647 = vmatprep.subr.mxu0 0.0
        %1648 = vmatpush2.msra.mxu0 0.0
        %1649 = vmatprep.subr.mxu0 0.0
        %1650 = vmatpush2.msra.mxu0 0.0
        %1651 = vmatprep.subr.mxu0 0.0
        %1652 = vmatpush2.msra.mxu0 0.0
        %1653 = vmatprep.subr.mxu0 0.0
        %1654 = vmatpush2.msra.mxu0 0.0
        %1655 = vmatprep.subr.mxu0 0.0
        %1656 = vmatpush2.msra.mxu0 0.0
        %1657 = vmatprep.subr.mxu0 0.0
        %1658 = vmatpush2.msra.mxu0 0.0
        %1659 = vmatprep.subr.mxu0 0.0
        %1660 = vmatpush2.msra.mxu0 0.0
        %1661 = vmatprep.subr.mxu0 0.0
        %1662 = vmatpush2.msra.mxu0 0.0
        %1663 = vmatprep.mubr.f32.mxu0 0.0
        %1664 = vmatmul.mubr.f32.gmra.mxu0 %v1519
        %v1665 = vpop.f32.mrf.mxu0
        %v1666 = vadd.f32 0.0, %v1665
        %v1667 = vpop.f32.mrf.mxu0
        %1668 = vmatprep.mubr.f32.mxu0 0.0
        %1669 = vmatmul.mubr.f32.gmra.mxu0 %v1522
        %v1670 = vpop.f32.mrf.mxu0
        %v1671 = vadd.f32 0.0, %v1670
        %v1672 = vpop.f32.mrf.mxu0
        %1673 = vmatprep.mubr.f32.mxu0 0.0
        %1674 = vmatmul.mubr.f32.gmra.mxu0 %v1524
        %v1675 = vpop.f32.mrf.mxu0
        %v1676 = vadd.f32 0.0, %v1675
        %v1677 = vpop.f32.mrf.mxu0
        %1678 = vmatprep.mubr.f32.mxu0 0.0
        %1679 = vmatmul.mubr.f32.gmra.mxu0 %v1527
        %v1680 = vpop.f32.mrf.mxu0
        %v1681 = vadd.f32 0.0, %v1680
        %v1682 = vpop.f32.mrf.mxu0
        %1683 = vmatprep.mubr.f32.mxu0 0.0
        %1684 = vmatmul.mubr.f32.gmra.mxu0 %v1529
        %v1685 = vpop.f32.mrf.mxu0
        %v1686 = vadd.f32 0.0, %v1685
        %v1687 = vpop.f32.mrf.mxu0
        %1688 = vmatprep.mubr.f32.mxu0 0.0
        %1689 = vmatmul.mubr.f32.gmra.mxu0 %v1532
        %v1690 = vpop.f32.mrf.mxu0
        %v1691 = vadd.f32 0.0, %v1690
        %v1692 = vpop.f32.mrf.mxu0
        %1693 = vmatprep.mubr.f32.mxu0 0.0
        %1694 = vmatmul.mubr.f32.gmra.mxu0 %v1534
        %v1695 = vpop.f32.mrf.mxu0
        %v1696 = vadd.f32 0.0, %v1695
        %v1697 = vpop.f32.mrf.mxu0
        %1698 = vmatprep.mubr.f32.mxu0 0.0
        %1699 = vmatmul.mubr.f32.gmra.mxu0 %v1537
        %v1700 = vpop.f32.mrf.mxu0
        %v1701 = vadd.f32 0.0, %v1700
        %v1702 = vpop.f32.mrf.mxu0
        %1703 = vmatprep.mubr.f32.mxu0 0.0
        %1704 = vmatmul.mubr.f32.gmra.mxu0 %v1539
        %v1705 = vpop.f32.mrf.mxu0
        %v1706 = vadd.f32 0.0, %v1705
        %v1707 = vpop.f32.mrf.mxu0
        %1708 = vmatprep.mubr.f32.mxu0 0.0
        %1709 = vmatmul.mubr.f32.gmra.mxu0 %v1542
        %v1710 = vpop.f32.mrf.mxu0
        %v1711 = vadd.f32 0.0, %v1710
        %v1712 = vpop.f32.mrf.mxu0
        %1713 = vmatprep.mubr.f32.mxu0 0.0
        %1714 = vmatmul.mubr.f32.gmra.mxu0 %v1544
        %v1715 = vpop.f32.mrf.mxu0
        %v1716 = vadd.f32 0.0, %v1715
        %v1717 = vpop.f32.mrf.mxu0
        %1718 = vmatprep.mubr.f32.mxu0 0.0
        %1719 = vmatmul.mubr.f32.gmra.mxu0 %v1547
        %v1720 = vpop.f32.mrf.mxu0
        %v1721 = vadd.f32 0.0, %v1720
        %v1722 = vpop.f32.mrf.mxu0
        %1723 = vmatprep.mubr.f32.mxu0 0.0
        %1724 = vmatmul.mubr.f32.gmra.mxu0 %v1549
        %v1725 = vpop.f32.mrf.mxu0
        %v1726 = vadd.f32 0.0, %v1725
        %v1727 = vpop.f32.mrf.mxu0
        %1728 = vmatprep.mubr.f32.mxu0 0.0
        %1729 = vmatmul.mubr.f32.gmra.mxu0 %v1552
        %v1730 = vpop.f32.mrf.mxu0
        %v1731 = vadd.f32 0.0, %v1730
        %v1732 = vpop.f32.mrf.mxu0
        %1733 = vmatprep.mubr.f32.mxu0 0.0
        %1734 = vmatmul.mubr.f32.gmra.mxu0 %v1554
        %v1735 = vpop.f32.mrf.mxu0
        %v1736 = vadd.f32 0.0, %v1735
        %v1737 = vpop.f32.mrf.mxu0
        %1738 = vmatprep.mubr.f32.mxu0 0.0
        %1739 = vmatmul.mubr.f32.gmra.mxu0 %v1557
        %v1740 = vpop.f32.mrf.mxu0
        %v1741 = vadd.f32 0.0, %v1740
        %v1742 = vpop.f32.mrf.mxu0
        %1743 = vmatprep.mubr.f32.mxu0 0.0
        %1744 = vmatmul.mubr.f32.gmra.mxu0 %v1559
        %v1745 = vpop.f32.mrf.mxu0
        %v1746 = vadd.f32 0.0, %v1745
        %v1747 = vpop.f32.mrf.mxu0
        %1748 = vmatprep.mubr.f32.mxu0 0.0
        %1749 = vmatmul.mubr.f32.gmra.mxu0 %v1562
        %v1750 = vpop.f32.mrf.mxu0
        %v1751 = vadd.f32 0.0, %v1750
        %v1752 = vpop.f32.mrf.mxu0
        %1753 = vmatprep.mubr.f32.mxu0 0.0
        %1754 = vmatmul.mubr.f32.gmra.mxu0 %v1564
        %v1755 = vpop.f32.mrf.mxu0
        %v1756 = vadd.f32 0.0, %v1755
        %v1757 = vpop.f32.mrf.mxu0
        %1758 = vmatprep.mubr.f32.mxu0 0.0
        %1759 = vmatmul.mubr.f32.gmra.mxu0 %v1567
        %v1760 = vpop.f32.mrf.mxu0
        %v1761 = vadd.f32 0.0, %v1760
        %v1762 = vpop.f32.mrf.mxu0
        %1763 = vmatprep.mubr.f32.mxu0 0.0
        %1764 = vmatmul.mubr.f32.gmra.mxu0 %v1569
        %v1765 = vpop.f32.mrf.mxu0
        %v1766 = vadd.f32 0.0, %v1765
        %v1767 = vpop.f32.mrf.mxu0
        %1768 = vmatprep.mubr.f32.mxu0 0.0
        %1769 = vmatmul.mubr.f32.gmra.mxu0 %v1572
        %v1770 = vpop.f32.mrf.mxu0
        %v1771 = vadd.f32 0.0, %v1770
        %v1772 = vpop.f32.mrf.mxu0
        %1773 = vmatprep.mubr.f32.mxu0 0.0
        %1774 = vmatmul.mubr.f32.gmra.mxu0 %v1574
        %v1775 = vpop.f32.mrf.mxu0
        %v1776 = vadd.f32 0.0, %v1775
        %v1777 = vpop.f32.mrf.mxu0
        %1778 = vmatprep.mubr.f32.mxu0 0.0
        %1779 = vmatmul.mubr.f32.gmra.mxu0 %v1577
        %v1780 = vpop.f32.mrf.mxu0
        %v1781 = vadd.f32 0.0, %v1780
        %v1782 = vpop.f32.mrf.mxu0
        %1783 = vmatprep.mubr.f32.mxu0 0.0
        %1784 = vmatmul.mubr.f32.gmra.mxu0 %v1579
        %v1785 = vpop.f32.mrf.mxu0
        %v1786 = vadd.f32 0.0, %v1785
        %v1787 = vpop.f32.mrf.mxu0
        %1788 = vmatprep.mubr.f32.mxu0 0.0
        %1789 = vmatmul.mubr.f32.gmra.mxu0 %v1582
        %v1790 = vpop.f32.mrf.mxu0
        %v1791 = vadd.f32 0.0, %v1790
        %v1792 = vpop.f32.mrf.mxu0
        %1793 = vmatprep.mubr.f32.mxu0 0.0
        %1794 = vmatmul.mubr.f32.gmra.mxu0 %v1584
        %v1795 = vpop.f32.mrf.mxu0
        %v1796 = vadd.f32 0.0, %v1795
        %v1797 = vpop.f32.mrf.mxu0
        %1798 = vmatprep.mubr.f32.mxu0 0.0
        %1799 = vmatmul.mubr.f32.gmra.mxu0 %v1587
        %v1800 = vpop.f32.mrf.mxu0
        %v1801 = vadd.f32 0.0, %v1800
        %v1802 = vpop.f32.mrf.mxu0
        %1803 = vmatprep.mubr.f32.mxu0 0.0
        %1804 = vmatmul.mubr.f32.gmra.mxu0 %v1589
        %v1805 = vpop.f32.mrf.mxu0
        %v1806 = vadd.f32 0.0, %v1805
        %v1807 = vpop.f32.mrf.mxu0
        %1808 = vmatprep.mubr.f32.mxu0 0.0
        %1809 = vmatmul.mubr.f32.gmra.mxu0 %v1592
        %v1810 = vpop.f32.mrf.mxu0
        %v1811 = vadd.f32 0.0, %v1810
        %v1812 = vpop.f32.mrf.mxu0
        %1813 = vmatprep.mubr.f32.mxu0 0.0
        %1814 = vmatmul.mubr.f32.gmra.mxu0 %v1594
        %v1815 = vpop.f32.mrf.mxu0
        %v1816 = vadd.f32 0.0, %v1815
        %v1817 = vpop.f32.mrf.mxu0
        %1818 = vmatprep.mubr.f32.mxu0 0.0
        %1819 = vmatmul.mubr.f32.gmra.mxu0 %v1597
        %v1820 = vpop.f32.mrf.mxu0
        %v1821 = vadd.f32 0.0, %v1820
        %v1822 = vpop.f32.mrf.mxu0
        %1823 = vdwg.mxu0
        %v1824 = vadd.f32 %v1482, %v1666
        %v1825 = vadd.f32 %v1483, %v1671
        %v1826 = vadd.f32 %v1484, %v1676
        %v1827 = vadd.f32 %v1485, %v1681
        %v1828 = vadd.f32 %v1486, %v1686
        %v1829 = vadd.f32 %v1487, %v1691
        %v1830 = vadd.f32 %v1488, %v1696
        %v1831 = vadd.f32 %v1489, %v1701
        %v1832 = vadd.f32 %v1490, %v1706
        %v1833 = vadd.f32 %v1491, %v1711
        %v1834 = vadd.f32 %v1492, %v1716
        %v1835 = vadd.f32 %v1493, %v1721
        %v1836 = vadd.f32 %v1494, %v1726
        %v1837 = vadd.f32 %v1495, %v1731
        %v1838 = vadd.f32 %v1496, %v1736
        %v1839 = vadd.f32 %v1497, %v1741
        %v1840 = vadd.f32 %v1498, %v1746
        %v1841 = vadd.f32 %v1499, %v1751
        %v1842 = vadd.f32 %v1500, %v1756
        %v1843 = vadd.f32 %v1501, %v1761
        %v1844 = vadd.f32 %v1502, %v1766
        %v1845 = vadd.f32 %v1503, %v1771
        %v1846 = vadd.f32 %v1504, %v1776
        %v1847 = vadd.f32 %v1505, %v1781
        %v1848 = vadd.f32 %v1506, %v1786
        %v1849 = vadd.f32 %v1507, %v1791
        %v1850 = vadd.f32 %v1508, %v1796
        %v1851 = vadd.f32 %v1509, %v1801
        %v1852 = vadd.f32 %v1510, %v1806
        %v1853 = vadd.f32 %v1511, %v1811
        %v1854 = vadd.f32 %v1512, %v1816
        %v1855 = vadd.f32 %v1513, %v1821
        %s1856 = scalar_lea.vmem [#allocation5], 96
        %v1857 = vld [vmem:[%s1856] sm:$0xff]
        %v1858 = vld [vmem:[%s1856 + $0x8] sm:$0xff]
        %v1859 = vld [vmem:[%s1856 + $0x10] sm:$0xff]
        %v1860 = vld [vmem:[%s1856 + $0x18] sm:$0xff]
        %v1862 = vsel %vm655, %v560, 0
        %v1864 = vsel %vm655, %v526, 0
        %1866 = vmatprep.subr.mxu0 0.0
        %1867 = vmatpush1.msra.mxu0 0.0
        %1868 = vmatprep.subr.mxu0 0.0
        %1869 = vmatpush1.msra.mxu0 0.0
        %1870 = vmatprep.subr.mxu0 0.0
        %1871 = vmatpush1.msra.mxu0 0.0
        %1872 = vmatprep.subr.mxu0 0.0
        %1873 = vmatpush1.msra.mxu0 0.0
        %1874 = vmatprep.subr.mxu0 0.0
        %1875 = vmatpush1.msra.mxu0 0.0
        %1876 = vmatprep.subr.mxu0 0.0
        %1877 = vmatpush1.msra.mxu0 0.0
        %1878 = vmatprep.subr.mxu0 0.0
        %1879 = vmatpush1.msra.mxu0 0.0
        %1880 = vmatprep.subr.mxu0 0.0
        %1881 = vmatpush1.msra.mxu0 0.0
        %1882 = vmatprep.subr.mxu0 0.0
        %1883 = vmatpush1.msra.mxu0 0.0
        %1884 = vmatprep.subr.mxu0 0.0
        %1885 = vmatpush1.msra.mxu0 0.0
        %1886 = vmatprep.subr.mxu0 0.0
        %1887 = vmatpush1.msra.mxu0 0.0
        %1888 = vmatprep.subr.mxu0 0.0
        %1889 = vmatpush1.msra.mxu0 0.0
        %1890 = vmatprep.subr.mxu0 0.0
        %1891 = vmatpush1.msra.mxu0 %v1860
        %1892 = vmatprep.subr.mxu0 0.0
        %1893 = vmatpush1.msra.mxu0 %v1859
        %1894 = vmatprep.subr.mxu0 0.0
        %1895 = vmatpush1.msra.mxu0 %v1858
        %1896 = vmatprep.subr.mxu0 0.0
        %1897 = vmatpush1.msra.mxu0 %v1857
        %1898 = vmatprep.subr.mxu0 0.0
        %1899 = vmatpush2.msra.mxu0 0.0
        %1900 = vmatprep.subr.mxu0 0.0
        %1901 = vmatpush2.msra.mxu0 0.0
        %1902 = vmatprep.subr.mxu0 0.0
        %1903 = vmatpush2.msra.mxu0 0.0
        %1904 = vmatprep.subr.mxu0 0.0
        %1905 = vmatpush2.msra.mxu0 0.0
        %1906 = vmatprep.subr.mxu0 0.0
        %1907 = vmatpush2.msra.mxu0 0.0
        %1908 = vmatprep.subr.mxu0 0.0
        %1909 = vmatpush2.msra.mxu0 0.0
        %1910 = vmatprep.subr.mxu0 0.0
        %1911 = vmatpush2.msra.mxu0 0.0
        %1912 = vmatprep.subr.mxu0 0.0
        %1913 = vmatpush2.msra.mxu0 0.0
        %1914 = vmatprep.subr.mxu0 0.0
        %1915 = vmatpush2.msra.mxu0 0.0
        %1916 = vmatprep.subr.mxu0 0.0
        %1917 = vmatpush2.msra.mxu0 0.0
        %1918 = vmatprep.subr.mxu0 0.0
        %1919 = vmatpush2.msra.mxu0 0.0
        %1920 = vmatprep.subr.mxu0 0.0
        %1921 = vmatpush2.msra.mxu0 0.0
        %1922 = vmatprep.subr.mxu0 0.0
        %1923 = vmatpush2.msra.mxu0 0.0
        %1924 = vmatprep.subr.mxu0 0.0
        %1925 = vmatpush2.msra.mxu0 0.0
        %1926 = vmatprep.subr.mxu0 0.0
        %1927 = vmatpush2.msra.mxu0 0.0
        %1928 = vmatprep.subr.mxu0 0.0
        %1929 = vmatpush2.msra.mxu0 0.0
        %1930 = vmatprep.mubr.f32.mxu0 0.0
        %1931 = vmatmul.mubr.f32.gmra.mxu0 %v662
        %v1932 = vpop.f32.mrf.mxu0
        %v1933 = vadd.f32 0.0, %v1932
        %v1934 = vpop.f32.mrf.mxu0
        %1935 = vmatprep.mubr.f32.mxu0 0.0
        %1936 = vmatmul.mubr.f32.gmra.mxu0 %v664
        %v1937 = vpop.f32.mrf.mxu0
        %v1938 = vadd.f32 0.0, %v1937
        %v1939 = vpop.f32.mrf.mxu0
        %1940 = vmatprep.mubr.f32.mxu0 0.0
        %1941 = vmatmul.mubr.f32.gmra.mxu0 %v667
        %v1942 = vpop.f32.mrf.mxu0
        %v1943 = vadd.f32 0.0, %v1942
        %v1944 = vpop.f32.mrf.mxu0
        %1945 = vmatprep.mubr.f32.mxu0 0.0
        %1946 = vmatmul.mubr.f32.gmra.mxu0 %v669
        %v1947 = vpop.f32.mrf.mxu0
        %v1948 = vadd.f32 0.0, %v1947
        %v1949 = vpop.f32.mrf.mxu0
        %1950 = vmatprep.mubr.f32.mxu0 0.0
        %1951 = vmatmul.mubr.f32.gmra.mxu0 %v672
        %v1952 = vpop.f32.mrf.mxu0
        %v1953 = vadd.f32 0.0, %v1952
        %v1954 = vpop.f32.mrf.mxu0
        %1955 = vmatprep.mubr.f32.mxu0 0.0
        %1956 = vmatmul.mubr.f32.gmra.mxu0 %v674
        %v1957 = vpop.f32.mrf.mxu0
        %v1958 = vadd.f32 0.0, %v1957
        %v1959 = vpop.f32.mrf.mxu0
        %1960 = vmatprep.mubr.f32.mxu0 0.0
        %1961 = vmatmul.mubr.f32.gmra.mxu0 %v677
        %v1962 = vpop.f32.mrf.mxu0
        %v1963 = vadd.f32 0.0, %v1962
        %v1964 = vpop.f32.mrf.mxu0
        %1965 = vmatprep.mubr.f32.mxu0 0.0
        %1966 = vmatmul.mubr.f32.gmra.mxu0 %v679
        %v1967 = vpop.f32.mrf.mxu0
        %v1968 = vadd.f32 0.0, %v1967
        %v1969 = vpop.f32.mrf.mxu0
        %1970 = vmatprep.mubr.f32.mxu0 0.0
        %1971 = vmatmul.mubr.f32.gmra.mxu0 %v682
        %v1972 = vpop.f32.mrf.mxu0
        %v1973 = vadd.f32 0.0, %v1972
        %v1974 = vpop.f32.mrf.mxu0
        %1975 = vmatprep.mubr.f32.mxu0 0.0
        %1976 = vmatmul.mubr.f32.gmra.mxu0 %v684
        %v1977 = vpop.f32.mrf.mxu0
        %v1978 = vadd.f32 0.0, %v1977
        %v1979 = vpop.f32.mrf.mxu0
        %1980 = vmatprep.mubr.f32.mxu0 0.0
        %1981 = vmatmul.mubr.f32.gmra.mxu0 %v687
        %v1982 = vpop.f32.mrf.mxu0
        %v1983 = vadd.f32 0.0, %v1982
        %v1984 = vpop.f32.mrf.mxu0
        %1985 = vmatprep.mubr.f32.mxu0 0.0
        %1986 = vmatmul.mubr.f32.gmra.mxu0 %v689
        %v1987 = vpop.f32.mrf.mxu0
        %v1988 = vadd.f32 0.0, %v1987
        %v1989 = vpop.f32.mrf.mxu0
        %1990 = vmatprep.mubr.f32.mxu0 0.0
        %1991 = vmatmul.mubr.f32.gmra.mxu0 %v692
        %v1992 = vpop.f32.mrf.mxu0
        %v1993 = vadd.f32 0.0, %v1992
        %v1994 = vpop.f32.mrf.mxu0
        %1995 = vmatprep.mubr.f32.mxu0 0.0
        %1996 = vmatmul.mubr.f32.gmra.mxu0 %v694
        %v1997 = vpop.f32.mrf.mxu0
        %v1998 = vadd.f32 0.0, %v1997
        %v1999 = vpop.f32.mrf.mxu0
        %2000 = vmatprep.mubr.f32.mxu0 0.0
        %2001 = vmatmul.mubr.f32.gmra.mxu0 %v697
        %v2002 = vpop.f32.mrf.mxu0
        %v2003 = vadd.f32 0.0, %v2002
        %v2004 = vpop.f32.mrf.mxu0
        %2005 = vmatprep.mubr.f32.mxu0 0.0
        %2006 = vmatmul.mubr.f32.gmra.mxu0 %v699
        %v2007 = vpop.f32.mrf.mxu0
        %v2008 = vadd.f32 0.0, %v2007
        %v2009 = vpop.f32.mrf.mxu0
        %2010 = vmatprep.mubr.f32.mxu0 0.0
        %2011 = vmatmul.mubr.f32.gmra.mxu0 %v702
        %v2012 = vpop.f32.mrf.mxu0
        %v2013 = vadd.f32 0.0, %v2012
        %v2014 = vpop.f32.mrf.mxu0
        %2015 = vmatprep.mubr.f32.mxu0 0.0
        %2016 = vmatmul.mubr.f32.gmra.mxu0 %v704
        %v2017 = vpop.f32.mrf.mxu0
        %v2018 = vadd.f32 0.0, %v2017
        %v2019 = vpop.f32.mrf.mxu0
        %2020 = vmatprep.mubr.f32.mxu0 0.0
        %2021 = vmatmul.mubr.f32.gmra.mxu0 %v707
        %v2022 = vpop.f32.mrf.mxu0
        %v2023 = vadd.f32 0.0, %v2022
        %v2024 = vpop.f32.mrf.mxu0
        %2025 = vmatprep.mubr.f32.mxu0 0.0
        %2026 = vmatmul.mubr.f32.gmra.mxu0 %v709
        %v2027 = vpop.f32.mrf.mxu0
        %v2028 = vadd.f32 0.0, %v2027
        %v2029 = vpop.f32.mrf.mxu0
        %2030 = vmatprep.mubr.f32.mxu0 0.0
        %2031 = vmatmul.mubr.f32.gmra.mxu0 %v712
        %v2032 = vpop.f32.mrf.mxu0
        %v2033 = vadd.f32 0.0, %v2032
        %v2034 = vpop.f32.mrf.mxu0
        %2035 = vmatprep.mubr.f32.mxu0 0.0
        %2036 = vmatmul.mubr.f32.gmra.mxu0 %v714
        %v2037 = vpop.f32.mrf.mxu0
        %v2038 = vadd.f32 0.0, %v2037
        %v2039 = vpop.f32.mrf.mxu0
        %2040 = vmatprep.mubr.f32.mxu0 0.0
        %2041 = vmatmul.mubr.f32.gmra.mxu0 %v717
        %v2042 = vpop.f32.mrf.mxu0
        %v2043 = vadd.f32 0.0, %v2042
        %v2044 = vpop.f32.mrf.mxu0
        %2045 = vmatprep.mubr.f32.mxu0 0.0
        %2046 = vmatmul.mubr.f32.gmra.mxu0 %v719
        %v2047 = vpop.f32.mrf.mxu0
        %v2048 = vadd.f32 0.0, %v2047
        %v2049 = vpop.f32.mrf.mxu0
        %2050 = vmatprep.mubr.f32.mxu0 0.0
        %2051 = vmatmul.mubr.f32.gmra.mxu0 %v722
        %v2052 = vpop.f32.mrf.mxu0
        %v2053 = vadd.f32 0.0, %v2052
        %v2054 = vpop.f32.mrf.mxu0
        %2055 = vmatprep.mubr.f32.mxu0 0.0
        %2056 = vmatmul.mubr.f32.gmra.mxu0 %v724
        %v2057 = vpop.f32.mrf.mxu0
        %v2058 = vadd.f32 0.0, %v2057
        %v2059 = vpop.f32.mrf.mxu0
        %2060 = vmatprep.mubr.f32.mxu0 0.0
        %2061 = vmatmul.mubr.f32.gmra.mxu0 %v727
        %v2062 = vpop.f32.mrf.mxu0
        %v2063 = vadd.f32 0.0, %v2062
        %v2064 = vpop.f32.mrf.mxu0
        %2065 = vmatprep.mubr.f32.mxu0 0.0
        %2066 = vmatmul.mubr.f32.gmra.mxu0 %v729
        %v2067 = vpop.f32.mrf.mxu0
        %v2068 = vadd.f32 0.0, %v2067
        %v2069 = vpop.f32.mrf.mxu0
        %2070 = vmatprep.mubr.f32.mxu0 0.0
        %2071 = vmatmul.mubr.f32.gmra.mxu0 %v732
        %v2072 = vpop.f32.mrf.mxu0
        %v2073 = vadd.f32 0.0, %v2072
        %v2074 = vpop.f32.mrf.mxu0
        %2075 = vmatprep.mubr.f32.mxu0 0.0
        %2076 = vmatmul.mubr.f32.gmra.mxu0 %v734
        %v2077 = vpop.f32.mrf.mxu0
        %v2078 = vadd.f32 0.0, %v2077
        %v2079 = vpop.f32.mrf.mxu0
        %2080 = vmatprep.mubr.f32.mxu0 0.0
        %2081 = vmatmul.mubr.f32.gmra.mxu0 %v1862
        %v2082 = vpop.f32.mrf.mxu0
        %v2083 = vadd.f32 0.0, %v2082
        %v2084 = vpop.f32.mrf.mxu0
        %2085 = vmatprep.mubr.f32.mxu0 0.0
        %2086 = vmatmul.mubr.f32.gmra.mxu0 %v1864
        %v2087 = vpop.f32.mrf.mxu0
        %v2088 = vadd.f32 0.0, %v2087
        %v2089 = vpop.f32.mrf.mxu0
        %2090 = vdwg.mxu0
        %v2091 = vadd.f32 %v1824, %v1933
        %v2092 = vadd.f32 %v1825, %v1938
        %v2093 = vadd.f32 %v1826, %v1943
        %v2094 = vadd.f32 %v1827, %v1948
        %v2095 = vadd.f32 %v1828, %v1953
        %v2096 = vadd.f32 %v1829, %v1958
        %v2097 = vadd.f32 %v1830, %v1963
        %v2098 = vadd.f32 %v1831, %v1968
        %v2099 = vadd.f32 %v1832, %v1973
        %v2100 = vadd.f32 %v1833, %v1978
        %v2101 = vadd.f32 %v1834, %v1983
        %v2102 = vadd.f32 %v1835, %v1988
        %v2103 = vadd.f32 %v1836, %v1993
        %v2104 = vadd.f32 %v1837, %v1998
        %v2105 = vadd.f32 %v1838, %v2003
        %v2106 = vadd.f32 %v1839, %v2008
        %v2107 = vadd.f32 %v1840, %v2013
        %v2108 = vadd.f32 %v1841, %v2018
        %v2109 = vadd.f32 %v1842, %v2023
        %v2110 = vadd.f32 %v1843, %v2028
        %v2111 = vadd.f32 %v1844, %v2033
        %v2112 = vadd.f32 %v1845, %v2038
        %v2113 = vadd.f32 %v1846, %v2043
        %v2114 = vadd.f32 %v1847, %v2048
        %v2115 = vadd.f32 %v1848, %v2053
        %v2116 = vadd.f32 %v1849, %v2058
        %v2117 = vadd.f32 %v1850, %v2063
        %v2118 = vadd.f32 %v1851, %v2068
        %v2119 = vadd.f32 %v1852, %v2073
        %v2120 = vadd.f32 %v1853, %v2078
        %v2121 = vadd.f32 %v1854, %v2083
        %v2122 = vadd.f32 %v1855, %v2088
        %s2123 = scalar_lea.vmem [#allocation5], 160
        %v2124 = vld [vmem:[%s2123] sm:$0xff]
        %v2125 = vld [vmem:[%s2123 + $0x8] sm:$0xff]
        %v2126 = vld [vmem:[%s2123 + $0x10] sm:$0xff]
        %v2127 = vld [vmem:[%s2123 + $0x18] sm:$0xff]
        %v2128 = vsel %vm655, %v611, 0
        %v2131 = vsel %vm655, %v645, 0
        %2133 = vmatprep.subr.mxu0 0.0
        %2134 = vmatpush1.msra.mxu0 0.0
        %2135 = vmatprep.subr.mxu0 0.0
        %2136 = vmatpush1.msra.mxu0 0.0
        %2137 = vmatprep.subr.mxu0 0.0
        %2138 = vmatpush1.msra.mxu0 0.0
        %2139 = vmatprep.subr.mxu0 0.0
        %2140 = vmatpush1.msra.mxu0 0.0
        %2141 = vmatprep.subr.mxu0 0.0
        %2142 = vmatpush1.msra.mxu0 0.0
        %2143 = vmatprep.subr.mxu0 0.0
        %2144 = vmatpush1.msra.mxu0 0.0
        %2145 = vmatprep.subr.mxu0 0.0
        %2146 = vmatpush1.msra.mxu0 0.0
        %2147 = vmatprep.subr.mxu0 0.0
        %2148 = vmatpush1.msra.mxu0 0.0
        %2149 = vmatprep.subr.mxu0 0.0
        %2150 = vmatpush1.msra.mxu0 0.0
        %2151 = vmatprep.subr.mxu0 0.0
        %2152 = vmatpush1.msra.mxu0 0.0
        %2153 = vmatprep.subr.mxu0 0.0
        %2154 = vmatpush1.msra.mxu0 0.0
        %2155 = vmatprep.subr.mxu0 0.0
        %2156 = vmatpush1.msra.mxu0 0.0
        %2157 = vmatprep.subr.mxu0 0.0
        %2158 = vmatpush1.msra.mxu0 %v2127
        %2159 = vmatprep.subr.mxu0 0.0
        %2160 = vmatpush1.msra.mxu0 %v2126
        %2161 = vmatprep.subr.mxu0 0.0
        %2162 = vmatpush1.msra.mxu0 %v2125
        %2163 = vmatprep.subr.mxu0 0.0
        %2164 = vmatpush1.msra.mxu0 %v2124
        %2165 = vmatprep.subr.mxu0 0.0
        %2166 = vmatpush2.msra.mxu0 0.0
        %2167 = vmatprep.subr.mxu0 0.0
        %2168 = vmatpush2.msra.mxu0 0.0
        %2169 = vmatprep.subr.mxu0 0.0
        %2170 = vmatpush2.msra.mxu0 0.0
        %2171 = vmatprep.subr.mxu0 0.0
        %2172 = vmatpush2.msra.mxu0 0.0
        %2173 = vmatprep.subr.mxu0 0.0
        %2174 = vmatpush2.msra.mxu0 0.0
        %2175 = vmatprep.subr.mxu0 0.0
        %2176 = vmatpush2.msra.mxu0 0.0
        %2177 = vmatprep.subr.mxu0 0.0
        %2178 = vmatpush2.msra.mxu0 0.0
        %2179 = vmatprep.subr.mxu0 0.0
        %2180 = vmatpush2.msra.mxu0 0.0
        %2181 = vmatprep.subr.mxu0 0.0
        %2182 = vmatpush2.msra.mxu0 0.0
        %2183 = vmatprep.subr.mxu0 0.0
        %2184 = vmatpush2.msra.mxu0 0.0
        %2185 = vmatprep.subr.mxu0 0.0
        %2186 = vmatpush2.msra.mxu0 0.0
        %2187 = vmatprep.subr.mxu0 0.0
        %2188 = vmatpush2.msra.mxu0 0.0
        %2189 = vmatprep.subr.mxu0 0.0
        %2190 = vmatpush2.msra.mxu0 0.0
        %2191 = vmatprep.subr.mxu0 0.0
        %2192 = vmatpush2.msra.mxu0 0.0
        %2193 = vmatprep.subr.mxu0 0.0
        %2194 = vmatpush2.msra.mxu0 0.0
        %2195 = vmatprep.subr.mxu0 0.0
        %2196 = vmatpush2.msra.mxu0 0.0
        %2197 = vmatprep.mubr.f32.mxu0 0.0
        %2198 = vmatmul.mubr.f32.gmra.mxu0 %v1524
        %v2199 = vpop.f32.mrf.mxu0
        %v2200 = vadd.f32 0.0, %v2199
        %v2201 = vpop.f32.mrf.mxu0
        %2202 = vmatprep.mubr.f32.mxu0 0.0
        %2203 = vmatmul.mubr.f32.gmra.mxu0 %v1527
        %v2204 = vpop.f32.mrf.mxu0
        %v2205 = vadd.f32 0.0, %v2204
        %v2206 = vpop.f32.mrf.mxu0
        %2207 = vmatprep.mubr.f32.mxu0 0.0
        %2208 = vmatmul.mubr.f32.gmra.mxu0 %v1529
        %v2209 = vpop.f32.mrf.mxu0
        %v2210 = vadd.f32 0.0, %v2209
        %v2211 = vpop.f32.mrf.mxu0
        %2212 = vmatprep.mubr.f32.mxu0 0.0
        %2213 = vmatmul.mubr.f32.gmra.mxu0 %v1532
        %v2214 = vpop.f32.mrf.mxu0
        %v2215 = vadd.f32 0.0, %v2214
        %v2216 = vpop.f32.mrf.mxu0
        %2217 = vmatprep.mubr.f32.mxu0 0.0
        %2218 = vmatmul.mubr.f32.gmra.mxu0 %v1534
        %v2219 = vpop.f32.mrf.mxu0
        %v2220 = vadd.f32 0.0, %v2219
        %v2221 = vpop.f32.mrf.mxu0
        %2222 = vmatprep.mubr.f32.mxu0 0.0
        %2223 = vmatmul.mubr.f32.gmra.mxu0 %v1537
        %v2224 = vpop.f32.mrf.mxu0
        %v2225 = vadd.f32 0.0, %v2224
        %v2226 = vpop.f32.mrf.mxu0
        %2227 = vmatprep.mubr.f32.mxu0 0.0
        %2228 = vmatmul.mubr.f32.gmra.mxu0 %v1539
        %v2229 = vpop.f32.mrf.mxu0
        %v2230 = vadd.f32 0.0, %v2229
        %v2231 = vpop.f32.mrf.mxu0
        %2232 = vmatprep.mubr.f32.mxu0 0.0
        %2233 = vmatmul.mubr.f32.gmra.mxu0 %v1542
        %v2234 = vpop.f32.mrf.mxu0
        %v2235 = vadd.f32 0.0, %v2234
        %v2236 = vpop.f32.mrf.mxu0
        %2237 = vmatprep.mubr.f32.mxu0 0.0
        %2238 = vmatmul.mubr.f32.gmra.mxu0 %v1544
        %v2239 = vpop.f32.mrf.mxu0
        %v2240 = vadd.f32 0.0, %v2239
        %v2241 = vpop.f32.mrf.mxu0
        %2242 = vmatprep.mubr.f32.mxu0 0.0
        %2243 = vmatmul.mubr.f32.gmra.mxu0 %v1547
        %v2244 = vpop.f32.mrf.mxu0
        %v2245 = vadd.f32 0.0, %v2244
        %v2246 = vpop.f32.mrf.mxu0
        %2247 = vmatprep.mubr.f32.mxu0 0.0
        %2248 = vmatmul.mubr.f32.gmra.mxu0 %v1549
        %v2249 = vpop.f32.mrf.mxu0
        %v2250 = vadd.f32 0.0, %v2249
        %v2251 = vpop.f32.mrf.mxu0
        %2252 = vmatprep.mubr.f32.mxu0 0.0
        %2253 = vmatmul.mubr.f32.gmra.mxu0 %v1552
        %v2254 = vpop.f32.mrf.mxu0
        %v2255 = vadd.f32 0.0, %v2254
        %v2256 = vpop.f32.mrf.mxu0
        %2257 = vmatprep.mubr.f32.mxu0 0.0
        %2258 = vmatmul.mubr.f32.gmra.mxu0 %v1554
        %v2259 = vpop.f32.mrf.mxu0
        %v2260 = vadd.f32 0.0, %v2259
        %v2261 = vpop.f32.mrf.mxu0
        %2262 = vmatprep.mubr.f32.mxu0 0.0
        %2263 = vmatmul.mubr.f32.gmra.mxu0 %v1557
        %v2264 = vpop.f32.mrf.mxu0
        %v2265 = vadd.f32 0.0, %v2264
        %v2266 = vpop.f32.mrf.mxu0
        %2267 = vmatprep.mubr.f32.mxu0 0.0
        %2268 = vmatmul.mubr.f32.gmra.mxu0 %v1559
        %v2269 = vpop.f32.mrf.mxu0
        %v2270 = vadd.f32 0.0, %v2269
        %v2271 = vpop.f32.mrf.mxu0
        %2272 = vmatprep.mubr.f32.mxu0 0.0
        %2273 = vmatmul.mubr.f32.gmra.mxu0 %v1562
        %v2274 = vpop.f32.mrf.mxu0
        %v2275 = vadd.f32 0.0, %v2274
        %v2276 = vpop.f32.mrf.mxu0
        %2277 = vmatprep.mubr.f32.mxu0 0.0
        %2278 = vmatmul.mubr.f32.gmra.mxu0 %v1564
        %v2279 = vpop.f32.mrf.mxu0
        %v2280 = vadd.f32 0.0, %v2279
        %v2281 = vpop.f32.mrf.mxu0
        %2282 = vmatprep.mubr.f32.mxu0 0.0
        %2283 = vmatmul.mubr.f32.gmra.mxu0 %v1567
        %v2284 = vpop.f32.mrf.mxu0
        %v2285 = vadd.f32 0.0, %v2284
        %v2286 = vpop.f32.mrf.mxu0
        %2287 = vmatprep.mubr.f32.mxu0 0.0
        %2288 = vmatmul.mubr.f32.gmra.mxu0 %v1569
        %v2289 = vpop.f32.mrf.mxu0
        %v2290 = vadd.f32 0.0, %v2289
        %v2291 = vpop.f32.mrf.mxu0
        %2292 = vmatprep.mubr.f32.mxu0 0.0
        %2293 = vmatmul.mubr.f32.gmra.mxu0 %v1572
        %v2294 = vpop.f32.mrf.mxu0
        %v2295 = vadd.f32 0.0, %v2294
        %v2296 = vpop.f32.mrf.mxu0
        %2297 = vmatprep.mubr.f32.mxu0 0.0
        %2298 = vmatmul.mubr.f32.gmra.mxu0 %v1574
        %v2299 = vpop.f32.mrf.mxu0
        %v2300 = vadd.f32 0.0, %v2299
        %v2301 = vpop.f32.mrf.mxu0
        %2302 = vmatprep.mubr.f32.mxu0 0.0
        %2303 = vmatmul.mubr.f32.gmra.mxu0 %v1577
        %v2304 = vpop.f32.mrf.mxu0
        %v2305 = vadd.f32 0.0, %v2304
        %v2306 = vpop.f32.mrf.mxu0
        %2307 = vmatprep.mubr.f32.mxu0 0.0
        %2308 = vmatmul.mubr.f32.gmra.mxu0 %v1579
        %v2309 = vpop.f32.mrf.mxu0
        %v2310 = vadd.f32 0.0, %v2309
        %v2311 = vpop.f32.mrf.mxu0
        %2312 = vmatprep.mubr.f32.mxu0 0.0
        %2313 = vmatmul.mubr.f32.gmra.mxu0 %v1582
        %v2314 = vpop.f32.mrf.mxu0
        %v2315 = vadd.f32 0.0, %v2314
        %v2316 = vpop.f32.mrf.mxu0
        %2317 = vmatprep.mubr.f32.mxu0 0.0
        %2318 = vmatmul.mubr.f32.gmra.mxu0 %v1584
        %v2319 = vpop.f32.mrf.mxu0
        %v2320 = vadd.f32 0.0, %v2319
        %v2321 = vpop.f32.mrf.mxu0
        %2322 = vmatprep.mubr.f32.mxu0 0.0
        %2323 = vmatmul.mubr.f32.gmra.mxu0 %v1587
        %v2324 = vpop.f32.mrf.mxu0
        %v2325 = vadd.f32 0.0, %v2324
        %v2326 = vpop.f32.mrf.mxu0
        %2327 = vmatprep.mubr.f32.mxu0 0.0
        %2328 = vmatmul.mubr.f32.gmra.mxu0 %v1589
        %v2329 = vpop.f32.mrf.mxu0
        %v2330 = vadd.f32 0.0, %v2329
        %v2331 = vpop.f32.mrf.mxu0
        %2332 = vmatprep.mubr.f32.mxu0 0.0
        %2333 = vmatmul.mubr.f32.gmra.mxu0 %v1592
        %v2334 = vpop.f32.mrf.mxu0
        %v2335 = vadd.f32 0.0, %v2334
        %v2336 = vpop.f32.mrf.mxu0
        %2337 = vmatprep.mubr.f32.mxu0 0.0
        %2338 = vmatmul.mubr.f32.gmra.mxu0 %v1594
        %v2339 = vpop.f32.mrf.mxu0
        %v2340 = vadd.f32 0.0, %v2339
        %v2341 = vpop.f32.mrf.mxu0
        %2342 = vmatprep.mubr.f32.mxu0 0.0
        %2343 = vmatmul.mubr.f32.gmra.mxu0 %v1597
        %v2344 = vpop.f32.mrf.mxu0
        %v2345 = vadd.f32 0.0, %v2344
        %v2346 = vpop.f32.mrf.mxu0
        %2347 = vmatprep.mubr.f32.mxu0 0.0
        %2348 = vmatmul.mubr.f32.gmra.mxu0 %v2128
        %v2349 = vpop.f32.mrf.mxu0
        %v2350 = vadd.f32 0.0, %v2349
        %v2351 = vpop.f32.mrf.mxu0
        %2352 = vmatprep.mubr.f32.mxu0 0.0
        %2353 = vmatmul.mubr.f32.gmra.mxu0 %v2131
        %v2354 = vpop.f32.mrf.mxu0
        %v2355 = vadd.f32 0.0, %v2354
        %v2356 = vpop.f32.mrf.mxu0
        %2357 = vdwg.mxu0
        %v2358 = vadd.f32 %v2091, %v2200
        %v2359 = vadd.f32 %v2092, %v2205
        %v2360 = vadd.f32 %v2093, %v2210
        %v2361 = vadd.f32 %v2094, %v2215
        %v2362 = vadd.f32 %v2095, %v2220
        %v2363 = vadd.f32 %v2096, %v2225
        %v2364 = vadd.f32 %v2097, %v2230
        %v2365 = vadd.f32 %v2098, %v2235
        %v2366 = vadd.f32 %v2099, %v2240
        %v2367 = vadd.f32 %v2100, %v2245
        %v2368 = vadd.f32 %v2101, %v2250
        %v2369 = vadd.f32 %v2102, %v2255
        %v2370 = vadd.f32 %v2103, %v2260
        %v2371 = vadd.f32 %v2104, %v2265
        %v2372 = vadd.f32 %v2105, %v2270
        %v2373 = vadd.f32 %v2106, %v2275
        %v2374 = vadd.f32 %v2107, %v2280
        %v2375 = vadd.f32 %v2108, %v2285
        %v2376 = vadd.f32 %v2109, %v2290
        %v2377 = vadd.f32 %v2110, %v2295
        %v2378 = vadd.f32 %v2111, %v2300
        %v2379 = vadd.f32 %v2112, %v2305
        %v2380 = vadd.f32 %v2113, %v2310
        %v2381 = vadd.f32 %v2114, %v2315
        %v2382 = vadd.f32 %v2115, %v2320
        %v2383 = vadd.f32 %v2116, %v2325
        %v2384 = vadd.f32 %v2117, %v2330
        %v2385 = vadd.f32 %v2118, %v2335
        %v2386 = vadd.f32 %v2119, %v2340
        %v2387 = vadd.f32 %v2120, %v2345
        %v2388 = vadd.f32 %v2121, %v2350
        %v2389 = vadd.f32 %v2122, %v2355
        %s2390 = scalar_lea.vmem [#allocation5], 192
        %v2391 = vld [vmem:[%s2390] sm:$0xff]
        %v2392 = vld [vmem:[%s2390 + $0x8] sm:$0xff]
        %v2393 = vld [vmem:[%s2390 + $0x10] sm:$0xff]
        %v2394 = vld [vmem:[%s2390 + $0x18] sm:$0xff]
        %2395 = vmatprep.subr.mxu0 0.0
        %2396 = vmatpush1.msra.mxu0 0.0
        %2397 = vmatprep.subr.mxu0 0.0
        %2398 = vmatpush1.msra.mxu0 0.0
        %2399 = vmatprep.subr.mxu0 0.0
        %2400 = vmatpush1.msra.mxu0 0.0
        %2401 = vmatprep.subr.mxu0 0.0
        %2402 = vmatpush1.msra.mxu0 0.0
        %2403 = vmatprep.subr.mxu0 0.0
        %2404 = vmatpush1.msra.mxu0 0.0
        %2405 = vmatprep.subr.mxu0 0.0
        %2406 = vmatpush1.msra.mxu0 0.0
        %2407 = vmatprep.subr.mxu0 0.0
        %2408 = vmatpush1.msra.mxu0 0.0
        %2409 = vmatprep.subr.mxu0 0.0
        %2410 = vmatpush1.msra.mxu0 0.0
        %2411 = vmatprep.subr.mxu0 0.0
        %2412 = vmatpush1.msra.mxu0 0.0
        %2413 = vmatprep.subr.mxu0 0.0
        %2414 = vmatpush1.msra.mxu0 0.0
        %2415 = vmatprep.subr.mxu0 0.0
        %2416 = vmatpush1.msra.mxu0 0.0
        %2417 = vmatprep.subr.mxu0 0.0
        %2418 = vmatpush1.msra.mxu0 0.0
        %2419 = vmatprep.subr.mxu0 0.0
        %2420 = vmatpush1.msra.mxu0 %v2394
        %2421 = vmatprep.subr.mxu0 0.0
        %2422 = vmatpush1.msra.mxu0 %v2393
        %2423 = vmatprep.subr.mxu0 0.0
        %2424 = vmatpush1.msra.mxu0 %v2392
        %2425 = vmatprep.subr.mxu0 0.0
        %2426 = vmatpush1.msra.mxu0 %v2391
        %2427 = vmatprep.subr.mxu0 0.0
        %2428 = vmatpush2.msra.mxu0 0.0
        %2429 = vmatprep.subr.mxu0 0.0
        %2430 = vmatpush2.msra.mxu0 0.0
        %2431 = vmatprep.subr.mxu0 0.0
        %2432 = vmatpush2.msra.mxu0 0.0
        %2433 = vmatprep.subr.mxu0 0.0
        %2434 = vmatpush2.msra.mxu0 0.0
        %2435 = vmatprep.subr.mxu0 0.0
        %2436 = vmatpush2.msra.mxu0 0.0
        %2437 = vmatprep.subr.mxu0 0.0
        %2438 = vmatpush2.msra.mxu0 0.0
        %2439 = vmatprep.subr.mxu0 0.0
        %2440 = vmatpush2.msra.mxu0 0.0
        %2441 = vmatprep.subr.mxu0 0.0
        %2442 = vmatpush2.msra.mxu0 0.0
        %2443 = vmatprep.subr.mxu0 0.0
        %2444 = vmatpush2.msra.mxu0 0.0
        %2445 = vmatprep.subr.mxu0 0.0
        %2446 = vmatpush2.msra.mxu0 0.0
        %2447 = vmatprep.subr.mxu0 0.0
        %2448 = vmatpush2.msra.mxu0 0.0
        %2449 = vmatprep.subr.mxu0 0.0
        %2450 = vmatpush2.msra.mxu0 0.0
        %2451 = vmatprep.subr.mxu0 0.0
        %2452 = vmatpush2.msra.mxu0 0.0
        %2453 = vmatprep.subr.mxu0 0.0
        %2454 = vmatpush2.msra.mxu0 0.0
        %2455 = vmatprep.subr.mxu0 0.0
        %2456 = vmatpush2.msra.mxu0 0.0
        %2457 = vmatprep.subr.mxu0 0.0
        %2458 = vmatpush2.msra.mxu0 0.0
        %2459 = vmatprep.mubr.f32.mxu0 0.0
        %2460 = vmatmul.mubr.f32.gmra.mxu0 %v667
        %v2461 = vpop.f32.mrf.mxu0
        %v2462 = vadd.f32 0.0, %v2461
        %v2463 = vpop.f32.mrf.mxu0
        %2464 = vmatprep.mubr.f32.mxu0 0.0
        %2465 = vmatmul.mubr.f32.gmra.mxu0 %v669
        %v2466 = vpop.f32.mrf.mxu0
        %v2467 = vadd.f32 0.0, %v2466
        %v2468 = vpop.f32.mrf.mxu0
        %2469 = vmatprep.mubr.f32.mxu0 0.0
        %2470 = vmatmul.mubr.f32.gmra.mxu0 %v672
        %v2471 = vpop.f32.mrf.mxu0
        %v2472 = vadd.f32 0.0, %v2471
        %v2473 = vpop.f32.mrf.mxu0
        %2474 = vmatprep.mubr.f32.mxu0 0.0
        %2475 = vmatmul.mubr.f32.gmra.mxu0 %v674
        %v2476 = vpop.f32.mrf.mxu0
        %v2477 = vadd.f32 0.0, %v2476
        %v2478 = vpop.f32.mrf.mxu0
        %2479 = vmatprep.mubr.f32.mxu0 0.0
        %2480 = vmatmul.mubr.f32.gmra.mxu0 %v677
        %v2481 = vpop.f32.mrf.mxu0
        %v2482 = vadd.f32 0.0, %v2481
        %v2483 = vpop.f32.mrf.mxu0
        %2484 = vmatprep.mubr.f32.mxu0 0.0
        %2485 = vmatmul.mubr.f32.gmra.mxu0 %v679
        %v2486 = vpop.f32.mrf.mxu0
        %v2487 = vadd.f32 0.0, %v2486
        %v2488 = vpop.f32.mrf.mxu0
        %2489 = vmatprep.mubr.f32.mxu0 0.0
        %2490 = vmatmul.mubr.f32.gmra.mxu0 %v682
        %v2491 = vpop.f32.mrf.mxu0
        %v2492 = vadd.f32 0.0, %v2491
        %v2493 = vpop.f32.mrf.mxu0
        %2494 = vmatprep.mubr.f32.mxu0 0.0
        %2495 = vmatmul.mubr.f32.gmra.mxu0 %v684
        %v2496 = vpop.f32.mrf.mxu0
        %v2497 = vadd.f32 0.0, %v2496
        %v2498 = vpop.f32.mrf.mxu0
        %2499 = vmatprep.mubr.f32.mxu0 0.0
        %2500 = vmatmul.mubr.f32.gmra.mxu0 %v687
        %v2501 = vpop.f32.mrf.mxu0
        %v2502 = vadd.f32 0.0, %v2501
        %v2503 = vpop.f32.mrf.mxu0
        %2504 = vmatprep.mubr.f32.mxu0 0.0
        %2505 = vmatmul.mubr.f32.gmra.mxu0 %v689
        %v2506 = vpop.f32.mrf.mxu0
        %v2507 = vadd.f32 0.0, %v2506
        %v2508 = vpop.f32.mrf.mxu0
        %2509 = vmatprep.mubr.f32.mxu0 0.0
        %2510 = vmatmul.mubr.f32.gmra.mxu0 %v692
        %v2511 = vpop.f32.mrf.mxu0
        %v2512 = vadd.f32 0.0, %v2511
        %v2513 = vpop.f32.mrf.mxu0
        %2514 = vmatprep.mubr.f32.mxu0 0.0
        %2515 = vmatmul.mubr.f32.gmra.mxu0 %v694
        %v2516 = vpop.f32.mrf.mxu0
        %v2517 = vadd.f32 0.0, %v2516
        %v2518 = vpop.f32.mrf.mxu0
        %2519 = vmatprep.mubr.f32.mxu0 0.0
        %2520 = vmatmul.mubr.f32.gmra.mxu0 %v697
        %v2521 = vpop.f32.mrf.mxu0
        %v2522 = vadd.f32 0.0, %v2521
        %v2523 = vpop.f32.mrf.mxu0
        %2524 = vmatprep.mubr.f32.mxu0 0.0
        %2525 = vmatmul.mubr.f32.gmra.mxu0 %v699
        %v2526 = vpop.f32.mrf.mxu0
        %v2527 = vadd.f32 0.0, %v2526
        %v2528 = vpop.f32.mrf.mxu0
        %2529 = vmatprep.mubr.f32.mxu0 0.0
        %2530 = vmatmul.mubr.f32.gmra.mxu0 %v702
        %v2531 = vpop.f32.mrf.mxu0
        %v2532 = vadd.f32 0.0, %v2531
        %v2533 = vpop.f32.mrf.mxu0
        %2534 = vmatprep.mubr.f32.mxu0 0.0
        %2535 = vmatmul.mubr.f32.gmra.mxu0 %v704
        %v2536 = vpop.f32.mrf.mxu0
        %v2537 = vadd.f32 0.0, %v2536
        %v2538 = vpop.f32.mrf.mxu0
        %2539 = vmatprep.mubr.f32.mxu0 0.0
        %2540 = vmatmul.mubr.f32.gmra.mxu0 %v707
        %v2541 = vpop.f32.mrf.mxu0
        %v2542 = vadd.f32 0.0, %v2541
        %v2543 = vpop.f32.mrf.mxu0
        %2544 = vmatprep.mubr.f32.mxu0 0.0
        %2545 = vmatmul.mubr.f32.gmra.mxu0 %v709
        %v2546 = vpop.f32.mrf.mxu0
        %v2547 = vadd.f32 0.0, %v2546
        %v2548 = vpop.f32.mrf.mxu0
        %2549 = vmatprep.mubr.f32.mxu0 0.0
        %2550 = vmatmul.mubr.f32.gmra.mxu0 %v712
        %v2551 = vpop.f32.mrf.mxu0
        %v2552 = vadd.f32 0.0, %v2551
        %v2553 = vpop.f32.mrf.mxu0
        %2554 = vmatprep.mubr.f32.mxu0 0.0
        %2555 = vmatmul.mubr.f32.gmra.mxu0 %v714
        %v2556 = vpop.f32.mrf.mxu0
        %v2557 = vadd.f32 0.0, %v2556
        %v2558 = vpop.f32.mrf.mxu0
        %2559 = vmatprep.mubr.f32.mxu0 0.0
        %2560 = vmatmul.mubr.f32.gmra.mxu0 %v717
        %v2561 = vpop.f32.mrf.mxu0
        %v2562 = vadd.f32 0.0, %v2561
        %v2563 = vpop.f32.mrf.mxu0
        %2564 = vmatprep.mubr.f32.mxu0 0.0
        %2565 = vmatmul.mubr.f32.gmra.mxu0 %v719
        %v2566 = vpop.f32.mrf.mxu0
        %v2567 = vadd.f32 0.0, %v2566
        %v2568 = vpop.f32.mrf.mxu0
        %2569 = vmatprep.mubr.f32.mxu0 0.0
        %2570 = vmatmul.mubr.f32.gmra.mxu0 %v722
        %v2571 = vpop.f32.mrf.mxu0
        %v2572 = vadd.f32 0.0, %v2571
        %v2573 = vpop.f32.mrf.mxu0
        %2574 = vmatprep.mubr.f32.mxu0 0.0
        %2575 = vmatmul.mubr.f32.gmra.mxu0 %v724
        %v2576 = vpop.f32.mrf.mxu0
        %v2577 = vadd.f32 0.0, %v2576
        %v2578 = vpop.f32.mrf.mxu0
        %2579 = vmatprep.mubr.f32.mxu0 0.0
        %2580 = vmatmul.mubr.f32.gmra.mxu0 %v727
        %v2581 = vpop.f32.mrf.mxu0
        %v2582 = vadd.f32 0.0, %v2581
        %v2583 = vpop.f32.mrf.mxu0
        %2584 = vmatprep.mubr.f32.mxu0 0.0
        %2585 = vmatmul.mubr.f32.gmra.mxu0 %v729
        %v2586 = vpop.f32.mrf.mxu0
        %v2587 = vadd.f32 0.0, %v2586
        %v2588 = vpop.f32.mrf.mxu0
        %2589 = vmatprep.mubr.f32.mxu0 0.0
        %2590 = vmatmul.mubr.f32.gmra.mxu0 %v732
        %v2591 = vpop.f32.mrf.mxu0
        %v2592 = vadd.f32 0.0, %v2591
        %v2593 = vpop.f32.mrf.mxu0
        %2594 = vmatprep.mubr.f32.mxu0 0.0
        %2595 = vmatmul.mubr.f32.gmra.mxu0 %v734
        %v2596 = vpop.f32.mrf.mxu0
        %v2597 = vadd.f32 0.0, %v2596
        %v2598 = vpop.f32.mrf.mxu0
        %2599 = vmatprep.mubr.f32.mxu0 0.0
        %2600 = vmatmul.mubr.f32.gmra.mxu0 %v1862
        %v2601 = vpop.f32.mrf.mxu0
        %v2602 = vadd.f32 0.0, %v2601
        %v2603 = vpop.f32.mrf.mxu0
        %2604 = vmatprep.mubr.f32.mxu0 0.0
        %2605 = vmatmul.mubr.f32.gmra.mxu0 %v1864
        %v2606 = vpop.f32.mrf.mxu0
        %v2607 = vadd.f32 0.0, %v2606
        %v2608 = vpop.f32.mrf.mxu0
        %2609 = vmatprep.mubr.f32.mxu0 0.0
        %2610 = vmatmul.mubr.f32.gmra.mxu0 %v657
        %v2611 = vpop.f32.mrf.mxu0
        %v2612 = vadd.f32 0.0, %v2611
        %v2613 = vpop.f32.mrf.mxu0
        %2614 = vmatprep.mubr.f32.mxu0 0.0
        %2615 = vmatmul.mubr.f32.gmra.mxu0 %v659
        %v2616 = vpop.f32.mrf.mxu0
        %v2617 = vadd.f32 0.0, %v2616
        %v2618 = vpop.f32.mrf.mxu0
        %2619 = vdwg.mxu0
        %v2620 = vadd.f32 %v2358, %v2462
        %v2621 = vadd.f32 %v2359, %v2467
        %v2622 = vadd.f32 %v2360, %v2472
        %v2623 = vadd.f32 %v2361, %v2477
        %v2624 = vadd.f32 %v2362, %v2482
        %v2625 = vadd.f32 %v2363, %v2487
        %v2626 = vadd.f32 %v2364, %v2492
        %v2627 = vadd.f32 %v2365, %v2497
        %v2628 = vadd.f32 %v2366, %v2502
        %v2629 = vadd.f32 %v2367, %v2507
        %v2630 = vadd.f32 %v2368, %v2512
        %v2631 = vadd.f32 %v2369, %v2517
        %v2632 = vadd.f32 %v2370, %v2522
        %v2633 = vadd.f32 %v2371, %v2527
        %v2634 = vadd.f32 %v2372, %v2532
        %v2635 = vadd.f32 %v2373, %v2537
        %v2636 = vadd.f32 %v2374, %v2542
        %v2637 = vadd.f32 %v2375, %v2547
        %v2638 = vadd.f32 %v2376, %v2552
        %v2639 = vadd.f32 %v2377, %v2557
        %v2640 = vadd.f32 %v2378, %v2562
        %v2641 = vadd.f32 %v2379, %v2567
        %v2642 = vadd.f32 %v2380, %v2572
        %v2643 = vadd.f32 %v2381, %v2577
        %v2644 = vadd.f32 %v2382, %v2582
        %v2645 = vadd.f32 %v2383, %v2587
        %v2646 = vadd.f32 %v2384, %v2592
        %v2647 = vadd.f32 %v2385, %v2597
        %v2648 = vadd.f32 %v2386, %v2602
        %v2649 = vadd.f32 %v2387, %v2607
        %v2650 = vadd.f32 %v2388, %v2612
        %v2651 = vadd.f32 %v2389, %v2617
        %s2652 = scalar_lea.vmem [#allocation5], 224
        %v2653 = vld [vmem:[%s2652] sm:$0xff]
        %v2654 = vld [vmem:[%s2652 + $0x8] sm:$0xff]
        %v2655 = vld [vmem:[%s2652 + $0x10] sm:$0xff]
        %v2656 = vld [vmem:[%s2652 + $0x18] sm:$0xff]
        %2657 = vmatprep.subr.mxu0 0.0
        %2658 = vmatpush1.msra.mxu0 0.0
        %2659 = vmatprep.subr.mxu0 0.0
        %2660 = vmatpush1.msra.mxu0 0.0
        %2661 = vmatprep.subr.mxu0 0.0
        %2662 = vmatpush1.msra.mxu0 0.0
        %2663 = vmatprep.subr.mxu0 0.0
        %2664 = vmatpush1.msra.mxu0 0.0
        %2665 = vmatprep.subr.mxu0 0.0
        %2666 = vmatpush1.msra.mxu0 0.0
        %2667 = vmatprep.subr.mxu0 0.0
        %2668 = vmatpush1.msra.mxu0 0.0
        %2669 = vmatprep.subr.mxu0 0.0
        %2670 = vmatpush1.msra.mxu0 0.0
        %2671 = vmatprep.subr.mxu0 0.0
        %2672 = vmatpush1.msra.mxu0 0.0
        %2673 = vmatprep.subr.mxu0 0.0
        %2674 = vmatpush1.msra.mxu0 0.0
        %2675 = vmatprep.subr.mxu0 0.0
        %2676 = vmatpush1.msra.mxu0 0.0
        %2677 = vmatprep.subr.mxu0 0.0
        %2678 = vmatpush1.msra.mxu0 0.0
        %2679 = vmatprep.subr.mxu0 0.0
        %2680 = vmatpush1.msra.mxu0 0.0
        %2681 = vmatprep.subr.mxu0 0.0
        %2682 = vmatpush1.msra.mxu0 %v2656
        %2683 = vmatprep.subr.mxu0 0.0
        %2684 = vmatpush1.msra.mxu0 %v2655
        %2685 = vmatprep.subr.mxu0 0.0
        %2686 = vmatpush1.msra.mxu0 %v2654
        %2687 = vmatprep.subr.mxu0 0.0
        %2688 = vmatpush1.msra.mxu0 %v2653
        %2689 = vmatprep.subr.mxu0 0.0
        %2690 = vmatpush2.msra.mxu0 0.0
        %2691 = vmatprep.subr.mxu0 0.0
        %2692 = vmatpush2.msra.mxu0 0.0
        %2693 = vmatprep.subr.mxu0 0.0
        %2694 = vmatpush2.msra.mxu0 0.0
        %2695 = vmatprep.subr.mxu0 0.0
        %2696 = vmatpush2.msra.mxu0 0.0
        %2697 = vmatprep.subr.mxu0 0.0
        %2698 = vmatpush2.msra.mxu0 0.0
        %2699 = vmatprep.subr.mxu0 0.0
        %2700 = vmatpush2.msra.mxu0 0.0
        %2701 = vmatprep.subr.mxu0 0.0
        %2702 = vmatpush2.msra.mxu0 0.0
        %2703 = vmatprep.subr.mxu0 0.0
        %2704 = vmatpush2.msra.mxu0 0.0
        %2705 = vmatprep.subr.mxu0 0.0
        %2706 = vmatpush2.msra.mxu0 0.0
        %2707 = vmatprep.subr.mxu0 0.0
        %2708 = vmatpush2.msra.mxu0 0.0
        %2709 = vmatprep.subr.mxu0 0.0
        %2710 = vmatpush2.msra.mxu0 0.0
        %2711 = vmatprep.subr.mxu0 0.0
        %2712 = vmatpush2.msra.mxu0 0.0
        %2713 = vmatprep.subr.mxu0 0.0
        %2714 = vmatpush2.msra.mxu0 0.0
        %2715 = vmatprep.subr.mxu0 0.0
        %2716 = vmatpush2.msra.mxu0 0.0
        %2717 = vmatprep.subr.mxu0 0.0
        %2718 = vmatpush2.msra.mxu0 0.0
        %2719 = vmatprep.subr.mxu0 0.0
        %2720 = vmatpush2.msra.mxu0 0.0
        %2721 = vmatprep.mubr.f32.mxu0 0.0
        %2722 = vmatmul.mubr.f32.gmra.mxu0 %v965
        %v2723 = vpop.f32.mrf.mxu0
        %v2724 = vadd.f32 0.0, %v2723
        %v2725 = vpop.f32.mrf.mxu0
        %2726 = vmatprep.mubr.f32.mxu0 0.0
        %2727 = vmatmul.mubr.f32.gmra.mxu0 %v967
        %v2728 = vpop.f32.mrf.mxu0
        %v2729 = vadd.f32 0.0, %v2728
        %v2730 = vpop.f32.mrf.mxu0
        %2731 = vmatprep.mubr.f32.mxu0 0.0
        %2732 = vmatmul.mubr.f32.gmra.mxu0 %v969
        %v2733 = vpop.f32.mrf.mxu0
        %v2734 = vadd.f32 0.0, %v2733
        %v2735 = vpop.f32.mrf.mxu0
        %2736 = vmatprep.mubr.f32.mxu0 0.0
        %2737 = vmatmul.mubr.f32.gmra.mxu0 %v971
        %v2738 = vpop.f32.mrf.mxu0
        %v2739 = vadd.f32 0.0, %v2738
        %v2740 = vpop.f32.mrf.mxu0
        %2741 = vmatprep.mubr.f32.mxu0 0.0
        %2742 = vmatmul.mubr.f32.gmra.mxu0 %v973
        %v2743 = vpop.f32.mrf.mxu0
        %v2744 = vadd.f32 0.0, %v2743
        %v2745 = vpop.f32.mrf.mxu0
        %2746 = vmatprep.mubr.f32.mxu0 0.0
        %2747 = vmatmul.mubr.f32.gmra.mxu0 %v975
        %v2748 = vpop.f32.mrf.mxu0
        %v2749 = vadd.f32 0.0, %v2748
        %v2750 = vpop.f32.mrf.mxu0
        %2751 = vmatprep.mubr.f32.mxu0 0.0
        %2752 = vmatmul.mubr.f32.gmra.mxu0 %v977
        %v2753 = vpop.f32.mrf.mxu0
        %v2754 = vadd.f32 0.0, %v2753
        %v2755 = vpop.f32.mrf.mxu0
        %2756 = vmatprep.mubr.f32.mxu0 0.0
        %2757 = vmatmul.mubr.f32.gmra.mxu0 %v979
        %v2758 = vpop.f32.mrf.mxu0
        %v2759 = vadd.f32 0.0, %v2758
        %v2760 = vpop.f32.mrf.mxu0
        %2761 = vmatprep.mubr.f32.mxu0 0.0
        %2762 = vmatmul.mubr.f32.gmra.mxu0 %v981
        %v2763 = vpop.f32.mrf.mxu0
        %v2764 = vadd.f32 0.0, %v2763
        %v2765 = vpop.f32.mrf.mxu0
        %2766 = vmatprep.mubr.f32.mxu0 0.0
        %2767 = vmatmul.mubr.f32.gmra.mxu0 %v983
        %v2768 = vpop.f32.mrf.mxu0
        %v2769 = vadd.f32 0.0, %v2768
        %v2770 = vpop.f32.mrf.mxu0
        %2771 = vmatprep.mubr.f32.mxu0 0.0
        %2772 = vmatmul.mubr.f32.gmra.mxu0 %v985
        %v2773 = vpop.f32.mrf.mxu0
        %v2774 = vadd.f32 0.0, %v2773
        %v2775 = vpop.f32.mrf.mxu0
        %2776 = vmatprep.mubr.f32.mxu0 0.0
        %2777 = vmatmul.mubr.f32.gmra.mxu0 %v987
        %v2778 = vpop.f32.mrf.mxu0
        %v2779 = vadd.f32 0.0, %v2778
        %v2780 = vpop.f32.mrf.mxu0
        %2781 = vmatprep.mubr.f32.mxu0 0.0
        %2782 = vmatmul.mubr.f32.gmra.mxu0 %v989
        %v2783 = vpop.f32.mrf.mxu0
        %v2784 = vadd.f32 0.0, %v2783
        %v2785 = vpop.f32.mrf.mxu0
        %2786 = vmatprep.mubr.f32.mxu0 0.0
        %2787 = vmatmul.mubr.f32.gmra.mxu0 %v991
        %v2788 = vpop.f32.mrf.mxu0
        %v2789 = vadd.f32 0.0, %v2788
        %v2790 = vpop.f32.mrf.mxu0
        %2791 = vmatprep.mubr.f32.mxu0 0.0
        %2792 = vmatmul.mubr.f32.gmra.mxu0 %v993
        %v2793 = vpop.f32.mrf.mxu0
        %v2794 = vadd.f32 0.0, %v2793
        %v2795 = vpop.f32.mrf.mxu0
        %2796 = vmatprep.mubr.f32.mxu0 0.0
        %2797 = vmatmul.mubr.f32.gmra.mxu0 %v995
        %v2798 = vpop.f32.mrf.mxu0
        %v2799 = vadd.f32 0.0, %v2798
        %v2800 = vpop.f32.mrf.mxu0
        %2801 = vmatprep.mubr.f32.mxu0 0.0
        %2802 = vmatmul.mubr.f32.gmra.mxu0 %v997
        %v2803 = vpop.f32.mrf.mxu0
        %v2804 = vadd.f32 0.0, %v2803
        %v2805 = vpop.f32.mrf.mxu0
        %2806 = vmatprep.mubr.f32.mxu0 0.0
        %2807 = vmatmul.mubr.f32.gmra.mxu0 %v999
        %v2808 = vpop.f32.mrf.mxu0
        %v2809 = vadd.f32 0.0, %v2808
        %v2810 = vpop.f32.mrf.mxu0
        %2811 = vmatprep.mubr.f32.mxu0 0.0
        %2812 = vmatmul.mubr.f32.gmra.mxu0 %v1001
        %v2813 = vpop.f32.mrf.mxu0
        %v2814 = vadd.f32 0.0, %v2813
        %v2815 = vpop.f32.mrf.mxu0
        %2816 = vmatprep.mubr.f32.mxu0 0.0
        %2817 = vmatmul.mubr.f32.gmra.mxu0 %v1003
        %v2818 = vpop.f32.mrf.mxu0
        %v2819 = vadd.f32 0.0, %v2818
        %v2820 = vpop.f32.mrf.mxu0
        %2821 = vmatprep.mubr.f32.mxu0 0.0
        %2822 = vmatmul.mubr.f32.gmra.mxu0 %v1005
        %v2823 = vpop.f32.mrf.mxu0
        %v2824 = vadd.f32 0.0, %v2823
        %v2825 = vpop.f32.mrf.mxu0
        %2826 = vmatprep.mubr.f32.mxu0 0.0
        %2827 = vmatmul.mubr.f32.gmra.mxu0 %v1007
        %v2828 = vpop.f32.mrf.mxu0
        %v2829 = vadd.f32 0.0, %v2828
        %v2830 = vpop.f32.mrf.mxu0
        %2831 = vmatprep.mubr.f32.mxu0 0.0
        %2832 = vmatmul.mubr.f32.gmra.mxu0 %v1009
        %v2833 = vpop.f32.mrf.mxu0
        %v2834 = vadd.f32 0.0, %v2833
        %v2835 = vpop.f32.mrf.mxu0
        %2836 = vmatprep.mubr.f32.mxu0 0.0
        %2837 = vmatmul.mubr.f32.gmra.mxu0 %v1011
        %v2838 = vpop.f32.mrf.mxu0
        %v2839 = vadd.f32 0.0, %v2838
        %v2840 = vpop.f32.mrf.mxu0
        %2841 = vmatprep.mubr.f32.mxu0 0.0
        %2842 = vmatmul.mubr.f32.gmra.mxu0 %v1013
        %v2843 = vpop.f32.mrf.mxu0
        %v2844 = vadd.f32 0.0, %v2843
        %v2845 = vpop.f32.mrf.mxu0
        %2846 = vmatprep.mubr.f32.mxu0 0.0
        %2847 = vmatmul.mubr.f32.gmra.mxu0 %v1015
        %v2848 = vpop.f32.mrf.mxu0
        %v2849 = vadd.f32 0.0, %v2848
        %v2850 = vpop.f32.mrf.mxu0
        %2851 = vmatprep.mubr.f32.mxu0 0.0
        %2852 = vmatmul.mubr.f32.gmra.mxu0 %v1017
        %v2853 = vpop.f32.mrf.mxu0
        %v2854 = vadd.f32 0.0, %v2853
        %v2855 = vpop.f32.mrf.mxu0
        %2856 = vmatprep.mubr.f32.mxu0 0.0
        %2857 = vmatmul.mubr.f32.gmra.mxu0 %v1019
        %v2858 = vpop.f32.mrf.mxu0
        %v2859 = vadd.f32 0.0, %v2858
        %v2860 = vpop.f32.mrf.mxu0
        %2861 = vmatprep.mubr.f32.mxu0 0.0
        %2862 = vmatmul.mubr.f32.gmra.mxu0 %v1021
        %v2863 = vpop.f32.mrf.mxu0
        %v2864 = vadd.f32 0.0, %v2863
        %v2865 = vpop.f32.mrf.mxu0
        %2866 = vmatprep.mubr.f32.mxu0 0.0
        %2867 = vmatmul.mubr.f32.gmra.mxu0 %v1023
        %v2868 = vpop.f32.mrf.mxu0
        %v2869 = vadd.f32 0.0, %v2868
        %v2870 = vpop.f32.mrf.mxu0
        %2871 = vmatprep.mubr.f32.mxu0 0.0
        %2872 = vmatmul.mubr.f32.gmra.mxu0 %v1255
        %v2873 = vpop.f32.mrf.mxu0
        %v2874 = vadd.f32 0.0, %v2873
        %v2875 = vpop.f32.mrf.mxu0
        %2876 = vmatprep.mubr.f32.mxu0 0.0
        %2877 = vmatmul.mubr.f32.gmra.mxu0 %v1255
        %v2878 = vpop.f32.mrf.mxu0
        %v2879 = vadd.f32 0.0, %v2878
        %v2880 = vpop.f32.mrf.mxu0
        %2881 = vdwg.mxu0
        %v2882 = vadd.f32 %v2620, %v2724
        %v2883 = vadd.f32 %v2621, %v2729
        %v2884 = vadd.f32 %v2622, %v2734
        %v2885 = vadd.f32 %v2623, %v2739
        %v2886 = vadd.f32 %v2624, %v2744
        %v2887 = vadd.f32 %v2625, %v2749
        %v2888 = vadd.f32 %v2626, %v2754
        %v2889 = vadd.f32 %v2627, %v2759
        %v2890 = vadd.f32 %v2628, %v2764
        %v2891 = vadd.f32 %v2629, %v2769
        %v2892 = vadd.f32 %v2630, %v2774
        %v2893 = vadd.f32 %v2631, %v2779
        %v2894 = vadd.f32 %v2632, %v2784
        %v2895 = vadd.f32 %v2633, %v2789
        %v2896 = vadd.f32 %v2634, %v2794
        %v2897 = vadd.f32 %v2635, %v2799
        %v2898 = vadd.f32 %v2636, %v2804
        %v2899 = vadd.f32 %v2637, %v2809
        %v2900 = vadd.f32 %v2638, %v2814
        %v2901 = vadd.f32 %v2639, %v2819
        %v2902 = vadd.f32 %v2640, %v2824
        %v2903 = vadd.f32 %v2641, %v2829
        %v2904 = vadd.f32 %v2642, %v2834
        %v2905 = vadd.f32 %v2643, %v2839
        %v2906 = vadd.f32 %v2644, %v2844
        %v2907 = vadd.f32 %v2645, %v2849
        %v2908 = vadd.f32 %v2646, %v2854
        %v2909 = vadd.f32 %v2647, %v2859
        %v2910 = vadd.f32 %v2648, %v2864
        %v2911 = vadd.f32 %v2649, %v2869
        %v2912 = vadd.f32 %v2650, %v2874
        %v2913 = vadd.f32 %v2651, %v2879
        %s2914 = scalar_lea.vmem [#allocation5], 256
        %v2915 = vld [vmem:[%s2914] sm:$0xff]
        %v2916 = vld [vmem:[%s2914 + $0x8] sm:$0xff]
        %v2917 = vld [vmem:[%s2914 + $0x10] sm:$0xff]
        %v2918 = vld [vmem:[%s2914 + $0x18] sm:$0xff]
        %2919 = vmatprep.subr.mxu0 0.0
        %2920 = vmatpush1.msra.mxu0 0.0
        %2921 = vmatprep.subr.mxu0 0.0
        %2922 = vmatpush1.msra.mxu0 0.0
        %2923 = vmatprep.subr.mxu0 0.0
        %2924 = vmatpush1.msra.mxu0 0.0
        %2925 = vmatprep.subr.mxu0 0.0
        %2926 = vmatpush1.msra.mxu0 0.0
        %2927 = vmatprep.subr.mxu0 0.0
        %2928 = vmatpush1.msra.mxu0 0.0
        %2929 = vmatprep.subr.mxu0 0.0
        %2930 = vmatpush1.msra.mxu0 0.0
        %2931 = vmatprep.subr.mxu0 0.0
        %2932 = vmatpush1.msra.mxu0 0.0
        %2933 = vmatprep.subr.mxu0 0.0
        %2934 = vmatpush1.msra.mxu0 0.0
        %2935 = vmatprep.subr.mxu0 0.0
        %2936 = vmatpush1.msra.mxu0 0.0
        %2937 = vmatprep.subr.mxu0 0.0
        %2938 = vmatpush1.msra.mxu0 0.0
        %2939 = vmatprep.subr.mxu0 0.0
        %2940 = vmatpush1.msra.mxu0 0.0
        %2941 = vmatprep.subr.mxu0 0.0
        %2942 = vmatpush1.msra.mxu0 0.0
        %2943 = vmatprep.subr.mxu0 0.0
        %2944 = vmatpush1.msra.mxu0 %v2918
        %2945 = vmatprep.subr.mxu0 0.0
        %2946 = vmatpush1.msra.mxu0 %v2917
        %2947 = vmatprep.subr.mxu0 0.0
        %2948 = vmatpush1.msra.mxu0 %v2916
        %2949 = vmatprep.subr.mxu0 0.0
        %2950 = vmatpush1.msra.mxu0 %v2915
        %2951 = vmatprep.subr.mxu0 0.0
        %2952 = vmatpush2.msra.mxu0 0.0
        %2953 = vmatprep.subr.mxu0 0.0
        %2954 = vmatpush2.msra.mxu0 0.0
        %2955 = vmatprep.subr.mxu0 0.0
        %2956 = vmatpush2.msra.mxu0 0.0
        %2957 = vmatprep.subr.mxu0 0.0
        %2958 = vmatpush2.msra.mxu0 0.0
        %2959 = vmatprep.subr.mxu0 0.0
        %2960 = vmatpush2.msra.mxu0 0.0
        %2961 = vmatprep.subr.mxu0 0.0
        %2962 = vmatpush2.msra.mxu0 0.0
        %2963 = vmatprep.subr.mxu0 0.0
        %2964 = vmatpush2.msra.mxu0 0.0
        %2965 = vmatprep.subr.mxu0 0.0
        %2966 = vmatpush2.msra.mxu0 0.0
        %2967 = vmatprep.subr.mxu0 0.0
        %2968 = vmatpush2.msra.mxu0 0.0
        %2969 = vmatprep.subr.mxu0 0.0
        %2970 = vmatpush2.msra.mxu0 0.0
        %2971 = vmatprep.subr.mxu0 0.0
        %2972 = vmatpush2.msra.mxu0 0.0
        %2973 = vmatprep.subr.mxu0 0.0
        %2974 = vmatpush2.msra.mxu0 0.0
        %2975 = vmatprep.subr.mxu0 0.0
        %2976 = vmatpush2.msra.mxu0 0.0
        %2977 = vmatprep.subr.mxu0 0.0
        %2978 = vmatpush2.msra.mxu0 0.0
        %2979 = vmatprep.subr.mxu0 0.0
        %2980 = vmatpush2.msra.mxu0 0.0
        %2981 = vmatprep.subr.mxu0 0.0
        %2982 = vmatpush2.msra.mxu0 0.0
        %2983 = vmatprep.mubr.f32.mxu0 0.0
        %2984 = vmatmul.mubr.f32.gmra.mxu0 %v1529
        %v2985 = vpop.f32.mrf.mxu0
        %v2986 = vadd.f32 0.0, %v2985
        %v2987 = vpop.f32.mrf.mxu0
        %2988 = vmatprep.mubr.f32.mxu0 0.0
        %2989 = vmatmul.mubr.f32.gmra.mxu0 %v1532
        %v2990 = vpop.f32.mrf.mxu0
        %v2991 = vadd.f32 0.0, %v2990
        %v2992 = vpop.f32.mrf.mxu0
        %2993 = vmatprep.mubr.f32.mxu0 0.0
        %2994 = vmatmul.mubr.f32.gmra.mxu0 %v1534
        %v2995 = vpop.f32.mrf.mxu0
        %v2996 = vadd.f32 0.0, %v2995
        %v2997 = vpop.f32.mrf.mxu0
        %2998 = vmatprep.mubr.f32.mxu0 0.0
        %2999 = vmatmul.mubr.f32.gmra.mxu0 %v1537
        %v3000 = vpop.f32.mrf.mxu0
        %v3001 = vadd.f32 0.0, %v3000
        %v3002 = vpop.f32.mrf.mxu0
        %3003 = vmatprep.mubr.f32.mxu0 0.0
        %3004 = vmatmul.mubr.f32.gmra.mxu0 %v1539
        %v3005 = vpop.f32.mrf.mxu0
        %v3006 = vadd.f32 0.0, %v3005
        %v3007 = vpop.f32.mrf.mxu0
        %3008 = vmatprep.mubr.f32.mxu0 0.0
        %3009 = vmatmul.mubr.f32.gmra.mxu0 %v1542
        %v3010 = vpop.f32.mrf.mxu0
        %v3011 = vadd.f32 0.0, %v3010
        %v3012 = vpop.f32.mrf.mxu0
        %3013 = vmatprep.mubr.f32.mxu0 0.0
        %3014 = vmatmul.mubr.f32.gmra.mxu0 %v1544
        %v3015 = vpop.f32.mrf.mxu0
        %v3016 = vadd.f32 0.0, %v3015
        %v3017 = vpop.f32.mrf.mxu0
        %3018 = vmatprep.mubr.f32.mxu0 0.0
        %3019 = vmatmul.mubr.f32.gmra.mxu0 %v1547
        %v3020 = vpop.f32.mrf.mxu0
        %v3021 = vadd.f32 0.0, %v3020
        %v3022 = vpop.f32.mrf.mxu0
        %3023 = vmatprep.mubr.f32.mxu0 0.0
        %3024 = vmatmul.mubr.f32.gmra.mxu0 %v1549
        %v3025 = vpop.f32.mrf.mxu0
        %v3026 = vadd.f32 0.0, %v3025
        %v3027 = vpop.f32.mrf.mxu0
        %3028 = vmatprep.mubr.f32.mxu0 0.0
        %3029 = vmatmul.mubr.f32.gmra.mxu0 %v1552
        %v3030 = vpop.f32.mrf.mxu0
        %v3031 = vadd.f32 0.0, %v3030
        %v3032 = vpop.f32.mrf.mxu0
        %3033 = vmatprep.mubr.f32.mxu0 0.0
        %3034 = vmatmul.mubr.f32.gmra.mxu0 %v1554
        %v3035 = vpop.f32.mrf.mxu0
        %v3036 = vadd.f32 0.0, %v3035
        %v3037 = vpop.f32.mrf.mxu0
        %3038 = vmatprep.mubr.f32.mxu0 0.0
        %3039 = vmatmul.mubr.f32.gmra.mxu0 %v1557
        %v3040 = vpop.f32.mrf.mxu0
        %v3041 = vadd.f32 0.0, %v3040
        %v3042 = vpop.f32.mrf.mxu0
        %3043 = vmatprep.mubr.f32.mxu0 0.0
        %3044 = vmatmul.mubr.f32.gmra.mxu0 %v1559
        %v3045 = vpop.f32.mrf.mxu0
        %v3046 = vadd.f32 0.0, %v3045
        %v3047 = vpop.f32.mrf.mxu0
        %3048 = vmatprep.mubr.f32.mxu0 0.0
        %3049 = vmatmul.mubr.f32.gmra.mxu0 %v1562
        %v3050 = vpop.f32.mrf.mxu0
        %v3051 = vadd.f32 0.0, %v3050
        %v3052 = vpop.f32.mrf.mxu0
        %3053 = vmatprep.mubr.f32.mxu0 0.0
        %3054 = vmatmul.mubr.f32.gmra.mxu0 %v1564
        %v3055 = vpop.f32.mrf.mxu0
        %v3056 = vadd.f32 0.0, %v3055
        %v3057 = vpop.f32.mrf.mxu0
        %3058 = vmatprep.mubr.f32.mxu0 0.0
        %3059 = vmatmul.mubr.f32.gmra.mxu0 %v1567
        %v3060 = vpop.f32.mrf.mxu0
        %v3061 = vadd.f32 0.0, %v3060
        %v3062 = vpop.f32.mrf.mxu0
        %3063 = vmatprep.mubr.f32.mxu0 0.0
        %3064 = vmatmul.mubr.f32.gmra.mxu0 %v1569
        %v3065 = vpop.f32.mrf.mxu0
        %v3066 = vadd.f32 0.0, %v3065
        %v3067 = vpop.f32.mrf.mxu0
        %3068 = vmatprep.mubr.f32.mxu0 0.0
        %3069 = vmatmul.mubr.f32.gmra.mxu0 %v1572
        %v3070 = vpop.f32.mrf.mxu0
        %v3071 = vadd.f32 0.0, %v3070
        %v3072 = vpop.f32.mrf.mxu0
        %3073 = vmatprep.mubr.f32.mxu0 0.0
        %3074 = vmatmul.mubr.f32.gmra.mxu0 %v1574
        %v3075 = vpop.f32.mrf.mxu0
        %v3076 = vadd.f32 0.0, %v3075
        %v3077 = vpop.f32.mrf.mxu0
        %3078 = vmatprep.mubr.f32.mxu0 0.0
        %3079 = vmatmul.mubr.f32.gmra.mxu0 %v1577
        %v3080 = vpop.f32.mrf.mxu0
        %v3081 = vadd.f32 0.0, %v3080
        %v3082 = vpop.f32.mrf.mxu0
        %3083 = vmatprep.mubr.f32.mxu0 0.0
        %3084 = vmatmul.mubr.f32.gmra.mxu0 %v1579
        %v3085 = vpop.f32.mrf.mxu0
        %v3086 = vadd.f32 0.0, %v3085
        %v3087 = vpop.f32.mrf.mxu0
        %3088 = vmatprep.mubr.f32.mxu0 0.0
        %3089 = vmatmul.mubr.f32.gmra.mxu0 %v1582
        %v3090 = vpop.f32.mrf.mxu0
        %v3091 = vadd.f32 0.0, %v3090
        %v3092 = vpop.f32.mrf.mxu0
        %3093 = vmatprep.mubr.f32.mxu0 0.0
        %3094 = vmatmul.mubr.f32.gmra.mxu0 %v1584
        %v3095 = vpop.f32.mrf.mxu0
        %v3096 = vadd.f32 0.0, %v3095
        %v3097 = vpop.f32.mrf.mxu0
        %3098 = vmatprep.mubr.f32.mxu0 0.0
        %3099 = vmatmul.mubr.f32.gmra.mxu0 %v1587
        %v3100 = vpop.f32.mrf.mxu0
        %v3101 = vadd.f32 0.0, %v3100
        %v3102 = vpop.f32.mrf.mxu0
        %3103 = vmatprep.mubr.f32.mxu0 0.0
        %3104 = vmatmul.mubr.f32.gmra.mxu0 %v1589
        %v3105 = vpop.f32.mrf.mxu0
        %v3106 = vadd.f32 0.0, %v3105
        %v3107 = vpop.f32.mrf.mxu0
        %3108 = vmatprep.mubr.f32.mxu0 0.0
        %3109 = vmatmul.mubr.f32.gmra.mxu0 %v1592
        %v3110 = vpop.f32.mrf.mxu0
        %v3111 = vadd.f32 0.0, %v3110
        %v3112 = vpop.f32.mrf.mxu0
        %3113 = vmatprep.mubr.f32.mxu0 0.0
        %3114 = vmatmul.mubr.f32.gmra.mxu0 %v1594
        %v3115 = vpop.f32.mrf.mxu0
        %v3116 = vadd.f32 0.0, %v3115
        %v3117 = vpop.f32.mrf.mxu0
        %3118 = vmatprep.mubr.f32.mxu0 0.0
        %3119 = vmatmul.mubr.f32.gmra.mxu0 %v1597
        %v3120 = vpop.f32.mrf.mxu0
        %v3121 = vadd.f32 0.0, %v3120
        %v3122 = vpop.f32.mrf.mxu0
        %3123 = vmatprep.mubr.f32.mxu0 0.0
        %3124 = vmatmul.mubr.f32.gmra.mxu0 %v2128
        %v3125 = vpop.f32.mrf.mxu0
        %v3126 = vadd.f32 0.0, %v3125
        %v3127 = vpop.f32.mrf.mxu0
        %3128 = vmatprep.mubr.f32.mxu0 0.0
        %3129 = vmatmul.mubr.f32.gmra.mxu0 %v2131
        %v3130 = vpop.f32.mrf.mxu0
        %v3131 = vadd.f32 0.0, %v3130
        %v3132 = vpop.f32.mrf.mxu0
        %3133 = vmatprep.mubr.f32.mxu0 0.0
        %3134 = vmatmul.mubr.f32.gmra.mxu0 %v1519
        %v3135 = vpop.f32.mrf.mxu0
        %v3136 = vadd.f32 0.0, %v3135
        %v3137 = vpop.f32.mrf.mxu0
        %3138 = vmatprep.mubr.f32.mxu0 0.0
        %3139 = vmatmul.mubr.f32.gmra.mxu0 %v1522
        %v3140 = vpop.f32.mrf.mxu0
        %v3141 = vadd.f32 0.0, %v3140
        %v3142 = vpop.f32.mrf.mxu0
        %3143 = vdwg.mxu0
        %v3144 = vadd.f32 %v2882, %v2986
        %v3145 = vadd.f32 %v2883, %v2991
        %v3146 = vadd.f32 %v2884, %v2996
        %v3147 = vadd.f32 %v2885, %v3001
        %v3148 = vadd.f32 %v2886, %v3006
        %v3149 = vadd.f32 %v2887, %v3011
        %v3150 = vadd.f32 %v2888, %v3016
        %v3151 = vadd.f32 %v2889, %v3021
        %v3152 = vadd.f32 %v2890, %v3026
        %v3153 = vadd.f32 %v2891, %v3031
        %v3154 = vadd.f32 %v2892, %v3036
        %v3155 = vadd.f32 %v2893, %v3041
        %v3156 = vadd.f32 %v2894, %v3046
        %v3157 = vadd.f32 %v2895, %v3051
        %v3158 = vadd.f32 %v2896, %v3056
        %v3159 = vadd.f32 %v2897, %v3061
        %v3160 = vadd.f32 %v2898, %v3066
        %v3161 = vadd.f32 %v2899, %v3071
        %v3162 = vadd.f32 %v2900, %v3076
        %v3163 = vadd.f32 %v2901, %v3081
        %v3164 = vadd.f32 %v2902, %v3086
        %v3165 = vadd.f32 %v2903, %v3091
        %v3166 = vadd.f32 %v2904, %v3096
        %v3167 = vadd.f32 %v2905, %v3101
        %v3168 = vadd.f32 %v2906, %v3106
        %v3169 = vadd.f32 %v2907, %v3111
        %v3170 = vadd.f32 %v2908, %v3116
        %v3171 = vadd.f32 %v2909, %v3121
        %v3172 = vadd.f32 %v2910, %v3126
        %v3173 = vadd.f32 %v2911, %v3131
        %v3174 = vadd.f32 %v2912, %v3136
        %v3175 = vadd.f32 %v2913, %v3141
        %v3176 = vld [vmem:[%s2] sm:$0x1]
        %v3178 = vlaneseq
        %v3179 = vshrl.u32 %v3178, 7
        %v3180 = vsub.s32 0, %v3179
        %v3181 = vrot.slane %v3176, %v3180
        %v3183 = vadd.f32 %v3144, %v3181
        %v3184 = vadd.f32 %v3145, %v3181
        %v3185 = vadd.f32 %v3146, %v3181
        %v3186 = vadd.f32 %v3147, %v3181
        %v3187 = vadd.f32 %v3148, %v3181
        %v3188 = vadd.f32 %v3149, %v3181
        %v3189 = vadd.f32 %v3150, %v3181
        %v3190 = vadd.f32 %v3151, %v3181
        %v3191 = vadd.f32 %v3152, %v3181
        %v3192 = vadd.f32 %v3153, %v3181
        %v3193 = vadd.f32 %v3154, %v3181
        %v3194 = vadd.f32 %v3155, %v3181
        %v3195 = vadd.f32 %v3156, %v3181
        %v3196 = vadd.f32 %v3157, %v3181
        %v3197 = vadd.f32 %v3158, %v3181
        %v3198 = vadd.f32 %v3159, %v3181
        %v3199 = vadd.f32 %v3160, %v3181
        %v3200 = vadd.f32 %v3161, %v3181
        %v3201 = vadd.f32 %v3162, %v3181
        %v3202 = vadd.f32 %v3163, %v3181
        %v3203 = vadd.f32 %v3164, %v3181
        %v3204 = vadd.f32 %v3165, %v3181
        %v3205 = vadd.f32 %v3166, %v3181
        %v3206 = vadd.f32 %v3167, %v3181
        %v3207 = vadd.f32 %v3168, %v3181
        %v3208 = vadd.f32 %v3169, %v3181
        %v3209 = vadd.f32 %v3170, %v3181
        %v3210 = vadd.f32 %v3171, %v3181
        %v3211 = vadd.f32 %v3172, %v3181
        %v3212 = vadd.f32 %v3173, %v3181
        %v3213 = vadd.f32 %v3174, %v3181
        %v3214 = vadd.f32 %v3175, %v3181
        %v3215 = vld [vmem:[%s3] sm:$0x1]
        %v3216 = vld [vmem:[%s4] sm:$0x1]
        %v3217 = vsel %vm655, %v3183, 0.0
        %v3218 = vsel %vm655, %v3184, 0.0
        %v3219 = vadd.f32 %v3217, %v3218
        %v3220 = vsel %vm655, %v3185, 0.0
        %v3221 = vadd.f32 %v3219, %v3220
        %v3222 = vsel %vm655, %v3186, 0.0
        %v3223 = vadd.f32 %v3221, %v3222
        %v3224 = vsel %vm655, %v3187, 0.0
        %v3225 = vadd.f32 %v3223, %v3224
        %v3226 = vsel %vm655, %v3188, 0.0
        %v3227 = vadd.f32 %v3225, %v3226
        %v3228 = vsel %vm655, %v3189, 0.0
        %v3229 = vadd.f32 %v3227, %v3228
        %v3230 = vsel %vm655, %v3190, 0.0
        %v3231 = vadd.f32 %v3229, %v3230
        %v3232 = vsel %vm655, %v3191, 0.0
        %v3233 = vadd.f32 %v3231, %v3232
        %v3234 = vsel %vm655, %v3192, 0.0
        %v3235 = vadd.f32 %v3233, %v3234
        %v3236 = vsel %vm655, %v3193, 0.0
        %v3237 = vadd.f32 %v3235, %v3236
        %v3238 = vsel %vm655, %v3194, 0.0
        %v3239 = vadd.f32 %v3237, %v3238
        %v3240 = vsel %vm655, %v3195, 0.0
        %v3241 = vadd.f32 %v3239, %v3240
        %v3242 = vsel %vm655, %v3196, 0.0
        %v3243 = vadd.f32 %v3241, %v3242
        %v3244 = vsel %vm655, %v3197, 0.0
        %v3245 = vadd.f32 %v3243, %v3244
        %v3246 = vsel %vm655, %v3198, 0.0
        %v3247 = vadd.f32 %v3245, %v3246
        %v3248 = vsel %vm655, %v3199, 0.0
        %v3249 = vadd.f32 %v3247, %v3248
        %v3250 = vsel %vm655, %v3200, 0.0
        %v3251 = vadd.f32 %v3249, %v3250
        %v3252 = vsel %vm655, %v3201, 0.0
        %v3253 = vadd.f32 %v3251, %v3252
        %v3254 = vsel %vm655, %v3202, 0.0
        %v3255 = vadd.f32 %v3253, %v3254
        %v3256 = vsel %vm655, %v3203, 0.0
        %v3257 = vadd.f32 %v3255, %v3256
        %v3258 = vsel %vm655, %v3204, 0.0
        %v3259 = vadd.f32 %v3257, %v3258
        %v3260 = vsel %vm655, %v3205, 0.0
        %v3261 = vadd.f32 %v3259, %v3260
        %v3262 = vsel %vm655, %v3206, 0.0
        %v3263 = vadd.f32 %v3261, %v3262
        %v3264 = vsel %vm655, %v3207, 0.0
        %v3265 = vadd.f32 %v3263, %v3264
        %v3266 = vsel %vm655, %v3208, 0.0
        %v3267 = vadd.f32 %v3265, %v3266
        %v3268 = vsel %vm655, %v3209, 0.0
        %v3269 = vadd.f32 %v3267, %v3268
        %v3270 = vsel %vm655, %v3210, 0.0
        %v3271 = vadd.f32 %v3269, %v3270
        %v3272 = vsel %vm655, %v3211, 0.0
        %v3273 = vadd.f32 %v3271, %v3272
        %v3274 = vsel %vm655, %v3212, 0.0
        %v3275 = vadd.f32 %v3273, %v3274
        %v3276 = vsel %vm655, %v3213, 0.0
        %v3277 = vadd.f32 %v3275, %v3276
        %v3278 = vsel %vm655, %v3214, 0.0
        %v3279 = vadd.f32 %v3277, %v3278
        %v3280 = vrot.slane %v3279, 4
        %v3281 = vadd.f32 %v3279, %v3280
        %v3282 = vrot.slane %v3281, 2
        %v3283 = vadd.f32 %v3281, %v3282
        %v3284 = vrot.slane %v3283, 1
        %v3285 = vadd.f32 %v3283, %v3284
        %v3286 = vmul.f32 %v3183, %v3183
        %v3287 = vmul.f32 %v3184, %v3184
        %v3288 = vmul.f32 %v3185, %v3185
        %v3289 = vmul.f32 %v3186, %v3186
        %v3290 = vmul.f32 %v3187, %v3187
        %v3291 = vmul.f32 %v3188, %v3188
        %v3292 = vmul.f32 %v3189, %v3189
        %v3293 = vmul.f32 %v3190, %v3190
        %v3294 = vmul.f32 %v3191, %v3191
        %v3295 = vmul.f32 %v3192, %v3192
        %v3296 = vmul.f32 %v3193, %v3193
        %v3297 = vmul.f32 %v3194, %v3194
        %v3298 = vmul.f32 %v3195, %v3195
        %v3299 = vmul.f32 %v3196, %v3196
        %v3300 = vmul.f32 %v3197, %v3197
        %v3301 = vmul.f32 %v3198, %v3198
        %v3302 = vmul.f32 %v3199, %v3199
        %v3303 = vmul.f32 %v3200, %v3200
        %v3304 = vmul.f32 %v3201, %v3201
        %v3305 = vmul.f32 %v3202, %v3202
        %v3306 = vmul.f32 %v3203, %v3203
        %v3307 = vmul.f32 %v3204, %v3204
        %v3308 = vmul.f32 %v3205, %v3205
        %v3309 = vmul.f32 %v3206, %v3206
        %v3310 = vmul.f32 %v3207, %v3207
        %v3311 = vmul.f32 %v3208, %v3208
        %v3312 = vmul.f32 %v3209, %v3209
        %v3313 = vmul.f32 %v3210, %v3210
        %v3314 = vmul.f32 %v3211, %v3211
        %v3315 = vmul.f32 %v3212, %v3212
        %v3316 = vmul.f32 %v3213, %v3213
        %v3317 = vmul.f32 %v3214, %v3214
        %v3318 = vsel %vm655, %v3286, 0.0
        %v3319 = vsel %vm655, %v3287, 0.0
        %v3320 = vadd.f32 %v3318, %v3319
        %v3321 = vsel %vm655, %v3288, 0.0
        %v3322 = vadd.f32 %v3320, %v3321
        %v3323 = vsel %vm655, %v3289, 0.0
        %v3324 = vadd.f32 %v3322, %v3323
        %v3325 = vsel %vm655, %v3290, 0.0
        %v3326 = vadd.f32 %v3324, %v3325
        %v3327 = vsel %vm655, %v3291, 0.0
        %v3328 = vadd.f32 %v3326, %v3327
        %v3329 = vsel %vm655, %v3292, 0.0
        %v3330 = vadd.f32 %v3328, %v3329
        %v3331 = vsel %vm655, %v3293, 0.0
        %v3332 = vadd.f32 %v3330, %v3331
        %v3333 = vsel %vm655, %v3294, 0.0
        %v3334 = vadd.f32 %v3332, %v3333
        %v3335 = vsel %vm655, %v3295, 0.0
        %v3336 = vadd.f32 %v3334, %v3335
        %v3337 = vsel %vm655, %v3296, 0.0
        %v3338 = vadd.f32 %v3336, %v3337
        %v3339 = vsel %vm655, %v3297, 0.0
        %v3340 = vadd.f32 %v3338, %v3339
        %v3341 = vsel %vm655, %v3298, 0.0
        %v3342 = vadd.f32 %v3340, %v3341
        %v3343 = vsel %vm655, %v3299, 0.0
        %v3344 = vadd.f32 %v3342, %v3343
        %v3345 = vsel %vm655, %v3300, 0.0
        %v3346 = vadd.f32 %v3344, %v3345
        %v3347 = vsel %vm655, %v3301, 0.0
        %v3348 = vadd.f32 %v3346, %v3347
        %v3349 = vsel %vm655, %v3302, 0.0
        %v3350 = vadd.f32 %v3348, %v3349
        %v3351 = vsel %vm655, %v3303, 0.0
        %v3352 = vadd.f32 %v3350, %v3351
        %v3353 = vsel %vm655, %v3304, 0.0
        %v3354 = vadd.f32 %v3352, %v3353
        %v3355 = vsel %vm655, %v3305, 0.0
        %v3356 = vadd.f32 %v3354, %v3355
        %v3357 = vsel %vm655, %v3306, 0.0
        %v3358 = vadd.f32 %v3356, %v3357
        %v3359 = vsel %vm655, %v3307, 0.0
        %v3360 = vadd.f32 %v3358, %v3359
        %v3361 = vsel %vm655, %v3308, 0.0
        %v3362 = vadd.f32 %v3360, %v3361
        %v3363 = vsel %vm655, %v3309, 0.0
        %v3364 = vadd.f32 %v3362, %v3363
        %v3365 = vsel %vm655, %v3310, 0.0
        %v3366 = vadd.f32 %v3364, %v3365
        %v3367 = vsel %vm655, %v3311, 0.0
        %v3368 = vadd.f32 %v3366, %v3367
        %v3369 = vsel %vm655, %v3312, 0.0
        %v3370 = vadd.f32 %v3368, %v3369
        %v3371 = vsel %vm655, %v3313, 0.0
        %v3372 = vadd.f32 %v3370, %v3371
        %v3373 = vsel %vm655, %v3314, 0.0
        %v3374 = vadd.f32 %v3372, %v3373
        %v3375 = vsel %vm655, %v3315, 0.0
        %v3376 = vadd.f32 %v3374, %v3375
        %v3377 = vsel %vm655, %v3316, 0.0
        %v3378 = vadd.f32 %v3376, %v3377
        %v3379 = vsel %vm655, %v3317, 0.0
        %v3380 = vadd.f32 %v3378, %v3379
        %v3381 = vrot.slane %v3380, 4
        %v3382 = vadd.f32 %v3380, %v3381
        %v3383 = vrot.slane %v3382, 2
        %v3384 = vadd.f32 %v3382, %v3383
        %v3385 = vrot.slane %v3384, 1
        %v3386 = vadd.f32 %v3384, %v3385
        %v3388 = vsel %vm655, %v3285, 0
        %3390 = vmatprep.subr.mxu0 0.0
        %3391 = vmatpush1.msra.mxu0 0.0
        %3392 = vmatprep.subr.mxu0 0.0
        %3393 = vmatpush1.msra.mxu0 0.0
        %3394 = vmatprep.subr.mxu0 0.0
        %3395 = vmatpush1.msra.mxu0 0.0
        %3396 = vmatprep.subr.mxu0 0.0
        %3397 = vmatpush1.msra.mxu0 0.0
        %3398 = vmatprep.subr.mxu0 0.0
        %3399 = vmatpush1.msra.mxu0 0.0
        %3400 = vmatprep.subr.mxu0 0.0
        %3401 = vmatpush1.msra.mxu0 0.0
        %3402 = vmatprep.subr.mxu0 0.0
        %3403 = vmatpush1.msra.mxu0 0.0
        %3404 = vmatprep.subr.mxu0 0.0
        %3405 = vmatpush1.msra.mxu0 0.0
        %3406 = vmatprep.subr.mxu0 0.0
        %3407 = vmatpush1.msra.mxu0 0.0
        %3408 = vmatprep.subr.mxu0 0.0
        %3409 = vmatpush1.msra.mxu0 0.0
        %3410 = vmatprep.subr.mxu0 0.0
        %3411 = vmatpush1.msra.mxu0 0.0
        %3412 = vmatprep.subr.mxu0 0.0
        %3413 = vmatpush1.msra.mxu0 0.0
        %3414 = vmatprep.subr.mxu0 0.0
        %3415 = vmatpush1.msra.mxu0 %v410
        %3416 = vmatprep.subr.mxu0 0.0
        %3417 = vmatpush1.msra.mxu0 %v409
        %3418 = vmatprep.subr.mxu0 0.0
        %3419 = vmatpush1.msra.mxu0 %v408
        %3420 = vmatprep.subr.mxu0 0.0
        %3421 = vmatpush1.msra.mxu0 %v407
        %3422 = vmatprep.subr.mxu0 0.0
        %3423 = vmatpush2.msra.mxu0 0.0
        %3424 = vmatprep.subr.mxu0 0.0
        %3425 = vmatpush2.msra.mxu0 0.0
        %3426 = vmatprep.subr.mxu0 0.0
        %3427 = vmatpush2.msra.mxu0 0.0
        %3428 = vmatprep.subr.mxu0 0.0
        %3429 = vmatpush2.msra.mxu0 0.0
        %3430 = vmatprep.subr.mxu0 0.0
        %3431 = vmatpush2.msra.mxu0 0.0
        %3432 = vmatprep.subr.mxu0 0.0
        %3433 = vmatpush2.msra.mxu0 0.0
        %3434 = vmatprep.subr.mxu0 0.0
        %3435 = vmatpush2.msra.mxu0 0.0
        %3436 = vmatprep.subr.mxu0 0.0
        %3437 = vmatpush2.msra.mxu0 0.0
        %3438 = vmatprep.subr.mxu0 0.0
        %3439 = vmatpush2.msra.mxu0 0.0
        %3440 = vmatprep.subr.mxu0 0.0
        %3441 = vmatpush2.msra.mxu0 0.0
        %3442 = vmatprep.subr.mxu0 0.0
        %3443 = vmatpush2.msra.mxu0 0.0
        %3444 = vmatprep.subr.mxu0 0.0
        %3445 = vmatpush2.msra.mxu0 0.0
        %3446 = vmatprep.subr.mxu0 0.0
        %3447 = vmatpush2.msra.mxu0 0.0
        %3448 = vmatprep.subr.mxu0 0.0
        %3449 = vmatpush2.msra.mxu0 0.0
        %3450 = vmatprep.subr.mxu0 0.0
        %3451 = vmatpush2.msra.mxu0 0.0
        %3452 = vmatprep.subr.mxu0 0.0
        %3453 = vmatpush2.msra.mxu0 0.0
        %3454 = vmatprep.mubr.f32.mxu0 0.0
        %3455 = vmatmul.mubr.f32.gmra.mxu0 %v3388
        %v3456 = vpop.f32.mrf.mxu0
        %v3457 = vadd.f32 0.0, %v3456
        %v3458 = vpop.f32.mrf.mxu0
        %3459 = vdwg.mxu0
        %v3460 = vmul.f32 %v3457, 0.00048828125
        %v3462 = vsel %vm655, %v3386, 0
        %3464 = vmatprep.subr.mxu0 0.0
        %3465 = vmatpush1.msra.mxu0 0.0
        %3466 = vmatprep.subr.mxu0 0.0
        %3467 = vmatpush1.msra.mxu0 0.0
        %3468 = vmatprep.subr.mxu0 0.0
        %3469 = vmatpush1.msra.mxu0 0.0
        %3470 = vmatprep.subr.mxu0 0.0
        %3471 = vmatpush1.msra.mxu0 0.0
        %3472 = vmatprep.subr.mxu0 0.0
        %3473 = vmatpush1.msra.mxu0 0.0
        %3474 = vmatprep.subr.mxu0 0.0
        %3475 = vmatpush1.msra.mxu0 0.0
        %3476 = vmatprep.subr.mxu0 0.0
        %3477 = vmatpush1.msra.mxu0 0.0
        %3478 = vmatprep.subr.mxu0 0.0
        %3479 = vmatpush1.msra.mxu0 0.0
        %3480 = vmatprep.subr.mxu0 0.0
        %3481 = vmatpush1.msra.mxu0 0.0
        %3482 = vmatprep.subr.mxu0 0.0
        %3483 = vmatpush1.msra.mxu0 0.0
        %3484 = vmatprep.subr.mxu0 0.0
        %3485 = vmatpush1.msra.mxu0 0.0
        %3486 = vmatprep.subr.mxu0 0.0
        %3487 = vmatpush1.msra.mxu0 0.0
        %3488 = vmatprep.subr.mxu0 0.0
        %3489 = vmatpush1.msra.mxu0 %v410
        %3490 = vmatprep.subr.mxu0 0.0
        %3491 = vmatpush1.msra.mxu0 %v409
        %3492 = vmatprep.subr.mxu0 0.0
        %3493 = vmatpush1.msra.mxu0 %v408
        %3494 = vmatprep.subr.mxu0 0.0
        %3495 = vmatpush1.msra.mxu0 %v407
        %3496 = vmatprep.subr.mxu0 0.0
        %3497 = vmatpush2.msra.mxu0 0.0
        %3498 = vmatprep.subr.mxu0 0.0
        %3499 = vmatpush2.msra.mxu0 0.0
        %3500 = vmatprep.subr.mxu0 0.0
        %3501 = vmatpush2.msra.mxu0 0.0
        %3502 = vmatprep.subr.mxu0 0.0
        %3503 = vmatpush2.msra.mxu0 0.0
        %3504 = vmatprep.subr.mxu0 0.0
        %3505 = vmatpush2.msra.mxu0 0.0
        %3506 = vmatprep.subr.mxu0 0.0
        %3507 = vmatpush2.msra.mxu0 0.0
        %3508 = vmatprep.subr.mxu0 0.0
        %3509 = vmatpush2.msra.mxu0 0.0
        %3510 = vmatprep.subr.mxu0 0.0
        %3511 = vmatpush2.msra.mxu0 0.0
        %3512 = vmatprep.subr.mxu0 0.0
        %3513 = vmatpush2.msra.mxu0 0.0
        %3514 = vmatprep.subr.mxu0 0.0
        %3515 = vmatpush2.msra.mxu0 0.0
        %3516 = vmatprep.subr.mxu0 0.0
        %3517 = vmatpush2.msra.mxu0 0.0
        %3518 = vmatprep.subr.mxu0 0.0
        %3519 = vmatpush2.msra.mxu0 0.0
        %3520 = vmatprep.subr.mxu0 0.0
        %3521 = vmatpush2.msra.mxu0 0.0
        %3522 = vmatprep.subr.mxu0 0.0
        %3523 = vmatpush2.msra.mxu0 0.0
        %3524 = vmatprep.subr.mxu0 0.0
        %3525 = vmatpush2.msra.mxu0 0.0
        %3526 = vmatprep.subr.mxu0 0.0
        %3527 = vmatpush2.msra.mxu0 0.0
        %3528 = vmatprep.mubr.f32.mxu0 0.0
        %3529 = vmatmul.mubr.f32.gmra.mxu0 %v3462
        %v3530 = vpop.f32.mrf.mxu0
        %v3531 = vadd.f32 0.0, %v3530
        %v3532 = vpop.f32.mrf.mxu0
        %3533 = vdwg.mxu0
        %v3534 = vmul.f32 %v3531, 0.00048828125
        %v3535 = vmul.f32 %v3460, %v3460
        %v3536 = vsub.f32 %v3534, %v3535
        %v3537 = vmax.f32 %v3536, 0.0
        %v3538 = vadd.f32 %v3537, 1e-05
        %v3539 = vrsqrt.pop %v3538
        %vm3540 = vcmask 31744
        %v3542 = vsel %vm3540, %v3460, 0
        %v3545 = vsel %vm3540, %v407, 0
        %v3548 = vsel %vm3540, %v408, 0
        %v3551 = vsel %vm3540, %v409, 0
        %v3554 = vsel %vm3540, %v410, 0
        %3556 = vmatprep.subr.mxu0 0.0
        %3557 = vmatpush1.xpose.msra.mxu0 0.0
        %3558 = vmatprep.subr.mxu0 0.0
        %3559 = vmatpush1.xpose.msra.mxu0 0.0
        %3560 = vmatprep.subr.mxu0 0.0
        %3561 = vmatpush1.xpose.msra.mxu0 0.0
        %3562 = vmatprep.subr.mxu0 0.0
        %3563 = vmatpush1.xpose.msra.mxu0 0.0
        %3564 = vmatprep.subr.mxu0 0.0
        %3565 = vmatpush1.xpose.msra.mxu0 0.0
        %3566 = vmatprep.subr.mxu0 0.0
        %3567 = vmatpush1.xpose.msra.mxu0 0.0
        %3568 = vmatprep.subr.mxu0 0.0
        %3569 = vmatpush1.xpose.msra.mxu0 0.0
        %3570 = vmatprep.subr.mxu0 0.0
        %3571 = vmatpush1.xpose.msra.mxu0 0.0
        %3572 = vmatprep.subr.mxu0 0.0
        %3573 = vmatpush1.xpose.msra.mxu0 0.0
        %3574 = vmatprep.subr.mxu0 0.0
        %3575 = vmatpush1.xpose.msra.mxu0 0.0
        %3576 = vmatprep.subr.mxu0 0.0
        %3577 = vmatpush1.xpose.msra.mxu0 0.0
        %3578 = vmatprep.subr.mxu0 0.0
        %3579 = vmatpush1.xpose.msra.mxu0 0.0
        %3580 = vmatprep.subr.mxu0 0.0
        %3581 = vmatpush1.xpose.msra.mxu0 %v3554
        %3582 = vmatprep.subr.mxu0 0.0
        %3583 = vmatpush1.xpose.msra.mxu0 %v3551
        %3584 = vmatprep.subr.mxu0 0.0
        %3585 = vmatpush1.xpose.msra.mxu0 %v3548
        %3586 = vmatprep.subr.mxu0 0.0
        %3587 = vmatpush1.xpose.msra.mxu0 %v3545
        %3588 = vmatprep.subr.mxu0 0.0
        %3589 = vmatpush2.xpose.msra.mxu0 0.0
        %3590 = vmatprep.subr.mxu0 0.0
        %3591 = vmatpush2.xpose.msra.mxu0 0.0
        %3592 = vmatprep.subr.mxu0 0.0
        %3593 = vmatpush2.xpose.msra.mxu0 0.0
        %3594 = vmatprep.subr.mxu0 0.0
        %3595 = vmatpush2.xpose.msra.mxu0 0.0
        %3596 = vmatprep.subr.mxu0 0.0
        %3597 = vmatpush2.xpose.msra.mxu0 0.0
        %3598 = vmatprep.subr.mxu0 0.0
        %3599 = vmatpush2.xpose.msra.mxu0 0.0
        %3600 = vmatprep.subr.mxu0 0.0
        %3601 = vmatpush2.xpose.msra.mxu0 0.0
        %3602 = vmatprep.subr.mxu0 0.0
        %3603 = vmatpush2.xpose.msra.mxu0 0.0
        %3604 = vmatprep.subr.mxu0 0.0
        %3605 = vmatpush2.xpose.msra.mxu0 0.0
        %3606 = vmatprep.subr.mxu0 0.0
        %3607 = vmatpush2.xpose.msra.mxu0 0.0
        %3608 = vmatprep.subr.mxu0 0.0
        %3609 = vmatpush2.xpose.msra.mxu0 0.0
        %3610 = vmatprep.subr.mxu0 0.0
        %3611 = vmatpush2.xpose.msra.mxu0 0.0
        %3612 = vmatprep.subr.mxu0 0.0
        %3613 = vmatpush2.xpose.msra.mxu0 0.0
        %3614 = vmatprep.subr.mxu0 0.0
        %3615 = vmatpush2.xpose.msra.mxu0 0.0
        %3616 = vmatprep.subr.mxu0 0.0
        %3617 = vmatpush2.xpose.msra.mxu0 0.0
        %3618 = vmatprep.subr.mxu0 0.0
        %3619 = vmatpush2.xpose.msra.mxu0 0.0
        %3620 = vmatprep.mubr.f32.mxu0 0.0
        %3621 = vmatmul.mubr.f32.gmra.mxu0 %v3542
        %v3622 = vpop.f32.mrf.mxu0
        %v3623 = vadd.f32 0.0, %v3622
        %v3624 = vpop.f32.mrf.mxu0
        %3625 = vdwg.mxu0
        %v3627 = vsel %vm3540, %v3539, 0
        %3629 = vmatprep.subr.mxu0 0.0
        %3630 = vmatpush1.xpose.msra.mxu0 0.0
        %3631 = vmatprep.subr.mxu0 0.0
        %3632 = vmatpush1.xpose.msra.mxu0 0.0
        %3633 = vmatprep.subr.mxu0 0.0
        %3634 = vmatpush1.xpose.msra.mxu0 0.0
        %3635 = vmatprep.subr.mxu0 0.0
        %3636 = vmatpush1.xpose.msra.mxu0 0.0
        %3637 = vmatprep.subr.mxu0 0.0
        %3638 = vmatpush1.xpose.msra.mxu0 0.0
        %3639 = vmatprep.subr.mxu0 0.0
        %3640 = vmatpush1.xpose.msra.mxu0 0.0
        %3641 = vmatprep.subr.mxu0 0.0
        %3642 = vmatpush1.xpose.msra.mxu0 0.0
        %3643 = vmatprep.subr.mxu0 0.0
        %3644 = vmatpush1.xpose.msra.mxu0 0.0
        %3645 = vmatprep.subr.mxu0 0.0
        %3646 = vmatpush1.xpose.msra.mxu0 0.0
        %3647 = vmatprep.subr.mxu0 0.0
        %3648 = vmatpush1.xpose.msra.mxu0 0.0
        %3649 = vmatprep.subr.mxu0 0.0
        %3650 = vmatpush1.xpose.msra.mxu0 0.0
        %3651 = vmatprep.subr.mxu0 0.0
        %3652 = vmatpush1.xpose.msra.mxu0 0.0
        %3653 = vmatprep.subr.mxu0 0.0
        %3654 = vmatpush1.xpose.msra.mxu0 %v3554
        %3655 = vmatprep.subr.mxu0 0.0
        %3656 = vmatpush1.xpose.msra.mxu0 %v3551
        %3657 = vmatprep.subr.mxu0 0.0
        %3658 = vmatpush1.xpose.msra.mxu0 %v3548
        %3659 = vmatprep.subr.mxu0 0.0
        %3660 = vmatpush1.xpose.msra.mxu0 %v3545
        %3661 = vmatprep.subr.mxu0 0.0
        %3662 = vmatpush2.xpose.msra.mxu0 0.0
        %3663 = vmatprep.subr.mxu0 0.0
        %3664 = vmatpush2.xpose.msra.mxu0 0.0
        %3665 = vmatprep.subr.mxu0 0.0
        %3666 = vmatpush2.xpose.msra.mxu0 0.0
        %3667 = vmatprep.subr.mxu0 0.0
        %3668 = vmatpush2.xpose.msra.mxu0 0.0
        %3669 = vmatprep.subr.mxu0 0.0
        %3670 = vmatpush2.xpose.msra.mxu0 0.0
        %3671 = vmatprep.subr.mxu0 0.0
        %3672 = vmatpush2.xpose.msra.mxu0 0.0
        %3673 = vmatprep.subr.mxu0 0.0
        %3674 = vmatpush2.xpose.msra.mxu0 0.0
        %3675 = vmatprep.subr.mxu0 0.0
        %3676 = vmatpush2.xpose.msra.mxu0 0.0
        %3677 = vmatprep.subr.mxu0 0.0
        %3678 = vmatpush2.xpose.msra.mxu0 0.0
        %3679 = vmatprep.subr.mxu0 0.0
        %3680 = vmatpush2.xpose.msra.mxu0 0.0
        %3681 = vmatprep.subr.mxu0 0.0
        %3682 = vmatpush2.xpose.msra.mxu0 0.0
        %3683 = vmatprep.subr.mxu0 0.0
        %3684 = vmatpush2.xpose.msra.mxu0 0.0
        %3685 = vmatprep.subr.mxu0 0.0
        %3686 = vmatpush2.xpose.msra.mxu0 0.0
        %3687 = vmatprep.subr.mxu0 0.0
        %3688 = vmatpush2.xpose.msra.mxu0 0.0
        %3689 = vmatprep.subr.mxu0 0.0
        %3690 = vmatpush2.xpose.msra.mxu0 0.0
        %3691 = vmatprep.subr.mxu0 0.0
        %3692 = vmatpush2.xpose.msra.mxu0 0.0
        %3693 = vmatprep.mubr.f32.mxu0 0.0
        %3694 = vmatmul.mubr.f32.gmra.mxu0 %v3627
        %v3695 = vpop.f32.mrf.mxu0
        %v3696 = vadd.f32 0.0, %v3695
        %v3697 = vpop.f32.mrf.mxu0
        %3698 = vdwg.mxu0
        %v3699 = vmul.f32 %v3696, %v3215
        %v3700 = vmul.f32 %v3623, %v3699
        %v3701 = vsub.f32 %v3216, %v3700
        %v3702 = vlaneseq
        %v3703 = vshrl.u32 %v3702, 7
        %v3704 = vsub.s32 0, %v3703
        %v3705 = vrot.slane %v3699, %v3704
        %v3706 = vmul.f32 %v3183, %v3705
        %v3707 = vmul.f32 %v3184, %v3705
        %v3708 = vmul.f32 %v3185, %v3705
        %v3709 = vmul.f32 %v3186, %v3705
        %v3710 = vmul.f32 %v3187, %v3705
        %v3711 = vmul.f32 %v3188, %v3705
        %v3712 = vmul.f32 %v3189, %v3705
        %v3713 = vmul.f32 %v3190, %v3705
        %v3714 = vmul.f32 %v3191, %v3705
        %v3715 = vmul.f32 %v3192, %v3705
        %v3716 = vmul.f32 %v3193, %v3705
        %v3717 = vmul.f32 %v3194, %v3705
        %v3718 = vmul.f32 %v3195, %v3705
        %v3719 = vmul.f32 %v3196, %v3705
        %v3720 = vmul.f32 %v3197, %v3705
        %v3721 = vmul.f32 %v3198, %v3705
        %v3722 = vmul.f32 %v3199, %v3705
        %v3723 = vmul.f32 %v3200, %v3705
        %v3724 = vmul.f32 %v3201, %v3705
        %v3725 = vmul.f32 %v3202, %v3705
        %v3726 = vmul.f32 %v3203, %v3705
        %v3727 = vmul.f32 %v3204, %v3705
        %v3728 = vmul.f32 %v3205, %v3705
        %v3729 = vmul.f32 %v3206, %v3705
        %v3730 = vmul.f32 %v3207, %v3705
        %v3731 = vmul.f32 %v3208, %v3705
        %v3732 = vmul.f32 %v3209, %v3705
        %v3733 = vmul.f32 %v3210, %v3705
        %v3734 = vmul.f32 %v3211, %v3705
        %v3735 = vmul.f32 %v3212, %v3705
        %v3736 = vmul.f32 %v3213, %v3705
        %v3737 = vmul.f32 %v3214, %v3705
        %v3739 = vlaneseq
        %v3740 = vshrl.u32 %v3739, 7
        %v3741 = vsub.s32 0, %v3740
        %v3742 = vrot.slane %v3701, %v3741
        %v3744 = vadd.f32 %v3706, %v3742
        %v3745 = vadd.f32 %v3707, %v3742
        %v3746 = vadd.f32 %v3708, %v3742
        %v3747 = vadd.f32 %v3709, %v3742
        %v3748 = vadd.f32 %v3710, %v3742
        %v3749 = vadd.f32 %v3711, %v3742
        %v3750 = vadd.f32 %v3712, %v3742
        %v3751 = vadd.f32 %v3713, %v3742
        %v3752 = vadd.f32 %v3714, %v3742
        %v3753 = vadd.f32 %v3715, %v3742
        %v3754 = vadd.f32 %v3716, %v3742
        %v3755 = vadd.f32 %v3717, %v3742
        %v3756 = vadd.f32 %v3718, %v3742
        %v3757 = vadd.f32 %v3719, %v3742
        %v3758 = vadd.f32 %v3720, %v3742
        %v3759 = vadd.f32 %v3721, %v3742
        %v3760 = vadd.f32 %v3722, %v3742
        %v3761 = vadd.f32 %v3723, %v3742
        %v3762 = vadd.f32 %v3724, %v3742
        %v3763 = vadd.f32 %v3725, %v3742
        %v3764 = vadd.f32 %v3726, %v3742
        %v3765 = vadd.f32 %v3727, %v3742
        %v3766 = vadd.f32 %v3728, %v3742
        %v3767 = vadd.f32 %v3729, %v3742
        %v3768 = vadd.f32 %v3730, %v3742
        %v3769 = vadd.f32 %v3731, %v3742
        %v3770 = vadd.f32 %v3732, %v3742
        %v3771 = vadd.f32 %v3733, %v3742
        %v3772 = vadd.f32 %v3734, %v3742
        %v3773 = vadd.f32 %v3735, %v3742
        %v3774 = vadd.f32 %v3736, %v3742
        %v3775 = vadd.f32 %v3737, %v3742
        %v3776 = vmax.f32 %v3744, 0.0
        %v3777 = vmax.f32 %v3745, 0.0
        %v3778 = vmax.f32 %v3746, 0.0
        %v3779 = vmax.f32 %v3747, 0.0
        %v3780 = vmax.f32 %v3748, 0.0
        %v3781 = vmax.f32 %v3749, 0.0
        %v3782 = vmax.f32 %v3750, 0.0
        %v3783 = vmax.f32 %v3751, 0.0
        %v3784 = vmax.f32 %v3752, 0.0
        %v3785 = vmax.f32 %v3753, 0.0
        %v3786 = vmax.f32 %v3754, 0.0
        %v3787 = vmax.f32 %v3755, 0.0
        %v3788 = vmax.f32 %v3756, 0.0
        %v3789 = vmax.f32 %v3757, 0.0
        %v3790 = vmax.f32 %v3758, 0.0
        %v3791 = vmax.f32 %v3759, 0.0
        %v3792 = vmax.f32 %v3760, 0.0
        %v3793 = vmax.f32 %v3761, 0.0
        %v3794 = vmax.f32 %v3762, 0.0
        %v3795 = vmax.f32 %v3763, 0.0
        %v3796 = vmax.f32 %v3764, 0.0
        %v3797 = vmax.f32 %v3765, 0.0
        %v3798 = vmax.f32 %v3766, 0.0
        %v3799 = vmax.f32 %v3767, 0.0
        %v3800 = vmax.f32 %v3768, 0.0
        %v3801 = vmax.f32 %v3769, 0.0
        %v3802 = vmax.f32 %v3770, 0.0
        %v3803 = vmax.f32 %v3771, 0.0
        %v3804 = vmax.f32 %v3772, 0.0
        %v3805 = vmax.f32 %v3773, 0.0
        %v3806 = vmax.f32 %v3774, 0.0
        %v3807 = vmax.f32 %v3775, 0.0
        %v3840 = vrot.slane %v3776, 7
        %v3841 = vrot.slane %v3777, 7
        %v3842 = vsel %vm476, %v3840, %v3841
        %v3843 = vrot.slane %v3778, 7
        %v3844 = vrot.slane %v3779, 7
        %v3845 = vsel %vm476, %v3843, %v3844
        %v3846 = vrot.slane %v3780, 7
        %v3847 = vrot.slane %v3781, 7
        %v3848 = vsel %vm476, %v3846, %v3847
        %v3849 = vrot.slane %v3782, 7
        %v3850 = vrot.slane %v3783, 7
        %v3851 = vsel %vm476, %v3849, %v3850
        %v3852 = vrot.slane %v3784, 7
        %v3853 = vrot.slane %v3785, 7
        %v3854 = vsel %vm476, %v3852, %v3853
        %v3855 = vrot.slane %v3786, 7
        %v3856 = vrot.slane %v3787, 7
        %v3857 = vsel %vm476, %v3855, %v3856
        %v3858 = vrot.slane %v3788, 7
        %v3859 = vrot.slane %v3789, 7
        %v3860 = vsel %vm476, %v3858, %v3859
        %v3861 = vrot.slane %v3790, 7
        %v3862 = vrot.slane %v3791, 7
        %v3863 = vsel %vm476, %v3861, %v3862
        %v3864 = vrot.slane %v3792, 7
        %v3865 = vrot.slane %v3793, 7
        %v3866 = vsel %vm476, %v3864, %v3865
        %v3867 = vrot.slane %v3794, 7
        %v3868 = vrot.slane %v3795, 7
        %v3869 = vsel %vm476, %v3867, %v3868
        %v3870 = vrot.slane %v3796, 7
        %v3871 = vrot.slane %v3797, 7
        %v3872 = vsel %vm476, %v3870, %v3871
        %v3873 = vrot.slane %v3798, 7
        %v3874 = vrot.slane %v3799, 7
        %v3875 = vsel %vm476, %v3873, %v3874
        %v3876 = vrot.slane %v3800, 7
        %v3877 = vrot.slane %v3801, 7
        %v3878 = vsel %vm476, %v3876, %v3877
        %v3879 = vrot.slane %v3802, 7
        %v3880 = vrot.slane %v3803, 7
        %v3881 = vsel %vm476, %v3879, %v3880
        %v3882 = vrot.slane %v3804, 7
        %v3883 = vrot.slane %v3805, 7
        %v3884 = vsel %vm476, %v3882, %v3883
        %v3885 = vrot.slane %v3806, 7
        %v3886 = vrot.slane %v3807, 7
        %v3887 = vsel %vm476, %v3885, %v3886
        %v3904 = vsel %vm476, 0.0, %v3840
        %v3905 = vsel %vm476, 0.0, %v3843
        %v3906 = vsel %vm476, 0.0, %v3846
        %v3907 = vsel %vm476, 0.0, %v3849
        %v3908 = vsel %vm476, 0.0, %v3852
        %v3909 = vsel %vm476, 0.0, %v3855
        %v3910 = vsel %vm476, 0.0, %v3858
        %v3911 = vsel %vm476, 0.0, %v3861
        %v3912 = vsel %vm476, 0.0, %v3864
        %v3913 = vsel %vm476, 0.0, %v3867
        %v3914 = vsel %vm476, 0.0, %v3870
        %v3915 = vsel %vm476, 0.0, %v3873
        %v3916 = vsel %vm476, 0.0, %v3876
        %v3917 = vsel %vm476, 0.0, %v3879
        %v3918 = vsel %vm476, 0.0, %v3882
        %v3919 = vsel %vm476, 0.0, %v3885
        %v3920 = vrot.slane %v3776, 1
        %v3921 = vrot.slane %v3777, 1
        %v3922 = vsel %vm561, %v3920, %v3921
        %v3923 = vrot.slane %v3778, 1
        %v3924 = vrot.slane %v3779, 1
        %v3925 = vsel %vm561, %v3923, %v3924
        %v3926 = vrot.slane %v3780, 1
        %v3927 = vrot.slane %v3781, 1
        %v3928 = vsel %vm561, %v3926, %v3927
        %v3929 = vrot.slane %v3782, 1
        %v3930 = vrot.slane %v3783, 1
        %v3931 = vsel %vm561, %v3929, %v3930
        %v3932 = vrot.slane %v3784, 1
        %v3933 = vrot.slane %v3785, 1
        %v3934 = vsel %vm561, %v3932, %v3933
        %v3935 = vrot.slane %v3786, 1
        %v3936 = vrot.slane %v3787, 1
        %v3937 = vsel %vm561, %v3935, %v3936
        %v3938 = vrot.slane %v3788, 1
        %v3939 = vrot.slane %v3789, 1
        %v3940 = vsel %vm561, %v3938, %v3939
        %v3941 = vrot.slane %v3790, 1
        %v3942 = vrot.slane %v3791, 1
        %v3943 = vsel %vm561, %v3941, %v3942
        %v3944 = vrot.slane %v3792, 1
        %v3945 = vrot.slane %v3793, 1
        %v3946 = vsel %vm561, %v3944, %v3945
        %v3947 = vrot.slane %v3794, 1
        %v3948 = vrot.slane %v3795, 1
        %v3949 = vsel %vm561, %v3947, %v3948
        %v3950 = vrot.slane %v3796, 1
        %v3951 = vrot.slane %v3797, 1
        %v3952 = vsel %vm561, %v3950, %v3951
        %v3953 = vrot.slane %v3798, 1
        %v3954 = vrot.slane %v3799, 1
        %v3955 = vsel %vm561, %v3953, %v3954
        %v3956 = vrot.slane %v3800, 1
        %v3957 = vrot.slane %v3801, 1
        %v3958 = vsel %vm561, %v3956, %v3957
        %v3959 = vrot.slane %v3802, 1
        %v3960 = vrot.slane %v3803, 1
        %v3961 = vsel %vm561, %v3959, %v3960
        %v3962 = vrot.slane %v3804, 1
        %v3963 = vrot.slane %v3805, 1
        %v3964 = vsel %vm561, %v3962, %v3963
        %v3965 = vrot.slane %v3806, 1
        %v3966 = vrot.slane %v3807, 1
        %v3967 = vsel %vm561, %v3965, %v3966
        %v3984 = vsel %vm561, %v3921, 0.0
        %v3985 = vsel %vm561, %v3924, 0.0
        %v3986 = vsel %vm561, %v3927, 0.0
        %v3987 = vsel %vm561, %v3930, 0.0
        %v3988 = vsel %vm561, %v3933, 0.0
        %v3989 = vsel %vm561, %v3936, 0.0
        %v3990 = vsel %vm561, %v3939, 0.0
        %v3991 = vsel %vm561, %v3942, 0.0
        %v3992 = vsel %vm561, %v3945, 0.0
        %v3993 = vsel %vm561, %v3948, 0.0
        %v3994 = vsel %vm561, %v3951, 0.0
        %v3995 = vsel %vm561, %v3954, 0.0
        %v3996 = vsel %vm561, %v3957, 0.0
        %v3997 = vsel %vm561, %v3960, 0.0
        %v3998 = vsel %vm561, %v3963, 0.0
        %v3999 = vsel %vm561, %v3966, 0.0
        %s4000 = scalar_lea.vmem [#allocation7], 128
        %v4001 = vld [vmem:[%s4000] sm:$0xff]
        %v4002 = vld [vmem:[%s4000 + $0x8] sm:$0xff]
        %v4003 = vld [vmem:[%s4000 + $0x10] sm:$0xff]
        %v4004 = vld [vmem:[%s4000 + $0x18] sm:$0xff]
        %v4005 = vld [vmem:[#allocation7] sm:$0xff]
        %v4006 = vld [vmem:[#allocation7 + $0x8] sm:$0xff]
        %v4007 = vld [vmem:[#allocation7 + $0x10] sm:$0xff]
        %v4008 = vld [vmem:[#allocation7 + $0x18] sm:$0xff]
        %v4010 = vsel %vm655, %v3904, 0
        %v4012 = vsel %vm655, %v3842, 0
        %v4015 = vsel %vm655, %v3905, 0
        %v4017 = vsel %vm655, %v3845, 0
        %v4020 = vsel %vm655, %v3906, 0
        %v4022 = vsel %vm655, %v3848, 0
        %v4025 = vsel %vm655, %v3907, 0
        %v4027 = vsel %vm655, %v3851, 0
        %v4030 = vsel %vm655, %v3908, 0
        %v4032 = vsel %vm655, %v3854, 0
        %v4035 = vsel %vm655, %v3909, 0
        %v4037 = vsel %vm655, %v3857, 0
        %v4040 = vsel %vm655, %v3910, 0
        %v4042 = vsel %vm655, %v3860, 0
        %v4045 = vsel %vm655, %v3911, 0
        %v4047 = vsel %vm655, %v3863, 0
        %v4050 = vsel %vm655, %v3912, 0
        %v4052 = vsel %vm655, %v3866, 0
        %v4055 = vsel %vm655, %v3913, 0
        %v4057 = vsel %vm655, %v3869, 0
        %v4060 = vsel %vm655, %v3914, 0
        %v4062 = vsel %vm655, %v3872, 0
        %v4065 = vsel %vm655, %v3915, 0
        %v4067 = vsel %vm655, %v3875, 0
        %v4070 = vsel %vm655, %v3916, 0
        %v4072 = vsel %vm655, %v3878, 0
        %v4075 = vsel %vm655, %v3917, 0
        %v4077 = vsel %vm655, %v3881, 0
        %v4080 = vsel %vm655, %v3918, 0
        %v4082 = vsel %vm655, %v3884, 0
        %4084 = vmatprep.subr.mxu0 0.0
        %4085 = vmatpush1.msra.mxu0 0.0
        %4086 = vmatprep.subr.mxu0 0.0
        %4087 = vmatpush1.msra.mxu0 0.0
        %4088 = vmatprep.subr.mxu0 0.0
        %4089 = vmatpush1.msra.mxu0 0.0
        %4090 = vmatprep.subr.mxu0 0.0
        %4091 = vmatpush1.msra.mxu0 0.0
        %4092 = vmatprep.subr.mxu0 0.0
        %4093 = vmatpush1.msra.mxu0 0.0
        %4094 = vmatprep.subr.mxu0 0.0
        %4095 = vmatpush1.msra.mxu0 0.0
        %4096 = vmatprep.subr.mxu0 0.0
        %4097 = vmatpush1.msra.mxu0 0.0
        %4098 = vmatprep.subr.mxu0 0.0
        %4099 = vmatpush1.msra.mxu0 0.0
        %4100 = vmatprep.subr.mxu0 0.0
        %4101 = vmatpush1.msra.mxu0 0.0
        %4102 = vmatprep.subr.mxu0 0.0
        %4103 = vmatpush1.msra.mxu0 0.0
        %4104 = vmatprep.subr.mxu0 0.0
        %4105 = vmatpush1.msra.mxu0 0.0
        %4106 = vmatprep.subr.mxu0 0.0
        %4107 = vmatpush1.msra.mxu0 0.0
        %4108 = vmatprep.subr.mxu0 0.0
        %4109 = vmatpush1.msra.mxu0 %v4008
        %4110 = vmatprep.subr.mxu0 0.0
        %4111 = vmatpush1.msra.mxu0 %v4007
        %4112 = vmatprep.subr.mxu0 0.0
        %4113 = vmatpush1.msra.mxu0 %v4006
        %4114 = vmatprep.subr.mxu0 0.0
        %4115 = vmatpush1.msra.mxu0 %v4005
        %4116 = vmatprep.subr.mxu0 0.0
        %4117 = vmatpush2.msra.mxu0 0.0
        %4118 = vmatprep.subr.mxu0 0.0
        %4119 = vmatpush2.msra.mxu0 0.0
        %4120 = vmatprep.subr.mxu0 0.0
        %4121 = vmatpush2.msra.mxu0 0.0
        %4122 = vmatprep.subr.mxu0 0.0
        %4123 = vmatpush2.msra.mxu0 0.0
        %4124 = vmatprep.subr.mxu0 0.0
        %4125 = vmatpush2.msra.mxu0 0.0
        %4126 = vmatprep.subr.mxu0 0.0
        %4127 = vmatpush2.msra.mxu0 0.0
        %4128 = vmatprep.subr.mxu0 0.0
        %4129 = vmatpush2.msra.mxu0 0.0
        %4130 = vmatprep.subr.mxu0 0.0
        %4131 = vmatpush2.msra.mxu0 0.0
        %4132 = vmatprep.subr.mxu0 0.0
        %4133 = vmatpush2.msra.mxu0 0.0
        %4134 = vmatprep.subr.mxu0 0.0
        %4135 = vmatpush2.msra.mxu0 0.0
        %4136 = vmatprep.subr.mxu0 0.0
        %4137 = vmatpush2.msra.mxu0 0.0
        %4138 = vmatprep.subr.mxu0 0.0
        %4139 = vmatpush2.msra.mxu0 0.0
        %4140 = vmatprep.subr.mxu0 0.0
        %4141 = vmatpush2.msra.mxu0 0.0
        %4142 = vmatprep.subr.mxu0 0.0
        %4143 = vmatpush2.msra.mxu0 0.0
        %4144 = vmatprep.subr.mxu0 0.0
        %4145 = vmatpush2.msra.mxu0 0.0
        %4146 = vmatprep.subr.mxu0 0.0
        %4147 = vmatpush2.msra.mxu0 0.0
        %4148 = vmatprep.mubr.f32.mxu0 0.0
        %4149 = vmatmul.mubr.f32.gmra.mxu0 %v657
        %v4150 = vpop.f32.mrf.mxu0
        %v4151 = vadd.f32 0.0, %v4150
        %v4152 = vpop.f32.mrf.mxu0
        %4153 = vmatprep.mubr.f32.mxu0 0.0
        %4154 = vmatmul.mubr.f32.gmra.mxu0 %v659
        %v4155 = vpop.f32.mrf.mxu0
        %v4156 = vadd.f32 0.0, %v4155
        %v4157 = vpop.f32.mrf.mxu0
        %4158 = vmatprep.mubr.f32.mxu0 0.0
        %4159 = vmatmul.mubr.f32.gmra.mxu0 %v4010
        %v4160 = vpop.f32.mrf.mxu0
        %v4161 = vadd.f32 0.0, %v4160
        %v4162 = vpop.f32.mrf.mxu0
        %4163 = vmatprep.mubr.f32.mxu0 0.0
        %4164 = vmatmul.mubr.f32.gmra.mxu0 %v4012
        %v4165 = vpop.f32.mrf.mxu0
        %v4166 = vadd.f32 0.0, %v4165
        %v4167 = vpop.f32.mrf.mxu0
        %4168 = vmatprep.mubr.f32.mxu0 0.0
        %4169 = vmatmul.mubr.f32.gmra.mxu0 %v4015
        %v4170 = vpop.f32.mrf.mxu0
        %v4171 = vadd.f32 0.0, %v4170
        %v4172 = vpop.f32.mrf.mxu0
        %4173 = vmatprep.mubr.f32.mxu0 0.0
        %4174 = vmatmul.mubr.f32.gmra.mxu0 %v4017
        %v4175 = vpop.f32.mrf.mxu0
        %v4176 = vadd.f32 0.0, %v4175
        %v4177 = vpop.f32.mrf.mxu0
        %4178 = vmatprep.mubr.f32.mxu0 0.0
        %4179 = vmatmul.mubr.f32.gmra.mxu0 %v4020
        %v4180 = vpop.f32.mrf.mxu0
        %v4181 = vadd.f32 0.0, %v4180
        %v4182 = vpop.f32.mrf.mxu0
        %4183 = vmatprep.mubr.f32.mxu0 0.0
        %4184 = vmatmul.mubr.f32.gmra.mxu0 %v4022
        %v4185 = vpop.f32.mrf.mxu0
        %v4186 = vadd.f32 0.0, %v4185
        %v4187 = vpop.f32.mrf.mxu0
        %4188 = vmatprep.mubr.f32.mxu0 0.0
        %4189 = vmatmul.mubr.f32.gmra.mxu0 %v4025
        %v4190 = vpop.f32.mrf.mxu0
        %v4191 = vadd.f32 0.0, %v4190
        %v4192 = vpop.f32.mrf.mxu0
        %4193 = vmatprep.mubr.f32.mxu0 0.0
        %4194 = vmatmul.mubr.f32.gmra.mxu0 %v4027
        %v4195 = vpop.f32.mrf.mxu0
        %v4196 = vadd.f32 0.0, %v4195
        %v4197 = vpop.f32.mrf.mxu0
        %4198 = vmatprep.mubr.f32.mxu0 0.0
        %4199 = vmatmul.mubr.f32.gmra.mxu0 %v4030
        %v4200 = vpop.f32.mrf.mxu0
        %v4201 = vadd.f32 0.0, %v4200
        %v4202 = vpop.f32.mrf.mxu0
        %4203 = vmatprep.mubr.f32.mxu0 0.0
        %4204 = vmatmul.mubr.f32.gmra.mxu0 %v4032
        %v4205 = vpop.f32.mrf.mxu0
        %v4206 = vadd.f32 0.0, %v4205
        %v4207 = vpop.f32.mrf.mxu0
        %4208 = vmatprep.mubr.f32.mxu0 0.0
        %4209 = vmatmul.mubr.f32.gmra.mxu0 %v4035
        %v4210 = vpop.f32.mrf.mxu0
        %v4211 = vadd.f32 0.0, %v4210
        %v4212 = vpop.f32.mrf.mxu0
        %4213 = vmatprep.mubr.f32.mxu0 0.0
        %4214 = vmatmul.mubr.f32.gmra.mxu0 %v4037
        %v4215 = vpop.f32.mrf.mxu0
        %v4216 = vadd.f32 0.0, %v4215
        %v4217 = vpop.f32.mrf.mxu0
        %4218 = vmatprep.mubr.f32.mxu0 0.0
        %4219 = vmatmul.mubr.f32.gmra.mxu0 %v4040
        %v4220 = vpop.f32.mrf.mxu0
        %v4221 = vadd.f32 0.0, %v4220
        %v4222 = vpop.f32.mrf.mxu0
        %4223 = vmatprep.mubr.f32.mxu0 0.0
        %4224 = vmatmul.mubr.f32.gmra.mxu0 %v4042
        %v4225 = vpop.f32.mrf.mxu0
        %v4226 = vadd.f32 0.0, %v4225
        %v4227 = vpop.f32.mrf.mxu0
        %4228 = vmatprep.mubr.f32.mxu0 0.0
        %4229 = vmatmul.mubr.f32.gmra.mxu0 %v4045
        %v4230 = vpop.f32.mrf.mxu0
        %v4231 = vadd.f32 0.0, %v4230
        %v4232 = vpop.f32.mrf.mxu0
        %4233 = vmatprep.mubr.f32.mxu0 0.0
        %4234 = vmatmul.mubr.f32.gmra.mxu0 %v4047
        %v4235 = vpop.f32.mrf.mxu0
        %v4236 = vadd.f32 0.0, %v4235
        %v4237 = vpop.f32.mrf.mxu0
        %4238 = vmatprep.mubr.f32.mxu0 0.0
        %4239 = vmatmul.mubr.f32.gmra.mxu0 %v4050
        %v4240 = vpop.f32.mrf.mxu0
        %v4241 = vadd.f32 0.0, %v4240
        %v4242 = vpop.f32.mrf.mxu0
        %4243 = vmatprep.mubr.f32.mxu0 0.0
        %4244 = vmatmul.mubr.f32.gmra.mxu0 %v4052
        %v4245 = vpop.f32.mrf.mxu0
        %v4246 = vadd.f32 0.0, %v4245
        %v4247 = vpop.f32.mrf.mxu0
        %4248 = vmatprep.mubr.f32.mxu0 0.0
        %4249 = vmatmul.mubr.f32.gmra.mxu0 %v4055
        %v4250 = vpop.f32.mrf.mxu0
        %v4251 = vadd.f32 0.0, %v4250
        %v4252 = vpop.f32.mrf.mxu0
        %4253 = vmatprep.mubr.f32.mxu0 0.0
        %4254 = vmatmul.mubr.f32.gmra.mxu0 %v4057
        %v4255 = vpop.f32.mrf.mxu0
        %v4256 = vadd.f32 0.0, %v4255
        %v4257 = vpop.f32.mrf.mxu0
        %4258 = vmatprep.mubr.f32.mxu0 0.0
        %4259 = vmatmul.mubr.f32.gmra.mxu0 %v4060
        %v4260 = vpop.f32.mrf.mxu0
        %v4261 = vadd.f32 0.0, %v4260
        %v4262 = vpop.f32.mrf.mxu0
        %4263 = vmatprep.mubr.f32.mxu0 0.0
        %4264 = vmatmul.mubr.f32.gmra.mxu0 %v4062
        %v4265 = vpop.f32.mrf.mxu0
        %v4266 = vadd.f32 0.0, %v4265
        %v4267 = vpop.f32.mrf.mxu0
        %4268 = vmatprep.mubr.f32.mxu0 0.0
        %4269 = vmatmul.mubr.f32.gmra.mxu0 %v4065
        %v4270 = vpop.f32.mrf.mxu0
        %v4271 = vadd.f32 0.0, %v4270
        %v4272 = vpop.f32.mrf.mxu0
        %4273 = vmatprep.mubr.f32.mxu0 0.0
        %4274 = vmatmul.mubr.f32.gmra.mxu0 %v4067
        %v4275 = vpop.f32.mrf.mxu0
        %v4276 = vadd.f32 0.0, %v4275
        %v4277 = vpop.f32.mrf.mxu0
        %4278 = vmatprep.mubr.f32.mxu0 0.0
        %4279 = vmatmul.mubr.f32.gmra.mxu0 %v4070
        %v4280 = vpop.f32.mrf.mxu0
        %v4281 = vadd.f32 0.0, %v4280
        %v4282 = vpop.f32.mrf.mxu0
        %4283 = vmatprep.mubr.f32.mxu0 0.0
        %4284 = vmatmul.mubr.f32.gmra.mxu0 %v4072
        %v4285 = vpop.f32.mrf.mxu0
        %v4286 = vadd.f32 0.0, %v4285
        %v4287 = vpop.f32.mrf.mxu0
        %4288 = vmatprep.mubr.f32.mxu0 0.0
        %4289 = vmatmul.mubr.f32.gmra.mxu0 %v4075
        %v4290 = vpop.f32.mrf.mxu0
        %v4291 = vadd.f32 0.0, %v4290
        %v4292 = vpop.f32.mrf.mxu0
        %4293 = vmatprep.mubr.f32.mxu0 0.0
        %4294 = vmatmul.mubr.f32.gmra.mxu0 %v4077
        %v4295 = vpop.f32.mrf.mxu0
        %v4296 = vadd.f32 0.0, %v4295
        %v4297 = vpop.f32.mrf.mxu0
        %4298 = vmatprep.mubr.f32.mxu0 0.0
        %4299 = vmatmul.mubr.f32.gmra.mxu0 %v4080
        %v4300 = vpop.f32.mrf.mxu0
        %v4301 = vadd.f32 0.0, %v4300
        %v4302 = vpop.f32.mrf.mxu0
        %4303 = vmatprep.mubr.f32.mxu0 0.0
        %4304 = vmatmul.mubr.f32.gmra.mxu0 %v4082
        %v4305 = vpop.f32.mrf.mxu0
        %v4306 = vadd.f32 0.0, %v4305
        %v4307 = vpop.f32.mrf.mxu0
        %4308 = vdwg.mxu0
        %v4309 = vsel %vm655, %v3776, 0
        %v4311 = vsel %vm655, %v3777, 0
        %v4313 = vsel %vm655, %v3778, 0
        %v4315 = vsel %vm655, %v3779, 0
        %v4317 = vsel %vm655, %v3780, 0
        %v4319 = vsel %vm655, %v3781, 0
        %v4321 = vsel %vm655, %v3782, 0
        %v4323 = vsel %vm655, %v3783, 0
        %v4325 = vsel %vm655, %v3784, 0
        %v4327 = vsel %vm655, %v3785, 0
        %v4329 = vsel %vm655, %v3786, 0
        %v4331 = vsel %vm655, %v3787, 0
        %v4333 = vsel %vm655, %v3788, 0
        %v4335 = vsel %vm655, %v3789, 0
        %v4337 = vsel %vm655, %v3790, 0
        %v4339 = vsel %vm655, %v3791, 0
        %v4341 = vsel %vm655, %v3792, 0
        %v4343 = vsel %vm655, %v3793, 0
        %v4345 = vsel %vm655, %v3794, 0
        %v4347 = vsel %vm655, %v3795, 0
        %v4349 = vsel %vm655, %v3796, 0
        %v4351 = vsel %vm655, %v3797, 0
        %v4353 = vsel %vm655, %v3798, 0
        %v4355 = vsel %vm655, %v3799, 0
        %v4357 = vsel %vm655, %v3800, 0
        %v4359 = vsel %vm655, %v3801, 0
        %v4361 = vsel %vm655, %v3802, 0
        %v4363 = vsel %vm655, %v3803, 0
        %v4365 = vsel %vm655, %v3804, 0
        %v4367 = vsel %vm655, %v3805, 0
        %v4369 = vsel %vm655, %v3806, 0
        %v4371 = vsel %vm655, %v3807, 0
        %4373 = vmatprep.subr.mxu0 0.0
        %4374 = vmatpush1.msra.mxu0 0.0
        %4375 = vmatprep.subr.mxu0 0.0
        %4376 = vmatpush1.msra.mxu0 0.0
        %4377 = vmatprep.subr.mxu0 0.0
        %4378 = vmatpush1.msra.mxu0 0.0
        %4379 = vmatprep.subr.mxu0 0.0
        %4380 = vmatpush1.msra.mxu0 0.0
        %4381 = vmatprep.subr.mxu0 0.0
        %4382 = vmatpush1.msra.mxu0 0.0
        %4383 = vmatprep.subr.mxu0 0.0
        %4384 = vmatpush1.msra.mxu0 0.0
        %4385 = vmatprep.subr.mxu0 0.0
        %4386 = vmatpush1.msra.mxu0 0.0
        %4387 = vmatprep.subr.mxu0 0.0
        %4388 = vmatpush1.msra.mxu0 0.0
        %4389 = vmatprep.subr.mxu0 0.0
        %4390 = vmatpush1.msra.mxu0 0.0
        %4391 = vmatprep.subr.mxu0 0.0
        %4392 = vmatpush1.msra.mxu0 0.0
        %4393 = vmatprep.subr.mxu0 0.0
        %4394 = vmatpush1.msra.mxu0 0.0
        %4395 = vmatprep.subr.mxu0 0.0
        %4396 = vmatpush1.msra.mxu0 0.0
        %4397 = vmatprep.subr.mxu0 0.0
        %4398 = vmatpush1.msra.mxu0 %v4004
        %4399 = vmatprep.subr.mxu0 0.0
        %4400 = vmatpush1.msra.mxu0 %v4003
        %4401 = vmatprep.subr.mxu0 0.0
        %4402 = vmatpush1.msra.mxu0 %v4002
        %4403 = vmatprep.subr.mxu0 0.0
        %4404 = vmatpush1.msra.mxu0 %v4001
        %4405 = vmatprep.subr.mxu0 0.0
        %4406 = vmatpush2.msra.mxu0 0.0
        %4407 = vmatprep.subr.mxu0 0.0
        %4408 = vmatpush2.msra.mxu0 0.0
        %4409 = vmatprep.subr.mxu0 0.0
        %4410 = vmatpush2.msra.mxu0 0.0
        %4411 = vmatprep.subr.mxu0 0.0
        %4412 = vmatpush2.msra.mxu0 0.0
        %4413 = vmatprep.subr.mxu0 0.0
        %4414 = vmatpush2.msra.mxu0 0.0
        %4415 = vmatprep.subr.mxu0 0.0
        %4416 = vmatpush2.msra.mxu0 0.0
        %4417 = vmatprep.subr.mxu0 0.0
        %4418 = vmatpush2.msra.mxu0 0.0
        %4419 = vmatprep.subr.mxu0 0.0
        %4420 = vmatpush2.msra.mxu0 0.0
        %4421 = vmatprep.subr.mxu0 0.0
        %4422 = vmatpush2.msra.mxu0 0.0
        %4423 = vmatprep.subr.mxu0 0.0
        %4424 = vmatpush2.msra.mxu0 0.0
        %4425 = vmatprep.subr.mxu0 0.0
        %4426 = vmatpush2.msra.mxu0 0.0
        %4427 = vmatprep.subr.mxu0 0.0
        %4428 = vmatpush2.msra.mxu0 0.0
        %4429 = vmatprep.subr.mxu0 0.0
        %4430 = vmatpush2.msra.mxu0 0.0
        %4431 = vmatprep.subr.mxu0 0.0
        %4432 = vmatpush2.msra.mxu0 0.0
        %4433 = vmatprep.subr.mxu0 0.0
        %4434 = vmatpush2.msra.mxu0 0.0
        %4435 = vmatprep.subr.mxu0 0.0
        %4436 = vmatpush2.msra.mxu0 0.0
        %4437 = vmatprep.mubr.f32.mxu0 0.0
        %4438 = vmatmul.mubr.f32.gmra.mxu0 %v4309
        %v4439 = vpop.f32.mrf.mxu0
        %v4440 = vadd.f32 %v4151, %v4439
        %v4441 = vpop.f32.mrf.mxu0
        %4442 = vmatprep.mubr.f32.mxu0 0.0
        %4443 = vmatmul.mubr.f32.gmra.mxu0 %v4311
        %v4444 = vpop.f32.mrf.mxu0
        %v4445 = vadd.f32 %v4156, %v4444
        %v4446 = vpop.f32.mrf.mxu0
        %4447 = vmatprep.mubr.f32.mxu0 0.0
        %4448 = vmatmul.mubr.f32.gmra.mxu0 %v4313
        %v4449 = vpop.f32.mrf.mxu0
        %v4450 = vadd.f32 %v4161, %v4449
        %v4451 = vpop.f32.mrf.mxu0
        %4452 = vmatprep.mubr.f32.mxu0 0.0
        %4453 = vmatmul.mubr.f32.gmra.mxu0 %v4315
        %v4454 = vpop.f32.mrf.mxu0
        %v4455 = vadd.f32 %v4166, %v4454
        %v4456 = vpop.f32.mrf.mxu0
        %4457 = vmatprep.mubr.f32.mxu0 0.0
        %4458 = vmatmul.mubr.f32.gmra.mxu0 %v4317
        %v4459 = vpop.f32.mrf.mxu0
        %v4460 = vadd.f32 %v4171, %v4459
        %v4461 = vpop.f32.mrf.mxu0
        %4462 = vmatprep.mubr.f32.mxu0 0.0
        %4463 = vmatmul.mubr.f32.gmra.mxu0 %v4319
        %v4464 = vpop.f32.mrf.mxu0
        %v4465 = vadd.f32 %v4176, %v4464
        %v4466 = vpop.f32.mrf.mxu0
        %4467 = vmatprep.mubr.f32.mxu0 0.0
        %4468 = vmatmul.mubr.f32.gmra.mxu0 %v4321
        %v4469 = vpop.f32.mrf.mxu0
        %v4470 = vadd.f32 %v4181, %v4469
        %v4471 = vpop.f32.mrf.mxu0
        %4472 = vmatprep.mubr.f32.mxu0 0.0
        %4473 = vmatmul.mubr.f32.gmra.mxu0 %v4323
        %v4474 = vpop.f32.mrf.mxu0
        %v4475 = vadd.f32 %v4186, %v4474
        %v4476 = vpop.f32.mrf.mxu0
        %4477 = vmatprep.mubr.f32.mxu0 0.0
        %4478 = vmatmul.mubr.f32.gmra.mxu0 %v4325
        %v4479 = vpop.f32.mrf.mxu0
        %v4480 = vadd.f32 %v4191, %v4479
        %v4481 = vpop.f32.mrf.mxu0
        %4482 = vmatprep.mubr.f32.mxu0 0.0
        %4483 = vmatmul.mubr.f32.gmra.mxu0 %v4327
        %v4484 = vpop.f32.mrf.mxu0
        %v4485 = vadd.f32 %v4196, %v4484
        %v4486 = vpop.f32.mrf.mxu0
        %4487 = vmatprep.mubr.f32.mxu0 0.0
        %4488 = vmatmul.mubr.f32.gmra.mxu0 %v4329
        %v4489 = vpop.f32.mrf.mxu0
        %v4490 = vadd.f32 %v4201, %v4489
        %v4491 = vpop.f32.mrf.mxu0
        %4492 = vmatprep.mubr.f32.mxu0 0.0
        %4493 = vmatmul.mubr.f32.gmra.mxu0 %v4331
        %v4494 = vpop.f32.mrf.mxu0
        %v4495 = vadd.f32 %v4206, %v4494
        %v4496 = vpop.f32.mrf.mxu0
        %4497 = vmatprep.mubr.f32.mxu0 0.0
        %4498 = vmatmul.mubr.f32.gmra.mxu0 %v4333
        %v4499 = vpop.f32.mrf.mxu0
        %v4500 = vadd.f32 %v4211, %v4499
        %v4501 = vpop.f32.mrf.mxu0
        %4502 = vmatprep.mubr.f32.mxu0 0.0
        %4503 = vmatmul.mubr.f32.gmra.mxu0 %v4335
        %v4504 = vpop.f32.mrf.mxu0
        %v4505 = vadd.f32 %v4216, %v4504
        %v4506 = vpop.f32.mrf.mxu0
        %4507 = vmatprep.mubr.f32.mxu0 0.0
        %4508 = vmatmul.mubr.f32.gmra.mxu0 %v4337
        %v4509 = vpop.f32.mrf.mxu0
        %v4510 = vadd.f32 %v4221, %v4509
        %v4511 = vpop.f32.mrf.mxu0
        %4512 = vmatprep.mubr.f32.mxu0 0.0
        %4513 = vmatmul.mubr.f32.gmra.mxu0 %v4339
        %v4514 = vpop.f32.mrf.mxu0
        %v4515 = vadd.f32 %v4226, %v4514
        %v4516 = vpop.f32.mrf.mxu0
        %4517 = vmatprep.mubr.f32.mxu0 0.0
        %4518 = vmatmul.mubr.f32.gmra.mxu0 %v4341
        %v4519 = vpop.f32.mrf.mxu0
        %v4520 = vadd.f32 %v4231, %v4519
        %v4521 = vpop.f32.mrf.mxu0
        %4522 = vmatprep.mubr.f32.mxu0 0.0
        %4523 = vmatmul.mubr.f32.gmra.mxu0 %v4343
        %v4524 = vpop.f32.mrf.mxu0
        %v4525 = vadd.f32 %v4236, %v4524
        %v4526 = vpop.f32.mrf.mxu0
        %4527 = vmatprep.mubr.f32.mxu0 0.0
        %4528 = vmatmul.mubr.f32.gmra.mxu0 %v4345
        %v4529 = vpop.f32.mrf.mxu0
        %v4530 = vadd.f32 %v4241, %v4529
        %v4531 = vpop.f32.mrf.mxu0
        %4532 = vmatprep.mubr.f32.mxu0 0.0
        %4533 = vmatmul.mubr.f32.gmra.mxu0 %v4347
        %v4534 = vpop.f32.mrf.mxu0
        %v4535 = vadd.f32 %v4246, %v4534
        %v4536 = vpop.f32.mrf.mxu0
        %4537 = vmatprep.mubr.f32.mxu0 0.0
        %4538 = vmatmul.mubr.f32.gmra.mxu0 %v4349
        %v4539 = vpop.f32.mrf.mxu0
        %v4540 = vadd.f32 %v4251, %v4539
        %v4541 = vpop.f32.mrf.mxu0
        %4542 = vmatprep.mubr.f32.mxu0 0.0
        %4543 = vmatmul.mubr.f32.gmra.mxu0 %v4351
        %v4544 = vpop.f32.mrf.mxu0
        %v4545 = vadd.f32 %v4256, %v4544
        %v4546 = vpop.f32.mrf.mxu0
        %4547 = vmatprep.mubr.f32.mxu0 0.0
        %4548 = vmatmul.mubr.f32.gmra.mxu0 %v4353
        %v4549 = vpop.f32.mrf.mxu0
        %v4550 = vadd.f32 %v4261, %v4549
        %v4551 = vpop.f32.mrf.mxu0
        %4552 = vmatprep.mubr.f32.mxu0 0.0
        %4553 = vmatmul.mubr.f32.gmra.mxu0 %v4355
        %v4554 = vpop.f32.mrf.mxu0
        %v4555 = vadd.f32 %v4266, %v4554
        %v4556 = vpop.f32.mrf.mxu0
        %4557 = vmatprep.mubr.f32.mxu0 0.0
        %4558 = vmatmul.mubr.f32.gmra.mxu0 %v4357
        %v4559 = vpop.f32.mrf.mxu0
        %v4560 = vadd.f32 %v4271, %v4559
        %v4561 = vpop.f32.mrf.mxu0
        %4562 = vmatprep.mubr.f32.mxu0 0.0
        %4563 = vmatmul.mubr.f32.gmra.mxu0 %v4359
        %v4564 = vpop.f32.mrf.mxu0
        %v4565 = vadd.f32 %v4276, %v4564
        %v4566 = vpop.f32.mrf.mxu0
        %4567 = vmatprep.mubr.f32.mxu0 0.0
        %4568 = vmatmul.mubr.f32.gmra.mxu0 %v4361
        %v4569 = vpop.f32.mrf.mxu0
        %v4570 = vadd.f32 %v4281, %v4569
        %v4571 = vpop.f32.mrf.mxu0
        %4572 = vmatprep.mubr.f32.mxu0 0.0
        %4573 = vmatmul.mubr.f32.gmra.mxu0 %v4363
        %v4574 = vpop.f32.mrf.mxu0
        %v4575 = vadd.f32 %v4286, %v4574
        %v4576 = vpop.f32.mrf.mxu0
        %4577 = vmatprep.mubr.f32.mxu0 0.0
        %4578 = vmatmul.mubr.f32.gmra.mxu0 %v4365
        %v4579 = vpop.f32.mrf.mxu0
        %v4580 = vadd.f32 %v4291, %v4579
        %v4581 = vpop.f32.mrf.mxu0
        %4582 = vmatprep.mubr.f32.mxu0 0.0
        %4583 = vmatmul.mubr.f32.gmra.mxu0 %v4367
        %v4584 = vpop.f32.mrf.mxu0
        %v4585 = vadd.f32 %v4296, %v4584
        %v4586 = vpop.f32.mrf.mxu0
        %4587 = vmatprep.mubr.f32.mxu0 0.0
        %4588 = vmatmul.mubr.f32.gmra.mxu0 %v4369
        %v4589 = vpop.f32.mrf.mxu0
        %v4590 = vadd.f32 %v4301, %v4589
        %v4591 = vpop.f32.mrf.mxu0
        %4592 = vmatprep.mubr.f32.mxu0 0.0
        %4593 = vmatmul.mubr.f32.gmra.mxu0 %v4371
        %v4594 = vpop.f32.mrf.mxu0
        %v4595 = vadd.f32 %v4306, %v4594
        %v4596 = vpop.f32.mrf.mxu0
        %4597 = vdwg.mxu0
        %s4598 = scalar_lea.vmem [#allocation7], 32
        %v4599 = vld [vmem:[%s4598] sm:$0xff]
        %v4600 = vld [vmem:[%s4598 + $0x8] sm:$0xff]
        %v4601 = vld [vmem:[%s4598 + $0x10] sm:$0xff]
        %v4602 = vld [vmem:[%s4598 + $0x18] sm:$0xff]
        %4603 = vmatprep.subr.mxu0 0.0
        %4604 = vmatpush1.msra.mxu0 0.0
        %4605 = vmatprep.subr.mxu0 0.0
        %4606 = vmatpush1.msra.mxu0 0.0
        %4607 = vmatprep.subr.mxu0 0.0
        %4608 = vmatpush1.msra.mxu0 0.0
        %4609 = vmatprep.subr.mxu0 0.0
        %4610 = vmatpush1.msra.mxu0 0.0
        %4611 = vmatprep.subr.mxu0 0.0
        %4612 = vmatpush1.msra.mxu0 0.0
        %4613 = vmatprep.subr.mxu0 0.0
        %4614 = vmatpush1.msra.mxu0 0.0
        %4615 = vmatprep.subr.mxu0 0.0
        %4616 = vmatpush1.msra.mxu0 0.0
        %4617 = vmatprep.subr.mxu0 0.0
        %4618 = vmatpush1.msra.mxu0 0.0
        %4619 = vmatprep.subr.mxu0 0.0
        %4620 = vmatpush1.msra.mxu0 0.0
        %4621 = vmatprep.subr.mxu0 0.0
        %4622 = vmatpush1.msra.mxu0 0.0
        %4623 = vmatprep.subr.mxu0 0.0
        %4624 = vmatpush1.msra.mxu0 0.0
        %4625 = vmatprep.subr.mxu0 0.0
        %4626 = vmatpush1.msra.mxu0 0.0
        %4627 = vmatprep.subr.mxu0 0.0
        %4628 = vmatpush1.msra.mxu0 %v4602
        %4629 = vmatprep.subr.mxu0 0.0
        %4630 = vmatpush1.msra.mxu0 %v4601
        %4631 = vmatprep.subr.mxu0 0.0
        %4632 = vmatpush1.msra.mxu0 %v4600
        %4633 = vmatprep.subr.mxu0 0.0
        %4634 = vmatpush1.msra.mxu0 %v4599
        %4635 = vmatprep.subr.mxu0 0.0
        %4636 = vmatpush2.msra.mxu0 0.0
        %4637 = vmatprep.subr.mxu0 0.0
        %4638 = vmatpush2.msra.mxu0 0.0
        %4639 = vmatprep.subr.mxu0 0.0
        %4640 = vmatpush2.msra.mxu0 0.0
        %4641 = vmatprep.subr.mxu0 0.0
        %4642 = vmatpush2.msra.mxu0 0.0
        %4643 = vmatprep.subr.mxu0 0.0
        %4644 = vmatpush2.msra.mxu0 0.0
        %4645 = vmatprep.subr.mxu0 0.0
        %4646 = vmatpush2.msra.mxu0 0.0
        %4647 = vmatprep.subr.mxu0 0.0
        %4648 = vmatpush2.msra.mxu0 0.0
        %4649 = vmatprep.subr.mxu0 0.0
        %4650 = vmatpush2.msra.mxu0 0.0
        %4651 = vmatprep.subr.mxu0 0.0
        %4652 = vmatpush2.msra.mxu0 0.0
        %4653 = vmatprep.subr.mxu0 0.0
        %4654 = vmatpush2.msra.mxu0 0.0
        %4655 = vmatprep.subr.mxu0 0.0
        %4656 = vmatpush2.msra.mxu0 0.0
        %4657 = vmatprep.subr.mxu0 0.0
        %4658 = vmatpush2.msra.mxu0 0.0
        %4659 = vmatprep.subr.mxu0 0.0
        %4660 = vmatpush2.msra.mxu0 0.0
        %4661 = vmatprep.subr.mxu0 0.0
        %4662 = vmatpush2.msra.mxu0 0.0
        %4663 = vmatprep.subr.mxu0 0.0
        %4664 = vmatpush2.msra.mxu0 0.0
        %4665 = vmatprep.subr.mxu0 0.0
        %4666 = vmatpush2.msra.mxu0 0.0
        %4667 = vmatprep.mubr.f32.mxu0 0.0
        %4668 = vmatmul.mubr.f32.gmra.mxu0 %v1255
        %v4669 = vpop.f32.mrf.mxu0
        %v4670 = vadd.f32 0.0, %v4669
        %v4671 = vpop.f32.mrf.mxu0
        %4672 = vmatprep.mubr.f32.mxu0 0.0
        %4673 = vmatmul.mubr.f32.gmra.mxu0 %v1255
        %v4674 = vpop.f32.mrf.mxu0
        %v4675 = vadd.f32 0.0, %v4674
        %v4676 = vpop.f32.mrf.mxu0
        %4677 = vmatprep.mubr.f32.mxu0 0.0
        %4678 = vmatmul.mubr.f32.gmra.mxu0 %v4309
        %v4679 = vpop.f32.mrf.mxu0
        %v4680 = vadd.f32 0.0, %v4679
        %v4681 = vpop.f32.mrf.mxu0
        %4682 = vmatprep.mubr.f32.mxu0 0.0
        %4683 = vmatmul.mubr.f32.gmra.mxu0 %v4311
        %v4684 = vpop.f32.mrf.mxu0
        %v4685 = vadd.f32 0.0, %v4684
        %v4686 = vpop.f32.mrf.mxu0
        %4687 = vmatprep.mubr.f32.mxu0 0.0
        %4688 = vmatmul.mubr.f32.gmra.mxu0 %v4313
        %v4689 = vpop.f32.mrf.mxu0
        %v4690 = vadd.f32 0.0, %v4689
        %v4691 = vpop.f32.mrf.mxu0
        %4692 = vmatprep.mubr.f32.mxu0 0.0
        %4693 = vmatmul.mubr.f32.gmra.mxu0 %v4315
        %v4694 = vpop.f32.mrf.mxu0
        %v4695 = vadd.f32 0.0, %v4694
        %v4696 = vpop.f32.mrf.mxu0
        %4697 = vmatprep.mubr.f32.mxu0 0.0
        %4698 = vmatmul.mubr.f32.gmra.mxu0 %v4317
        %v4699 = vpop.f32.mrf.mxu0
        %v4700 = vadd.f32 0.0, %v4699
        %v4701 = vpop.f32.mrf.mxu0
        %4702 = vmatprep.mubr.f32.mxu0 0.0
        %4703 = vmatmul.mubr.f32.gmra.mxu0 %v4319
        %v4704 = vpop.f32.mrf.mxu0
        %v4705 = vadd.f32 0.0, %v4704
        %v4706 = vpop.f32.mrf.mxu0
        %4707 = vmatprep.mubr.f32.mxu0 0.0
        %4708 = vmatmul.mubr.f32.gmra.mxu0 %v4321
        %v4709 = vpop.f32.mrf.mxu0
        %v4710 = vadd.f32 0.0, %v4709
        %v4711 = vpop.f32.mrf.mxu0
        %4712 = vmatprep.mubr.f32.mxu0 0.0
        %4713 = vmatmul.mubr.f32.gmra.mxu0 %v4323
        %v4714 = vpop.f32.mrf.mxu0
        %v4715 = vadd.f32 0.0, %v4714
        %v4716 = vpop.f32.mrf.mxu0
        %4717 = vmatprep.mubr.f32.mxu0 0.0
        %4718 = vmatmul.mubr.f32.gmra.mxu0 %v4325
        %v4719 = vpop.f32.mrf.mxu0
        %v4720 = vadd.f32 0.0, %v4719
        %v4721 = vpop.f32.mrf.mxu0
        %4722 = vmatprep.mubr.f32.mxu0 0.0
        %4723 = vmatmul.mubr.f32.gmra.mxu0 %v4327
        %v4724 = vpop.f32.mrf.mxu0
        %v4725 = vadd.f32 0.0, %v4724
        %v4726 = vpop.f32.mrf.mxu0
        %4727 = vmatprep.mubr.f32.mxu0 0.0
        %4728 = vmatmul.mubr.f32.gmra.mxu0 %v4329
        %v4729 = vpop.f32.mrf.mxu0
        %v4730 = vadd.f32 0.0, %v4729
        %v4731 = vpop.f32.mrf.mxu0
        %4732 = vmatprep.mubr.f32.mxu0 0.0
        %4733 = vmatmul.mubr.f32.gmra.mxu0 %v4331
        %v4734 = vpop.f32.mrf.mxu0
        %v4735 = vadd.f32 0.0, %v4734
        %v4736 = vpop.f32.mrf.mxu0
        %4737 = vmatprep.mubr.f32.mxu0 0.0
        %4738 = vmatmul.mubr.f32.gmra.mxu0 %v4333
        %v4739 = vpop.f32.mrf.mxu0
        %v4740 = vadd.f32 0.0, %v4739
        %v4741 = vpop.f32.mrf.mxu0
        %4742 = vmatprep.mubr.f32.mxu0 0.0
        %4743 = vmatmul.mubr.f32.gmra.mxu0 %v4335
        %v4744 = vpop.f32.mrf.mxu0
        %v4745 = vadd.f32 0.0, %v4744
        %v4746 = vpop.f32.mrf.mxu0
        %4747 = vmatprep.mubr.f32.mxu0 0.0
        %4748 = vmatmul.mubr.f32.gmra.mxu0 %v4337
        %v4749 = vpop.f32.mrf.mxu0
        %v4750 = vadd.f32 0.0, %v4749
        %v4751 = vpop.f32.mrf.mxu0
        %4752 = vmatprep.mubr.f32.mxu0 0.0
        %4753 = vmatmul.mubr.f32.gmra.mxu0 %v4339
        %v4754 = vpop.f32.mrf.mxu0
        %v4755 = vadd.f32 0.0, %v4754
        %v4756 = vpop.f32.mrf.mxu0
        %4757 = vmatprep.mubr.f32.mxu0 0.0
        %4758 = vmatmul.mubr.f32.gmra.mxu0 %v4341
        %v4759 = vpop.f32.mrf.mxu0
        %v4760 = vadd.f32 0.0, %v4759
        %v4761 = vpop.f32.mrf.mxu0
        %4762 = vmatprep.mubr.f32.mxu0 0.0
        %4763 = vmatmul.mubr.f32.gmra.mxu0 %v4343
        %v4764 = vpop.f32.mrf.mxu0
        %v4765 = vadd.f32 0.0, %v4764
        %v4766 = vpop.f32.mrf.mxu0
        %4767 = vmatprep.mubr.f32.mxu0 0.0
        %4768 = vmatmul.mubr.f32.gmra.mxu0 %v4345
        %v4769 = vpop.f32.mrf.mxu0
        %v4770 = vadd.f32 0.0, %v4769
        %v4771 = vpop.f32.mrf.mxu0
        %4772 = vmatprep.mubr.f32.mxu0 0.0
        %4773 = vmatmul.mubr.f32.gmra.mxu0 %v4347
        %v4774 = vpop.f32.mrf.mxu0
        %v4775 = vadd.f32 0.0, %v4774
        %v4776 = vpop.f32.mrf.mxu0
        %4777 = vmatprep.mubr.f32.mxu0 0.0
        %4778 = vmatmul.mubr.f32.gmra.mxu0 %v4349
        %v4779 = vpop.f32.mrf.mxu0
        %v4780 = vadd.f32 0.0, %v4779
        %v4781 = vpop.f32.mrf.mxu0
        %4782 = vmatprep.mubr.f32.mxu0 0.0
        %4783 = vmatmul.mubr.f32.gmra.mxu0 %v4351
        %v4784 = vpop.f32.mrf.mxu0
        %v4785 = vadd.f32 0.0, %v4784
        %v4786 = vpop.f32.mrf.mxu0
        %4787 = vmatprep.mubr.f32.mxu0 0.0
        %4788 = vmatmul.mubr.f32.gmra.mxu0 %v4353
        %v4789 = vpop.f32.mrf.mxu0
        %v4790 = vadd.f32 0.0, %v4789
        %v4791 = vpop.f32.mrf.mxu0
        %4792 = vmatprep.mubr.f32.mxu0 0.0
        %4793 = vmatmul.mubr.f32.gmra.mxu0 %v4355
        %v4794 = vpop.f32.mrf.mxu0
        %v4795 = vadd.f32 0.0, %v4794
        %v4796 = vpop.f32.mrf.mxu0
        %4797 = vmatprep.mubr.f32.mxu0 0.0
        %4798 = vmatmul.mubr.f32.gmra.mxu0 %v4357
        %v4799 = vpop.f32.mrf.mxu0
        %v4800 = vadd.f32 0.0, %v4799
        %v4801 = vpop.f32.mrf.mxu0
        %4802 = vmatprep.mubr.f32.mxu0 0.0
        %4803 = vmatmul.mubr.f32.gmra.mxu0 %v4359
        %v4804 = vpop.f32.mrf.mxu0
        %v4805 = vadd.f32 0.0, %v4804
        %v4806 = vpop.f32.mrf.mxu0
        %4807 = vmatprep.mubr.f32.mxu0 0.0
        %4808 = vmatmul.mubr.f32.gmra.mxu0 %v4361
        %v4809 = vpop.f32.mrf.mxu0
        %v4810 = vadd.f32 0.0, %v4809
        %v4811 = vpop.f32.mrf.mxu0
        %4812 = vmatprep.mubr.f32.mxu0 0.0
        %4813 = vmatmul.mubr.f32.gmra.mxu0 %v4363
        %v4814 = vpop.f32.mrf.mxu0
        %v4815 = vadd.f32 0.0, %v4814
        %v4816 = vpop.f32.mrf.mxu0
        %4817 = vmatprep.mubr.f32.mxu0 0.0
        %4818 = vmatmul.mubr.f32.gmra.mxu0 %v4365
        %v4819 = vpop.f32.mrf.mxu0
        %v4820 = vadd.f32 0.0, %v4819
        %v4821 = vpop.f32.mrf.mxu0
        %4822 = vmatprep.mubr.f32.mxu0 0.0
        %4823 = vmatmul.mubr.f32.gmra.mxu0 %v4367
        %v4824 = vpop.f32.mrf.mxu0
        %v4825 = vadd.f32 0.0, %v4824
        %v4826 = vpop.f32.mrf.mxu0
        %4827 = vdwg.mxu0
        %v4828 = vadd.f32 %v4440, %v4670
        %v4829 = vadd.f32 %v4445, %v4675
        %v4830 = vadd.f32 %v4450, %v4680
        %v4831 = vadd.f32 %v4455, %v4685
        %v4832 = vadd.f32 %v4460, %v4690
        %v4833 = vadd.f32 %v4465, %v4695
        %v4834 = vadd.f32 %v4470, %v4700
        %v4835 = vadd.f32 %v4475, %v4705
        %v4836 = vadd.f32 %v4480, %v4710
        %v4837 = vadd.f32 %v4485, %v4715
        %v4838 = vadd.f32 %v4490, %v4720
        %v4839 = vadd.f32 %v4495, %v4725
        %v4840 = vadd.f32 %v4500, %v4730
        %v4841 = vadd.f32 %v4505, %v4735
        %v4842 = vadd.f32 %v4510, %v4740
        %v4843 = vadd.f32 %v4515, %v4745
        %v4844 = vadd.f32 %v4520, %v4750
        %v4845 = vadd.f32 %v4525, %v4755
        %v4846 = vadd.f32 %v4530, %v4760
        %v4847 = vadd.f32 %v4535, %v4765
        %v4848 = vadd.f32 %v4540, %v4770
        %v4849 = vadd.f32 %v4545, %v4775
        %v4850 = vadd.f32 %v4550, %v4780
        %v4851 = vadd.f32 %v4555, %v4785
        %v4852 = vadd.f32 %v4560, %v4790
        %v4853 = vadd.f32 %v4565, %v4795
        %v4854 = vadd.f32 %v4570, %v4800
        %v4855 = vadd.f32 %v4575, %v4805
        %v4856 = vadd.f32 %v4580, %v4810
        %v4857 = vadd.f32 %v4585, %v4815
        %v4858 = vadd.f32 %v4590, %v4820
        %v4859 = vadd.f32 %v4595, %v4825
        %s4860 = scalar_lea.vmem [#allocation7], 64
        %v4861 = vld [vmem:[%s4860] sm:$0xff]
        %v4862 = vld [vmem:[%s4860 + $0x8] sm:$0xff]
        %v4863 = vld [vmem:[%s4860 + $0x10] sm:$0xff]
        %v4864 = vld [vmem:[%s4860 + $0x18] sm:$0xff]
        %v4865 = vsel %vm655, %v3922, 0
        %v4868 = vsel %vm655, %v3984, 0
        %v4870 = vsel %vm655, %v3925, 0
        %v4873 = vsel %vm655, %v3985, 0
        %v4875 = vsel %vm655, %v3928, 0
        %v4878 = vsel %vm655, %v3986, 0
        %v4880 = vsel %vm655, %v3931, 0
        %v4883 = vsel %vm655, %v3987, 0
        %v4885 = vsel %vm655, %v3934, 0
        %v4888 = vsel %vm655, %v3988, 0
        %v4890 = vsel %vm655, %v3937, 0
        %v4893 = vsel %vm655, %v3989, 0
        %v4895 = vsel %vm655, %v3940, 0
        %v4898 = vsel %vm655, %v3990, 0
        %v4900 = vsel %vm655, %v3943, 0
        %v4903 = vsel %vm655, %v3991, 0
        %v4905 = vsel %vm655, %v3946, 0
        %v4908 = vsel %vm655, %v3992, 0
        %v4910 = vsel %vm655, %v3949, 0
        %v4913 = vsel %vm655, %v3993, 0
        %v4915 = vsel %vm655, %v3952, 0
        %v4918 = vsel %vm655, %v3994, 0
        %v4920 = vsel %vm655, %v3955, 0
        %v4923 = vsel %vm655, %v3995, 0
        %v4925 = vsel %vm655, %v3958, 0
        %v4928 = vsel %vm655, %v3996, 0
        %v4930 = vsel %vm655, %v3961, 0
        %v4933 = vsel %vm655, %v3997, 0
        %v4935 = vsel %vm655, %v3964, 0
        %v4938 = vsel %vm655, %v3998, 0
        %4940 = vmatprep.subr.mxu0 0.0
        %4941 = vmatpush1.msra.mxu0 0.0
        %4942 = vmatprep.subr.mxu0 0.0
        %4943 = vmatpush1.msra.mxu0 0.0
        %4944 = vmatprep.subr.mxu0 0.0
        %4945 = vmatpush1.msra.mxu0 0.0
        %4946 = vmatprep.subr.mxu0 0.0
        %4947 = vmatpush1.msra.mxu0 0.0
        %4948 = vmatprep.subr.mxu0 0.0
        %4949 = vmatpush1.msra.mxu0 0.0
        %4950 = vmatprep.subr.mxu0 0.0
        %4951 = vmatpush1.msra.mxu0 0.0
        %4952 = vmatprep.subr.mxu0 0.0
        %4953 = vmatpush1.msra.mxu0 0.0
        %4954 = vmatprep.subr.mxu0 0.0
        %4955 = vmatpush1.msra.mxu0 0.0
        %4956 = vmatprep.subr.mxu0 0.0
        %4957 = vmatpush1.msra.mxu0 0.0
        %4958 = vmatprep.subr.mxu0 0.0
        %4959 = vmatpush1.msra.mxu0 0.0
        %4960 = vmatprep.subr.mxu0 0.0
        %4961 = vmatpush1.msra.mxu0 0.0
        %4962 = vmatprep.subr.mxu0 0.0
        %4963 = vmatpush1.msra.mxu0 0.0
        %4964 = vmatprep.subr.mxu0 0.0
        %4965 = vmatpush1.msra.mxu0 %v4864
        %4966 = vmatprep.subr.mxu0 0.0
        %4967 = vmatpush1.msra.mxu0 %v4863
        %4968 = vmatprep.subr.mxu0 0.0
        %4969 = vmatpush1.msra.mxu0 %v4862
        %4970 = vmatprep.subr.mxu0 0.0
        %4971 = vmatpush1.msra.mxu0 %v4861
        %4972 = vmatprep.subr.mxu0 0.0
        %4973 = vmatpush2.msra.mxu0 0.0
        %4974 = vmatprep.subr.mxu0 0.0
        %4975 = vmatpush2.msra.mxu0 0.0
        %4976 = vmatprep.subr.mxu0 0.0
        %4977 = vmatpush2.msra.mxu0 0.0
        %4978 = vmatprep.subr.mxu0 0.0
        %4979 = vmatpush2.msra.mxu0 0.0
        %4980 = vmatprep.subr.mxu0 0.0
        %4981 = vmatpush2.msra.mxu0 0.0
        %4982 = vmatprep.subr.mxu0 0.0
        %4983 = vmatpush2.msra.mxu0 0.0
        %4984 = vmatprep.subr.mxu0 0.0
        %4985 = vmatpush2.msra.mxu0 0.0
        %4986 = vmatprep.subr.mxu0 0.0
        %4987 = vmatpush2.msra.mxu0 0.0
        %4988 = vmatprep.subr.mxu0 0.0
        %4989 = vmatpush2.msra.mxu0 0.0
        %4990 = vmatprep.subr.mxu0 0.0
        %4991 = vmatpush2.msra.mxu0 0.0
        %4992 = vmatprep.subr.mxu0 0.0
        %4993 = vmatpush2.msra.mxu0 0.0
        %4994 = vmatprep.subr.mxu0 0.0
        %4995 = vmatpush2.msra.mxu0 0.0
        %4996 = vmatprep.subr.mxu0 0.0
        %4997 = vmatpush2.msra.mxu0 0.0
        %4998 = vmatprep.subr.mxu0 0.0
        %4999 = vmatpush2.msra.mxu0 0.0
        %5000 = vmatprep.subr.mxu0 0.0
        %5001 = vmatpush2.msra.mxu0 0.0
        %5002 = vmatprep.subr.mxu0 0.0
        %5003 = vmatpush2.msra.mxu0 0.0
        %5004 = vmatprep.mubr.f32.mxu0 0.0
        %5005 = vmatmul.mubr.f32.gmra.mxu0 %v1519
        %v5006 = vpop.f32.mrf.mxu0
        %v5007 = vadd.f32 0.0, %v5006
        %v5008 = vpop.f32.mrf.mxu0
        %5009 = vmatprep.mubr.f32.mxu0 0.0
        %5010 = vmatmul.mubr.f32.gmra.mxu0 %v1522
        %v5011 = vpop.f32.mrf.mxu0
        %v5012 = vadd.f32 0.0, %v5011
        %v5013 = vpop.f32.mrf.mxu0
        %5014 = vmatprep.mubr.f32.mxu0 0.0
        %5015 = vmatmul.mubr.f32.gmra.mxu0 %v4865
        %v5016 = vpop.f32.mrf.mxu0
        %v5017 = vadd.f32 0.0, %v5016
        %v5018 = vpop.f32.mrf.mxu0
        %5019 = vmatprep.mubr.f32.mxu0 0.0
        %5020 = vmatmul.mubr.f32.gmra.mxu0 %v4868
        %v5021 = vpop.f32.mrf.mxu0
        %v5022 = vadd.f32 0.0, %v5021
        %v5023 = vpop.f32.mrf.mxu0
        %5024 = vmatprep.mubr.f32.mxu0 0.0
        %5025 = vmatmul.mubr.f32.gmra.mxu0 %v4870
        %v5026 = vpop.f32.mrf.mxu0
        %v5027 = vadd.f32 0.0, %v5026
        %v5028 = vpop.f32.mrf.mxu0
        %5029 = vmatprep.mubr.f32.mxu0 0.0
        %5030 = vmatmul.mubr.f32.gmra.mxu0 %v4873
        %v5031 = vpop.f32.mrf.mxu0
        %v5032 = vadd.f32 0.0, %v5031
        %v5033 = vpop.f32.mrf.mxu0
        %5034 = vmatprep.mubr.f32.mxu0 0.0
        %5035 = vmatmul.mubr.f32.gmra.mxu0 %v4875
        %v5036 = vpop.f32.mrf.mxu0
        %v5037 = vadd.f32 0.0, %v5036
        %v5038 = vpop.f32.mrf.mxu0
        %5039 = vmatprep.mubr.f32.mxu0 0.0
        %5040 = vmatmul.mubr.f32.gmra.mxu0 %v4878
        %v5041 = vpop.f32.mrf.mxu0
        %v5042 = vadd.f32 0.0, %v5041
        %v5043 = vpop.f32.mrf.mxu0
        %5044 = vmatprep.mubr.f32.mxu0 0.0
        %5045 = vmatmul.mubr.f32.gmra.mxu0 %v4880
        %v5046 = vpop.f32.mrf.mxu0
        %v5047 = vadd.f32 0.0, %v5046
        %v5048 = vpop.f32.mrf.mxu0
        %5049 = vmatprep.mubr.f32.mxu0 0.0
        %5050 = vmatmul.mubr.f32.gmra.mxu0 %v4883
        %v5051 = vpop.f32.mrf.mxu0
        %v5052 = vadd.f32 0.0, %v5051
        %v5053 = vpop.f32.mrf.mxu0
        %5054 = vmatprep.mubr.f32.mxu0 0.0
        %5055 = vmatmul.mubr.f32.gmra.mxu0 %v4885
        %v5056 = vpop.f32.mrf.mxu0
        %v5057 = vadd.f32 0.0, %v5056
        %v5058 = vpop.f32.mrf.mxu0
        %5059 = vmatprep.mubr.f32.mxu0 0.0
        %5060 = vmatmul.mubr.f32.gmra.mxu0 %v4888
        %v5061 = vpop.f32.mrf.mxu0
        %v5062 = vadd.f32 0.0, %v5061
        %v5063 = vpop.f32.mrf.mxu0
        %5064 = vmatprep.mubr.f32.mxu0 0.0
        %5065 = vmatmul.mubr.f32.gmra.mxu0 %v4890
        %v5066 = vpop.f32.mrf.mxu0
        %v5067 = vadd.f32 0.0, %v5066
        %v5068 = vpop.f32.mrf.mxu0
        %5069 = vmatprep.mubr.f32.mxu0 0.0
        %5070 = vmatmul.mubr.f32.gmra.mxu0 %v4893
        %v5071 = vpop.f32.mrf.mxu0
        %v5072 = vadd.f32 0.0, %v5071
        %v5073 = vpop.f32.mrf.mxu0
        %5074 = vmatprep.mubr.f32.mxu0 0.0
        %5075 = vmatmul.mubr.f32.gmra.mxu0 %v4895
        %v5076 = vpop.f32.mrf.mxu0
        %v5077 = vadd.f32 0.0, %v5076
        %v5078 = vpop.f32.mrf.mxu0
        %5079 = vmatprep.mubr.f32.mxu0 0.0
        %5080 = vmatmul.mubr.f32.gmra.mxu0 %v4898
        %v5081 = vpop.f32.mrf.mxu0
        %v5082 = vadd.f32 0.0, %v5081
        %v5083 = vpop.f32.mrf.mxu0
        %5084 = vmatprep.mubr.f32.mxu0 0.0
        %5085 = vmatmul.mubr.f32.gmra.mxu0 %v4900
        %v5086 = vpop.f32.mrf.mxu0
        %v5087 = vadd.f32 0.0, %v5086
        %v5088 = vpop.f32.mrf.mxu0
        %5089 = vmatprep.mubr.f32.mxu0 0.0
        %5090 = vmatmul.mubr.f32.gmra.mxu0 %v4903
        %v5091 = vpop.f32.mrf.mxu0
        %v5092 = vadd.f32 0.0, %v5091
        %v5093 = vpop.f32.mrf.mxu0
        %5094 = vmatprep.mubr.f32.mxu0 0.0
        %5095 = vmatmul.mubr.f32.gmra.mxu0 %v4905
        %v5096 = vpop.f32.mrf.mxu0
        %v5097 = vadd.f32 0.0, %v5096
        %v5098 = vpop.f32.mrf.mxu0
        %5099 = vmatprep.mubr.f32.mxu0 0.0
        %5100 = vmatmul.mubr.f32.gmra.mxu0 %v4908
        %v5101 = vpop.f32.mrf.mxu0
        %v5102 = vadd.f32 0.0, %v5101
        %v5103 = vpop.f32.mrf.mxu0
        %5104 = vmatprep.mubr.f32.mxu0 0.0
        %5105 = vmatmul.mubr.f32.gmra.mxu0 %v4910
        %v5106 = vpop.f32.mrf.mxu0
        %v5107 = vadd.f32 0.0, %v5106
        %v5108 = vpop.f32.mrf.mxu0
        %5109 = vmatprep.mubr.f32.mxu0 0.0
        %5110 = vmatmul.mubr.f32.gmra.mxu0 %v4913
        %v5111 = vpop.f32.mrf.mxu0
        %v5112 = vadd.f32 0.0, %v5111
        %v5113 = vpop.f32.mrf.mxu0
        %5114 = vmatprep.mubr.f32.mxu0 0.0
        %5115 = vmatmul.mubr.f32.gmra.mxu0 %v4915
        %v5116 = vpop.f32.mrf.mxu0
        %v5117 = vadd.f32 0.0, %v5116
        %v5118 = vpop.f32.mrf.mxu0
        %5119 = vmatprep.mubr.f32.mxu0 0.0
        %5120 = vmatmul.mubr.f32.gmra.mxu0 %v4918
        %v5121 = vpop.f32.mrf.mxu0
        %v5122 = vadd.f32 0.0, %v5121
        %v5123 = vpop.f32.mrf.mxu0
        %5124 = vmatprep.mubr.f32.mxu0 0.0
        %5125 = vmatmul.mubr.f32.gmra.mxu0 %v4920
        %v5126 = vpop.f32.mrf.mxu0
        %v5127 = vadd.f32 0.0, %v5126
        %v5128 = vpop.f32.mrf.mxu0
        %5129 = vmatprep.mubr.f32.mxu0 0.0
        %5130 = vmatmul.mubr.f32.gmra.mxu0 %v4923
        %v5131 = vpop.f32.mrf.mxu0
        %v5132 = vadd.f32 0.0, %v5131
        %v5133 = vpop.f32.mrf.mxu0
        %5134 = vmatprep.mubr.f32.mxu0 0.0
        %5135 = vmatmul.mubr.f32.gmra.mxu0 %v4925
        %v5136 = vpop.f32.mrf.mxu0
        %v5137 = vadd.f32 0.0, %v5136
        %v5138 = vpop.f32.mrf.mxu0
        %5139 = vmatprep.mubr.f32.mxu0 0.0
        %5140 = vmatmul.mubr.f32.gmra.mxu0 %v4928
        %v5141 = vpop.f32.mrf.mxu0
        %v5142 = vadd.f32 0.0, %v5141
        %v5143 = vpop.f32.mrf.mxu0
        %5144 = vmatprep.mubr.f32.mxu0 0.0
        %5145 = vmatmul.mubr.f32.gmra.mxu0 %v4930
        %v5146 = vpop.f32.mrf.mxu0
        %v5147 = vadd.f32 0.0, %v5146
        %v5148 = vpop.f32.mrf.mxu0
        %5149 = vmatprep.mubr.f32.mxu0 0.0
        %5150 = vmatmul.mubr.f32.gmra.mxu0 %v4933
        %v5151 = vpop.f32.mrf.mxu0
        %v5152 = vadd.f32 0.0, %v5151
        %v5153 = vpop.f32.mrf.mxu0
        %5154 = vmatprep.mubr.f32.mxu0 0.0
        %5155 = vmatmul.mubr.f32.gmra.mxu0 %v4935
        %v5156 = vpop.f32.mrf.mxu0
        %v5157 = vadd.f32 0.0, %v5156
        %v5158 = vpop.f32.mrf.mxu0
        %5159 = vmatprep.mubr.f32.mxu0 0.0
        %5160 = vmatmul.mubr.f32.gmra.mxu0 %v4938
        %v5161 = vpop.f32.mrf.mxu0
        %v5162 = vadd.f32 0.0, %v5161
        %v5163 = vpop.f32.mrf.mxu0
        %5164 = vdwg.mxu0
        %v5165 = vadd.f32 %v4828, %v5007
        %v5166 = vadd.f32 %v4829, %v5012
        %v5167 = vadd.f32 %v4830, %v5017
        %v5168 = vadd.f32 %v4831, %v5022
        %v5169 = vadd.f32 %v4832, %v5027
        %v5170 = vadd.f32 %v4833, %v5032
        %v5171 = vadd.f32 %v4834, %v5037
        %v5172 = vadd.f32 %v4835, %v5042
        %v5173 = vadd.f32 %v4836, %v5047
        %v5174 = vadd.f32 %v4837, %v5052
        %v5175 = vadd.f32 %v4838, %v5057
        %v5176 = vadd.f32 %v4839, %v5062
        %v5177 = vadd.f32 %v4840, %v5067
        %v5178 = vadd.f32 %v4841, %v5072
        %v5179 = vadd.f32 %v4842, %v5077
        %v5180 = vadd.f32 %v4843, %v5082
        %v5181 = vadd.f32 %v4844, %v5087
        %v5182 = vadd.f32 %v4845, %v5092
        %v5183 = vadd.f32 %v4846, %v5097
        %v5184 = vadd.f32 %v4847, %v5102
        %v5185 = vadd.f32 %v4848, %v5107
        %v5186 = vadd.f32 %v4849, %v5112
        %v5187 = vadd.f32 %v4850, %v5117
        %v5188 = vadd.f32 %v4851, %v5122
        %v5189 = vadd.f32 %v4852, %v5127
        %v5190 = vadd.f32 %v4853, %v5132
        %v5191 = vadd.f32 %v4854, %v5137
        %v5192 = vadd.f32 %v4855, %v5142
        %v5193 = vadd.f32 %v4856, %v5147
        %v5194 = vadd.f32 %v4857, %v5152
        %v5195 = vadd.f32 %v4858, %v5157
        %v5196 = vadd.f32 %v4859, %v5162
        %s5197 = scalar_lea.vmem [#allocation7], 96
        %v5198 = vld [vmem:[%s5197] sm:$0xff]
        %v5199 = vld [vmem:[%s5197 + $0x8] sm:$0xff]
        %v5200 = vld [vmem:[%s5197 + $0x10] sm:$0xff]
        %v5201 = vld [vmem:[%s5197 + $0x18] sm:$0xff]
        %v5203 = vsel %vm655, %v3919, 0
        %v5205 = vsel %vm655, %v3887, 0
        %5207 = vmatprep.subr.mxu0 0.0
        %5208 = vmatpush1.msra.mxu0 0.0
        %5209 = vmatprep.subr.mxu0 0.0
        %5210 = vmatpush1.msra.mxu0 0.0
        %5211 = vmatprep.subr.mxu0 0.0
        %5212 = vmatpush1.msra.mxu0 0.0
        %5213 = vmatprep.subr.mxu0 0.0
        %5214 = vmatpush1.msra.mxu0 0.0
        %5215 = vmatprep.subr.mxu0 0.0
        %5216 = vmatpush1.msra.mxu0 0.0
        %5217 = vmatprep.subr.mxu0 0.0
        %5218 = vmatpush1.msra.mxu0 0.0
        %5219 = vmatprep.subr.mxu0 0.0
        %5220 = vmatpush1.msra.mxu0 0.0
        %5221 = vmatprep.subr.mxu0 0.0
        %5222 = vmatpush1.msra.mxu0 0.0
        %5223 = vmatprep.subr.mxu0 0.0
        %5224 = vmatpush1.msra.mxu0 0.0
        %5225 = vmatprep.subr.mxu0 0.0
        %5226 = vmatpush1.msra.mxu0 0.0
        %5227 = vmatprep.subr.mxu0 0.0
        %5228 = vmatpush1.msra.mxu0 0.0
        %5229 = vmatprep.subr.mxu0 0.0
        %5230 = vmatpush1.msra.mxu0 0.0
        %5231 = vmatprep.subr.mxu0 0.0
        %5232 = vmatpush1.msra.mxu0 %v5201
        %5233 = vmatprep.subr.mxu0 0.0
        %5234 = vmatpush1.msra.mxu0 %v5200
        %5235 = vmatprep.subr.mxu0 0.0
        %5236 = vmatpush1.msra.mxu0 %v5199
        %5237 = vmatprep.subr.mxu0 0.0
        %5238 = vmatpush1.msra.mxu0 %v5198
        %5239 = vmatprep.subr.mxu0 0.0
        %5240 = vmatpush2.msra.mxu0 0.0
        %5241 = vmatprep.subr.mxu0 0.0
        %5242 = vmatpush2.msra.mxu0 0.0
        %5243 = vmatprep.subr.mxu0 0.0
        %5244 = vmatpush2.msra.mxu0 0.0
        %5245 = vmatprep.subr.mxu0 0.0
        %5246 = vmatpush2.msra.mxu0 0.0
        %5247 = vmatprep.subr.mxu0 0.0
        %5248 = vmatpush2.msra.mxu0 0.0
        %5249 = vmatprep.subr.mxu0 0.0
        %5250 = vmatpush2.msra.mxu0 0.0
        %5251 = vmatprep.subr.mxu0 0.0
        %5252 = vmatpush2.msra.mxu0 0.0
        %5253 = vmatprep.subr.mxu0 0.0
        %5254 = vmatpush2.msra.mxu0 0.0
        %5255 = vmatprep.subr.mxu0 0.0
        %5256 = vmatpush2.msra.mxu0 0.0
        %5257 = vmatprep.subr.mxu0 0.0
        %5258 = vmatpush2.msra.mxu0 0.0
        %5259 = vmatprep.subr.mxu0 0.0
        %5260 = vmatpush2.msra.mxu0 0.0
        %5261 = vmatprep.subr.mxu0 0.0
        %5262 = vmatpush2.msra.mxu0 0.0
        %5263 = vmatprep.subr.mxu0 0.0
        %5264 = vmatpush2.msra.mxu0 0.0
        %5265 = vmatprep.subr.mxu0 0.0
        %5266 = vmatpush2.msra.mxu0 0.0
        %5267 = vmatprep.subr.mxu0 0.0
        %5268 = vmatpush2.msra.mxu0 0.0
        %5269 = vmatprep.subr.mxu0 0.0
        %5270 = vmatpush2.msra.mxu0 0.0
        %5271 = vmatprep.mubr.f32.mxu0 0.0
        %5272 = vmatmul.mubr.f32.gmra.mxu0 %v4010
        %v5273 = vpop.f32.mrf.mxu0
        %v5274 = vadd.f32 0.0, %v5273
        %v5275 = vpop.f32.mrf.mxu0
        %5276 = vmatprep.mubr.f32.mxu0 0.0
        %5277 = vmatmul.mubr.f32.gmra.mxu0 %v4012
        %v5278 = vpop.f32.mrf.mxu0
        %v5279 = vadd.f32 0.0, %v5278
        %v5280 = vpop.f32.mrf.mxu0
        %5281 = vmatprep.mubr.f32.mxu0 0.0
        %5282 = vmatmul.mubr.f32.gmra.mxu0 %v4015
        %v5283 = vpop.f32.mrf.mxu0
        %v5284 = vadd.f32 0.0, %v5283
        %v5285 = vpop.f32.mrf.mxu0
        %5286 = vmatprep.mubr.f32.mxu0 0.0
        %5287 = vmatmul.mubr.f32.gmra.mxu0 %v4017
        %v5288 = vpop.f32.mrf.mxu0
        %v5289 = vadd.f32 0.0, %v5288
        %v5290 = vpop.f32.mrf.mxu0
        %5291 = vmatprep.mubr.f32.mxu0 0.0
        %5292 = vmatmul.mubr.f32.gmra.mxu0 %v4020
        %v5293 = vpop.f32.mrf.mxu0
        %v5294 = vadd.f32 0.0, %v5293
        %v5295 = vpop.f32.mrf.mxu0
        %5296 = vmatprep.mubr.f32.mxu0 0.0
        %5297 = vmatmul.mubr.f32.gmra.mxu0 %v4022
        %v5298 = vpop.f32.mrf.mxu0
        %v5299 = vadd.f32 0.0, %v5298
        %v5300 = vpop.f32.mrf.mxu0
        %5301 = vmatprep.mubr.f32.mxu0 0.0
        %5302 = vmatmul.mubr.f32.gmra.mxu0 %v4025
        %v5303 = vpop.f32.mrf.mxu0
        %v5304 = vadd.f32 0.0, %v5303
        %v5305 = vpop.f32.mrf.mxu0
        %5306 = vmatprep.mubr.f32.mxu0 0.0
        %5307 = vmatmul.mubr.f32.gmra.mxu0 %v4027
        %v5308 = vpop.f32.mrf.mxu0
        %v5309 = vadd.f32 0.0, %v5308
        %v5310 = vpop.f32.mrf.mxu0
        %5311 = vmatprep.mubr.f32.mxu0 0.0
        %5312 = vmatmul.mubr.f32.gmra.mxu0 %v4030
        %v5313 = vpop.f32.mrf.mxu0
        %v5314 = vadd.f32 0.0, %v5313
        %v5315 = vpop.f32.mrf.mxu0
        %5316 = vmatprep.mubr.f32.mxu0 0.0
        %5317 = vmatmul.mubr.f32.gmra.mxu0 %v4032
        %v5318 = vpop.f32.mrf.mxu0
        %v5319 = vadd.f32 0.0, %v5318
        %v5320 = vpop.f32.mrf.mxu0
        %5321 = vmatprep.mubr.f32.mxu0 0.0
        %5322 = vmatmul.mubr.f32.gmra.mxu0 %v4035
        %v5323 = vpop.f32.mrf.mxu0
        %v5324 = vadd.f32 0.0, %v5323
        %v5325 = vpop.f32.mrf.mxu0
        %5326 = vmatprep.mubr.f32.mxu0 0.0
        %5327 = vmatmul.mubr.f32.gmra.mxu0 %v4037
        %v5328 = vpop.f32.mrf.mxu0
        %v5329 = vadd.f32 0.0, %v5328
        %v5330 = vpop.f32.mrf.mxu0
        %5331 = vmatprep.mubr.f32.mxu0 0.0
        %5332 = vmatmul.mubr.f32.gmra.mxu0 %v4040
        %v5333 = vpop.f32.mrf.mxu0
        %v5334 = vadd.f32 0.0, %v5333
        %v5335 = vpop.f32.mrf.mxu0
        %5336 = vmatprep.mubr.f32.mxu0 0.0
        %5337 = vmatmul.mubr.f32.gmra.mxu0 %v4042
        %v5338 = vpop.f32.mrf.mxu0
        %v5339 = vadd.f32 0.0, %v5338
        %v5340 = vpop.f32.mrf.mxu0
        %5341 = vmatprep.mubr.f32.mxu0 0.0
        %5342 = vmatmul.mubr.f32.gmra.mxu0 %v4045
        %v5343 = vpop.f32.mrf.mxu0
        %v5344 = vadd.f32 0.0, %v5343
        %v5345 = vpop.f32.mrf.mxu0
        %5346 = vmatprep.mubr.f32.mxu0 0.0
        %5347 = vmatmul.mubr.f32.gmra.mxu0 %v4047
        %v5348 = vpop.f32.mrf.mxu0
        %v5349 = vadd.f32 0.0, %v5348
        %v5350 = vpop.f32.mrf.mxu0
        %5351 = vmatprep.mubr.f32.mxu0 0.0
        %5352 = vmatmul.mubr.f32.gmra.mxu0 %v4050
        %v5353 = vpop.f32.mrf.mxu0
        %v5354 = vadd.f32 0.0, %v5353
        %v5355 = vpop.f32.mrf.mxu0
        %5356 = vmatprep.mubr.f32.mxu0 0.0
        %5357 = vmatmul.mubr.f32.gmra.mxu0 %v4052
        %v5358 = vpop.f32.mrf.mxu0
        %v5359 = vadd.f32 0.0, %v5358
        %v5360 = vpop.f32.mrf.mxu0
        %5361 = vmatprep.mubr.f32.mxu0 0.0
        %5362 = vmatmul.mubr.f32.gmra.mxu0 %v4055
        %v5363 = vpop.f32.mrf.mxu0
        %v5364 = vadd.f32 0.0, %v5363
        %v5365 = vpop.f32.mrf.mxu0
        %5366 = vmatprep.mubr.f32.mxu0 0.0
        %5367 = vmatmul.mubr.f32.gmra.mxu0 %v4057
        %v5368 = vpop.f32.mrf.mxu0
        %v5369 = vadd.f32 0.0, %v5368
        %v5370 = vpop.f32.mrf.mxu0
        %5371 = vmatprep.mubr.f32.mxu0 0.0
        %5372 = vmatmul.mubr.f32.gmra.mxu0 %v4060
        %v5373 = vpop.f32.mrf.mxu0
        %v5374 = vadd.f32 0.0, %v5373
        %v5375 = vpop.f32.mrf.mxu0
        %5376 = vmatprep.mubr.f32.mxu0 0.0
        %5377 = vmatmul.mubr.f32.gmra.mxu0 %v4062
        %v5378 = vpop.f32.mrf.mxu0
        %v5379 = vadd.f32 0.0, %v5378
        %v5380 = vpop.f32.mrf.mxu0
        %5381 = vmatprep.mubr.f32.mxu0 0.0
        %5382 = vmatmul.mubr.f32.gmra.mxu0 %v4065
        %v5383 = vpop.f32.mrf.mxu0
        %v5384 = vadd.f32 0.0, %v5383
        %v5385 = vpop.f32.mrf.mxu0
        %5386 = vmatprep.mubr.f32.mxu0 0.0
        %5387 = vmatmul.mubr.f32.gmra.mxu0 %v4067
        %v5388 = vpop.f32.mrf.mxu0
        %v5389 = vadd.f32 0.0, %v5388
        %v5390 = vpop.f32.mrf.mxu0
        %5391 = vmatprep.mubr.f32.mxu0 0.0
        %5392 = vmatmul.mubr.f32.gmra.mxu0 %v4070
        %v5393 = vpop.f32.mrf.mxu0
        %v5394 = vadd.f32 0.0, %v5393
        %v5395 = vpop.f32.mrf.mxu0
        %5396 = vmatprep.mubr.f32.mxu0 0.0
        %5397 = vmatmul.mubr.f32.gmra.mxu0 %v4072
        %v5398 = vpop.f32.mrf.mxu0
        %v5399 = vadd.f32 0.0, %v5398
        %v5400 = vpop.f32.mrf.mxu0
        %5401 = vmatprep.mubr.f32.mxu0 0.0
        %5402 = vmatmul.mubr.f32.gmra.mxu0 %v4075
        %v5403 = vpop.f32.mrf.mxu0
        %v5404 = vadd.f32 0.0, %v5403
        %v5405 = vpop.f32.mrf.mxu0
        %5406 = vmatprep.mubr.f32.mxu0 0.0
        %5407 = vmatmul.mubr.f32.gmra.mxu0 %v4077
        %v5408 = vpop.f32.mrf.mxu0
        %v5409 = vadd.f32 0.0, %v5408
        %v5410 = vpop.f32.mrf.mxu0
        %5411 = vmatprep.mubr.f32.mxu0 0.0
        %5412 = vmatmul.mubr.f32.gmra.mxu0 %v4080
        %v5413 = vpop.f32.mrf.mxu0
        %v5414 = vadd.f32 0.0, %v5413
        %v5415 = vpop.f32.mrf.mxu0
        %5416 = vmatprep.mubr.f32.mxu0 0.0
        %5417 = vmatmul.mubr.f32.gmra.mxu0 %v4082
        %v5418 = vpop.f32.mrf.mxu0
        %v5419 = vadd.f32 0.0, %v5418
        %v5420 = vpop.f32.mrf.mxu0
        %5421 = vmatprep.mubr.f32.mxu0 0.0
        %5422 = vmatmul.mubr.f32.gmra.mxu0 %v5203
        %v5423 = vpop.f32.mrf.mxu0
        %v5424 = vadd.f32 0.0, %v5423
        %v5425 = vpop.f32.mrf.mxu0
        %5426 = vmatprep.mubr.f32.mxu0 0.0
        %5427 = vmatmul.mubr.f32.gmra.mxu0 %v5205
        %v5428 = vpop.f32.mrf.mxu0
        %v5429 = vadd.f32 0.0, %v5428
        %v5430 = vpop.f32.mrf.mxu0
        %5431 = vdwg.mxu0
        %v5432 = vadd.f32 %v5165, %v5274
        %v5433 = vadd.f32 %v5166, %v5279
        %v5434 = vadd.f32 %v5167, %v5284
        %v5435 = vadd.f32 %v5168, %v5289
        %v5436 = vadd.f32 %v5169, %v5294
        %v5437 = vadd.f32 %v5170, %v5299
        %v5438 = vadd.f32 %v5171, %v5304
        %v5439 = vadd.f32 %v5172, %v5309
        %v5440 = vadd.f32 %v5173, %v5314
        %v5441 = vadd.f32 %v5174, %v5319
        %v5442 = vadd.f32 %v5175, %v5324
        %v5443 = vadd.f32 %v5176, %v5329
        %v5444 = vadd.f32 %v5177, %v5334
        %v5445 = vadd.f32 %v5178, %v5339
        %v5446 = vadd.f32 %v5179, %v5344
        %v5447 = vadd.f32 %v5180, %v5349
        %v5448 = vadd.f32 %v5181, %v5354
        %v5449 = vadd.f32 %v5182, %v5359
        %v5450 = vadd.f32 %v5183, %v5364
        %v5451 = vadd.f32 %v5184, %v5369
        %v5452 = vadd.f32 %v5185, %v5374
        %v5453 = vadd.f32 %v5186, %v5379
        %v5454 = vadd.f32 %v5187, %v5384
        %v5455 = vadd.f32 %v5188, %v5389
        %v5456 = vadd.f32 %v5189, %v5394
        %v5457 = vadd.f32 %v5190, %v5399
        %v5458 = vadd.f32 %v5191, %v5404
        %v5459 = vadd.f32 %v5192, %v5409
        %v5460 = vadd.f32 %v5193, %v5414
        %v5461 = vadd.f32 %v5194, %v5419
        %v5462 = vadd.f32 %v5195, %v5424
        %v5463 = vadd.f32 %v5196, %v5429
        %s5464 = scalar_lea.vmem [#allocation7], 160
        %v5465 = vld [vmem:[%s5464] sm:$0xff]
        %v5466 = vld [vmem:[%s5464 + $0x8] sm:$0xff]
        %v5467 = vld [vmem:[%s5464 + $0x10] sm:$0xff]
        %v5468 = vld [vmem:[%s5464 + $0x18] sm:$0xff]
        %v5469 = vsel %vm655, %v3967, 0
        %v5472 = vsel %vm655, %v3999, 0
        %5474 = vmatprep.subr.mxu0 0.0
        %5475 = vmatpush1.msra.mxu0 0.0
        %5476 = vmatprep.subr.mxu0 0.0
        %5477 = vmatpush1.msra.mxu0 0.0
        %5478 = vmatprep.subr.mxu0 0.0
        %5479 = vmatpush1.msra.mxu0 0.0
        %5480 = vmatprep.subr.mxu0 0.0
        %5481 = vmatpush1.msra.mxu0 0.0
        %5482 = vmatprep.subr.mxu0 0.0
        %5483 = vmatpush1.msra.mxu0 0.0
        %5484 = vmatprep.subr.mxu0 0.0
        %5485 = vmatpush1.msra.mxu0 0.0
        %5486 = vmatprep.subr.mxu0 0.0
        %5487 = vmatpush1.msra.mxu0 0.0
        %5488 = vmatprep.subr.mxu0 0.0
        %5489 = vmatpush1.msra.mxu0 0.0
        %5490 = vmatprep.subr.mxu0 0.0
        %5491 = vmatpush1.msra.mxu0 0.0
        %5492 = vmatprep.subr.mxu0 0.0
        %5493 = vmatpush1.msra.mxu0 0.0
        %5494 = vmatprep.subr.mxu0 0.0
        %5495 = vmatpush1.msra.mxu0 0.0
        %5496 = vmatprep.subr.mxu0 0.0
        %5497 = vmatpush1.msra.mxu0 0.0
        %5498 = vmatprep.subr.mxu0 0.0
        %5499 = vmatpush1.msra.mxu0 %v5468
        %5500 = vmatprep.subr.mxu0 0.0
        %5501 = vmatpush1.msra.mxu0 %v5467
        %5502 = vmatprep.subr.mxu0 0.0
        %5503 = vmatpush1.msra.mxu0 %v5466
        %5504 = vmatprep.subr.mxu0 0.0
        %5505 = vmatpush1.msra.mxu0 %v5465
        %5506 = vmatprep.subr.mxu0 0.0
        %5507 = vmatpush2.msra.mxu0 0.0
        %5508 = vmatprep.subr.mxu0 0.0
        %5509 = vmatpush2.msra.mxu0 0.0
        %5510 = vmatprep.subr.mxu0 0.0
        %5511 = vmatpush2.msra.mxu0 0.0
        %5512 = vmatprep.subr.mxu0 0.0
        %5513 = vmatpush2.msra.mxu0 0.0
        %5514 = vmatprep.subr.mxu0 0.0
        %5515 = vmatpush2.msra.mxu0 0.0
        %5516 = vmatprep.subr.mxu0 0.0
        %5517 = vmatpush2.msra.mxu0 0.0
        %5518 = vmatprep.subr.mxu0 0.0
        %5519 = vmatpush2.msra.mxu0 0.0
        %5520 = vmatprep.subr.mxu0 0.0
        %5521 = vmatpush2.msra.mxu0 0.0
        %5522 = vmatprep.subr.mxu0 0.0
        %5523 = vmatpush2.msra.mxu0 0.0
        %5524 = vmatprep.subr.mxu0 0.0
        %5525 = vmatpush2.msra.mxu0 0.0
        %5526 = vmatprep.subr.mxu0 0.0
        %5527 = vmatpush2.msra.mxu0 0.0
        %5528 = vmatprep.subr.mxu0 0.0
        %5529 = vmatpush2.msra.mxu0 0.0
        %5530 = vmatprep.subr.mxu0 0.0
        %5531 = vmatpush2.msra.mxu0 0.0
        %5532 = vmatprep.subr.mxu0 0.0
        %5533 = vmatpush2.msra.mxu0 0.0
        %5534 = vmatprep.subr.mxu0 0.0
        %5535 = vmatpush2.msra.mxu0 0.0
        %5536 = vmatprep.subr.mxu0 0.0
        %5537 = vmatpush2.msra.mxu0 0.0
        %5538 = vmatprep.mubr.f32.mxu0 0.0
        %5539 = vmatmul.mubr.f32.gmra.mxu0 %v4865
        %v5540 = vpop.f32.mrf.mxu0
        %v5541 = vadd.f32 0.0, %v5540
        %v5542 = vpop.f32.mrf.mxu0
        %5543 = vmatprep.mubr.f32.mxu0 0.0
        %5544 = vmatmul.mubr.f32.gmra.mxu0 %v4868
        %v5545 = vpop.f32.mrf.mxu0
        %v5546 = vadd.f32 0.0, %v5545
        %v5547 = vpop.f32.mrf.mxu0
        %5548 = vmatprep.mubr.f32.mxu0 0.0
        %5549 = vmatmul.mubr.f32.gmra.mxu0 %v4870
        %v5550 = vpop.f32.mrf.mxu0
        %v5551 = vadd.f32 0.0, %v5550
        %v5552 = vpop.f32.mrf.mxu0
        %5553 = vmatprep.mubr.f32.mxu0 0.0
        %5554 = vmatmul.mubr.f32.gmra.mxu0 %v4873
        %v5555 = vpop.f32.mrf.mxu0
        %v5556 = vadd.f32 0.0, %v5555
        %v5557 = vpop.f32.mrf.mxu0
        %5558 = vmatprep.mubr.f32.mxu0 0.0
        %5559 = vmatmul.mubr.f32.gmra.mxu0 %v4875
        %v5560 = vpop.f32.mrf.mxu0
        %v5561 = vadd.f32 0.0, %v5560
        %v5562 = vpop.f32.mrf.mxu0
        %5563 = vmatprep.mubr.f32.mxu0 0.0
        %5564 = vmatmul.mubr.f32.gmra.mxu0 %v4878
        %v5565 = vpop.f32.mrf.mxu0
        %v5566 = vadd.f32 0.0, %v5565
        %v5567 = vpop.f32.mrf.mxu0
        %5568 = vmatprep.mubr.f32.mxu0 0.0
        %5569 = vmatmul.mubr.f32.gmra.mxu0 %v4880
        %v5570 = vpop.f32.mrf.mxu0
        %v5571 = vadd.f32 0.0, %v5570
        %v5572 = vpop.f32.mrf.mxu0
        %5573 = vmatprep.mubr.f32.mxu0 0.0
        %5574 = vmatmul.mubr.f32.gmra.mxu0 %v4883
        %v5575 = vpop.f32.mrf.mxu0
        %v5576 = vadd.f32 0.0, %v5575
        %v5577 = vpop.f32.mrf.mxu0
        %5578 = vmatprep.mubr.f32.mxu0 0.0
        %5579 = vmatmul.mubr.f32.gmra.mxu0 %v4885
        %v5580 = vpop.f32.mrf.mxu0
        %v5581 = vadd.f32 0.0, %v5580
        %v5582 = vpop.f32.mrf.mxu0
        %5583 = vmatprep.mubr.f32.mxu0 0.0
        %5584 = vmatmul.mubr.f32.gmra.mxu0 %v4888
        %v5585 = vpop.f32.mrf.mxu0
        %v5586 = vadd.f32 0.0, %v5585
        %v5587 = vpop.f32.mrf.mxu0
        %5588 = vmatprep.mubr.f32.mxu0 0.0
        %5589 = vmatmul.mubr.f32.gmra.mxu0 %v4890
        %v5590 = vpop.f32.mrf.mxu0
        %v5591 = vadd.f32 0.0, %v5590
        %v5592 = vpop.f32.mrf.mxu0
        %5593 = vmatprep.mubr.f32.mxu0 0.0
        %5594 = vmatmul.mubr.f32.gmra.mxu0 %v4893
        %v5595 = vpop.f32.mrf.mxu0
        %v5596 = vadd.f32 0.0, %v5595
        %v5597 = vpop.f32.mrf.mxu0
        %5598 = vmatprep.mubr.f32.mxu0 0.0
        %5599 = vmatmul.mubr.f32.gmra.mxu0 %v4895
        %v5600 = vpop.f32.mrf.mxu0
        %v5601 = vadd.f32 0.0, %v5600
        %v5602 = vpop.f32.mrf.mxu0
        %5603 = vmatprep.mubr.f32.mxu0 0.0
        %5604 = vmatmul.mubr.f32.gmra.mxu0 %v4898
        %v5605 = vpop.f32.mrf.mxu0
        %v5606 = vadd.f32 0.0, %v5605
        %v5607 = vpop.f32.mrf.mxu0
        %5608 = vmatprep.mubr.f32.mxu0 0.0
        %5609 = vmatmul.mubr.f32.gmra.mxu0 %v4900
        %v5610 = vpop.f32.mrf.mxu0
        %v5611 = vadd.f32 0.0, %v5610
        %v5612 = vpop.f32.mrf.mxu0
        %5613 = vmatprep.mubr.f32.mxu0 0.0
        %5614 = vmatmul.mubr.f32.gmra.mxu0 %v4903
        %v5615 = vpop.f32.mrf.mxu0
        %v5616 = vadd.f32 0.0, %v5615
        %v5617 = vpop.f32.mrf.mxu0
        %5618 = vmatprep.mubr.f32.mxu0 0.0
        %5619 = vmatmul.mubr.f32.gmra.mxu0 %v4905
        %v5620 = vpop.f32.mrf.mxu0
        %v5621 = vadd.f32 0.0, %v5620
        %v5622 = vpop.f32.mrf.mxu0
        %5623 = vmatprep.mubr.f32.mxu0 0.0
        %5624 = vmatmul.mubr.f32.gmra.mxu0 %v4908
        %v5625 = vpop.f32.mrf.mxu0
        %v5626 = vadd.f32 0.0, %v5625
        %v5627 = vpop.f32.mrf.mxu0
        %5628 = vmatprep.mubr.f32.mxu0 0.0
        %5629 = vmatmul.mubr.f32.gmra.mxu0 %v4910
        %v5630 = vpop.f32.mrf.mxu0
        %v5631 = vadd.f32 0.0, %v5630
        %v5632 = vpop.f32.mrf.mxu0
        %5633 = vmatprep.mubr.f32.mxu0 0.0
        %5634 = vmatmul.mubr.f32.gmra.mxu0 %v4913
        %v5635 = vpop.f32.mrf.mxu0
        %v5636 = vadd.f32 0.0, %v5635
        %v5637 = vpop.f32.mrf.mxu0
        %5638 = vmatprep.mubr.f32.mxu0 0.0
        %5639 = vmatmul.mubr.f32.gmra.mxu0 %v4915
        %v5640 = vpop.f32.mrf.mxu0
        %v5641 = vadd.f32 0.0, %v5640
        %v5642 = vpop.f32.mrf.mxu0
        %5643 = vmatprep.mubr.f32.mxu0 0.0
        %5644 = vmatmul.mubr.f32.gmra.mxu0 %v4918
        %v5645 = vpop.f32.mrf.mxu0
        %v5646 = vadd.f32 0.0, %v5645
        %v5647 = vpop.f32.mrf.mxu0
        %5648 = vmatprep.mubr.f32.mxu0 0.0
        %5649 = vmatmul.mubr.f32.gmra.mxu0 %v4920
        %v5650 = vpop.f32.mrf.mxu0
        %v5651 = vadd.f32 0.0, %v5650
        %v5652 = vpop.f32.mrf.mxu0
        %5653 = vmatprep.mubr.f32.mxu0 0.0
        %5654 = vmatmul.mubr.f32.gmra.mxu0 %v4923
        %v5655 = vpop.f32.mrf.mxu0
        %v5656 = vadd.f32 0.0, %v5655
        %v5657 = vpop.f32.mrf.mxu0
        %5658 = vmatprep.mubr.f32.mxu0 0.0
        %5659 = vmatmul.mubr.f32.gmra.mxu0 %v4925
        %v5660 = vpop.f32.mrf.mxu0
        %v5661 = vadd.f32 0.0, %v5660
        %v5662 = vpop.f32.mrf.mxu0
        %5663 = vmatprep.mubr.f32.mxu0 0.0
        %5664 = vmatmul.mubr.f32.gmra.mxu0 %v4928
        %v5665 = vpop.f32.mrf.mxu0
        %v5666 = vadd.f32 0.0, %v5665
        %v5667 = vpop.f32.mrf.mxu0
        %5668 = vmatprep.mubr.f32.mxu0 0.0
        %5669 = vmatmul.mubr.f32.gmra.mxu0 %v4930
        %v5670 = vpop.f32.mrf.mxu0
        %v5671 = vadd.f32 0.0, %v5670
        %v5672 = vpop.f32.mrf.mxu0
        %5673 = vmatprep.mubr.f32.mxu0 0.0
        %5674 = vmatmul.mubr.f32.gmra.mxu0 %v4933
        %v5675 = vpop.f32.mrf.mxu0
        %v5676 = vadd.f32 0.0, %v5675
        %v5677 = vpop.f32.mrf.mxu0
        %5678 = vmatprep.mubr.f32.mxu0 0.0
        %5679 = vmatmul.mubr.f32.gmra.mxu0 %v4935
        %v5680 = vpop.f32.mrf.mxu0
        %v5681 = vadd.f32 0.0, %v5680
        %v5682 = vpop.f32.mrf.mxu0
        %5683 = vmatprep.mubr.f32.mxu0 0.0
        %5684 = vmatmul.mubr.f32.gmra.mxu0 %v4938
        %v5685 = vpop.f32.mrf.mxu0
        %v5686 = vadd.f32 0.0, %v5685
        %v5687 = vpop.f32.mrf.mxu0
        %5688 = vmatprep.mubr.f32.mxu0 0.0
        %5689 = vmatmul.mubr.f32.gmra.mxu0 %v5469
        %v5690 = vpop.f32.mrf.mxu0
        %v5691 = vadd.f32 0.0, %v5690
        %v5692 = vpop.f32.mrf.mxu0
        %5693 = vmatprep.mubr.f32.mxu0 0.0
        %5694 = vmatmul.mubr.f32.gmra.mxu0 %v5472
        %v5695 = vpop.f32.mrf.mxu0
        %v5696 = vadd.f32 0.0, %v5695
        %v5697 = vpop.f32.mrf.mxu0
        %5698 = vdwg.mxu0
        %v5699 = vadd.f32 %v5432, %v5541
        %v5700 = vadd.f32 %v5433, %v5546
        %v5701 = vadd.f32 %v5434, %v5551
        %v5702 = vadd.f32 %v5435, %v5556
        %v5703 = vadd.f32 %v5436, %v5561
        %v5704 = vadd.f32 %v5437, %v5566
        %v5705 = vadd.f32 %v5438, %v5571
        %v5706 = vadd.f32 %v5439, %v5576
        %v5707 = vadd.f32 %v5440, %v5581
        %v5708 = vadd.f32 %v5441, %v5586
        %v5709 = vadd.f32 %v5442, %v5591
        %v5710 = vadd.f32 %v5443, %v5596
        %v5711 = vadd.f32 %v5444, %v5601
        %v5712 = vadd.f32 %v5445, %v5606
        %v5713 = vadd.f32 %v5446, %v5611
        %v5714 = vadd.f32 %v5447, %v5616
        %v5715 = vadd.f32 %v5448, %v5621
        %v5716 = vadd.f32 %v5449, %v5626
        %v5717 = vadd.f32 %v5450, %v5631
        %v5718 = vadd.f32 %v5451, %v5636
        %v5719 = vadd.f32 %v5452, %v5641
        %v5720 = vadd.f32 %v5453, %v5646
        %v5721 = vadd.f32 %v5454, %v5651
        %v5722 = vadd.f32 %v5455, %v5656
        %v5723 = vadd.f32 %v5456, %v5661
        %v5724 = vadd.f32 %v5457, %v5666
        %v5725 = vadd.f32 %v5458, %v5671
        %v5726 = vadd.f32 %v5459, %v5676
        %v5727 = vadd.f32 %v5460, %v5681
        %v5728 = vadd.f32 %v5461, %v5686
        %v5729 = vadd.f32 %v5462, %v5691
        %v5730 = vadd.f32 %v5463, %v5696
        %s5731 = scalar_lea.vmem [#allocation7], 192
        %v5732 = vld [vmem:[%s5731] sm:$0xff]
        %v5733 = vld [vmem:[%s5731 + $0x8] sm:$0xff]
        %v5734 = vld [vmem:[%s5731 + $0x10] sm:$0xff]
        %v5735 = vld [vmem:[%s5731 + $0x18] sm:$0xff]
        %5736 = vmatprep.subr.mxu0 0.0
        %5737 = vmatpush1.msra.mxu0 0.0
        %5738 = vmatprep.subr.mxu0 0.0
        %5739 = vmatpush1.msra.mxu0 0.0
        %5740 = vmatprep.subr.mxu0 0.0
        %5741 = vmatpush1.msra.mxu0 0.0
        %5742 = vmatprep.subr.mxu0 0.0
        %5743 = vmatpush1.msra.mxu0 0.0
        %5744 = vmatprep.subr.mxu0 0.0
        %5745 = vmatpush1.msra.mxu0 0.0
        %5746 = vmatprep.subr.mxu0 0.0
        %5747 = vmatpush1.msra.mxu0 0.0
        %5748 = vmatprep.subr.mxu0 0.0
        %5749 = vmatpush1.msra.mxu0 0.0
        %5750 = vmatprep.subr.mxu0 0.0
        %5751 = vmatpush1.msra.mxu0 0.0
        %5752 = vmatprep.subr.mxu0 0.0
        %5753 = vmatpush1.msra.mxu0 0.0
        %5754 = vmatprep.subr.mxu0 0.0
        %5755 = vmatpush1.msra.mxu0 0.0
        %5756 = vmatprep.subr.mxu0 0.0
        %5757 = vmatpush1.msra.mxu0 0.0
        %5758 = vmatprep.subr.mxu0 0.0
        %5759 = vmatpush1.msra.mxu0 0.0
        %5760 = vmatprep.subr.mxu0 0.0
        %5761 = vmatpush1.msra.mxu0 %v5735
        %5762 = vmatprep.subr.mxu0 0.0
        %5763 = vmatpush1.msra.mxu0 %v5734
        %5764 = vmatprep.subr.mxu0 0.0
        %5765 = vmatpush1.msra.mxu0 %v5733
        %5766 = vmatprep.subr.mxu0 0.0
        %5767 = vmatpush1.msra.mxu0 %v5732
        %5768 = vmatprep.subr.mxu0 0.0
        %5769 = vmatpush2.msra.mxu0 0.0
        %5770 = vmatprep.subr.mxu0 0.0
        %5771 = vmatpush2.msra.mxu0 0.0
        %5772 = vmatprep.subr.mxu0 0.0
        %5773 = vmatpush2.msra.mxu0 0.0
        %5774 = vmatprep.subr.mxu0 0.0
        %5775 = vmatpush2.msra.mxu0 0.0
        %5776 = vmatprep.subr.mxu0 0.0
        %5777 = vmatpush2.msra.mxu0 0.0
        %5778 = vmatprep.subr.mxu0 0.0
        %5779 = vmatpush2.msra.mxu0 0.0
        %5780 = vmatprep.subr.mxu0 0.0
        %5781 = vmatpush2.msra.mxu0 0.0
        %5782 = vmatprep.subr.mxu0 0.0
        %5783 = vmatpush2.msra.mxu0 0.0
        %5784 = vmatprep.subr.mxu0 0.0
        %5785 = vmatpush2.msra.mxu0 0.0
        %5786 = vmatprep.subr.mxu0 0.0
        %5787 = vmatpush2.msra.mxu0 0.0
        %5788 = vmatprep.subr.mxu0 0.0
        %5789 = vmatpush2.msra.mxu0 0.0
        %5790 = vmatprep.subr.mxu0 0.0
        %5791 = vmatpush2.msra.mxu0 0.0
        %5792 = vmatprep.subr.mxu0 0.0
        %5793 = vmatpush2.msra.mxu0 0.0
        %5794 = vmatprep.subr.mxu0 0.0
        %5795 = vmatpush2.msra.mxu0 0.0
        %5796 = vmatprep.subr.mxu0 0.0
        %5797 = vmatpush2.msra.mxu0 0.0
        %5798 = vmatprep.subr.mxu0 0.0
        %5799 = vmatpush2.msra.mxu0 0.0
        %5800 = vmatprep.mubr.f32.mxu0 0.0
        %5801 = vmatmul.mubr.f32.gmra.mxu0 %v4015
        %v5802 = vpop.f32.mrf.mxu0
        %v5803 = vadd.f32 0.0, %v5802
        %v5804 = vpop.f32.mrf.mxu0
        %5805 = vmatprep.mubr.f32.mxu0 0.0
        %5806 = vmatmul.mubr.f32.gmra.mxu0 %v4017
        %v5807 = vpop.f32.mrf.mxu0
        %v5808 = vadd.f32 0.0, %v5807
        %v5809 = vpop.f32.mrf.mxu0
        %5810 = vmatprep.mubr.f32.mxu0 0.0
        %5811 = vmatmul.mubr.f32.gmra.mxu0 %v4020
        %v5812 = vpop.f32.mrf.mxu0
        %v5813 = vadd.f32 0.0, %v5812
        %v5814 = vpop.f32.mrf.mxu0
        %5815 = vmatprep.mubr.f32.mxu0 0.0
        %5816 = vmatmul.mubr.f32.gmra.mxu0 %v4022
        %v5817 = vpop.f32.mrf.mxu0
        %v5818 = vadd.f32 0.0, %v5817
        %v5819 = vpop.f32.mrf.mxu0
        %5820 = vmatprep.mubr.f32.mxu0 0.0
        %5821 = vmatmul.mubr.f32.gmra.mxu0 %v4025
        %v5822 = vpop.f32.mrf.mxu0
        %v5823 = vadd.f32 0.0, %v5822
        %v5824 = vpop.f32.mrf.mxu0
        %5825 = vmatprep.mubr.f32.mxu0 0.0
        %5826 = vmatmul.mubr.f32.gmra.mxu0 %v4027
        %v5827 = vpop.f32.mrf.mxu0
        %v5828 = vadd.f32 0.0, %v5827
        %v5829 = vpop.f32.mrf.mxu0
        %5830 = vmatprep.mubr.f32.mxu0 0.0
        %5831 = vmatmul.mubr.f32.gmra.mxu0 %v4030
        %v5832 = vpop.f32.mrf.mxu0
        %v5833 = vadd.f32 0.0, %v5832
        %v5834 = vpop.f32.mrf.mxu0
        %5835 = vmatprep.mubr.f32.mxu0 0.0
        %5836 = vmatmul.mubr.f32.gmra.mxu0 %v4032
        %v5837 = vpop.f32.mrf.mxu0
        %v5838 = vadd.f32 0.0, %v5837
        %v5839 = vpop.f32.mrf.mxu0
        %5840 = vmatprep.mubr.f32.mxu0 0.0
        %5841 = vmatmul.mubr.f32.gmra.mxu0 %v4035
        %v5842 = vpop.f32.mrf.mxu0
        %v5843 = vadd.f32 0.0, %v5842
        %v5844 = vpop.f32.mrf.mxu0
        %5845 = vmatprep.mubr.f32.mxu0 0.0
        %5846 = vmatmul.mubr.f32.gmra.mxu0 %v4037
        %v5847 = vpop.f32.mrf.mxu0
        %v5848 = vadd.f32 0.0, %v5847
        %v5849 = vpop.f32.mrf.mxu0
        %5850 = vmatprep.mubr.f32.mxu0 0.0
        %5851 = vmatmul.mubr.f32.gmra.mxu0 %v4040
        %v5852 = vpop.f32.mrf.mxu0
        %v5853 = vadd.f32 0.0, %v5852
        %v5854 = vpop.f32.mrf.mxu0
        %5855 = vmatprep.mubr.f32.mxu0 0.0
        %5856 = vmatmul.mubr.f32.gmra.mxu0 %v4042
        %v5857 = vpop.f32.mrf.mxu0
        %v5858 = vadd.f32 0.0, %v5857
        %v5859 = vpop.f32.mrf.mxu0
        %5860 = vmatprep.mubr.f32.mxu0 0.0
        %5861 = vmatmul.mubr.f32.gmra.mxu0 %v4045
        %v5862 = vpop.f32.mrf.mxu0
        %v5863 = vadd.f32 0.0, %v5862
        %v5864 = vpop.f32.mrf.mxu0
        %5865 = vmatprep.mubr.f32.mxu0 0.0
        %5866 = vmatmul.mubr.f32.gmra.mxu0 %v4047
        %v5867 = vpop.f32.mrf.mxu0
        %v5868 = vadd.f32 0.0, %v5867
        %v5869 = vpop.f32.mrf.mxu0
        %5870 = vmatprep.mubr.f32.mxu0 0.0
        %5871 = vmatmul.mubr.f32.gmra.mxu0 %v4050
        %v5872 = vpop.f32.mrf.mxu0
        %v5873 = vadd.f32 0.0, %v5872
        %v5874 = vpop.f32.mrf.mxu0
        %5875 = vmatprep.mubr.f32.mxu0 0.0
        %5876 = vmatmul.mubr.f32.gmra.mxu0 %v4052
        %v5877 = vpop.f32.mrf.mxu0
        %v5878 = vadd.f32 0.0, %v5877
        %v5879 = vpop.f32.mrf.mxu0
        %5880 = vmatprep.mubr.f32.mxu0 0.0
        %5881 = vmatmul.mubr.f32.gmra.mxu0 %v4055
        %v5882 = vpop.f32.mrf.mxu0
        %v5883 = vadd.f32 0.0, %v5882
        %v5884 = vpop.f32.mrf.mxu0
        %5885 = vmatprep.mubr.f32.mxu0 0.0
        %5886 = vmatmul.mubr.f32.gmra.mxu0 %v4057
        %v5887 = vpop.f32.mrf.mxu0
        %v5888 = vadd.f32 0.0, %v5887
        %v5889 = vpop.f32.mrf.mxu0
        %5890 = vmatprep.mubr.f32.mxu0 0.0
        %5891 = vmatmul.mubr.f32.gmra.mxu0 %v4060
        %v5892 = vpop.f32.mrf.mxu0
        %v5893 = vadd.f32 0.0, %v5892
        %v5894 = vpop.f32.mrf.mxu0
        %5895 = vmatprep.mubr.f32.mxu0 0.0
        %5896 = vmatmul.mubr.f32.gmra.mxu0 %v4062
        %v5897 = vpop.f32.mrf.mxu0
        %v5898 = vadd.f32 0.0, %v5897
        %v5899 = vpop.f32.mrf.mxu0
        %5900 = vmatprep.mubr.f32.mxu0 0.0
        %5901 = vmatmul.mubr.f32.gmra.mxu0 %v4065
        %v5902 = vpop.f32.mrf.mxu0
        %v5903 = vadd.f32 0.0, %v5902
        %v5904 = vpop.f32.mrf.mxu0
        %5905 = vmatprep.mubr.f32.mxu0 0.0
        %5906 = vmatmul.mubr.f32.gmra.mxu0 %v4067
        %v5907 = vpop.f32.mrf.mxu0
        %v5908 = vadd.f32 0.0, %v5907
        %v5909 = vpop.f32.mrf.mxu0
        %5910 = vmatprep.mubr.f32.mxu0 0.0
        %5911 = vmatmul.mubr.f32.gmra.mxu0 %v4070
        %v5912 = vpop.f32.mrf.mxu0
        %v5913 = vadd.f32 0.0, %v5912
        %v5914 = vpop.f32.mrf.mxu0
        %5915 = vmatprep.mubr.f32.mxu0 0.0
        %5916 = vmatmul.mubr.f32.gmra.mxu0 %v4072
        %v5917 = vpop.f32.mrf.mxu0
        %v5918 = vadd.f32 0.0, %v5917
        %v5919 = vpop.f32.mrf.mxu0
        %5920 = vmatprep.mubr.f32.mxu0 0.0
        %5921 = vmatmul.mubr.f32.gmra.mxu0 %v4075
        %v5922 = vpop.f32.mrf.mxu0
        %v5923 = vadd.f32 0.0, %v5922
        %v5924 = vpop.f32.mrf.mxu0
        %5925 = vmatprep.mubr.f32.mxu0 0.0
        %5926 = vmatmul.mubr.f32.gmra.mxu0 %v4077
        %v5927 = vpop.f32.mrf.mxu0
        %v5928 = vadd.f32 0.0, %v5927
        %v5929 = vpop.f32.mrf.mxu0
        %5930 = vmatprep.mubr.f32.mxu0 0.0
        %5931 = vmatmul.mubr.f32.gmra.mxu0 %v4080
        %v5932 = vpop.f32.mrf.mxu0
        %v5933 = vadd.f32 0.0, %v5932
        %v5934 = vpop.f32.mrf.mxu0
        %5935 = vmatprep.mubr.f32.mxu0 0.0
        %5936 = vmatmul.mubr.f32.gmra.mxu0 %v4082
        %v5937 = vpop.f32.mrf.mxu0
        %v5938 = vadd.f32 0.0, %v5937
        %v5939 = vpop.f32.mrf.mxu0
        %5940 = vmatprep.mubr.f32.mxu0 0.0
        %5941 = vmatmul.mubr.f32.gmra.mxu0 %v5203
        %v5942 = vpop.f32.mrf.mxu0
        %v5943 = vadd.f32 0.0, %v5942
        %v5944 = vpop.f32.mrf.mxu0
        %5945 = vmatprep.mubr.f32.mxu0 0.0
        %5946 = vmatmul.mubr.f32.gmra.mxu0 %v5205
        %v5947 = vpop.f32.mrf.mxu0
        %v5948 = vadd.f32 0.0, %v5947
        %v5949 = vpop.f32.mrf.mxu0
        %5950 = vmatprep.mubr.f32.mxu0 0.0
        %5951 = vmatmul.mubr.f32.gmra.mxu0 %v657
        %v5952 = vpop.f32.mrf.mxu0
        %v5953 = vadd.f32 0.0, %v5952
        %v5954 = vpop.f32.mrf.mxu0
        %5955 = vmatprep.mubr.f32.mxu0 0.0
        %5956 = vmatmul.mubr.f32.gmra.mxu0 %v659
        %v5957 = vpop.f32.mrf.mxu0
        %v5958 = vadd.f32 0.0, %v5957
        %v5959 = vpop.f32.mrf.mxu0
        %5960 = vdwg.mxu0
        %v5961 = vadd.f32 %v5699, %v5803
        %v5962 = vadd.f32 %v5700, %v5808
        %v5963 = vadd.f32 %v5701, %v5813
        %v5964 = vadd.f32 %v5702, %v5818
        %v5965 = vadd.f32 %v5703, %v5823
        %v5966 = vadd.f32 %v5704, %v5828
        %v5967 = vadd.f32 %v5705, %v5833
        %v5968 = vadd.f32 %v5706, %v5838
        %v5969 = vadd.f32 %v5707, %v5843
        %v5970 = vadd.f32 %v5708, %v5848
        %v5971 = vadd.f32 %v5709, %v5853
        %v5972 = vadd.f32 %v5710, %v5858
        %v5973 = vadd.f32 %v5711, %v5863
        %v5974 = vadd.f32 %v5712, %v5868
        %v5975 = vadd.f32 %v5713, %v5873
        %v5976 = vadd.f32 %v5714, %v5878
        %v5977 = vadd.f32 %v5715, %v5883
        %v5978 = vadd.f32 %v5716, %v5888
        %v5979 = vadd.f32 %v5717, %v5893
        %v5980 = vadd.f32 %v5718, %v5898
        %v5981 = vadd.f32 %v5719, %v5903
        %v5982 = vadd.f32 %v5720, %v5908
        %v5983 = vadd.f32 %v5721, %v5913
        %v5984 = vadd.f32 %v5722, %v5918
        %v5985 = vadd.f32 %v5723, %v5923
        %v5986 = vadd.f32 %v5724, %v5928
        %v5987 = vadd.f32 %v5725, %v5933
        %v5988 = vadd.f32 %v5726, %v5938
        %v5989 = vadd.f32 %v5727, %v5943
        %v5990 = vadd.f32 %v5728, %v5948
        %v5991 = vadd.f32 %v5729, %v5953
        %v5992 = vadd.f32 %v5730, %v5958
        %s5993 = scalar_lea.vmem [#allocation7], 224
        %v5994 = vld [vmem:[%s5993] sm:$0xff]
        %v5995 = vld [vmem:[%s5993 + $0x8] sm:$0xff]
        %v5996 = vld [vmem:[%s5993 + $0x10] sm:$0xff]
        %v5997 = vld [vmem:[%s5993 + $0x18] sm:$0xff]
        %5998 = vmatprep.subr.mxu0 0.0
        %5999 = vmatpush1.msra.mxu0 0.0
        %6000 = vmatprep.subr.mxu0 0.0
        %6001 = vmatpush1.msra.mxu0 0.0
        %6002 = vmatprep.subr.mxu0 0.0
        %6003 = vmatpush1.msra.mxu0 0.0
        %6004 = vmatprep.subr.mxu0 0.0
        %6005 = vmatpush1.msra.mxu0 0.0
        %6006 = vmatprep.subr.mxu0 0.0
        %6007 = vmatpush1.msra.mxu0 0.0
        %6008 = vmatprep.subr.mxu0 0.0
        %6009 = vmatpush1.msra.mxu0 0.0
        %6010 = vmatprep.subr.mxu0 0.0
        %6011 = vmatpush1.msra.mxu0 0.0
        %6012 = vmatprep.subr.mxu0 0.0
        %6013 = vmatpush1.msra.mxu0 0.0
        %6014 = vmatprep.subr.mxu0 0.0
        %6015 = vmatpush1.msra.mxu0 0.0
        %6016 = vmatprep.subr.mxu0 0.0
        %6017 = vmatpush1.msra.mxu0 0.0
        %6018 = vmatprep.subr.mxu0 0.0
        %6019 = vmatpush1.msra.mxu0 0.0
        %6020 = vmatprep.subr.mxu0 0.0
        %6021 = vmatpush1.msra.mxu0 0.0
        %6022 = vmatprep.subr.mxu0 0.0
        %6023 = vmatpush1.msra.mxu0 %v5997
        %6024 = vmatprep.subr.mxu0 0.0
        %6025 = vmatpush1.msra.mxu0 %v5996
        %6026 = vmatprep.subr.mxu0 0.0
        %6027 = vmatpush1.msra.mxu0 %v5995
        %6028 = vmatprep.subr.mxu0 0.0
        %6029 = vmatpush1.msra.mxu0 %v5994
        %6030 = vmatprep.subr.mxu0 0.0
        %6031 = vmatpush2.msra.mxu0 0.0
        %6032 = vmatprep.subr.mxu0 0.0
        %6033 = vmatpush2.msra.mxu0 0.0
        %6034 = vmatprep.subr.mxu0 0.0
        %6035 = vmatpush2.msra.mxu0 0.0
        %6036 = vmatprep.subr.mxu0 0.0
        %6037 = vmatpush2.msra.mxu0 0.0
        %6038 = vmatprep.subr.mxu0 0.0
        %6039 = vmatpush2.msra.mxu0 0.0
        %6040 = vmatprep.subr.mxu0 0.0
        %6041 = vmatpush2.msra.mxu0 0.0
        %6042 = vmatprep.subr.mxu0 0.0
        %6043 = vmatpush2.msra.mxu0 0.0
        %6044 = vmatprep.subr.mxu0 0.0
        %6045 = vmatpush2.msra.mxu0 0.0
        %6046 = vmatprep.subr.mxu0 0.0
        %6047 = vmatpush2.msra.mxu0 0.0
        %6048 = vmatprep.subr.mxu0 0.0
        %6049 = vmatpush2.msra.mxu0 0.0
        %6050 = vmatprep.subr.mxu0 0.0
        %6051 = vmatpush2.msra.mxu0 0.0
        %6052 = vmatprep.subr.mxu0 0.0
        %6053 = vmatpush2.msra.mxu0 0.0
        %6054 = vmatprep.subr.mxu0 0.0
        %6055 = vmatpush2.msra.mxu0 0.0
        %6056 = vmatprep.subr.mxu0 0.0
        %6057 = vmatpush2.msra.mxu0 0.0
        %6058 = vmatprep.subr.mxu0 0.0
        %6059 = vmatpush2.msra.mxu0 0.0
        %6060 = vmatprep.subr.mxu0 0.0
        %6061 = vmatpush2.msra.mxu0 0.0
        %6062 = vmatprep.mubr.f32.mxu0 0.0
        %6063 = vmatmul.mubr.f32.gmra.mxu0 %v4313
        %v6064 = vpop.f32.mrf.mxu0
        %v6065 = vadd.f32 0.0, %v6064
        %v6066 = vpop.f32.mrf.mxu0
        %6067 = vmatprep.mubr.f32.mxu0 0.0
        %6068 = vmatmul.mubr.f32.gmra.mxu0 %v4315
        %v6069 = vpop.f32.mrf.mxu0
        %v6070 = vadd.f32 0.0, %v6069
        %v6071 = vpop.f32.mrf.mxu0
        %6072 = vmatprep.mubr.f32.mxu0 0.0
        %6073 = vmatmul.mubr.f32.gmra.mxu0 %v4317
        %v6074 = vpop.f32.mrf.mxu0
        %v6075 = vadd.f32 0.0, %v6074
        %v6076 = vpop.f32.mrf.mxu0
        %6077 = vmatprep.mubr.f32.mxu0 0.0
        %6078 = vmatmul.mubr.f32.gmra.mxu0 %v4319
        %v6079 = vpop.f32.mrf.mxu0
        %v6080 = vadd.f32 0.0, %v6079
        %v6081 = vpop.f32.mrf.mxu0
        %6082 = vmatprep.mubr.f32.mxu0 0.0
        %6083 = vmatmul.mubr.f32.gmra.mxu0 %v4321
        %v6084 = vpop.f32.mrf.mxu0
        %v6085 = vadd.f32 0.0, %v6084
        %v6086 = vpop.f32.mrf.mxu0
        %6087 = vmatprep.mubr.f32.mxu0 0.0
        %6088 = vmatmul.mubr.f32.gmra.mxu0 %v4323
        %v6089 = vpop.f32.mrf.mxu0
        %v6090 = vadd.f32 0.0, %v6089
        %v6091 = vpop.f32.mrf.mxu0
        %6092 = vmatprep.mubr.f32.mxu0 0.0
        %6093 = vmatmul.mubr.f32.gmra.mxu0 %v4325
        %v6094 = vpop.f32.mrf.mxu0
        %v6095 = vadd.f32 0.0, %v6094
        %v6096 = vpop.f32.mrf.mxu0
        %6097 = vmatprep.mubr.f32.mxu0 0.0
        %6098 = vmatmul.mubr.f32.gmra.mxu0 %v4327
        %v6099 = vpop.f32.mrf.mxu0
        %v6100 = vadd.f32 0.0, %v6099
        %v6101 = vpop.f32.mrf.mxu0
        %6102 = vmatprep.mubr.f32.mxu0 0.0
        %6103 = vmatmul.mubr.f32.gmra.mxu0 %v4329
        %v6104 = vpop.f32.mrf.mxu0
        %v6105 = vadd.f32 0.0, %v6104
        %v6106 = vpop.f32.mrf.mxu0
        %6107 = vmatprep.mubr.f32.mxu0 0.0
        %6108 = vmatmul.mubr.f32.gmra.mxu0 %v4331
        %v6109 = vpop.f32.mrf.mxu0
        %v6110 = vadd.f32 0.0, %v6109
        %v6111 = vpop.f32.mrf.mxu0
        %6112 = vmatprep.mubr.f32.mxu0 0.0
        %6113 = vmatmul.mubr.f32.gmra.mxu0 %v4333
        %v6114 = vpop.f32.mrf.mxu0
        %v6115 = vadd.f32 0.0, %v6114
        %v6116 = vpop.f32.mrf.mxu0
        %6117 = vmatprep.mubr.f32.mxu0 0.0
        %6118 = vmatmul.mubr.f32.gmra.mxu0 %v4335
        %v6119 = vpop.f32.mrf.mxu0
        %v6120 = vadd.f32 0.0, %v6119
        %v6121 = vpop.f32.mrf.mxu0
        %6122 = vmatprep.mubr.f32.mxu0 0.0
        %6123 = vmatmul.mubr.f32.gmra.mxu0 %v4337
        %v6124 = vpop.f32.mrf.mxu0
        %v6125 = vadd.f32 0.0, %v6124
        %v6126 = vpop.f32.mrf.mxu0
        %6127 = vmatprep.mubr.f32.mxu0 0.0
        %6128 = vmatmul.mubr.f32.gmra.mxu0 %v4339
        %v6129 = vpop.f32.mrf.mxu0
        %v6130 = vadd.f32 0.0, %v6129
        %v6131 = vpop.f32.mrf.mxu0
        %6132 = vmatprep.mubr.f32.mxu0 0.0
        %6133 = vmatmul.mubr.f32.gmra.mxu0 %v4341
        %v6134 = vpop.f32.mrf.mxu0
        %v6135 = vadd.f32 0.0, %v6134
        %v6136 = vpop.f32.mrf.mxu0
        %6137 = vmatprep.mubr.f32.mxu0 0.0
        %6138 = vmatmul.mubr.f32.gmra.mxu0 %v4343
        %v6139 = vpop.f32.mrf.mxu0
        %v6140 = vadd.f32 0.0, %v6139
        %v6141 = vpop.f32.mrf.mxu0
        %6142 = vmatprep.mubr.f32.mxu0 0.0
        %6143 = vmatmul.mubr.f32.gmra.mxu0 %v4345
        %v6144 = vpop.f32.mrf.mxu0
        %v6145 = vadd.f32 0.0, %v6144
        %v6146 = vpop.f32.mrf.mxu0
        %6147 = vmatprep.mubr.f32.mxu0 0.0
        %6148 = vmatmul.mubr.f32.gmra.mxu0 %v4347
        %v6149 = vpop.f32.mrf.mxu0
        %v6150 = vadd.f32 0.0, %v6149
        %v6151 = vpop.f32.mrf.mxu0
        %6152 = vmatprep.mubr.f32.mxu0 0.0
        %6153 = vmatmul.mubr.f32.gmra.mxu0 %v4349
        %v6154 = vpop.f32.mrf.mxu0
        %v6155 = vadd.f32 0.0, %v6154
        %v6156 = vpop.f32.mrf.mxu0
        %6157 = vmatprep.mubr.f32.mxu0 0.0
        %6158 = vmatmul.mubr.f32.gmra.mxu0 %v4351
        %v6159 = vpop.f32.mrf.mxu0
        %v6160 = vadd.f32 0.0, %v6159
        %v6161 = vpop.f32.mrf.mxu0
        %6162 = vmatprep.mubr.f32.mxu0 0.0
        %6163 = vmatmul.mubr.f32.gmra.mxu0 %v4353
        %v6164 = vpop.f32.mrf.mxu0
        %v6165 = vadd.f32 0.0, %v6164
        %v6166 = vpop.f32.mrf.mxu0
        %6167 = vmatprep.mubr.f32.mxu0 0.0
        %6168 = vmatmul.mubr.f32.gmra.mxu0 %v4355
        %v6169 = vpop.f32.mrf.mxu0
        %v6170 = vadd.f32 0.0, %v6169
        %v6171 = vpop.f32.mrf.mxu0
        %6172 = vmatprep.mubr.f32.mxu0 0.0
        %6173 = vmatmul.mubr.f32.gmra.mxu0 %v4357
        %v6174 = vpop.f32.mrf.mxu0
        %v6175 = vadd.f32 0.0, %v6174
        %v6176 = vpop.f32.mrf.mxu0
        %6177 = vmatprep.mubr.f32.mxu0 0.0
        %6178 = vmatmul.mubr.f32.gmra.mxu0 %v4359
        %v6179 = vpop.f32.mrf.mxu0
        %v6180 = vadd.f32 0.0, %v6179
        %v6181 = vpop.f32.mrf.mxu0
        %6182 = vmatprep.mubr.f32.mxu0 0.0
        %6183 = vmatmul.mubr.f32.gmra.mxu0 %v4361
        %v6184 = vpop.f32.mrf.mxu0
        %v6185 = vadd.f32 0.0, %v6184
        %v6186 = vpop.f32.mrf.mxu0
        %6187 = vmatprep.mubr.f32.mxu0 0.0
        %6188 = vmatmul.mubr.f32.gmra.mxu0 %v4363
        %v6189 = vpop.f32.mrf.mxu0
        %v6190 = vadd.f32 0.0, %v6189
        %v6191 = vpop.f32.mrf.mxu0
        %6192 = vmatprep.mubr.f32.mxu0 0.0
        %6193 = vmatmul.mubr.f32.gmra.mxu0 %v4365
        %v6194 = vpop.f32.mrf.mxu0
        %v6195 = vadd.f32 0.0, %v6194
        %v6196 = vpop.f32.mrf.mxu0
        %6197 = vmatprep.mubr.f32.mxu0 0.0
        %6198 = vmatmul.mubr.f32.gmra.mxu0 %v4367
        %v6199 = vpop.f32.mrf.mxu0
        %v6200 = vadd.f32 0.0, %v6199
        %v6201 = vpop.f32.mrf.mxu0
        %6202 = vmatprep.mubr.f32.mxu0 0.0
        %6203 = vmatmul.mubr.f32.gmra.mxu0 %v4369
        %v6204 = vpop.f32.mrf.mxu0
        %v6205 = vadd.f32 0.0, %v6204
        %v6206 = vpop.f32.mrf.mxu0
        %6207 = vmatprep.mubr.f32.mxu0 0.0
        %6208 = vmatmul.mubr.f32.gmra.mxu0 %v4371
        %v6209 = vpop.f32.mrf.mxu0
        %v6210 = vadd.f32 0.0, %v6209
        %v6211 = vpop.f32.mrf.mxu0
        %6212 = vmatprep.mubr.f32.mxu0 0.0
        %6213 = vmatmul.mubr.f32.gmra.mxu0 %v1255
        %v6214 = vpop.f32.mrf.mxu0
        %v6215 = vadd.f32 0.0, %v6214
        %v6216 = vpop.f32.mrf.mxu0
        %6217 = vmatprep.mubr.f32.mxu0 0.0
        %6218 = vmatmul.mubr.f32.gmra.mxu0 %v1255
        %v6219 = vpop.f32.mrf.mxu0
        %v6220 = vadd.f32 0.0, %v6219
        %v6221 = vpop.f32.mrf.mxu0
        %6222 = vdwg.mxu0
        %v6223 = vadd.f32 %v5961, %v6065
        %v6224 = vadd.f32 %v5962, %v6070
        %v6225 = vadd.f32 %v5963, %v6075
        %v6226 = vadd.f32 %v5964, %v6080
        %v6227 = vadd.f32 %v5965, %v6085
        %v6228 = vadd.f32 %v5966, %v6090
        %v6229 = vadd.f32 %v5967, %v6095
        %v6230 = vadd.f32 %v5968, %v6100
        %v6231 = vadd.f32 %v5969, %v6105
        %v6232 = vadd.f32 %v5970, %v6110
        %v6233 = vadd.f32 %v5971, %v6115
        %v6234 = vadd.f32 %v5972, %v6120
        %v6235 = vadd.f32 %v5973, %v6125
        %v6236 = vadd.f32 %v5974, %v6130
        %v6237 = vadd.f32 %v5975, %v6135
        %v6238 = vadd.f32 %v5976, %v6140
        %v6239 = vadd.f32 %v5977, %v6145
        %v6240 = vadd.f32 %v5978, %v6150
        %v6241 = vadd.f32 %v5979, %v6155
        %v6242 = vadd.f32 %v5980, %v6160
        %v6243 = vadd.f32 %v5981, %v6165
        %v6244 = vadd.f32 %v5982, %v6170
        %v6245 = vadd.f32 %v5983, %v6175
        %v6246 = vadd.f32 %v5984, %v6180
        %v6247 = vadd.f32 %v5985, %v6185
        %v6248 = vadd.f32 %v5986, %v6190
        %v6249 = vadd.f32 %v5987, %v6195
        %v6250 = vadd.f32 %v5988, %v6200
        %v6251 = vadd.f32 %v5989, %v6205
        %v6252 = vadd.f32 %v5990, %v6210
        %v6253 = vadd.f32 %v5991, %v6215
        %v6254 = vadd.f32 %v5992, %v6220
        %s6255 = scalar_lea.vmem [#allocation7], 256
        %v6256 = vld [vmem:[%s6255] sm:$0xff]
        %v6257 = vld [vmem:[%s6255 + $0x8] sm:$0xff]
        %v6258 = vld [vmem:[%s6255 + $0x10] sm:$0xff]
        %v6259 = vld [vmem:[%s6255 + $0x18] sm:$0xff]
        %6260 = vmatprep.subr.mxu0 0.0
        %6261 = vmatpush1.msra.mxu0 0.0
        %6262 = vmatprep.subr.mxu0 0.0
        %6263 = vmatpush1.msra.mxu0 0.0
        %6264 = vmatprep.subr.mxu0 0.0
        %6265 = vmatpush1.msra.mxu0 0.0
        %6266 = vmatprep.subr.mxu0 0.0
        %6267 = vmatpush1.msra.mxu0 0.0
        %6268 = vmatprep.subr.mxu0 0.0
        %6269 = vmatpush1.msra.mxu0 0.0
        %6270 = vmatprep.subr.mxu0 0.0
        %6271 = vmatpush1.msra.mxu0 0.0
        %6272 = vmatprep.subr.mxu0 0.0
        %6273 = vmatpush1.msra.mxu0 0.0
        %6274 = vmatprep.subr.mxu0 0.0
        %6275 = vmatpush1.msra.mxu0 0.0
        %6276 = vmatprep.subr.mxu0 0.0
        %6277 = vmatpush1.msra.mxu0 0.0
        %6278 = vmatprep.subr.mxu0 0.0
        %6279 = vmatpush1.msra.mxu0 0.0
        %6280 = vmatprep.subr.mxu0 0.0
        %6281 = vmatpush1.msra.mxu0 0.0
        %6282 = vmatprep.subr.mxu0 0.0
        %6283 = vmatpush1.msra.mxu0 0.0
        %6284 = vmatprep.subr.mxu0 0.0
        %6285 = vmatpush1.msra.mxu0 %v6259
        %6286 = vmatprep.subr.mxu0 0.0
        %6287 = vmatpush1.msra.mxu0 %v6258
        %6288 = vmatprep.subr.mxu0 0.0
        %6289 = vmatpush1.msra.mxu0 %v6257
        %6290 = vmatprep.subr.mxu0 0.0
        %6291 = vmatpush1.msra.mxu0 %v6256
        %6292 = vmatprep.subr.mxu0 0.0
        %6293 = vmatpush2.msra.mxu0 0.0
        %6294 = vmatprep.subr.mxu0 0.0
        %6295 = vmatpush2.msra.mxu0 0.0
        %6296 = vmatprep.subr.mxu0 0.0
        %6297 = vmatpush2.msra.mxu0 0.0
        %6298 = vmatprep.subr.mxu0 0.0
        %6299 = vmatpush2.msra.mxu0 0.0
        %6300 = vmatprep.subr.mxu0 0.0
        %6301 = vmatpush2.msra.mxu0 0.0
        %6302 = vmatprep.subr.mxu0 0.0
        %6303 = vmatpush2.msra.mxu0 0.0
        %6304 = vmatprep.subr.mxu0 0.0
        %6305 = vmatpush2.msra.mxu0 0.0
        %6306 = vmatprep.subr.mxu0 0.0
        %6307 = vmatpush2.msra.mxu0 0.0
        %6308 = vmatprep.subr.mxu0 0.0
        %6309 = vmatpush2.msra.mxu0 0.0
        %6310 = vmatprep.subr.mxu0 0.0
        %6311 = vmatpush2.msra.mxu0 0.0
        %6312 = vmatprep.subr.mxu0 0.0
        %6313 = vmatpush2.msra.mxu0 0.0
        %6314 = vmatprep.subr.mxu0 0.0
        %6315 = vmatpush2.msra.mxu0 0.0
        %6316 = vmatprep.subr.mxu0 0.0
        %6317 = vmatpush2.msra.mxu0 0.0
        %6318 = vmatprep.subr.mxu0 0.0
        %6319 = vmatpush2.msra.mxu0 0.0
        %6320 = vmatprep.subr.mxu0 0.0
        %6321 = vmatpush2.msra.mxu0 0.0
        %6322 = vmatprep.subr.mxu0 0.0
        %6323 = vmatpush2.msra.mxu0 0.0
        %6324 = vmatprep.mubr.f32.mxu0 0.0
        %6325 = vmatmul.mubr.f32.gmra.mxu0 %v4870
        %v6326 = vpop.f32.mrf.mxu0
        %v6327 = vadd.f32 0.0, %v6326
        %v6328 = vpop.f32.mrf.mxu0
        %6329 = vmatprep.mubr.f32.mxu0 0.0
        %6330 = vmatmul.mubr.f32.gmra.mxu0 %v4873
        %v6331 = vpop.f32.mrf.mxu0
        %v6332 = vadd.f32 0.0, %v6331
        %v6333 = vpop.f32.mrf.mxu0
        %6334 = vmatprep.mubr.f32.mxu0 0.0
        %6335 = vmatmul.mubr.f32.gmra.mxu0 %v4875
        %v6336 = vpop.f32.mrf.mxu0
        %v6337 = vadd.f32 0.0, %v6336
        %v6338 = vpop.f32.mrf.mxu0
        %6339 = vmatprep.mubr.f32.mxu0 0.0
        %6340 = vmatmul.mubr.f32.gmra.mxu0 %v4878
        %v6341 = vpop.f32.mrf.mxu0
        %v6342 = vadd.f32 0.0, %v6341
        %v6343 = vpop.f32.mrf.mxu0
        %6344 = vmatprep.mubr.f32.mxu0 0.0
        %6345 = vmatmul.mubr.f32.gmra.mxu0 %v4880
        %v6346 = vpop.f32.mrf.mxu0
        %v6347 = vadd.f32 0.0, %v6346
        %v6348 = vpop.f32.mrf.mxu0
        %6349 = vmatprep.mubr.f32.mxu0 0.0
        %6350 = vmatmul.mubr.f32.gmra.mxu0 %v4883
        %v6351 = vpop.f32.mrf.mxu0
        %v6352 = vadd.f32 0.0, %v6351
        %v6353 = vpop.f32.mrf.mxu0
        %6354 = vmatprep.mubr.f32.mxu0 0.0
        %6355 = vmatmul.mubr.f32.gmra.mxu0 %v4885
        %v6356 = vpop.f32.mrf.mxu0
        %v6357 = vadd.f32 0.0, %v6356
        %v6358 = vpop.f32.mrf.mxu0
        %6359 = vmatprep.mubr.f32.mxu0 0.0
        %6360 = vmatmul.mubr.f32.gmra.mxu0 %v4888
        %v6361 = vpop.f32.mrf.mxu0
        %v6362 = vadd.f32 0.0, %v6361
        %v6363 = vpop.f32.mrf.mxu0
        %6364 = vmatprep.mubr.f32.mxu0 0.0
        %6365 = vmatmul.mubr.f32.gmra.mxu0 %v4890
        %v6366 = vpop.f32.mrf.mxu0
        %v6367 = vadd.f32 0.0, %v6366
        %v6368 = vpop.f32.mrf.mxu0
        %6369 = vmatprep.mubr.f32.mxu0 0.0
        %6370 = vmatmul.mubr.f32.gmra.mxu0 %v4893
        %v6371 = vpop.f32.mrf.mxu0
        %v6372 = vadd.f32 0.0, %v6371
        %v6373 = vpop.f32.mrf.mxu0
        %6374 = vmatprep.mubr.f32.mxu0 0.0
        %6375 = vmatmul.mubr.f32.gmra.mxu0 %v4895
        %v6376 = vpop.f32.mrf.mxu0
        %v6377 = vadd.f32 0.0, %v6376
        %v6378 = vpop.f32.mrf.mxu0
        %6379 = vmatprep.mubr.f32.mxu0 0.0
        %6380 = vmatmul.mubr.f32.gmra.mxu0 %v4898
        %v6381 = vpop.f32.mrf.mxu0
        %v6382 = vadd.f32 0.0, %v6381
        %v6383 = vpop.f32.mrf.mxu0
        %6384 = vmatprep.mubr.f32.mxu0 0.0
        %6385 = vmatmul.mubr.f32.gmra.mxu0 %v4900
        %v6386 = vpop.f32.mrf.mxu0
        %v6387 = vadd.f32 0.0, %v6386
        %v6388 = vpop.f32.mrf.mxu0
        %6389 = vmatprep.mubr.f32.mxu0 0.0
        %6390 = vmatmul.mubr.f32.gmra.mxu0 %v4903
        %v6391 = vpop.f32.mrf.mxu0
        %v6392 = vadd.f32 0.0, %v6391
        %v6393 = vpop.f32.mrf.mxu0
        %6394 = vmatprep.mubr.f32.mxu0 0.0
        %6395 = vmatmul.mubr.f32.gmra.mxu0 %v4905
        %v6396 = vpop.f32.mrf.mxu0
        %v6397 = vadd.f32 0.0, %v6396
        %v6398 = vpop.f32.mrf.mxu0
        %6399 = vmatprep.mubr.f32.mxu0 0.0
        %6400 = vmatmul.mubr.f32.gmra.mxu0 %v4908
        %v6401 = vpop.f32.mrf.mxu0
        %v6402 = vadd.f32 0.0, %v6401
        %v6403 = vpop.f32.mrf.mxu0
        %6404 = vmatprep.mubr.f32.mxu0 0.0
        %6405 = vmatmul.mubr.f32.gmra.mxu0 %v4910
        %v6406 = vpop.f32.mrf.mxu0
        %v6407 = vadd.f32 0.0, %v6406
        %v6408 = vpop.f32.mrf.mxu0
        %6409 = vmatprep.mubr.f32.mxu0 0.0
        %6410 = vmatmul.mubr.f32.gmra.mxu0 %v4913
        %v6411 = vpop.f32.mrf.mxu0
        %v6412 = vadd.f32 0.0, %v6411
        %v6413 = vpop.f32.mrf.mxu0
        %6414 = vmatprep.mubr.f32.mxu0 0.0
        %6415 = vmatmul.mubr.f32.gmra.mxu0 %v4915
        %v6416 = vpop.f32.mrf.mxu0
        %v6417 = vadd.f32 0.0, %v6416
        %v6418 = vpop.f32.mrf.mxu0
        %6419 = vmatprep.mubr.f32.mxu0 0.0
        %6420 = vmatmul.mubr.f32.gmra.mxu0 %v4918
        %v6421 = vpop.f32.mrf.mxu0
        %v6422 = vadd.f32 0.0, %v6421
        %v6423 = vpop.f32.mrf.mxu0
        %6424 = vmatprep.mubr.f32.mxu0 0.0
        %6425 = vmatmul.mubr.f32.gmra.mxu0 %v4920
        %v6426 = vpop.f32.mrf.mxu0
        %v6427 = vadd.f32 0.0, %v6426
        %v6428 = vpop.f32.mrf.mxu0
        %6429 = vmatprep.mubr.f32.mxu0 0.0
        %6430 = vmatmul.mubr.f32.gmra.mxu0 %v4923
        %v6431 = vpop.f32.mrf.mxu0
        %v6432 = vadd.f32 0.0, %v6431
        %v6433 = vpop.f32.mrf.mxu0
        %6434 = vmatprep.mubr.f32.mxu0 0.0
        %6435 = vmatmul.mubr.f32.gmra.mxu0 %v4925
        %v6436 = vpop.f32.mrf.mxu0
        %v6437 = vadd.f32 0.0, %v6436
        %v6438 = vpop.f32.mrf.mxu0
        %6439 = vmatprep.mubr.f32.mxu0 0.0
        %6440 = vmatmul.mubr.f32.gmra.mxu0 %v4928
        %v6441 = vpop.f32.mrf.mxu0
        %v6442 = vadd.f32 0.0, %v6441
        %v6443 = vpop.f32.mrf.mxu0
        %6444 = vmatprep.mubr.f32.mxu0 0.0
        %6445 = vmatmul.mubr.f32.gmra.mxu0 %v4930
        %v6446 = vpop.f32.mrf.mxu0
        %v6447 = vadd.f32 0.0, %v6446
        %v6448 = vpop.f32.mrf.mxu0
        %6449 = vmatprep.mubr.f32.mxu0 0.0
        %6450 = vmatmul.mubr.f32.gmra.mxu0 %v4933
        %v6451 = vpop.f32.mrf.mxu0
        %v6452 = vadd.f32 0.0, %v6451
        %v6453 = vpop.f32.mrf.mxu0
        %6454 = vmatprep.mubr.f32.mxu0 0.0
        %6455 = vmatmul.mubr.f32.gmra.mxu0 %v4935
        %v6456 = vpop.f32.mrf.mxu0
        %v6457 = vadd.f32 0.0, %v6456
        %v6458 = vpop.f32.mrf.mxu0
        %6459 = vmatprep.mubr.f32.mxu0 0.0
        %6460 = vmatmul.mubr.f32.gmra.mxu0 %v4938
        %v6461 = vpop.f32.mrf.mxu0
        %v6462 = vadd.f32 0.0, %v6461
        %v6463 = vpop.f32.mrf.mxu0
        %6464 = vmatprep.mubr.f32.mxu0 0.0
        %6465 = vmatmul.mubr.f32.gmra.mxu0 %v5469
        %v6466 = vpop.f32.mrf.mxu0
        %v6467 = vadd.f32 0.0, %v6466
        %v6468 = vpop.f32.mrf.mxu0
        %6469 = vmatprep.mubr.f32.mxu0 0.0
        %6470 = vmatmul.mubr.f32.gmra.mxu0 %v5472
        %v6471 = vpop.f32.mrf.mxu0
        %v6472 = vadd.f32 0.0, %v6471
        %v6473 = vpop.f32.mrf.mxu0
        %6474 = vmatprep.mubr.f32.mxu0 0.0
        %6475 = vmatmul.mubr.f32.gmra.mxu0 %v1519
        %v6476 = vpop.f32.mrf.mxu0
        %v6477 = vadd.f32 0.0, %v6476
        %v6478 = vpop.f32.mrf.mxu0
        %6479 = vmatprep.mubr.f32.mxu0 0.0
        %6480 = vmatmul.mubr.f32.gmra.mxu0 %v1522
        %v6481 = vpop.f32.mrf.mxu0
        %v6482 = vadd.f32 0.0, %v6481
        %v6483 = vpop.f32.mrf.mxu0
        %6484 = vdwg.mxu0
        %v6485 = vadd.f32 %v6223, %v6327
        %v6486 = vadd.f32 %v6224, %v6332
        %v6487 = vadd.f32 %v6225, %v6337
        %v6488 = vadd.f32 %v6226, %v6342
        %v6489 = vadd.f32 %v6227, %v6347
        %v6490 = vadd.f32 %v6228, %v6352
        %v6491 = vadd.f32 %v6229, %v6357
        %v6492 = vadd.f32 %v6230, %v6362
        %v6493 = vadd.f32 %v6231, %v6367
        %v6494 = vadd.f32 %v6232, %v6372
        %v6495 = vadd.f32 %v6233, %v6377
        %v6496 = vadd.f32 %v6234, %v6382
        %v6497 = vadd.f32 %v6235, %v6387
        %v6498 = vadd.f32 %v6236, %v6392
        %v6499 = vadd.f32 %v6237, %v6397
        %v6500 = vadd.f32 %v6238, %v6402
        %v6501 = vadd.f32 %v6239, %v6407
        %v6502 = vadd.f32 %v6240, %v6412
        %v6503 = vadd.f32 %v6241, %v6417
        %v6504 = vadd.f32 %v6242, %v6422
        %v6505 = vadd.f32 %v6243, %v6427
        %v6506 = vadd.f32 %v6244, %v6432
        %v6507 = vadd.f32 %v6245, %v6437
        %v6508 = vadd.f32 %v6246, %v6442
        %v6509 = vadd.f32 %v6247, %v6447
        %v6510 = vadd.f32 %v6248, %v6452
        %v6511 = vadd.f32 %v6249, %v6457
        %v6512 = vadd.f32 %v6250, %v6462
        %v6513 = vadd.f32 %v6251, %v6467
        %v6514 = vadd.f32 %v6252, %v6472
        %v6515 = vadd.f32 %v6253, %v6477
        %v6516 = vadd.f32 %v6254, %v6482
        %v6517 = vld [vmem:[%s6] sm:$0x1]
        %v6519 = vlaneseq
        %v6520 = vshrl.u32 %v6519, 7
        %v6521 = vsub.s32 0, %v6520
        %v6522 = vrot.slane %v6517, %v6521
        %v6524 = vadd.f32 %v6485, %v6522
        %v6525 = vadd.f32 %v6486, %v6522
        %v6526 = vadd.f32 %v6487, %v6522
        %v6527 = vadd.f32 %v6488, %v6522
        %v6528 = vadd.f32 %v6489, %v6522
        %v6529 = vadd.f32 %v6490, %v6522
        %v6530 = vadd.f32 %v6491, %v6522
        %v6531 = vadd.f32 %v6492, %v6522
        %v6532 = vadd.f32 %v6493, %v6522
        %v6533 = vadd.f32 %v6494, %v6522
        %v6534 = vadd.f32 %v6495, %v6522
        %v6535 = vadd.f32 %v6496, %v6522
        %v6536 = vadd.f32 %v6497, %v6522
        %v6537 = vadd.f32 %v6498, %v6522
        %v6538 = vadd.f32 %v6499, %v6522
        %v6539 = vadd.f32 %v6500, %v6522
        %v6540 = vadd.f32 %v6501, %v6522
        %v6541 = vadd.f32 %v6502, %v6522
        %v6542 = vadd.f32 %v6503, %v6522
        %v6543 = vadd.f32 %v6504, %v6522
        %v6544 = vadd.f32 %v6505, %v6522
        %v6545 = vadd.f32 %v6506, %v6522
        %v6546 = vadd.f32 %v6507, %v6522
        %v6547 = vadd.f32 %v6508, %v6522
        %v6548 = vadd.f32 %v6509, %v6522
        %v6549 = vadd.f32 %v6510, %v6522
        %v6550 = vadd.f32 %v6511, %v6522
        %v6551 = vadd.f32 %v6512, %v6522
        %v6552 = vadd.f32 %v6513, %v6522
        %v6553 = vadd.f32 %v6514, %v6522
        %v6554 = vadd.f32 %v6515, %v6522
        %v6555 = vadd.f32 %v6516, %v6522
        %v6556 = vld [vmem:[%s7] sm:$0x1]
        %v6557 = vld [vmem:[%s8] sm:$0x1]
        %v6558 = vsel %vm655, %v6524, 0.0
        %v6559 = vsel %vm655, %v6525, 0.0
        %v6560 = vadd.f32 %v6558, %v6559
        %v6561 = vsel %vm655, %v6526, 0.0
        %v6562 = vadd.f32 %v6560, %v6561
        %v6563 = vsel %vm655, %v6527, 0.0
        %v6564 = vadd.f32 %v6562, %v6563
        %v6565 = vsel %vm655, %v6528, 0.0
        %v6566 = vadd.f32 %v6564, %v6565
        %v6567 = vsel %vm655, %v6529, 0.0
        %v6568 = vadd.f32 %v6566, %v6567
        %v6569 = vsel %vm655, %v6530, 0.0
        %v6570 = vadd.f32 %v6568, %v6569
        %v6571 = vsel %vm655, %v6531, 0.0
        %v6572 = vadd.f32 %v6570, %v6571
        %v6573 = vsel %vm655, %v6532, 0.0
        %v6574 = vadd.f32 %v6572, %v6573
        %v6575 = vsel %vm655, %v6533, 0.0
        %v6576 = vadd.f32 %v6574, %v6575
        %v6577 = vsel %vm655, %v6534, 0.0
        %v6578 = vadd.f32 %v6576, %v6577
        %v6579 = vsel %vm655, %v6535, 0.0
        %v6580 = vadd.f32 %v6578, %v6579
        %v6581 = vsel %vm655, %v6536, 0.0
        %v6582 = vadd.f32 %v6580, %v6581
        %v6583 = vsel %vm655, %v6537, 0.0
        %v6584 = vadd.f32 %v6582, %v6583
        %v6585 = vsel %vm655, %v6538, 0.0
        %v6586 = vadd.f32 %v6584, %v6585
        %v6587 = vsel %vm655, %v6539, 0.0
        %v6588 = vadd.f32 %v6586, %v6587
        %v6589 = vsel %vm655, %v6540, 0.0
        %v6590 = vadd.f32 %v6588, %v6589
        %v6591 = vsel %vm655, %v6541, 0.0
        %v6592 = vadd.f32 %v6590, %v6591
        %v6593 = vsel %vm655, %v6542, 0.0
        %v6594 = vadd.f32 %v6592, %v6593
        %v6595 = vsel %vm655, %v6543, 0.0
        %v6596 = vadd.f32 %v6594, %v6595
        %v6597 = vsel %vm655, %v6544, 0.0
        %v6598 = vadd.f32 %v6596, %v6597
        %v6599 = vsel %vm655, %v6545, 0.0
        %v6600 = vadd.f32 %v6598, %v6599
        %v6601 = vsel %vm655, %v6546, 0.0
        %v6602 = vadd.f32 %v6600, %v6601
        %v6603 = vsel %vm655, %v6547, 0.0
        %v6604 = vadd.f32 %v6602, %v6603
        %v6605 = vsel %vm655, %v6548, 0.0
        %v6606 = vadd.f32 %v6604, %v6605
        %v6607 = vsel %vm655, %v6549, 0.0
        %v6608 = vadd.f32 %v6606, %v6607
        %v6609 = vsel %vm655, %v6550, 0.0
        %v6610 = vadd.f32 %v6608, %v6609
        %v6611 = vsel %vm655, %v6551, 0.0
        %v6612 = vadd.f32 %v6610, %v6611
        %v6613 = vsel %vm655, %v6552, 0.0
        %v6614 = vadd.f32 %v6612, %v6613
        %v6615 = vsel %vm655, %v6553, 0.0
        %v6616 = vadd.f32 %v6614, %v6615
        %v6617 = vsel %vm655, %v6554, 0.0
        %v6618 = vadd.f32 %v6616, %v6617
        %v6619 = vsel %vm655, %v6555, 0.0
        %v6620 = vadd.f32 %v6618, %v6619
        %v6621 = vrot.slane %v6620, 4
        %v6622 = vadd.f32 %v6620, %v6621
        %v6623 = vrot.slane %v6622, 2
        %v6624 = vadd.f32 %v6622, %v6623
        %v6625 = vrot.slane %v6624, 1
        %v6626 = vadd.f32 %v6624, %v6625
        %v6627 = vmul.f32 %v6524, %v6524
        %v6628 = vmul.f32 %v6525, %v6525
        %v6629 = vmul.f32 %v6526, %v6526
        %v6630 = vmul.f32 %v6527, %v6527
        %v6631 = vmul.f32 %v6528, %v6528
        %v6632 = vmul.f32 %v6529, %v6529
        %v6633 = vmul.f32 %v6530, %v6530
        %v6634 = vmul.f32 %v6531, %v6531
        %v6635 = vmul.f32 %v6532, %v6532
        %v6636 = vmul.f32 %v6533, %v6533
        %v6637 = vmul.f32 %v6534, %v6534
        %v6638 = vmul.f32 %v6535, %v6535
        %v6639 = vmul.f32 %v6536, %v6536
        %v6640 = vmul.f32 %v6537, %v6537
        %v6641 = vmul.f32 %v6538, %v6538
        %v6642 = vmul.f32 %v6539, %v6539
        %v6643 = vmul.f32 %v6540, %v6540
        %v6644 = vmul.f32 %v6541, %v6541
        %v6645 = vmul.f32 %v6542, %v6542
        %v6646 = vmul.f32 %v6543, %v6543
        %v6647 = vmul.f32 %v6544, %v6544
        %v6648 = vmul.f32 %v6545, %v6545
        %v6649 = vmul.f32 %v6546, %v6546
        %v6650 = vmul.f32 %v6547, %v6547
        %v6651 = vmul.f32 %v6548, %v6548
        %v6652 = vmul.f32 %v6549, %v6549
        %v6653 = vmul.f32 %v6550, %v6550
        %v6654 = vmul.f32 %v6551, %v6551
        %v6655 = vmul.f32 %v6552, %v6552
        %v6656 = vmul.f32 %v6553, %v6553
        %v6657 = vmul.f32 %v6554, %v6554
        %v6658 = vmul.f32 %v6555, %v6555
        %v6659 = vsel %vm655, %v6627, 0.0
        %v6660 = vsel %vm655, %v6628, 0.0
        %v6661 = vadd.f32 %v6659, %v6660
        %v6662 = vsel %vm655, %v6629, 0.0
        %v6663 = vadd.f32 %v6661, %v6662
        %v6664 = vsel %vm655, %v6630, 0.0
        %v6665 = vadd.f32 %v6663, %v6664
        %v6666 = vsel %vm655, %v6631, 0.0
        %v6667 = vadd.f32 %v6665, %v6666
        %v6668 = vsel %vm655, %v6632, 0.0
        %v6669 = vadd.f32 %v6667, %v6668
        %v6670 = vsel %vm655, %v6633, 0.0
        %v6671 = vadd.f32 %v6669, %v6670
        %v6672 = vsel %vm655, %v6634, 0.0
        %v6673 = vadd.f32 %v6671, %v6672
        %v6674 = vsel %vm655, %v6635, 0.0
        %v6675 = vadd.f32 %v6673, %v6674
        %v6676 = vsel %vm655, %v6636, 0.0
        %v6677 = vadd.f32 %v6675, %v6676
        %v6678 = vsel %vm655, %v6637, 0.0
        %v6679 = vadd.f32 %v6677, %v6678
        %v6680 = vsel %vm655, %v6638, 0.0
        %v6681 = vadd.f32 %v6679, %v6680
        %v6682 = vsel %vm655, %v6639, 0.0
        %v6683 = vadd.f32 %v6681, %v6682
        %v6684 = vsel %vm655, %v6640, 0.0
        %v6685 = vadd.f32 %v6683, %v6684
        %v6686 = vsel %vm655, %v6641, 0.0
        %v6687 = vadd.f32 %v6685, %v6686
        %v6688 = vsel %vm655, %v6642, 0.0
        %v6689 = vadd.f32 %v6687, %v6688
        %v6690 = vsel %vm655, %v6643, 0.0
        %v6691 = vadd.f32 %v6689, %v6690
        %v6692 = vsel %vm655, %v6644, 0.0
        %v6693 = vadd.f32 %v6691, %v6692
        %v6694 = vsel %vm655, %v6645, 0.0
        %v6695 = vadd.f32 %v6693, %v6694
        %v6696 = vsel %vm655, %v6646, 0.0
        %v6697 = vadd.f32 %v6695, %v6696
        %v6698 = vsel %vm655, %v6647, 0.0
        %v6699 = vadd.f32 %v6697, %v6698
        %v6700 = vsel %vm655, %v6648, 0.0
        %v6701 = vadd.f32 %v6699, %v6700
        %v6702 = vsel %vm655, %v6649, 0.0
        %v6703 = vadd.f32 %v6701, %v6702
        %v6704 = vsel %vm655, %v6650, 0.0
        %v6705 = vadd.f32 %v6703, %v6704
        %v6706 = vsel %vm655, %v6651, 0.0
        %v6707 = vadd.f32 %v6705, %v6706
        %v6708 = vsel %vm655, %v6652, 0.0
        %v6709 = vadd.f32 %v6707, %v6708
        %v6710 = vsel %vm655, %v6653, 0.0
        %v6711 = vadd.f32 %v6709, %v6710
        %v6712 = vsel %vm655, %v6654, 0.0
        %v6713 = vadd.f32 %v6711, %v6712
        %v6714 = vsel %vm655, %v6655, 0.0
        %v6715 = vadd.f32 %v6713, %v6714
        %v6716 = vsel %vm655, %v6656, 0.0
        %v6717 = vadd.f32 %v6715, %v6716
        %v6718 = vsel %vm655, %v6657, 0.0
        %v6719 = vadd.f32 %v6717, %v6718
        %v6720 = vsel %vm655, %v6658, 0.0
        %v6721 = vadd.f32 %v6719, %v6720
        %v6722 = vrot.slane %v6721, 4
        %v6723 = vadd.f32 %v6721, %v6722
        %v6724 = vrot.slane %v6723, 2
        %v6725 = vadd.f32 %v6723, %v6724
        %v6726 = vrot.slane %v6725, 1
        %v6727 = vadd.f32 %v6725, %v6726
        %v6729 = vsel %vm655, %v6626, 0
        %6731 = vmatprep.subr.mxu0 0.0
        %6732 = vmatpush1.msra.mxu0 0.0
        %6733 = vmatprep.subr.mxu0 0.0
        %6734 = vmatpush1.msra.mxu0 0.0
        %6735 = vmatprep.subr.mxu0 0.0
        %6736 = vmatpush1.msra.mxu0 0.0
        %6737 = vmatprep.subr.mxu0 0.0
        %6738 = vmatpush1.msra.mxu0 0.0
        %6739 = vmatprep.subr.mxu0 0.0
        %6740 = vmatpush1.msra.mxu0 0.0
        %6741 = vmatprep.subr.mxu0 0.0
        %6742 = vmatpush1.msra.mxu0 0.0
        %6743 = vmatprep.subr.mxu0 0.0
        %6744 = vmatpush1.msra.mxu0 0.0
        %6745 = vmatprep.subr.mxu0 0.0
        %6746 = vmatpush1.msra.mxu0 0.0
        %6747 = vmatprep.subr.mxu0 0.0
        %6748 = vmatpush1.msra.mxu0 0.0
        %6749 = vmatprep.subr.mxu0 0.0
        %6750 = vmatpush1.msra.mxu0 0.0
        %6751 = vmatprep.subr.mxu0 0.0
        %6752 = vmatpush1.msra.mxu0 0.0
        %6753 = vmatprep.subr.mxu0 0.0
        %6754 = vmatpush1.msra.mxu0 0.0
        %6755 = vmatprep.subr.mxu0 0.0
        %6756 = vmatpush1.msra.mxu0 %v410
        %6757 = vmatprep.subr.mxu0 0.0
        %6758 = vmatpush1.msra.mxu0 %v409
        %6759 = vmatprep.subr.mxu0 0.0
        %6760 = vmatpush1.msra.mxu0 %v408
        %6761 = vmatprep.subr.mxu0 0.0
        %6762 = vmatpush1.msra.mxu0 %v407
        %6763 = vmatprep.subr.mxu0 0.0
        %6764 = vmatpush2.msra.mxu0 0.0
        %6765 = vmatprep.subr.mxu0 0.0
        %6766 = vmatpush2.msra.mxu0 0.0
        %6767 = vmatprep.subr.mxu0 0.0
        %6768 = vmatpush2.msra.mxu0 0.0
        %6769 = vmatprep.subr.mxu0 0.0
        %6770 = vmatpush2.msra.mxu0 0.0
        %6771 = vmatprep.subr.mxu0 0.0
        %6772 = vmatpush2.msra.mxu0 0.0
        %6773 = vmatprep.subr.mxu0 0.0
        %6774 = vmatpush2.msra.mxu0 0.0
        %6775 = vmatprep.subr.mxu0 0.0
        %6776 = vmatpush2.msra.mxu0 0.0
        %6777 = vmatprep.subr.mxu0 0.0
        %6778 = vmatpush2.msra.mxu0 0.0
        %6779 = vmatprep.subr.mxu0 0.0
        %6780 = vmatpush2.msra.mxu0 0.0
        %6781 = vmatprep.subr.mxu0 0.0
        %6782 = vmatpush2.msra.mxu0 0.0
        %6783 = vmatprep.subr.mxu0 0.0
        %6784 = vmatpush2.msra.mxu0 0.0
        %6785 = vmatprep.subr.mxu0 0.0
        %6786 = vmatpush2.msra.mxu0 0.0
        %6787 = vmatprep.subr.mxu0 0.0
        %6788 = vmatpush2.msra.mxu0 0.0
        %6789 = vmatprep.subr.mxu0 0.0
        %6790 = vmatpush2.msra.mxu0 0.0
        %6791 = vmatprep.subr.mxu0 0.0
        %6792 = vmatpush2.msra.mxu0 0.0
        %6793 = vmatprep.subr.mxu0 0.0
        %6794 = vmatpush2.msra.mxu0 0.0
        %6795 = vmatprep.mubr.f32.mxu0 0.0
        %6796 = vmatmul.mubr.f32.gmra.mxu0 %v6729
        %v6797 = vpop.f32.mrf.mxu0
        %v6798 = vadd.f32 0.0, %v6797
        %v6799 = vpop.f32.mrf.mxu0
        %6800 = vdwg.mxu0
        %v6801 = vmul.f32 %v6798, 0.00048828125
        %v6803 = vsel %vm655, %v6727, 0
        %6805 = vmatprep.subr.mxu0 0.0
        %6806 = vmatpush1.msra.mxu0 0.0
        %6807 = vmatprep.subr.mxu0 0.0
        %6808 = vmatpush1.msra.mxu0 0.0
        %6809 = vmatprep.subr.mxu0 0.0
        %6810 = vmatpush1.msra.mxu0 0.0
        %6811 = vmatprep.subr.mxu0 0.0
        %6812 = vmatpush1.msra.mxu0 0.0
        %6813 = vmatprep.subr.mxu0 0.0
        %6814 = vmatpush1.msra.mxu0 0.0
        %6815 = vmatprep.subr.mxu0 0.0
        %6816 = vmatpush1.msra.mxu0 0.0
        %6817 = vmatprep.subr.mxu0 0.0
        %6818 = vmatpush1.msra.mxu0 0.0
        %6819 = vmatprep.subr.mxu0 0.0
        %6820 = vmatpush1.msra.mxu0 0.0
        %6821 = vmatprep.subr.mxu0 0.0
        %6822 = vmatpush1.msra.mxu0 0.0
        %6823 = vmatprep.subr.mxu0 0.0
        %6824 = vmatpush1.msra.mxu0 0.0
        %6825 = vmatprep.subr.mxu0 0.0
        %6826 = vmatpush1.msra.mxu0 0.0
        %6827 = vmatprep.subr.mxu0 0.0
        %6828 = vmatpush1.msra.mxu0 0.0
        %6829 = vmatprep.subr.mxu0 0.0
        %6830 = vmatpush1.msra.mxu0 %v410
        %6831 = vmatprep.subr.mxu0 0.0
        %6832 = vmatpush1.msra.mxu0 %v409
        %6833 = vmatprep.subr.mxu0 0.0
        %6834 = vmatpush1.msra.mxu0 %v408
        %6835 = vmatprep.subr.mxu0 0.0
        %6836 = vmatpush1.msra.mxu0 %v407
        %6837 = vmatprep.subr.mxu0 0.0
        %6838 = vmatpush2.msra.mxu0 0.0
        %6839 = vmatprep.subr.mxu0 0.0
        %6840 = vmatpush2.msra.mxu0 0.0
        %6841 = vmatprep.subr.mxu0 0.0
        %6842 = vmatpush2.msra.mxu0 0.0
        %6843 = vmatprep.subr.mxu0 0.0
        %6844 = vmatpush2.msra.mxu0 0.0
        %6845 = vmatprep.subr.mxu0 0.0
        %6846 = vmatpush2.msra.mxu0 0.0
        %6847 = vmatprep.subr.mxu0 0.0
        %6848 = vmatpush2.msra.mxu0 0.0
        %6849 = vmatprep.subr.mxu0 0.0
        %6850 = vmatpush2.msra.mxu0 0.0
        %6851 = vmatprep.subr.mxu0 0.0
        %6852 = vmatpush2.msra.mxu0 0.0
        %6853 = vmatprep.subr.mxu0 0.0
        %6854 = vmatpush2.msra.mxu0 0.0
        %6855 = vmatprep.subr.mxu0 0.0
        %6856 = vmatpush2.msra.mxu0 0.0
        %6857 = vmatprep.subr.mxu0 0.0
        %6858 = vmatpush2.msra.mxu0 0.0
        %6859 = vmatprep.subr.mxu0 0.0
        %6860 = vmatpush2.msra.mxu0 0.0
        %6861 = vmatprep.subr.mxu0 0.0
        %6862 = vmatpush2.msra.mxu0 0.0
        %6863 = vmatprep.subr.mxu0 0.0
        %6864 = vmatpush2.msra.mxu0 0.0
        %6865 = vmatprep.subr.mxu0 0.0
        %6866 = vmatpush2.msra.mxu0 0.0
        %6867 = vmatprep.subr.mxu0 0.0
        %6868 = vmatpush2.msra.mxu0 0.0
        %6869 = vmatprep.mubr.f32.mxu0 0.0
        %6870 = vmatmul.mubr.f32.gmra.mxu0 %v6803
        %v6871 = vpop.f32.mrf.mxu0
        %v6872 = vadd.f32 0.0, %v6871
        %v6873 = vpop.f32.mrf.mxu0
        %6874 = vdwg.mxu0
        %v6875 = vmul.f32 %v6872, 0.00048828125
        %v6876 = vmul.f32 %v6801, %v6801
        %v6877 = vsub.f32 %v6875, %v6876
        %v6878 = vmax.f32 %v6877, 0.0
        %v6879 = vadd.f32 %v6878, 1e-05
        %v6880 = vrsqrt.pop %v6879
        %v6882 = vsel %vm3540, %v6801, 0
        %6884 = vmatprep.subr.mxu0 0.0
        %6885 = vmatpush1.xpose.msra.mxu0 0.0
        %6886 = vmatprep.subr.mxu0 0.0
        %6887 = vmatpush1.xpose.msra.mxu0 0.0
        %6888 = vmatprep.subr.mxu0 0.0
        %6889 = vmatpush1.xpose.msra.mxu0 0.0
        %6890 = vmatprep.subr.mxu0 0.0
        %6891 = vmatpush1.xpose.msra.mxu0 0.0
        %6892 = vmatprep.subr.mxu0 0.0
        %6893 = vmatpush1.xpose.msra.mxu0 0.0
        %6894 = vmatprep.subr.mxu0 0.0
        %6895 = vmatpush1.xpose.msra.mxu0 0.0
        %6896 = vmatprep.subr.mxu0 0.0
        %6897 = vmatpush1.xpose.msra.mxu0 0.0
        %6898 = vmatprep.subr.mxu0 0.0
        %6899 = vmatpush1.xpose.msra.mxu0 0.0
        %6900 = vmatprep.subr.mxu0 0.0
        %6901 = vmatpush1.xpose.msra.mxu0 0.0
        %6902 = vmatprep.subr.mxu0 0.0
        %6903 = vmatpush1.xpose.msra.mxu0 0.0
        %6904 = vmatprep.subr.mxu0 0.0
        %6905 = vmatpush1.xpose.msra.mxu0 0.0
        %6906 = vmatprep.subr.mxu0 0.0
        %6907 = vmatpush1.xpose.msra.mxu0 0.0
        %6908 = vmatprep.subr.mxu0 0.0
        %6909 = vmatpush1.xpose.msra.mxu0 %v3554
        %6910 = vmatprep.subr.mxu0 0.0
        %6911 = vmatpush1.xpose.msra.mxu0 %v3551
        %6912 = vmatprep.subr.mxu0 0.0
        %6913 = vmatpush1.xpose.msra.mxu0 %v3548
        %6914 = vmatprep.subr.mxu0 0.0
        %6915 = vmatpush1.xpose.msra.mxu0 %v3545
        %6916 = vmatprep.subr.mxu0 0.0
        %6917 = vmatpush2.xpose.msra.mxu0 0.0
        %6918 = vmatprep.subr.mxu0 0.0
        %6919 = vmatpush2.xpose.msra.mxu0 0.0
        %6920 = vmatprep.subr.mxu0 0.0
        %6921 = vmatpush2.xpose.msra.mxu0 0.0
        %6922 = vmatprep.subr.mxu0 0.0
        %6923 = vmatpush2.xpose.msra.mxu0 0.0
        %6924 = vmatprep.subr.mxu0 0.0
        %6925 = vmatpush2.xpose.msra.mxu0 0.0
        %6926 = vmatprep.subr.mxu0 0.0
        %6927 = vmatpush2.xpose.msra.mxu0 0.0
        %6928 = vmatprep.subr.mxu0 0.0
        %6929 = vmatpush2.xpose.msra.mxu0 0.0
        %6930 = vmatprep.subr.mxu0 0.0
        %6931 = vmatpush2.xpose.msra.mxu0 0.0
        %6932 = vmatprep.subr.mxu0 0.0
        %6933 = vmatpush2.xpose.msra.mxu0 0.0
        %6934 = vmatprep.subr.mxu0 0.0
        %6935 = vmatpush2.xpose.msra.mxu0 0.0
        %6936 = vmatprep.subr.mxu0 0.0
        %6937 = vmatpush2.xpose.msra.mxu0 0.0
        %6938 = vmatprep.subr.mxu0 0.0
        %6939 = vmatpush2.xpose.msra.mxu0 0.0
        %6940 = vmatprep.subr.mxu0 0.0
        %6941 = vmatpush2.xpose.msra.mxu0 0.0
        %6942 = vmatprep.subr.mxu0 0.0
        %6943 = vmatpush2.xpose.msra.mxu0 0.0
        %6944 = vmatprep.subr.mxu0 0.0
        %6945 = vmatpush2.xpose.msra.mxu0 0.0
        %6946 = vmatprep.subr.mxu0 0.0
        %6947 = vmatpush2.xpose.msra.mxu0 0.0
        %6948 = vmatprep.mubr.f32.mxu0 0.0
        %6949 = vmatmul.mubr.f32.gmra.mxu0 %v6882
        %v6950 = vpop.f32.mrf.mxu0
        %v6951 = vadd.f32 0.0, %v6950
        %v6952 = vpop.f32.mrf.mxu0
        %6953 = vdwg.mxu0
        %v6955 = vsel %vm3540, %v6880, 0
        %6957 = vmatprep.subr.mxu0 0.0
        %6958 = vmatpush1.xpose.msra.mxu0 0.0
        %6959 = vmatprep.subr.mxu0 0.0
        %6960 = vmatpush1.xpose.msra.mxu0 0.0
        %6961 = vmatprep.subr.mxu0 0.0
        %6962 = vmatpush1.xpose.msra.mxu0 0.0
        %6963 = vmatprep.subr.mxu0 0.0
        %6964 = vmatpush1.xpose.msra.mxu0 0.0
        %6965 = vmatprep.subr.mxu0 0.0
        %6966 = vmatpush1.xpose.msra.mxu0 0.0
        %6967 = vmatprep.subr.mxu0 0.0
        %6968 = vmatpush1.xpose.msra.mxu0 0.0
        %6969 = vmatprep.subr.mxu0 0.0
        %6970 = vmatpush1.xpose.msra.mxu0 0.0
        %6971 = vmatprep.subr.mxu0 0.0
        %6972 = vmatpush1.xpose.msra.mxu0 0.0
        %6973 = vmatprep.subr.mxu0 0.0
        %6974 = vmatpush1.xpose.msra.mxu0 0.0
        %6975 = vmatprep.subr.mxu0 0.0
        %6976 = vmatpush1.xpose.msra.mxu0 0.0
        %6977 = vmatprep.subr.mxu0 0.0
        %6978 = vmatpush1.xpose.msra.mxu0 0.0
        %6979 = vmatprep.subr.mxu0 0.0
        %6980 = vmatpush1.xpose.msra.mxu0 0.0
        %6981 = vmatprep.subr.mxu0 0.0
        %6982 = vmatpush1.xpose.msra.mxu0 %v3554
        %6983 = vmatprep.subr.mxu0 0.0
        %6984 = vmatpush1.xpose.msra.mxu0 %v3551
        %6985 = vmatprep.subr.mxu0 0.0
        %6986 = vmatpush1.xpose.msra.mxu0 %v3548
        %6987 = vmatprep.subr.mxu0 0.0
        %6988 = vmatpush1.xpose.msra.mxu0 %v3545
        %6989 = vmatprep.subr.mxu0 0.0
        %6990 = vmatpush2.xpose.msra.mxu0 0.0
        %6991 = vmatprep.subr.mxu0 0.0
        %6992 = vmatpush2.xpose.msra.mxu0 0.0
        %6993 = vmatprep.subr.mxu0 0.0
        %6994 = vmatpush2.xpose.msra.mxu0 0.0
        %6995 = vmatprep.subr.mxu0 0.0
        %6996 = vmatpush2.xpose.msra.mxu0 0.0
        %6997 = vmatprep.subr.mxu0 0.0
        %6998 = vmatpush2.xpose.msra.mxu0 0.0
        %6999 = vmatprep.subr.mxu0 0.0
        %7000 = vmatpush2.xpose.msra.mxu0 0.0
        %7001 = vmatprep.subr.mxu0 0.0
        %7002 = vmatpush2.xpose.msra.mxu0 0.0
        %7003 = vmatprep.subr.mxu0 0.0
        %7004 = vmatpush2.xpose.msra.mxu0 0.0
        %7005 = vmatprep.subr.mxu0 0.0
        %7006 = vmatpush2.xpose.msra.mxu0 0.0
        %7007 = vmatprep.subr.mxu0 0.0
        %7008 = vmatpush2.xpose.msra.mxu0 0.0
        %7009 = vmatprep.subr.mxu0 0.0
        %7010 = vmatpush2.xpose.msra.mxu0 0.0
        %7011 = vmatprep.subr.mxu0 0.0
        %7012 = vmatpush2.xpose.msra.mxu0 0.0
        %7013 = vmatprep.subr.mxu0 0.0
        %7014 = vmatpush2.xpose.msra.mxu0 0.0
        %7015 = vmatprep.subr.mxu0 0.0
        %7016 = vmatpush2.xpose.msra.mxu0 0.0
        %7017 = vmatprep.subr.mxu0 0.0
        %7018 = vmatpush2.xpose.msra.mxu0 0.0
        %7019 = vmatprep.subr.mxu0 0.0
        %7020 = vmatpush2.xpose.msra.mxu0 0.0
        %7021 = vmatprep.mubr.f32.mxu0 0.0
        %7022 = vmatmul.mubr.f32.gmra.mxu0 %v6955
        %v7023 = vpop.f32.mrf.mxu0
        %v7024 = vadd.f32 0.0, %v7023
        %v7025 = vpop.f32.mrf.mxu0
        %7026 = vdwg.mxu0
        %v7027 = vmul.f32 %v7024, %v6556
        %v7028 = vmul.f32 %v6951, %v7027
        %v7029 = vsub.f32 %v6557, %v7028
        %v7030 = vlaneseq
        %v7031 = vshrl.u32 %v7030, 7
        %v7032 = vsub.s32 0, %v7031
        %v7033 = vrot.slane %v7027, %v7032
        %v7034 = vmul.f32 %v6524, %v7033
        %v7035 = vmul.f32 %v6525, %v7033
        %v7036 = vmul.f32 %v6526, %v7033
        %v7037 = vmul.f32 %v6527, %v7033
        %v7038 = vmul.f32 %v6528, %v7033
        %v7039 = vmul.f32 %v6529, %v7033
        %v7040 = vmul.f32 %v6530, %v7033
        %v7041 = vmul.f32 %v6531, %v7033
        %v7042 = vmul.f32 %v6532, %v7033
        %v7043 = vmul.f32 %v6533, %v7033
        %v7044 = vmul.f32 %v6534, %v7033
        %v7045 = vmul.f32 %v6535, %v7033
        %v7046 = vmul.f32 %v6536, %v7033
        %v7047 = vmul.f32 %v6537, %v7033
        %v7048 = vmul.f32 %v6538, %v7033
        %v7049 = vmul.f32 %v6539, %v7033
        %v7050 = vmul.f32 %v6540, %v7033
        %v7051 = vmul.f32 %v6541, %v7033
        %v7052 = vmul.f32 %v6542, %v7033
        %v7053 = vmul.f32 %v6543, %v7033
        %v7054 = vmul.f32 %v6544, %v7033
        %v7055 = vmul.f32 %v6545, %v7033
        %v7056 = vmul.f32 %v6546, %v7033
        %v7057 = vmul.f32 %v6547, %v7033
        %v7058 = vmul.f32 %v6548, %v7033
        %v7059 = vmul.f32 %v6549, %v7033
        %v7060 = vmul.f32 %v6550, %v7033
        %v7061 = vmul.f32 %v6551, %v7033
        %v7062 = vmul.f32 %v6552, %v7033
        %v7063 = vmul.f32 %v6553, %v7033
        %v7064 = vmul.f32 %v6554, %v7033
        %v7065 = vmul.f32 %v6555, %v7033
        %v7067 = vlaneseq
        %v7068 = vshrl.u32 %v7067, 7
        %v7069 = vsub.s32 0, %v7068
        %v7070 = vrot.slane %v7029, %v7069
        %v7072 = vadd.f32 %v7034, %v7070
        %v7073 = vadd.f32 %v7035, %v7070
        %v7074 = vadd.f32 %v7036, %v7070
        %v7075 = vadd.f32 %v7037, %v7070
        %v7076 = vadd.f32 %v7038, %v7070
        %v7077 = vadd.f32 %v7039, %v7070
        %v7078 = vadd.f32 %v7040, %v7070
        %v7079 = vadd.f32 %v7041, %v7070
        %v7080 = vadd.f32 %v7042, %v7070
        %v7081 = vadd.f32 %v7043, %v7070
        %v7082 = vadd.f32 %v7044, %v7070
        %v7083 = vadd.f32 %v7045, %v7070
        %v7084 = vadd.f32 %v7046, %v7070
        %v7085 = vadd.f32 %v7047, %v7070
        %v7086 = vadd.f32 %v7048, %v7070
        %v7087 = vadd.f32 %v7049, %v7070
        %v7088 = vadd.f32 %v7050, %v7070
        %v7089 = vadd.f32 %v7051, %v7070
        %v7090 = vadd.f32 %v7052, %v7070
        %v7091 = vadd.f32 %v7053, %v7070
        %v7092 = vadd.f32 %v7054, %v7070
        %v7093 = vadd.f32 %v7055, %v7070
        %v7094 = vadd.f32 %v7056, %v7070
        %v7095 = vadd.f32 %v7057, %v7070
        %v7096 = vadd.f32 %v7058, %v7070
        %v7097 = vadd.f32 %v7059, %v7070
        %v7098 = vadd.f32 %v7060, %v7070
        %v7099 = vadd.f32 %v7061, %v7070
        %v7100 = vadd.f32 %v7062, %v7070
        %v7101 = vadd.f32 %v7063, %v7070
        %v7102 = vadd.f32 %v7064, %v7070
        %v7103 = vadd.f32 %v7065, %v7070
        %v7104 = vmax.f32 %v7072, 0.0
        %v7105 = vmax.f32 %v7073, 0.0
        %v7106 = vmax.f32 %v7074, 0.0
        %v7107 = vmax.f32 %v7075, 0.0
        %v7108 = vmax.f32 %v7076, 0.0
        %v7109 = vmax.f32 %v7077, 0.0
        %v7110 = vmax.f32 %v7078, 0.0
        %v7111 = vmax.f32 %v7079, 0.0
        %v7112 = vmax.f32 %v7080, 0.0
        %v7113 = vmax.f32 %v7081, 0.0
        %v7114 = vmax.f32 %v7082, 0.0
        %v7115 = vmax.f32 %v7083, 0.0
        %v7116 = vmax.f32 %v7084, 0.0
        %v7117 = vmax.f32 %v7085, 0.0
        %v7118 = vmax.f32 %v7086, 0.0
        %v7119 = vmax.f32 %v7087, 0.0
        %v7120 = vmax.f32 %v7088, 0.0
        %v7121 = vmax.f32 %v7089, 0.0
        %v7122 = vmax.f32 %v7090, 0.0
        %v7123 = vmax.f32 %v7091, 0.0
        %v7124 = vmax.f32 %v7092, 0.0
        %v7125 = vmax.f32 %v7093, 0.0
        %v7126 = vmax.f32 %v7094, 0.0
        %v7127 = vmax.f32 %v7095, 0.0
        %v7128 = vmax.f32 %v7096, 0.0
        %v7129 = vmax.f32 %v7097, 0.0
        %v7130 = vmax.f32 %v7098, 0.0
        %v7131 = vmax.f32 %v7099, 0.0
        %v7132 = vmax.f32 %v7100, 0.0
        %v7133 = vmax.f32 %v7101, 0.0
        %v7134 = vmax.f32 %v7102, 0.0
        %v7135 = vmax.f32 %v7103, 0.0
        %v7136 = vadd.f32 %v411, %v7104
        %v7137 = vadd.f32 %v412, %v7105
        %v7138 = vadd.f32 %v413, %v7106
        %v7139 = vadd.f32 %v414, %v7107
        %v7140 = vadd.f32 %v415, %v7108
        %v7141 = vadd.f32 %v416, %v7109
        %v7142 = vadd.f32 %v417, %v7110
        %v7143 = vadd.f32 %v418, %v7111
        %v7144 = vadd.f32 %v419, %v7112
        %v7145 = vadd.f32 %v420, %v7113
        %v7146 = vadd.f32 %v421, %v7114
        %v7147 = vadd.f32 %v422, %v7115
        %v7148 = vadd.f32 %v423, %v7116
        %v7149 = vadd.f32 %v424, %v7117
        %v7150 = vadd.f32 %v425, %v7118
        %v7151 = vadd.f32 %v426, %v7119
        %v7152 = vadd.f32 %v427, %v7120
        %v7153 = vadd.f32 %v428, %v7121
        %v7154 = vadd.f32 %v429, %v7122
        %v7155 = vadd.f32 %v430, %v7123
        %v7156 = vadd.f32 %v431, %v7124
        %v7157 = vadd.f32 %v432, %v7125
        %v7158 = vadd.f32 %v433, %v7126
        %v7159 = vadd.f32 %v434, %v7127
        %v7160 = vadd.f32 %v435, %v7128
        %v7161 = vadd.f32 %v436, %v7129
        %v7162 = vadd.f32 %v437, %v7130
        %v7163 = vadd.f32 %v438, %v7131
        %v7164 = vadd.f32 %v439, %v7132
        %v7165 = vadd.f32 %v440, %v7133
        %v7166 = vadd.f32 %v441, %v7134
        %v7167 = vadd.f32 %v442, %v7135
        %v7168 = vmax.f32 %v7136, 0.0
        %v7169 = vmax.f32 %v7137, 0.0
        %v7170 = vmax.f32 %v7138, 0.0
        %v7171 = vmax.f32 %v7139, 0.0
        %v7172 = vmax.f32 %v7140, 0.0
        %v7173 = vmax.f32 %v7141, 0.0
        %v7174 = vmax.f32 %v7142, 0.0
        %v7175 = vmax.f32 %v7143, 0.0
        %v7176 = vmax.f32 %v7144, 0.0
        %v7177 = vmax.f32 %v7145, 0.0
        %v7178 = vmax.f32 %v7146, 0.0
        %v7179 = vmax.f32 %v7147, 0.0
        %v7180 = vmax.f32 %v7148, 0.0
        %v7181 = vmax.f32 %v7149, 0.0
        %v7182 = vmax.f32 %v7150, 0.0
        %v7183 = vmax.f32 %v7151, 0.0
        %v7184 = vmax.f32 %v7152, 0.0
        %v7185 = vmax.f32 %v7153, 0.0
        %v7186 = vmax.f32 %v7154, 0.0
        %v7187 = vmax.f32 %v7155, 0.0
        %v7188 = vmax.f32 %v7156, 0.0
        %v7189 = vmax.f32 %v7157, 0.0
        %v7190 = vmax.f32 %v7158, 0.0
        %v7191 = vmax.f32 %v7159, 0.0
        %v7192 = vmax.f32 %v7160, 0.0
        %v7193 = vmax.f32 %v7161, 0.0
        %v7194 = vmax.f32 %v7162, 0.0
        %v7195 = vmax.f32 %v7163, 0.0
        %v7196 = vmax.f32 %v7164, 0.0
        %v7197 = vmax.f32 %v7165, 0.0
        %v7198 = vmax.f32 %v7166, 0.0
        %v7199 = vmax.f32 %v7167, 0.0
        %v7216 = vrot.slane %v7170, 7
        %vm7217 = vcmask 1041409
        %v7218 = vsel %vm7217, %v7216, %v7168
        %v7219 = vrot.slane %v7172, 6
        %vm7220 = vcmask 1042434
        %v7221 = vsel %vm7220, %v7219, %v7218
        %v7222 = vrot.slane %v7174, 5
        %vm7223 = vcmask 1043459
        %v7224 = vsel %vm7223, %v7222, %v7221
        %v7225 = vrot.slane %v7176, 4
        %vm7226 = vcmask 1044484
        %v7227 = vsel %vm7226, %v7225, %v7224
        %v7228 = vrot.slane %v7178, 3
        %vm7229 = vcmask 1045509
        %v7230 = vsel %vm7229, %v7228, %v7227
        %v7231 = vrot.slane %v7180, 2
        %vm7232 = vcmask 1046534
        %v7233 = vsel %vm7232, %v7231, %v7230
        %v7234 = vrot.slane %v7182, 1
        %vm7235 = vcmask 1047559
        %v7236 = vsel %vm7235, %v7234, %v7233
        %v7237 = vrot.slane %v7186, 7
        %v7238 = vsel %vm7217, %v7237, %v7184
        %v7239 = vrot.slane %v7188, 6
        %v7240 = vsel %vm7220, %v7239, %v7238
        %v7241 = vrot.slane %v7190, 5
        %v7242 = vsel %vm7223, %v7241, %v7240
        %v7243 = vrot.slane %v7192, 4
        %v7244 = vsel %vm7226, %v7243, %v7242
        %v7245 = vrot.slane %v7194, 3
        %v7246 = vsel %vm7229, %v7245, %v7244
        %v7247 = vrot.slane %v7196, 2
        %v7248 = vsel %vm7232, %v7247, %v7246
        %v7249 = vrot.slane %v7198, 1
        %v7250 = vsel %vm7235, %v7249, %v7248
        %v7253 = vrot.slane %v7168, 1
        %v7254 = vsel %vm7217, %v7170, %v7253
        %v7255 = vrot.slane %v7172, 7
        %v7256 = vsel %vm7220, %v7255, %v7254
        %v7257 = vrot.slane %v7174, 6
        %v7258 = vsel %vm7223, %v7257, %v7256
        %v7259 = vrot.slane %v7176, 5
        %v7260 = vsel %vm7226, %v7259, %v7258
        %v7261 = vrot.slane %v7178, 4
        %v7262 = vsel %vm7229, %v7261, %v7260
        %v7263 = vrot.slane %v7180, 3
        %v7264 = vsel %vm7232, %v7263, %v7262
        %v7265 = vrot.slane %v7182, 2
        %v7266 = vsel %vm7235, %v7265, %v7264
        %v7267 = vrot.slane %v7184, 1
        %v7268 = vsel %vm7217, %v7186, %v7267
        %v7269 = vrot.slane %v7188, 7
        %v7270 = vsel %vm7220, %v7269, %v7268
        %v7271 = vrot.slane %v7190, 6
        %v7272 = vsel %vm7223, %v7271, %v7270
        %v7273 = vrot.slane %v7192, 5
        %v7274 = vsel %vm7226, %v7273, %v7272
        %v7275 = vrot.slane %v7194, 4
        %v7276 = vsel %vm7229, %v7275, %v7274
        %v7277 = vrot.slane %v7196, 3
        %v7278 = vsel %vm7232, %v7277, %v7276
        %v7279 = vrot.slane %v7198, 2
        %v7280 = vsel %vm7235, %v7279, %v7278
        %7281 = vrot.lane.b32.xlu0 %v7266, 32
        %v7282 = vpop.permute.xlu0 %7281
        %7283 = vrot.lane.b32.xlu0 %v7280, 32
        %v7284 = vpop.permute.xlu0 %7283
        %v7287 = vrot.slane %v7168, 2
        %v7288 = vrot.slane %v7170, 1
        %v7289 = vsel %vm7217, %v7288, %v7287
        %v7290 = vsel %vm7220, %v7172, %v7289
        %v7291 = vrot.slane %v7174, 7
        %v7292 = vsel %vm7223, %v7291, %v7290
        %v7293 = vrot.slane %v7176, 6
        %v7294 = vsel %vm7226, %v7293, %v7292
        %v7295 = vrot.slane %v7178, 5
        %v7296 = vsel %vm7229, %v7295, %v7294
        %v7297 = vrot.slane %v7180, 4
        %v7298 = vsel %vm7232, %v7297, %v7296
        %v7299 = vrot.slane %v7182, 3
        %v7300 = vsel %vm7235, %v7299, %v7298
        %v7301 = vrot.slane %v7184, 2
        %v7302 = vrot.slane %v7186, 1
        %v7303 = vsel %vm7217, %v7302, %v7301
        %v7304 = vsel %vm7220, %v7188, %v7303
        %v7305 = vrot.slane %v7190, 7
        %v7306 = vsel %vm7223, %v7305, %v7304
        %v7307 = vrot.slane %v7192, 6
        %v7308 = vsel %vm7226, %v7307, %v7306
        %v7309 = vrot.slane %v7194, 5
        %v7310 = vsel %vm7229, %v7309, %v7308
        %v7311 = vrot.slane %v7196, 4
        %v7312 = vsel %vm7232, %v7311, %v7310
        %v7313 = vrot.slane %v7198, 3
        %v7314 = vsel %vm7235, %v7313, %v7312
        %7315 = vrot.lane.b32.xlu0 %v7300, 64
        %v7316 = vpop.permute.xlu0 %7315
        %7317 = vrot.lane.b32.xlu0 %v7314, 64
        %v7318 = vpop.permute.xlu0 %7317
        %v7321 = vrot.slane %v7168, 3
        %v7322 = vrot.slane %v7170, 2
        %v7323 = vsel %vm7217, %v7322, %v7321
        %v7324 = vrot.slane %v7172, 1
        %v7325 = vsel %vm7220, %v7324, %v7323
        %v7326 = vsel %vm7223, %v7174, %v7325
        %v7327 = vrot.slane %v7176, 7
        %v7328 = vsel %vm7226, %v7327, %v7326
        %v7329 = vrot.slane %v7178, 6
        %v7330 = vsel %vm7229, %v7329, %v7328
        %v7331 = vrot.slane %v7180, 5
        %v7332 = vsel %vm7232, %v7331, %v7330
        %v7333 = vrot.slane %v7182, 4
        %v7334 = vsel %vm7235, %v7333, %v7332
        %v7335 = vrot.slane %v7184, 3
        %v7336 = vrot.slane %v7186, 2
        %v7337 = vsel %vm7217, %v7336, %v7335
        %v7338 = vrot.slane %v7188, 1
        %v7339 = vsel %vm7220, %v7338, %v7337
        %v7340 = vsel %vm7223, %v7190, %v7339
        %v7341 = vrot.slane %v7192, 7
        %v7342 = vsel %vm7226, %v7341, %v7340
        %v7343 = vrot.slane %v7194, 6
        %v7344 = vsel %vm7229, %v7343, %v7342
        %v7345 = vrot.slane %v7196, 5
        %v7346 = vsel %vm7232, %v7345, %v7344
        %v7347 = vrot.slane %v7198, 4
        %v7348 = vsel %vm7235, %v7347, %v7346
        %7349 = vrot.lane.b32.xlu0 %v7334, 96
        %v7350 = vpop.permute.xlu0 %7349
        %7351 = vrot.lane.b32.xlu0 %v7348, 96
        %v7352 = vpop.permute.xlu0 %7351
        %v7355 = vrot.slane %v7168, 4
        %v7356 = vrot.slane %v7170, 3
        %v7357 = vsel %vm7217, %v7356, %v7355
        %v7358 = vrot.slane %v7172, 2
        %v7359 = vsel %vm7220, %v7358, %v7357
        %v7360 = vrot.slane %v7174, 1
        %v7361 = vsel %vm7223, %v7360, %v7359
        %v7362 = vsel %vm7226, %v7176, %v7361
        %v7363 = vrot.slane %v7178, 7
        %v7364 = vsel %vm7229, %v7363, %v7362
        %v7365 = vrot.slane %v7180, 6
        %v7366 = vsel %vm7232, %v7365, %v7364
        %v7367 = vrot.slane %v7182, 5
        %v7368 = vsel %vm7235, %v7367, %v7366
        %v7369 = vrot.slane %v7184, 4
        %v7370 = vrot.slane %v7186, 3
        %v7371 = vsel %vm7217, %v7370, %v7369
        %v7372 = vrot.slane %v7188, 2
        %v7373 = vsel %vm7220, %v7372, %v7371
        %v7374 = vrot.slane %v7190, 1
        %v7375 = vsel %vm7223, %v7374, %v7373
        %v7376 = vsel %vm7226, %v7192, %v7375
        %v7377 = vrot.slane %v7194, 7
        %v7378 = vsel %vm7229, %v7377, %v7376
        %v7379 = vrot.slane %v7196, 6
        %v7380 = vsel %vm7232, %v7379, %v7378
        %v7381 = vrot.slane %v7198, 5
        %v7382 = vsel %vm7235, %v7381, %v7380
        %v7385 = vrot.slane %v7168, 5
        %v7386 = vrot.slane %v7170, 4
        %v7387 = vsel %vm7217, %v7386, %v7385
        %v7388 = vrot.slane %v7172, 3
        %v7389 = vsel %vm7220, %v7388, %v7387
        %v7390 = vrot.slane %v7174, 2
        %v7391 = vsel %vm7223, %v7390, %v7389
        %v7392 = vrot.slane %v7176, 1
        %v7393 = vsel %vm7226, %v7392, %v7391
        %v7394 = vsel %vm7229, %v7178, %v7393
        %v7395 = vrot.slane %v7180, 7
        %v7396 = vsel %vm7232, %v7395, %v7394
        %v7397 = vrot.slane %v7182, 6
        %v7398 = vsel %vm7235, %v7397, %v7396
        %v7399 = vrot.slane %v7184, 5
        %v7400 = vrot.slane %v7186, 4
        %v7401 = vsel %vm7217, %v7400, %v7399
        %v7402 = vrot.slane %v7188, 3
        %v7403 = vsel %vm7220, %v7402, %v7401
        %v7404 = vrot.slane %v7190, 2
        %v7405 = vsel %vm7223, %v7404, %v7403
        %v7406 = vrot.slane %v7192, 1
        %v7407 = vsel %vm7226, %v7406, %v7405
        %v7408 = vsel %vm7229, %v7194, %v7407
        %v7409 = vrot.slane %v7196, 7
        %v7410 = vsel %vm7232, %v7409, %v7408
        %v7411 = vrot.slane %v7198, 6
        %v7412 = vsel %vm7235, %v7411, %v7410
        %7413 = vrot.lane.b32.xlu0 %v7398, 32
        %v7414 = vpop.permute.xlu0 %7413
        %7415 = vrot.lane.b32.xlu0 %v7412, 32
        %v7416 = vpop.permute.xlu0 %7415
        %v7419 = vrot.slane %v7168, 6
        %v7420 = vrot.slane %v7170, 5
        %v7421 = vsel %vm7217, %v7420, %v7419
        %v7422 = vrot.slane %v7172, 4
        %v7423 = vsel %vm7220, %v7422, %v7421
        %v7424 = vrot.slane %v7174, 3
        %v7425 = vsel %vm7223, %v7424, %v7423
        %v7426 = vrot.slane %v7176, 2
        %v7427 = vsel %vm7226, %v7426, %v7425
        %v7428 = vrot.slane %v7178, 1
        %v7429 = vsel %vm7229, %v7428, %v7427
        %v7430 = vsel %vm7232, %v7180, %v7429
        %v7431 = vrot.slane %v7182, 7
        %v7432 = vsel %vm7235, %v7431, %v7430
        %v7433 = vrot.slane %v7184, 6
        %v7434 = vrot.slane %v7186, 5
        %v7435 = vsel %vm7217, %v7434, %v7433
        %v7436 = vrot.slane %v7188, 4
        %v7437 = vsel %vm7220, %v7436, %v7435
        %v7438 = vrot.slane %v7190, 3
        %v7439 = vsel %vm7223, %v7438, %v7437
        %v7440 = vrot.slane %v7192, 2
        %v7441 = vsel %vm7226, %v7440, %v7439
        %v7442 = vrot.slane %v7194, 1
        %v7443 = vsel %vm7229, %v7442, %v7441
        %v7444 = vsel %vm7232, %v7196, %v7443
        %v7445 = vrot.slane %v7198, 7
        %v7446 = vsel %vm7235, %v7445, %v7444
        %7447 = vrot.lane.b32.xlu0 %v7432, 64
        %v7448 = vpop.permute.xlu0 %7447
        %7449 = vrot.lane.b32.xlu0 %v7446, 64
        %v7450 = vpop.permute.xlu0 %7449
        %v7453 = vrot.slane %v7168, 7
        %v7454 = vrot.slane %v7170, 6
        %v7455 = vsel %vm7217, %v7454, %v7453
        %v7456 = vrot.slane %v7172, 5
        %v7457 = vsel %vm7220, %v7456, %v7455
        %v7458 = vrot.slane %v7174, 4
        %v7459 = vsel %vm7223, %v7458, %v7457
        %v7460 = vrot.slane %v7176, 3
        %v7461 = vsel %vm7226, %v7460, %v7459
        %v7462 = vrot.slane %v7178, 2
        %v7463 = vsel %vm7229, %v7462, %v7461
        %v7464 = vrot.slane %v7180, 1
        %v7465 = vsel %vm7232, %v7464, %v7463
        %v7466 = vsel %vm7235, %v7182, %v7465
        %v7467 = vrot.slane %v7184, 7
        %v7468 = vrot.slane %v7186, 6
        %v7469 = vsel %vm7217, %v7468, %v7467
        %v7470 = vrot.slane %v7188, 5
        %v7471 = vsel %vm7220, %v7470, %v7469
        %v7472 = vrot.slane %v7190, 4
        %v7473 = vsel %vm7223, %v7472, %v7471
        %v7474 = vrot.slane %v7192, 3
        %v7475 = vsel %vm7226, %v7474, %v7473
        %v7476 = vrot.slane %v7194, 2
        %v7477 = vsel %vm7229, %v7476, %v7475
        %v7478 = vrot.slane %v7196, 1
        %v7479 = vsel %vm7232, %v7478, %v7477
        %v7480 = vsel %vm7235, %v7198, %v7479
        %7481 = vrot.lane.b32.xlu0 %v7466, 96
        %v7482 = vpop.permute.xlu0 %7481
        %7483 = vrot.lane.b32.xlu0 %v7480, 96
        %v7484 = vpop.permute.xlu0 %7483
        %v7503 = vrot.slane %v7171, 7
        %v7504 = vsel %vm7217, %v7503, %v7169
        %v7505 = vrot.slane %v7173, 6
        %v7506 = vsel %vm7220, %v7505, %v7504
        %v7507 = vrot.slane %v7175, 5
        %v7508 = vsel %vm7223, %v7507, %v7506
        %v7509 = vrot.slane %v7177, 4
        %v7510 = vsel %vm7226, %v7509, %v7508
        %v7511 = vrot.slane %v7179, 3
        %v7512 = vsel %vm7229, %v7511, %v7510
        %v7513 = vrot.slane %v7181, 2
        %v7514 = vsel %vm7232, %v7513, %v7512
        %v7515 = vrot.slane %v7183, 1
        %v7516 = vsel %vm7235, %v7515, %v7514
        %v7517 = vrot.slane %v7187, 7
        %v7518 = vsel %vm7217, %v7517, %v7185
        %v7519 = vrot.slane %v7189, 6
        %v7520 = vsel %vm7220, %v7519, %v7518
        %v7521 = vrot.slane %v7191, 5
        %v7522 = vsel %vm7223, %v7521, %v7520
        %v7523 = vrot.slane %v7193, 4
        %v7524 = vsel %vm7226, %v7523, %v7522
        %v7525 = vrot.slane %v7195, 3
        %v7526 = vsel %vm7229, %v7525, %v7524
        %v7527 = vrot.slane %v7197, 2
        %v7528 = vsel %vm7232, %v7527, %v7526
        %v7529 = vrot.slane %v7199, 1
        %v7530 = vsel %vm7235, %v7529, %v7528
        %v7533 = vrot.slane %v7169, 1
        %v7534 = vsel %vm7217, %v7171, %v7533
        %v7535 = vrot.slane %v7173, 7
        %v7536 = vsel %vm7220, %v7535, %v7534
        %v7537 = vrot.slane %v7175, 6
        %v7538 = vsel %vm7223, %v7537, %v7536
        %v7539 = vrot.slane %v7177, 5
        %v7540 = vsel %vm7226, %v7539, %v7538
        %v7541 = vrot.slane %v7179, 4
        %v7542 = vsel %vm7229, %v7541, %v7540
        %v7543 = vrot.slane %v7181, 3
        %v7544 = vsel %vm7232, %v7543, %v7542
        %v7545 = vrot.slane %v7183, 2
        %v7546 = vsel %vm7235, %v7545, %v7544
        %v7547 = vrot.slane %v7185, 1
        %v7548 = vsel %vm7217, %v7187, %v7547
        %v7549 = vrot.slane %v7189, 7
        %v7550 = vsel %vm7220, %v7549, %v7548
        %v7551 = vrot.slane %v7191, 6
        %v7552 = vsel %vm7223, %v7551, %v7550
        %v7553 = vrot.slane %v7193, 5
        %v7554 = vsel %vm7226, %v7553, %v7552
        %v7555 = vrot.slane %v7195, 4
        %v7556 = vsel %vm7229, %v7555, %v7554
        %v7557 = vrot.slane %v7197, 3
        %v7558 = vsel %vm7232, %v7557, %v7556
        %v7559 = vrot.slane %v7199, 2
        %v7560 = vsel %vm7235, %v7559, %v7558
        %7561 = vrot.lane.b32.xlu0 %v7546, 32
        %v7562 = vpop.permute.xlu0 %7561
        %7563 = vrot.lane.b32.xlu0 %v7560, 32
        %v7564 = vpop.permute.xlu0 %7563
        %v7567 = vrot.slane %v7169, 2
        %v7568 = vrot.slane %v7171, 1
        %v7569 = vsel %vm7217, %v7568, %v7567
        %v7570 = vsel %vm7220, %v7173, %v7569
        %v7571 = vrot.slane %v7175, 7
        %v7572 = vsel %vm7223, %v7571, %v7570
        %v7573 = vrot.slane %v7177, 6
        %v7574 = vsel %vm7226, %v7573, %v7572
        %v7575 = vrot.slane %v7179, 5
        %v7576 = vsel %vm7229, %v7575, %v7574
        %v7577 = vrot.slane %v7181, 4
        %v7578 = vsel %vm7232, %v7577, %v7576
        %v7579 = vrot.slane %v7183, 3
        %v7580 = vsel %vm7235, %v7579, %v7578
        %v7581 = vrot.slane %v7185, 2
        %v7582 = vrot.slane %v7187, 1
        %v7583 = vsel %vm7217, %v7582, %v7581
        %v7584 = vsel %vm7220, %v7189, %v7583
        %v7585 = vrot.slane %v7191, 7
        %v7586 = vsel %vm7223, %v7585, %v7584
        %v7587 = vrot.slane %v7193, 6
        %v7588 = vsel %vm7226, %v7587, %v7586
        %v7589 = vrot.slane %v7195, 5
        %v7590 = vsel %vm7229, %v7589, %v7588
        %v7591 = vrot.slane %v7197, 4
        %v7592 = vsel %vm7232, %v7591, %v7590
        %v7593 = vrot.slane %v7199, 3
        %v7594 = vsel %vm7235, %v7593, %v7592
        %7595 = vrot.lane.b32.xlu0 %v7580, 64
        %v7596 = vpop.permute.xlu0 %7595
        %7597 = vrot.lane.b32.xlu0 %v7594, 64
        %v7598 = vpop.permute.xlu0 %7597
        %v7601 = vrot.slane %v7169, 3
        %v7602 = vrot.slane %v7171, 2
        %v7603 = vsel %vm7217, %v7602, %v7601
        %v7604 = vrot.slane %v7173, 1
        %v7605 = vsel %vm7220, %v7604, %v7603
        %v7606 = vsel %vm7223, %v7175, %v7605
        %v7607 = vrot.slane %v7177, 7
        %v7608 = vsel %vm7226, %v7607, %v7606
        %v7609 = vrot.slane %v7179, 6
        %v7610 = vsel %vm7229, %v7609, %v7608
        %v7611 = vrot.slane %v7181, 5
        %v7612 = vsel %vm7232, %v7611, %v7610
        %v7613 = vrot.slane %v7183, 4
        %v7614 = vsel %vm7235, %v7613, %v7612
        %v7615 = vrot.slane %v7185, 3
        %v7616 = vrot.slane %v7187, 2
        %v7617 = vsel %vm7217, %v7616, %v7615
        %v7618 = vrot.slane %v7189, 1
        %v7619 = vsel %vm7220, %v7618, %v7617
        %v7620 = vsel %vm7223, %v7191, %v7619
        %v7621 = vrot.slane %v7193, 7
        %v7622 = vsel %vm7226, %v7621, %v7620
        %v7623 = vrot.slane %v7195, 6
        %v7624 = vsel %vm7229, %v7623, %v7622
        %v7625 = vrot.slane %v7197, 5
        %v7626 = vsel %vm7232, %v7625, %v7624
        %v7627 = vrot.slane %v7199, 4
        %v7628 = vsel %vm7235, %v7627, %v7626
        %7629 = vrot.lane.b32.xlu0 %v7614, 96
        %v7630 = vpop.permute.xlu0 %7629
        %7631 = vrot.lane.b32.xlu0 %v7628, 96
        %v7632 = vpop.permute.xlu0 %7631
        %v7635 = vrot.slane %v7169, 4
        %v7636 = vrot.slane %v7171, 3
        %v7637 = vsel %vm7217, %v7636, %v7635
        %v7638 = vrot.slane %v7173, 2
        %v7639 = vsel %vm7220, %v7638, %v7637
        %v7640 = vrot.slane %v7175, 1
        %v7641 = vsel %vm7223, %v7640, %v7639
        %v7642 = vsel %vm7226, %v7177, %v7641
        %v7643 = vrot.slane %v7179, 7
        %v7644 = vsel %vm7229, %v7643, %v7642
        %v7645 = vrot.slane %v7181, 6
        %v7646 = vsel %vm7232, %v7645, %v7644
        %v7647 = vrot.slane %v7183, 5
        %v7648 = vsel %vm7235, %v7647, %v7646
        %v7649 = vrot.slane %v7185, 4
        %v7650 = vrot.slane %v7187, 3
        %v7651 = vsel %vm7217, %v7650, %v7649
        %v7652 = vrot.slane %v7189, 2
        %v7653 = vsel %vm7220, %v7652, %v7651
        %v7654 = vrot.slane %v7191, 1
        %v7655 = vsel %vm7223, %v7654, %v7653
        %v7656 = vsel %vm7226, %v7193, %v7655
        %v7657 = vrot.slane %v7195, 7
        %v7658 = vsel %vm7229, %v7657, %v7656
        %v7659 = vrot.slane %v7197, 6
        %v7660 = vsel %vm7232, %v7659, %v7658
        %v7661 = vrot.slane %v7199, 5
        %v7662 = vsel %vm7235, %v7661, %v7660
        %v7665 = vrot.slane %v7169, 5
        %v7666 = vrot.slane %v7171, 4
        %v7667 = vsel %vm7217, %v7666, %v7665
        %v7668 = vrot.slane %v7173, 3
        %v7669 = vsel %vm7220, %v7668, %v7667
        %v7670 = vrot.slane %v7175, 2
        %v7671 = vsel %vm7223, %v7670, %v7669
        %v7672 = vrot.slane %v7177, 1
        %v7673 = vsel %vm7226, %v7672, %v7671
        %v7674 = vsel %vm7229, %v7179, %v7673
        %v7675 = vrot.slane %v7181, 7
        %v7676 = vsel %vm7232, %v7675, %v7674
        %v7677 = vrot.slane %v7183, 6
        %v7678 = vsel %vm7235, %v7677, %v7676
        %v7679 = vrot.slane %v7185, 5
        %v7680 = vrot.slane %v7187, 4
        %v7681 = vsel %vm7217, %v7680, %v7679
        %v7682 = vrot.slane %v7189, 3
        %v7683 = vsel %vm7220, %v7682, %v7681
        %v7684 = vrot.slane %v7191, 2
        %v7685 = vsel %vm7223, %v7684, %v7683
        %v7686 = vrot.slane %v7193, 1
        %v7687 = vsel %vm7226, %v7686, %v7685
        %v7688 = vsel %vm7229, %v7195, %v7687
        %v7689 = vrot.slane %v7197, 7
        %v7690 = vsel %vm7232, %v7689, %v7688
        %v7691 = vrot.slane %v7199, 6
        %v7692 = vsel %vm7235, %v7691, %v7690
        %7693 = vrot.lane.b32.xlu0 %v7678, 32
        %v7694 = vpop.permute.xlu0 %7693
        %7695 = vrot.lane.b32.xlu0 %v7692, 32
        %v7696 = vpop.permute.xlu0 %7695
        %v7699 = vrot.slane %v7169, 6
        %v7700 = vrot.slane %v7171, 5
        %v7701 = vsel %vm7217, %v7700, %v7699
        %v7702 = vrot.slane %v7173, 4
        %v7703 = vsel %vm7220, %v7702, %v7701
        %v7704 = vrot.slane %v7175, 3
        %v7705 = vsel %vm7223, %v7704, %v7703
        %v7706 = vrot.slane %v7177, 2
        %v7707 = vsel %vm7226, %v7706, %v7705
        %v7708 = vrot.slane %v7179, 1
        %v7709 = vsel %vm7229, %v7708, %v7707
        %v7710 = vsel %vm7232, %v7181, %v7709
        %v7711 = vrot.slane %v7183, 7
        %v7712 = vsel %vm7235, %v7711, %v7710
        %v7713 = vrot.slane %v7185, 6
        %v7714 = vrot.slane %v7187, 5
        %v7715 = vsel %vm7217, %v7714, %v7713
        %v7716 = vrot.slane %v7189, 4
        %v7717 = vsel %vm7220, %v7716, %v7715
        %v7718 = vrot.slane %v7191, 3
        %v7719 = vsel %vm7223, %v7718, %v7717
        %v7720 = vrot.slane %v7193, 2
        %v7721 = vsel %vm7226, %v7720, %v7719
        %v7722 = vrot.slane %v7195, 1
        %v7723 = vsel %vm7229, %v7722, %v7721
        %v7724 = vsel %vm7232, %v7197, %v7723
        %v7725 = vrot.slane %v7199, 7
        %v7726 = vsel %vm7235, %v7725, %v7724
        %7727 = vrot.lane.b32.xlu0 %v7712, 64
        %v7728 = vpop.permute.xlu0 %7727
        %7729 = vrot.lane.b32.xlu0 %v7726, 64
        %v7730 = vpop.permute.xlu0 %7729
        %v7733 = vrot.slane %v7169, 7
        %v7734 = vrot.slane %v7171, 6
        %v7735 = vsel %vm7217, %v7734, %v7733
        %v7736 = vrot.slane %v7173, 5
        %v7737 = vsel %vm7220, %v7736, %v7735
        %v7738 = vrot.slane %v7175, 4
        %v7739 = vsel %vm7223, %v7738, %v7737
        %v7740 = vrot.slane %v7177, 3
        %v7741 = vsel %vm7226, %v7740, %v7739
        %v7742 = vrot.slane %v7179, 2
        %v7743 = vsel %vm7229, %v7742, %v7741
        %v7744 = vrot.slane %v7181, 1
        %v7745 = vsel %vm7232, %v7744, %v7743
        %v7746 = vsel %vm7235, %v7183, %v7745
        %v7747 = vrot.slane %v7185, 7
        %v7748 = vrot.slane %v7187, 6
        %v7749 = vsel %vm7217, %v7748, %v7747
        %v7750 = vrot.slane %v7189, 5
        %v7751 = vsel %vm7220, %v7750, %v7749
        %v7752 = vrot.slane %v7191, 4
        %v7753 = vsel %vm7223, %v7752, %v7751
        %v7754 = vrot.slane %v7193, 3
        %v7755 = vsel %vm7226, %v7754, %v7753
        %v7756 = vrot.slane %v7195, 2
        %v7757 = vsel %vm7229, %v7756, %v7755
        %v7758 = vrot.slane %v7197, 1
        %v7759 = vsel %vm7232, %v7758, %v7757
        %v7760 = vsel %vm7235, %v7199, %v7759
        %7761 = vrot.lane.b32.xlu0 %v7746, 96
        %v7762 = vpop.permute.xlu0 %7761
        %7763 = vrot.lane.b32.xlu0 %v7760, 96
        %v7764 = vpop.permute.xlu0 %7763
        %v7767 = vsel %vm655, %v7236, %v7282
        %v7768 = vsel %vm655, %v7250, %v7284
        %vm7769 = vcmask 523264
        %v7770 = vsel %vm7769, %v7767, %v7316
        %v7771 = vsel %vm7769, %v7768, %v7318
        %vm7772 = vcmask 785408
        %v7773 = vsel %vm7772, %v7770, %v7350
        %v7774 = vsel %vm7772, %v7771, %v7352
        %v7775 = vsel %vm655, %v7368, %v7414
        %v7776 = vsel %vm655, %v7382, %v7416
        %v7777 = vsel %vm7769, %v7775, %v7448
        %v7778 = vsel %vm7769, %v7776, %v7450
        %v7779 = vsel %vm7772, %v7777, %v7482
        %v7780 = vsel %vm7772, %v7778, %v7484
        %v7781 = vsel %vm655, %v7516, %v7562
        %v7782 = vsel %vm655, %v7530, %v7564
        %v7783 = vsel %vm7769, %v7781, %v7596
        %v7784 = vsel %vm7769, %v7782, %v7598
        %v7785 = vsel %vm7772, %v7783, %v7630
        %v7786 = vsel %vm7772, %v7784, %v7632
        %v7787 = vsel %vm655, %v7648, %v7694
        %v7788 = vsel %vm655, %v7662, %v7696
        %v7789 = vsel %vm7769, %v7787, %v7728
        %v7790 = vsel %vm7769, %v7788, %v7730
        %v7791 = vsel %vm7772, %v7789, %v7762
        %v7792 = vsel %vm7772, %v7790, %v7764
        %7793 = vst [vmem:[%s406] sm:$0xff] %v7773
        %7794 = vst [vmem:[%s406 + $0x8] sm:$0xff] %v7779
        %7795 = vst [vmem:[%s406 + $0x10] sm:$0xff] %v7785
        %7796 = vst [vmem:[%s406 + $0x18] sm:$0xff] %v7791
        %7797 = vst [vmem:[%s406 + $0x20] sm:$0xff] %v7774
        %7798 = vst [vmem:[%s406 + $0x28] sm:$0xff] %v7780
        %7799 = vst [vmem:[%s406 + $0x30] sm:$0xff] %v7786
        %7800 = vst [vmem:[%s406 + $0x38] sm:$0xff] %v7792
        %s7801 = sand.u32 %s251, 1
        %s7802 = scalar_lea.sflag [#allocation4], %s7801
        %s7803 = sand.u32 %s251, 1
        %s7804 = smul.addr %s7803, 64
        %s7805 = scalar_lea.vmem [#allocation8], %s7804
        // Predicated region
        $region73: #{tpu_custom_call.1} parent=59 // pred_check
          %p7806 = pneg %p261
        $region74: #{tpu_custom_call.1} parent=59 // pred_check_branch
          %7808 = sbr.rel (%p7806) target = $region76
        $region75: #{tpu_custom_call.1} parent=59 // pred_region
          %s7810 = ssub.s32 1024, 1024
          %7811 = vsyncadd %s7802, %s7810
          %s7812 = smul.addr %s28, 8
          %s7813 = smul.addr %s7812, 128
          %s7814 = scalar_lea.hbm %s10, %s7813
          %s7815 = sshll.u32 %s7805, 4
          %s7816 = int_to_ptr.vmem [resolvable:$true] %s7815
          %7821 = dma.vmem_to_hbm [thread:$0]  %s7816, 1024, %s7814, %s7802, 512, 512, 32
        $region76: #{tpu_custom_call.1} parent=59 // pred_fallthru
          _
      $region60: #{tpu_custom_call.1} parent=5 // pred_fallthru
        _
      %p7822 = scmp.le.s32.totalorder 2, %s23
      // Predicated region
      $region77: #{tpu_custom_call.1} parent=5 // pred_check
        %p7823 = pneg %p7822
      $region78: #{tpu_custom_call.1} parent=5 // pred_check_branch
        %7825 = sbr.rel (%p7823) target = $region80
      $region79: #{tpu_custom_call.1} parent=5 // pred_region
        %s7826 = ssub.s32 %s23, 2
        // Predicated region
        $region81: #{tpu_custom_call.1} parent=79 // pred_check
          %p7827 = pneg %p267
        $region82: #{tpu_custom_call.1} parent=79 // pred_check_branch
          %7829 = sbr.rel (%p7827) target = $region84
        $region83: #{tpu_custom_call.1} parent=79 // pred_region
          %s7830 = sand.u32 %s252, 1
          %s7831 = scalar_lea.sflag [#allocation4], %s7830
          %s7832 = sand.u32 %s252, 1
          %s7833 = smul.addr %s7832, 64
          %s7834 = scalar_lea.vmem [#allocation8], %s7833
          %7835 = dma.done %s7831, 1024
        $region84: #{tpu_custom_call.1} parent=79 // pred_fallthru
          _
      $region80: #{tpu_custom_call.1} parent=5 // pred_fallthru
        _
    $region6: #{tpu_custom_call.1} parent=1 // loop_footer
      %s27 = sadd.s32 1, %s23
    $region7: #{tpu_custom_call.1} parent=1 // loop_footer_branch
      %22 = sbr.rel target = $region3
    $region8: #{tpu_custom_call.1} parent=1 // loop_exit
      _
    %7836 = vsyncpa [#allocation3], 1
    %s7837 = scalar_lea.sflag [#allocation3], 1
    %7838 = vsyncpa %s7837, 1
    %7839 = vsyncpa [#allocation6], 1
    %7840 = vsyncpa [#allocation4], 1
    %s7841 = scalar_lea.sflag [#allocation4], 1
    %7842 = vsyncpa %s7841, 1

</llo_original>
